<compile_context>
chip_gen: v7x
topology: tpu7x:2x2x1
jax: 0.10.0
libtpu: 0.0.40
codegen_flags: <defaults>
</compile_context>

<pallas_src>
import jax
import jax.numpy as jnp
from jax.experimental import pallas as pl
from jax.experimental.pallas import tpu as pltpu

_HIGHEST = jax.lax.Precision.HIGHEST


def _apply_mlp_refs(h, layers):
    """layers: list of (w_ref, b_ref) VMEM refs. tanh on all but the last layer."""
    n = len(layers)
    for li, (w_ref, b_ref) in enumerate(layers):
        h = jnp.dot(h, w_ref[...], preferred_element_type=jnp.float32,
                    precision=_HIGHEST) + b_ref[...]
        if li < n - 1:
            h = jnp.tanh(h)
    return h


def _make_gc_kernel(n_pp, n_pi, n_ii, n_nodes, n_edges, edge_tile):
    n_params = 2 * (n_pp + n_pi + n_ii)
    ragged = (n_edges % edge_tile) != 0  # static: skip mask ops when not needed

    def kernel(p1_ref, idx_i_col_ref, idx_j_col_ref, idx_i_row_ref, basis_ref,
               *rest):
        param_refs = rest[:n_params]
        out_ref = rest[n_params]
        pp1_ref = rest[n_params + 1]

        def split(refs, n):
            return [(refs[2 * i], refs[2 * i + 1]) for i in range(n)]

        pp_layers = split(param_refs[: 2 * n_pp], n_pp)
        pi_layers = split(param_refs[2 * n_pp: 2 * (n_pp + n_pi)], n_pi)
        ii_layers = split(param_refs[2 * (n_pp + n_pi):], n_ii)

        e_step = pl.program_id(0)

        # --- grid step 0: per-node MLP (pp1) once into VMEM; zero accumulator.
        @pl.when(e_step == 0)
        def _():
            pp1_ref[...] = _apply_mlp_refs(p1_ref[...], pp_layers)
            out_ref[...] = jnp.zeros_like(out_ref)

        pp1 = pp1_ref[...]                                       # [N, Cp]

        # --- gather pp1[idx_i] + pp1[idx_j] via ONE fused one-hot MXU matmul --
        idx_i_col = idx_i_col_ref[...]                           # [tE, 1] int32
        idx_j_col = idx_j_col_ref[...]                           # [tE, 1] int32
        node_ids = jax.lax.broadcasted_iota(
            jnp.int32, (edge_tile, n_nodes), 1)                  # [tE, N]
        oh_sum = ((idx_i_col == node_ids).astype(jnp.float32)
                  + (idx_j_col == node_ids).astype(jnp.float32))  # values {0,1,2}
        prop_ij = jnp.dot(oh_sum, pp1, preferred_element_type=jnp.float32,
                          precision=_HIGHEST)                    # [tE, Cp]

        # --- per-edge MLPs (PILayer mlp + ii layer) ---------------------------
        inter = prop_ij + basis_ref[...]
        pi1 = _apply_mlp_refs(inter, pi_layers)
        ii1 = _apply_mlp_refs(pi1, ii_layers)                    # [tE, Co]

        # mask padded rows of the ragged last edge tile (select -> NaN-safe)
        if ragged:
            edge_ids = (e_step * edge_tile
                        + jax.lax.broadcasted_iota(jnp.int32, (edge_tile, 1), 0))
            ii1 = jnp.where(edge_ids < n_edges, ii1, 0.0)

        # --- scatter_add over idx_i via the lane-layout one-hot ---------------
        idx_i_row = idx_i_row_ref[...]                           # [1, tE] int32
        node_ids_t = jax.lax.broadcasted_iota(
            jnp.int32, (n_nodes, edge_tile), 0)                  # [N, tE]
        oh_scatter = (node_ids_t == idx_i_row).astype(jnp.float32)
        out_ref[...] += jnp.dot(oh_scatter, ii1,
                                preferred_element_type=jnp.float32,
                                precision=_HIGHEST)              # [N, Co]

    return kernel


def gcblock_forward(idx_i, idx_j, p1, basis, pp_layers, pi_layers, ii_layers,
                    *, edge_block=512):
    """Fused GCBlock.forward -> scatter_add(MLP_ii(MLP_pi(gather+basis)), idx_i)."""
    n_nodes = p1.shape[0]
    n_edges = idx_i.shape[0]
    assert idx_j.shape == (n_edges,) and basis.shape[0] == n_edges

    c_out = ii_layers[-1][0].shape[1]
    c_pp = pp_layers[-1][0].shape[1]

    # Edge tile: one full-extent tile when it fits, else a 128-lane aligned tile
    # with a ragged, in-kernel-masked last block (pl.cdiv grid, no padding).
    if n_edges <= edge_block:
        t_e = n_edges
    else:
        assert edge_block % 128 == 0, "edge_block must be a multiple of 128"
        t_e = edge_block
    grid = (pl.cdiv(n_edges, t_e),)

    # idx_i in both layouts: [E,1] (sublane axis -> gather one-hot) and
    # [1,E] (lane axis -> scatter one-hot); idx_j only needs the gather layout.
    idx_i_col = idx_i.astype(jnp.int32).reshape(n_edges, 1)
    idx_j_col = idx_j.astype(jnp.int32).reshape(n_edges, 1)
    idx_i_row = idx_i.astype(jnp.int32).reshape(1, n_edges)

    # Flatten MLP params; biases as [1, C] rows so they broadcast in VMEM.
    flat_params = []
    for layers in (pp_layers, pi_layers, ii_layers):
        for w, b in layers:
            flat_params.append(jnp.asarray(w, jnp.float32))
            flat_params.append(jnp.asarray(b, jnp.float32).reshape(1, -1))

    def resident(shape):
        return pl.BlockSpec(shape, lambda e: (0, 0))

    in_specs = [
        resident(p1.shape),                                    # p1 (resident)
        pl.BlockSpec((t_e, 1), lambda e: (e, 0)),              # idx_i column
        pl.BlockSpec((t_e, 1), lambda e: (e, 0)),              # idx_j column
        pl.BlockSpec((1, t_e), lambda e: (0, e)),              # idx_i row
        pl.BlockSpec((t_e, basis.shape[1]), lambda e: (e, 0)), # basis tile
    ] + [resident(p.shape) for p in flat_params]               # weights/biases

    kernel = _make_gc_kernel(len(pp_layers), len(pi_layers), len(ii_layers),
                             n_nodes, n_edges, t_e)

    return pl.pallas_call(
        kernel,
        out_shape=jax.ShapeDtypeStruct((n_nodes, c_out), jnp.float32),
        grid_spec=pltpu.PrefetchScalarGridSpec(
            num_scalar_prefetch=0,
            grid=grid,
            in_specs=in_specs,
            out_specs=pl.BlockSpec((n_nodes, c_out), lambda e: (0, 0)),
            scratch_shapes=[pltpu.VMEM((n_nodes, c_pp), jnp.float32)],
        ),
        compiler_params=pltpu.CompilerParams(
            # edge axis accumulates into the resident output -> reduction axis
            dimension_semantics=("arbitrary",),
        ),
    )(p1.astype(jnp.float32), idx_i_col, idx_j_col, idx_i_row,
      basis.astype(jnp.float32), *flat_params)


# ----------------------------- pure-JAX reference -----------------------------
def _apply_mlp(h, layers):
    n = len(layers)
    for li, (w, b) in enumerate(layers):
        h = jnp.dot(h, w, precision=_HIGHEST) + b
        if li < n - 1:
            h = jnp.tanh(h)
    return h


def gcblock_reference(idx_i, idx_j, p1, basis, pp_layers, pi_layers, ii_layers):
    n_nodes = p1.shape[0]
    pp1 = _apply_mlp(p1, pp_layers)
    inter = pp1[idx_i] + basis + pp1[idx_j]
    pi1 = _apply_mlp(inter, pi_layers)
    ii1 = _apply_mlp(pi1, ii_layers)
    return jax.ops.segment_sum(ii1, idx_i, num_segments=n_nodes)


if __name__ == "__main__":
    key = jax.random.PRNGKey(0)
    n_nodes, n_edges = 64, 200
    pp_nodes = [32, 64, 32]   # per-node MLP 32 -> 64 -> 32
    pi_nodes = [32, 64, 32]   # per-edge MLP (basis dim = 32)
    ii_nodes = [32, 64, 32]   # per-edge MLP

    ks = jax.random.split(key, 7)
    idx_i = jax.random.randint(ks[0], (n_edges,), 0, n_nodes, dtype=jnp.int32)
    idx_j = jax.random.randint(ks[1], (n_edges,), 0, n_nodes, dtype=jnp.int32)
    p1 = jax.random.normal(ks[2], (n_nodes, pp_nodes[0]), jnp.float32)
    basis = jax.random.normal(ks[3], (n_edges, pi_nodes[0]), jnp.float32)

    def init_mlp(k, nodes):
        layers = []
        lks = jax.random.split(k, len(nodes) - 1)
        for lk, c_in, c_out in zip(lks, nodes[:-1], nodes[1:]):
            kw, kb = jax.random.split(lk)
            w = jax.random.normal(kw, (c_in, c_out), jnp.float32) / jnp.sqrt(c_in)
            b = 0.1 * jax.random.normal(kb, (c_out,), jnp.float32)
            layers.append((w, b))
        return layers

    pp_layers = init_mlp(ks[4], pp_nodes)
    pi_layers = init_mlp(ks[5], pi_nodes)
    ii_layers = init_mlp(ks[6], ii_nodes)

    # edge_block=128 -> grid of 2 edge tiles (200 = 128 + ragged 72), exercising
    # the in-kernel mask and the resident output accumulator.
    out = gcblock_forward(idx_i, idx_j, p1, basis,
                          pp_layers, pi_layers, ii_layers, edge_block=128)
    jax.block_until_ready(out)

    ref = gcblock_reference(idx_i, idx_j, p1, basis,
                            pp_layers, pi_layers, ii_layers)
    assert out.shape == ref.shape and out.dtype == ref.dtype
    max_err = float(jnp.max(jnp.abs(out - ref)))
    assert jnp.allclose(out, ref, rtol=1e-3, atol=1e-3), f"max abs err {max_err}"
    print("KERNEL_OK")
</pallas_src>

<mosaic_0001>
module attributes {stable_mosaic.version = 11 : i64} {
  func.func @kernel(%arg0: i32, %arg1: memref<64x32xf32, #tpu.memory_space<vmem>>, %arg2: memref<128x1xi32, #tpu.memory_space<vmem>>, %arg3: memref<128x1xi32, #tpu.memory_space<vmem>>, %arg4: memref<1x128xi32, #tpu.memory_space<vmem>>, %arg5: memref<128x32xf32, #tpu.memory_space<vmem>>, %arg6: memref<32x64xf32, #tpu.memory_space<vmem>>, %arg7: memref<1x64xf32, #tpu.memory_space<vmem>>, %arg8: memref<64x32xf32, #tpu.memory_space<vmem>>, %arg9: memref<1x32xf32, #tpu.memory_space<vmem>>, %arg10: memref<32x64xf32, #tpu.memory_space<vmem>>, %arg11: memref<1x64xf32, #tpu.memory_space<vmem>>, %arg12: memref<64x32xf32, #tpu.memory_space<vmem>>, %arg13: memref<1x32xf32, #tpu.memory_space<vmem>>, %arg14: memref<32x64xf32, #tpu.memory_space<vmem>>, %arg15: memref<1x64xf32, #tpu.memory_space<vmem>>, %arg16: memref<64x32xf32, #tpu.memory_space<vmem>>, %arg17: memref<1x32xf32, #tpu.memory_space<vmem>>, %arg18: memref<64x32xf32, #tpu.memory_space<vmem>>, %arg19: memref<64x32xf32, #tpu.memory_space<vmem>>) attributes {dimension_semantics = [#tpu.dimension_semantics<arbitrary>], iteration_bounds = array<i64: 2>, scalar_prefetch = 0 : i64, scratch_operands = 1 : i64, tpu.core_type = #tpu.core_type<tc>, window_params = [{pipeline_mode = #tpu.pipeline_mode<synchronous>, transform_indices = @transform_0, window_bounds = array<i64: 64, 32>}, {transform_indices = @transform_1, window_bounds = array<i64: 128, 1>}, {transform_indices = @transform_2, window_bounds = array<i64: 128, 1>}, {transform_indices = @transform_3, window_bounds = array<i64: 1, 128>}, {transform_indices = @transform_4, window_bounds = array<i64: 128, 32>}, {pipeline_mode = #tpu.pipeline_mode<synchronous>, transform_indices = @transform_5, window_bounds = array<i64: 32, 64>}, {pipeline_mode = #tpu.pipeline_mode<synchronous>, transform_indices = @transform_6, window_bounds = array<i64: 1, 64>}, {pipeline_mode = #tpu.pipeline_mode<synchronous>, transform_indices = @transform_7, window_bounds = array<i64: 64, 32>}, {pipeline_mode = #tpu.pipeline_mode<synchronous>, transform_indices = @transform_8, window_bounds = array<i64: 1, 32>}, {pipeline_mode = #tpu.pipeline_mode<synchronous>, transform_indices = @transform_9, window_bounds = array<i64: 32, 64>}, {pipeline_mode = #tpu.pipeline_mode<synchronous>, transform_indices = @transform_10, window_bounds = array<i64: 1, 64>}, {pipeline_mode = #tpu.pipeline_mode<synchronous>, transform_indices = @transform_11, window_bounds = array<i64: 64, 32>}, {pipeline_mode = #tpu.pipeline_mode<synchronous>, transform_indices = @transform_12, window_bounds = array<i64: 1, 32>}, {pipeline_mode = #tpu.pipeline_mode<synchronous>, transform_indices = @transform_13, window_bounds = array<i64: 32, 64>}, {pipeline_mode = #tpu.pipeline_mode<synchronous>, transform_indices = @transform_14, window_bounds = array<i64: 1, 64>}, {pipeline_mode = #tpu.pipeline_mode<synchronous>, transform_indices = @transform_15, window_bounds = array<i64: 64, 32>}, {pipeline_mode = #tpu.pipeline_mode<synchronous>, transform_indices = @transform_16, window_bounds = array<i64: 1, 32>}, {pipeline_mode = #tpu.pipeline_mode<synchronous>, transform_indices = @transform_17, window_bounds = array<i64: 64, 32>}]} {
    %c0_i32 = arith.constant 0 : i32
    %0 = arith.cmpi eq, %arg0, %c0_i32 : i32
    %1 = arith.extui %0 : i1 to i32
    %c0_i32_0 = arith.constant 0 : i32
    %2 = arith.cmpi ne, %1, %c0_i32_0 : i32
    scf.if %2 {
      %c0_36 = arith.constant 0 : index
      %c0_37 = arith.constant 0 : index
      %61 = vector.load %arg1[%c0_36, %c0_37] : memref<64x32xf32, #tpu.memory_space<vmem>>, vector<64x32xf32>
      %c0_38 = arith.constant 0 : index
      %c0_39 = arith.constant 0 : index
      %62 = vector.load %arg6[%c0_38, %c0_39] : memref<32x64xf32, #tpu.memory_space<vmem>>, vector<32x64xf32>
      %cst_40 = arith.constant dense<0.000000e+00> : vector<64x64xf32>
      %63 = tpu.matmul %61, %62, %cst_40 {dimension_numbers = #tpu.dot_dimension_numbers<[1], [0], [0], [1], [0, 0, 1, 1], [], []>, precision = #tpu.contract_precision<fp32>} : vector<64x32xf32>, vector<32x64xf32>, vector<64x64xf32> -> vector<64x64xf32>
      %c0_41 = arith.constant 0 : index
      %c0_42 = arith.constant 0 : index
      %64 = vector.load %arg7[%c0_41, %c0_42] : memref<1x64xf32, #tpu.memory_space<vmem>>, vector<1x64xf32>
      %65 = vector.broadcast %64 : vector<1x64xf32> to vector<64x64xf32>
      %66 = arith.addf %63, %65 : vector<64x64xf32>
      %67 = math.tanh %66 : vector<64x64xf32>
      %c0_43 = arith.constant 0 : index
      %c0_44 = arith.constant 0 : index
      %68 = vector.load %arg8[%c0_43, %c0_44] : memref<64x32xf32, #tpu.memory_space<vmem>>, vector<64x32xf32>
      %cst_45 = arith.constant dense<0.000000e+00> : vector<64x32xf32>
      %69 = tpu.matmul %67, %68, %cst_45 {dimension_numbers = #tpu.dot_dimension_numbers<[1], [0], [0], [1], [0, 0, 1, 1], [], []>, precision = #tpu.contract_precision<fp32>} : vector<64x64xf32>, vector<64x32xf32>, vector<64x32xf32> -> vector<64x32xf32>
      %c0_46 = arith.constant 0 : index
      %c0_47 = arith.constant 0 : index
      %70 = vector.load %arg9[%c0_46, %c0_47] : memref<1x32xf32, #tpu.memory_space<vmem>>, vector<1x32xf32>
      %71 = vector.broadcast %70 : vector<1x32xf32> to vector<64x32xf32>
      %72 = arith.addf %69, %71 : vector<64x32xf32>
      %c0_48 = arith.constant 0 : index
      %c0_49 = arith.constant 0 : index
      %73 = vector.load %arg19[%c0_48, %c0_49] : memref<64x32xf32, #tpu.memory_space<vmem>>, vector<64x32xf32>
      tpu.vector_store %arg19[%c0_48, %c0_49], %72 {strides = array<i32>} : memref<64x32xf32, #tpu.memory_space<vmem>>, vector<64x32xf32>,
      %cst_50 = arith.constant 0.000000e+00 : f32
      %74 = vector.broadcast %cst_50 : f32 to vector<64x32xf32>
      %c0_51 = arith.constant 0 : index
      %c0_52 = arith.constant 0 : index
      %75 = vector.load %arg18[%c0_51, %c0_52] : memref<64x32xf32, #tpu.memory_space<vmem>>, vector<64x32xf32>
      tpu.vector_store %arg18[%c0_51, %c0_52], %74 {strides = array<i32>} : memref<64x32xf32, #tpu.memory_space<vmem>>, vector<64x32xf32>,
    } else {
    }
    %c0 = arith.constant 0 : index
    %c0_1 = arith.constant 0 : index
    %3 = vector.load %arg19[%c0, %c0_1] : memref<64x32xf32, #tpu.memory_space<vmem>>, vector<64x32xf32>
    %c0_2 = arith.constant 0 : index
    %c0_3 = arith.constant 0 : index
    %4 = vector.load %arg2[%c0_2, %c0_3] : memref<128x1xi32, #tpu.memory_space<vmem>>, vector<128x1xi32>
    %c0_4 = arith.constant 0 : index
    %c0_5 = arith.constant 0 : index
    %5 = vector.load %arg3[%c0_4, %c0_5] : memref<128x1xi32, #tpu.memory_space<vmem>>, vector<128x1xi32>
    %6 = tpu.iota {dimensions = array<i32: 1>} : vector<128x64xi32>
    %7 = vector.broadcast %4 : vector<128x1xi32> to vector<128x64xi32>
    %8 = arith.cmpi eq, %7, %6 : vector<128x64xi32>
    %9 = arith.extui %8 : vector<128x64xi1> to vector<128x64xi32>
    %10 = arith.sitofp %9 : vector<128x64xi32> to vector<128x64xf32>
    %11 = vector.broadcast %5 : vector<128x1xi32> to vector<128x64xi32>
    %12 = arith.cmpi eq, %11, %6 : vector<128x64xi32>
    %13 = arith.extui %12 : vector<128x64xi1> to vector<128x64xi32>
    %14 = arith.sitofp %13 : vector<128x64xi32> to vector<128x64xf32>
    %15 = arith.addf %10, %14 : vector<128x64xf32>
    %cst = arith.constant dense<0.000000e+00> : vector<128x32xf32>
    %16 = tpu.matmul %15, %3, %cst {dimension_numbers = #tpu.dot_dimension_numbers<[1], [0], [0], [1], [0, 0, 1, 1], [], []>, precision = #tpu.contract_precision<fp32>} : vector<128x64xf32>, vector<64x32xf32>, vector<128x32xf32> -> vector<128x32xf32>
    %c0_6 = arith.constant 0 : index
    %c0_7 = arith.constant 0 : index
    %17 = vector.load %arg5[%c0_6, %c0_7] : memref<128x32xf32, #tpu.memory_space<vmem>>, vector<128x32xf32>
    %18 = arith.addf %16, %17 : vector<128x32xf32>
    %c0_8 = arith.constant 0 : index
    %c0_9 = arith.constant 0 : index
    %19 = vector.load %arg10[%c0_8, %c0_9] : memref<32x64xf32, #tpu.memory_space<vmem>>, vector<32x64xf32>
    %cst_10 = arith.constant dense<0.000000e+00> : vector<128x64xf32>
    %20 = tpu.matmul %18, %19, %cst_10 {dimension_numbers = #tpu.dot_dimension_numbers<[1], [0], [0], [1], [0, 0, 1, 1], [], []>, precision = #tpu.contract_precision<fp32>} : vector<128x32xf32>, vector<32x64xf32>, vector<128x64xf32> -> vector<128x64xf32>
    %c0_11 = arith.constant 0 : index
    %c0_12 = arith.constant 0 : index
    %21 = vector.load %arg11[%c0_11, %c0_12] : memref<1x64xf32, #tpu.memory_space<vmem>>, vector<1x64xf32>
    %22 = vector.broadcast %21 : vector<1x64xf32> to vector<128x64xf32>
    %23 = arith.addf %20, %22 : vector<128x64xf32>
    %24 = math.tanh %23 : vector<128x64xf32>
    %c0_13 = arith.constant 0 : index
    %c0_14 = arith.constant 0 : index
    %25 = vector.load %arg12[%c0_13, %c0_14] : memref<64x32xf32, #tpu.memory_space<vmem>>, vector<64x32xf32>
    %cst_15 = arith.constant dense<0.000000e+00> : vector<128x32xf32>
    %26 = tpu.matmul %24, %25, %cst_15 {dimension_numbers = #tpu.dot_dimension_numbers<[1], [0], [0], [1], [0, 0, 1, 1], [], []>, precision = #tpu.contract_precision<fp32>} : vector<128x64xf32>, vector<64x32xf32>, vector<128x32xf32> -> vector<128x32xf32>
    %c0_16 = arith.constant 0 : index
    %c0_17 = arith.constant 0 : index
    %27 = vector.load %arg13[%c0_16, %c0_17] : memref<1x32xf32, #tpu.memory_space<vmem>>, vector<1x32xf32>
    %28 = vector.broadcast %27 : vector<1x32xf32> to vector<128x32xf32>
    %29 = arith.addf %26, %28 : vector<128x32xf32>
    %c0_18 = arith.constant 0 : index
    %c0_19 = arith.constant 0 : index
    %30 = vector.load %arg14[%c0_18, %c0_19] : memref<32x64xf32, #tpu.memory_space<vmem>>, vector<32x64xf32>
    %cst_20 = arith.constant dense<0.000000e+00> : vector<128x64xf32>
    %31 = tpu.matmul %29, %30, %cst_20 {dimension_numbers = #tpu.dot_dimension_numbers<[1], [0], [0], [1], [0, 0, 1, 1], [], []>, precision = #tpu.contract_precision<fp32>} : vector<128x32xf32>, vector<32x64xf32>, vector<128x64xf32> -> vector<128x64xf32>
    %c0_21 = arith.constant 0 : index
    %c0_22 = arith.constant 0 : index
    %32 = vector.load %arg15[%c0_21, %c0_22] : memref<1x64xf32, #tpu.memory_space<vmem>>, vector<1x64xf32>
    %33 = vector.broadcast %32 : vector<1x64xf32> to vector<128x64xf32>
    %34 = arith.addf %31, %33 : vector<128x64xf32>
    %35 = math.tanh %34 : vector<128x64xf32>
    %c0_23 = arith.constant 0 : index
    %c0_24 = arith.constant 0 : index
    %36 = vector.load %arg16[%c0_23, %c0_24] : memref<64x32xf32, #tpu.memory_space<vmem>>, vector<64x32xf32>
    %cst_25 = arith.constant dense<0.000000e+00> : vector<128x32xf32>
    %37 = tpu.matmul %35, %36, %cst_25 {dimension_numbers = #tpu.dot_dimension_numbers<[1], [0], [0], [1], [0, 0, 1, 1], [], []>, precision = #tpu.contract_precision<fp32>} : vector<128x64xf32>, vector<64x32xf32>, vector<128x32xf32> -> vector<128x32xf32>
    %c0_26 = arith.constant 0 : index
    %c0_27 = arith.constant 0 : index
    %38 = vector.load %arg17[%c0_26, %c0_27] : memref<1x32xf32, #tpu.memory_space<vmem>>, vector<1x32xf32>
    %39 = vector.broadcast %38 : vector<1x32xf32> to vector<128x32xf32>
    %40 = arith.addf %37, %39 : vector<128x32xf32>
    %c128_i32 = arith.constant 128 : i32
    %41 = arith.muli %arg0, %c128_i32 : i32
    %42 = tpu.iota {dimensions = array<i32: 0>} : vector<128x1xi32>
    %43 = vector.broadcast %41 : i32 to vector<128x1xi32>
    %44 = arith.addi %43, %42 : vector<128x1xi32>
    %c200_i32 = arith.constant 200 : i32
    %45 = vector.broadcast %c200_i32 : i32 to vector<128x1xi32>
    %46 = arith.cmpi slt, %44, %45 : vector<128x1xi32>
    %cst_28 = arith.constant 0.000000e+00 : f32
    %47 = vector.shape_cast %46 : vector<128x1xi1> to vector<128x1xi1>
    %48 = vector.broadcast %47 : vector<128x1xi1> to vector<128x32xi1>
    %49 = vector.broadcast %cst_28 : f32 to vector<128x32xf32>
    %50 = arith.select %48, %40, %49 : vector<128x32xi1>, vector<128x32xf32>
    %c0_29 = arith.constant 0 : index
    %c0_30 = arith.constant 0 : index
    %51 = vector.load %arg4[%c0_29, %c0_30] : memref<1x128xi32, #tpu.memory_space<vmem>>, vector<1x128xi32>
    %52 = tpu.iota {dimensions = array<i32: 0>} : vector<64x128xi32>
    %53 = vector.broadcast %51 : vector<1x128xi32> to vector<64x128xi32>
    %54 = arith.cmpi eq, %52, %53 : vector<64x128xi32>
    %55 = arith.extui %54 : vector<64x128xi1> to vector<64x128xi32>
    %56 = arith.sitofp %55 : vector<64x128xi32> to vector<64x128xf32>
    %c0_31 = arith.constant 0 : index
    %c0_32 = arith.constant 0 : index
    %57 = vector.load %arg18[%c0_31, %c0_32] : memref<64x32xf32, #tpu.memory_space<vmem>>, vector<64x32xf32>
    %cst_33 = arith.constant dense<0.000000e+00> : vector<64x32xf32>
    %58 = tpu.matmul %56, %50, %cst_33 {dimension_numbers = #tpu.dot_dimension_numbers<[1], [0], [0], [1], [0, 0, 1, 1], [], []>, precision = #tpu.contract_precision<fp32>} : vector<64x128xf32>, vector<128x32xf32>, vector<64x32xf32> -> vector<64x32xf32>
    %59 = arith.addf %57, %58 : vector<64x32xf32>
    %c0_34 = arith.constant 0 : index
    %c0_35 = arith.constant 0 : index
    %60 = vector.load %arg18[%c0_34, %c0_35] : memref<64x32xf32, #tpu.memory_space<vmem>>, vector<64x32xf32>
    tpu.vector_store %arg18[%c0_34, %c0_35], %59 {strides = array<i32>} : memref<64x32xf32, #tpu.memory_space<vmem>>, vector<64x32xf32>,
    return
  }
  func.func @transform_0(%arg0: i32) -> (i32, i32) {
    %c0_i32 = arith.constant 0 : i32
    %c0_i32_0 = arith.constant 0 : i32
    %c0_i32_1 = arith.constant 0 : i32
    return %c0_i32, %c0_i32_0 : i32, i32
  }
  func.func @transform_1(%arg0: i32) -> (i32, i32) {
    %c0_i32 = arith.constant 0 : i32
    %c0_i32_0 = arith.constant 0 : i32
    return %arg0, %c0_i32 : i32, i32
  }
  func.func @transform_2(%arg0: i32) -> (i32, i32) {
    %c0_i32 = arith.constant 0 : i32
    %c0_i32_0 = arith.constant 0 : i32
    return %arg0, %c0_i32 : i32, i32
  }
  func.func @transform_3(%arg0: i32) -> (i32, i32) {
    %c0_i32 = arith.constant 0 : i32
    %c0_i32_0 = arith.constant 0 : i32
    return %c0_i32, %arg0 : i32, i32
  }
  func.func @transform_4(%arg0: i32) -> (i32, i32) {
    %c0_i32 = arith.constant 0 : i32
    %c0_i32_0 = arith.constant 0 : i32
    return %arg0, %c0_i32 : i32, i32
  }
  func.func @transform_5(%arg0: i32) -> (i32, i32) {
    %c0_i32 = arith.constant 0 : i32
    %c0_i32_0 = arith.constant 0 : i32
    %c0_i32_1 = arith.constant 0 : i32
    return %c0_i32, %c0_i32_0 : i32, i32
  }
  func.func @transform_6(%arg0: i32) -> (i32, i32) {
    %c0_i32 = arith.constant 0 : i32
    %c0_i32_0 = arith.constant 0 : i32
    %c0_i32_1 = arith.constant 0 : i32
    return %c0_i32, %c0_i32_0 : i32, i32
  }
  func.func @transform_7(%arg0: i32) -> (i32, i32) {
    %c0_i32 = arith.constant 0 : i32
    %c0_i32_0 = arith.constant 0 : i32
    %c0_i32_1 = arith.constant 0 : i32
    return %c0_i32, %c0_i32_0 : i32, i32
  }
  func.func @transform_8(%arg0: i32) -> (i32, i32) {
    %c0_i32 = arith.constant 0 : i32
    %c0_i32_0 = arith.constant 0 : i32
    %c0_i32_1 = arith.constant 0 : i32
    return %c0_i32, %c0_i32_0 : i32, i32
  }
  func.func @transform_9(%arg0: i32) -> (i32, i32) {
    %c0_i32 = arith.constant 0 : i32
    %c0_i32_0 = arith.constant 0 : i32
    %c0_i32_1 = arith.constant 0 : i32
    return %c0_i32, %c0_i32_0 : i32, i32
  }
  func.func @transform_10(%arg0: i32) -> (i32, i32) {
    %c0_i32 = arith.constant 0 : i32
    %c0_i32_0 = arith.constant 0 : i32
    %c0_i32_1 = arith.constant 0 : i32
    return %c0_i32, %c0_i32_0 : i32, i32
  }
  func.func @transform_11(%arg0: i32) -> (i32, i32) {
    %c0_i32 = arith.constant 0 : i32
    %c0_i32_0 = arith.constant 0 : i32
    %c0_i32_1 = arith.constant 0 : i32
    return %c0_i32, %c0_i32_0 : i32, i32
  }
  func.func @transform_12(%arg0: i32) -> (i32, i32) {
    %c0_i32 = arith.constant 0 : i32
    %c0_i32_0 = arith.constant 0 : i32
    %c0_i32_1 = arith.constant 0 : i32
    return %c0_i32, %c0_i32_0 : i32, i32
  }
  func.func @transform_13(%arg0: i32) -> (i32, i32) {
    %c0_i32 = arith.constant 0 : i32
    %c0_i32_0 = arith.constant 0 : i32
    %c0_i32_1 = arith.constant 0 : i32
    return %c0_i32, %c0_i32_0 : i32, i32
  }
  func.func @transform_14(%arg0: i32) -> (i32, i32) {
    %c0_i32 = arith.constant 0 : i32
    %c0_i32_0 = arith.constant 0 : i32
    %c0_i32_1 = arith.constant 0 : i32
    return %c0_i32, %c0_i32_0 : i32, i32
  }
  func.func @transform_15(%arg0: i32) -> (i32, i32) {
    %c0_i32 = arith.constant 0 : i32
    %c0_i32_0 = arith.constant 0 : i32
    %c0_i32_1 = arith.constant 0 : i32
    return %c0_i32, %c0_i32_0 : i32, i32
  }
  func.func @transform_16(%arg0: i32) -> (i32, i32) {
    %c0_i32 = arith.constant 0 : i32
    %c0_i32_0 = arith.constant 0 : i32
    %c0_i32_1 = arith.constant 0 : i32
    return %c0_i32, %c0_i32_0 : i32, i32
  }
  func.func @transform_17(%arg0: i32) -> (i32, i32) {
    %c0_i32 = arith.constant 0 : i32
    %c0_i32_0 = arith.constant 0 : i32
    %c0_i32_1 = arith.constant 0 : i32
    return %c0_i32, %c0_i32_0 : i32, i32
  }
}

</mosaic_0001>

<llo_original>
// kernel: tpu_custom_call.1
$region0: #{tpu_custom_call.1}
  #allocation0 [shape = 'u32[]', space=smem, size = 0x4, offset = 0x4, fixed_abs, tag = 'smem constant byte address 0x4 - core index']
  #allocation1 [shape = 'u32[144,128]{1,0:T(1,128)}', space=vmem, size = 0x12000, scoped, tag = 'internal scratch']
  #allocation2 [shape = 'f32[64,32]{1,0:T(8,128)}', space=vmem, size = 0x8000, scoped, tag = 'scratch operand']
  %s0 = inlined_call_operand.vmem [shape: f32[64,32], index: 0, kind: input, shape index: {}]
  %s1 = inlined_call_operand.vmem [shape: s32[200,1], index: 1, kind: input, shape index: {}]
  %s2 = inlined_call_operand.vmem [shape: s32[200,1], index: 2, kind: input, shape index: {}]
  %s3 = inlined_call_operand.vmem [shape: s32[1,200], index: 3, kind: input, shape index: {}]
  %s4 = inlined_call_operand.vmem [shape: f32[200,32], index: 4, kind: input, shape index: {}]
  %s5 = inlined_call_operand.vmem [shape: f32[32,64], index: 5, kind: input, shape index: {}]
  %s6 = inlined_call_operand.vmem [shape: f32[1,64], index: 6, kind: input, shape index: {}]
  %s7 = inlined_call_operand.vmem [shape: f32[64,32], index: 7, kind: input, shape index: {}]
  %s8 = inlined_call_operand.vmem [shape: f32[1,32], index: 8, kind: input, shape index: {}]
  %s9 = inlined_call_operand.vmem [shape: f32[32,64], index: 9, kind: input, shape index: {}]
  %s10 = inlined_call_operand.vmem [shape: f32[1,64], index: 10, kind: input, shape index: {}]
  %s11 = inlined_call_operand.vmem [shape: f32[64,32], index: 11, kind: input, shape index: {}]
  %s12 = inlined_call_operand.vmem [shape: f32[1,32], index: 12, kind: input, shape index: {}]
  %s13 = inlined_call_operand.vmem [shape: f32[32,64], index: 13, kind: input, shape index: {}]
  %s14 = inlined_call_operand.vmem [shape: f32[1,64], index: 14, kind: input, shape index: {}]
  %s15 = inlined_call_operand.vmem [shape: f32[64,32], index: 15, kind: input, shape index: {}]
  %s16 = inlined_call_operand.vmem [shape: f32[1,32], index: 16, kind: input, shape index: {}]
  %s17 = inlined_call_operand.vmem [shape: f32[64,32], index: 17, kind: output, shape index: {}]
  %s18 = sld [smem:[#allocation0]]
  $region105: #{tpu_custom_call.1} parent=0
    _
  %s20 = ssub.s32 1, %s18
  %s21 = scalar_select 0, %s20, %s18
  loop: start=0, step=1, limit=4
  $region2: #{tpu_custom_call.1} parent=0 // loop_pre_header
    _
  $region3: #{tpu_custom_call.1} parent=0 // loop_header
    %s23 = sphi 0, %s27
    %p24 = scmp.ge.s32.totalorder %s23, 4
    %s31 = sphi 0, %s31
    %s33 = sphi 0, %s31
    %s34 = sphi 0, %s33
    %s48 = sphi 0, %s34
    %s54 = sphi 0, %s56
    %s57 = sphi 0, %s54
    %s58 = sphi 0, %s57
    %s74 = sphi 0, %s58
    %s80 = sphi 0, %s82
    %s83 = sphi 0, %s80
    %s84 = sphi 0, %s83
    %s100 = sphi 0, %s84
    %s106 = sphi 0, %s108
    %s109 = sphi 0, %s106
    %s110 = sphi 0, %s109
    %s126 = sphi 0, %s110
    %s132 = sphi 0, %s134
    %s135 = sphi 0, %s132
    %s136 = sphi 0, %s135
    %s152 = sphi 0, %s136
    %s156 = sphi 0, %s156
    %s158 = sphi 0, %s156
    %s159 = sphi 0, %s158
    %s173 = sphi 0, %s159
    %s177 = sphi 0, %s177
    %s179 = sphi 0, %s177
    %s180 = sphi 0, %s179
    %s194 = sphi 0, %s180
    %s198 = sphi 0, %s198
    %s200 = sphi 0, %s198
    %s201 = sphi 0, %s200
    %s215 = sphi 0, %s201
    %s219 = sphi 0, %s219
    %s221 = sphi 0, %s219
    %s222 = sphi 0, %s221
    %s236 = sphi 0, %s222
    %s240 = sphi 0, %s240
    %s242 = sphi 0, %s240
    %s243 = sphi 0, %s242
    %s257 = sphi 0, %s243
    %s261 = sphi 0, %s261
    %s263 = sphi 0, %s261
    %s264 = sphi 0, %s263
    %s278 = sphi 0, %s264
    %s282 = sphi 0, %s282
    %s284 = sphi 0, %s282
    %s285 = sphi 0, %s284
    %s299 = sphi 0, %s285
    %s303 = sphi 0, %s303
    %s305 = sphi 0, %s303
    %s306 = sphi 0, %s305
    %s320 = sphi 0, %s306
    %s324 = sphi 0, %s324
    %s326 = sphi 0, %s324
    %s327 = sphi 0, %s326
    %s341 = sphi 0, %s327
    %s345 = sphi 0, %s345
    %s347 = sphi 0, %s345
    %s348 = sphi 0, %s347
    %s362 = sphi 0, %s348
    %s366 = sphi 0, %s366
    %s368 = sphi 0, %s366
    %s369 = sphi 0, %s368
    %s383 = sphi 0, %s369
    %s387 = sphi 0, %s387
    %s389 = sphi 0, %s387
    %s390 = sphi 0, %s389
    %s404 = sphi 0, %s390
    %s408 = sphi 0, %s408
    %s410 = sphi 0, %s408
    %s411 = sphi 0, %s410
    %s425 = sphi 0, %s411
  $region4: #{tpu_custom_call.1} parent=0 // loop_header_branch
    %26 = sbr.rel (%p24) target = $region8
  $region5: #{tpu_custom_call.1} parent=0 // loop_body
    %s28 = ssub.s32 %s23, 1
    %s29 = ssub.s32 %s23, 2
    %s30 = sadd.s32 %s23, 1
    %s32 = sadd.s32 %s31, 1
    %p35 = scmp.eq.s32.totalorder %s23, 1
    %p36 = scmp.ne.s32.totalorder %s31, %s33
    %p37 = scmp.eq.s32.totalorder %s23, 0
    %p38 = por %p36, %p37
    %p39 = scmp.ne.s32.totalorder %s31, %s33
    %p40 = scmp.eq.s32.totalorder %s28, 1
    %p41 = por %p39, %p40
    %p42 = scmp.ne.s32.totalorder %s33, %s34
    %p43 = scmp.eq.s32.totalorder %s28, 0
    %p44 = por %p42, %p43
    %p45 = scmp.ne.s32.totalorder %s33, %s34
    %p46 = scmp.eq.s32.totalorder %s29, 1
    %p47 = por %p45, %p46
    %p49 = scmp.ne.s32.totalorder %s34, %s48
    %p50 = scmp.eq.s32.totalorder %s29, 0
    %p51 = por %p49, %p50
    %s52 = ssub.s32 %s23, %s30
    %p53 = scmp.eq.s32.totalorder %s52, 0
    %s55 = sadd.s32 %s54, 1
    %s56 = scalar_select %p53, %s54, %s55
    %p59 = pneg %p53
    %p60 = scmp.eq.s32.totalorder %s23, 1
    %p61 = por %p59, %p60
    %p62 = scmp.ne.s32.totalorder %s54, %s57
    %p63 = scmp.eq.s32.totalorder %s23, 0
    %p64 = por %p62, %p63
    %p65 = scmp.ne.s32.totalorder %s54, %s57
    %p66 = scmp.eq.s32.totalorder %s28, 1
    %p67 = por %p65, %p66
    %p68 = scmp.ne.s32.totalorder %s57, %s58
    %p69 = scmp.eq.s32.totalorder %s28, 0
    %p70 = por %p68, %p69
    %p71 = scmp.ne.s32.totalorder %s57, %s58
    %p72 = scmp.eq.s32.totalorder %s29, 1
    %p73 = por %p71, %p72
    %p75 = scmp.ne.s32.totalorder %s58, %s74
    %p76 = scmp.eq.s32.totalorder %s29, 0
    %p77 = por %p75, %p76
    %s78 = ssub.s32 %s23, %s30
    %p79 = scmp.eq.s32.totalorder %s78, 0
    %s81 = sadd.s32 %s80, 1
    %s82 = scalar_select %p79, %s80, %s81
    %p85 = pneg %p79
    %p86 = scmp.eq.s32.totalorder %s23, 1
    %p87 = por %p85, %p86
    %p88 = scmp.ne.s32.totalorder %s80, %s83
    %p89 = scmp.eq.s32.totalorder %s23, 0
    %p90 = por %p88, %p89
    %p91 = scmp.ne.s32.totalorder %s80, %s83
    %p92 = scmp.eq.s32.totalorder %s28, 1
    %p93 = por %p91, %p92
    %p94 = scmp.ne.s32.totalorder %s83, %s84
    %p95 = scmp.eq.s32.totalorder %s28, 0
    %p96 = por %p94, %p95
    %p97 = scmp.ne.s32.totalorder %s83, %s84
    %p98 = scmp.eq.s32.totalorder %s29, 1
    %p99 = por %p97, %p98
    %p101 = scmp.ne.s32.totalorder %s84, %s100
    %p102 = scmp.eq.s32.totalorder %s29, 0
    %p103 = por %p101, %p102
    %s104 = ssub.s32 %s23, %s30
    %p105 = scmp.eq.s32.totalorder %s104, 0
    %s107 = sadd.s32 %s106, 1
    %s108 = scalar_select %p105, %s106, %s107
    %p111 = pneg %p105
    %p112 = scmp.eq.s32.totalorder %s23, 1
    %p113 = por %p111, %p112
    %p114 = scmp.ne.s32.totalorder %s106, %s109
    %p115 = scmp.eq.s32.totalorder %s23, 0
    %p116 = por %p114, %p115
    %p117 = scmp.ne.s32.totalorder %s106, %s109
    %p118 = scmp.eq.s32.totalorder %s28, 1
    %p119 = por %p117, %p118
    %p120 = scmp.ne.s32.totalorder %s109, %s110
    %p121 = scmp.eq.s32.totalorder %s28, 0
    %p122 = por %p120, %p121
    %p123 = scmp.ne.s32.totalorder %s109, %s110
    %p124 = scmp.eq.s32.totalorder %s29, 1
    %p125 = por %p123, %p124
    %p127 = scmp.ne.s32.totalorder %s110, %s126
    %p128 = scmp.eq.s32.totalorder %s29, 0
    %p129 = por %p127, %p128
    %s130 = ssub.s32 %s23, %s30
    %p131 = scmp.eq.s32.totalorder %s130, 0
    %s133 = sadd.s32 %s132, 1
    %s134 = scalar_select %p131, %s132, %s133
    %p137 = pneg %p131
    %p138 = scmp.eq.s32.totalorder %s23, 1
    %p139 = por %p137, %p138
    %p140 = scmp.ne.s32.totalorder %s132, %s135
    %p141 = scmp.eq.s32.totalorder %s23, 0
    %p142 = por %p140, %p141
    %p143 = scmp.ne.s32.totalorder %s132, %s135
    %p144 = scmp.eq.s32.totalorder %s28, 1
    %p145 = por %p143, %p144
    %p146 = scmp.ne.s32.totalorder %s135, %s136
    %p147 = scmp.eq.s32.totalorder %s28, 0
    %p148 = por %p146, %p147
    %p149 = scmp.ne.s32.totalorder %s135, %s136
    %p150 = scmp.eq.s32.totalorder %s29, 1
    %p151 = por %p149, %p150
    %p153 = scmp.ne.s32.totalorder %s136, %s152
    %p154 = scmp.eq.s32.totalorder %s29, 0
    %p155 = por %p153, %p154
    %s157 = sadd.s32 %s156, 1
    %p160 = scmp.eq.s32.totalorder %s23, 1
    %p161 = scmp.ne.s32.totalorder %s156, %s158
    %p162 = scmp.eq.s32.totalorder %s23, 0
    %p163 = por %p161, %p162
    %p164 = scmp.ne.s32.totalorder %s156, %s158
    %p165 = scmp.eq.s32.totalorder %s28, 1
    %p166 = por %p164, %p165
    %p167 = scmp.ne.s32.totalorder %s158, %s159
    %p168 = scmp.eq.s32.totalorder %s28, 0
    %p169 = por %p167, %p168
    %p170 = scmp.ne.s32.totalorder %s158, %s159
    %p171 = scmp.eq.s32.totalorder %s29, 1
    %p172 = por %p170, %p171
    %p174 = scmp.ne.s32.totalorder %s159, %s173
    %p175 = scmp.eq.s32.totalorder %s29, 0
    %p176 = por %p174, %p175
    %s178 = sadd.s32 %s177, 1
    %p181 = scmp.eq.s32.totalorder %s23, 1
    %p182 = scmp.ne.s32.totalorder %s177, %s179
    %p183 = scmp.eq.s32.totalorder %s23, 0
    %p184 = por %p182, %p183
    %p185 = scmp.ne.s32.totalorder %s177, %s179
    %p186 = scmp.eq.s32.totalorder %s28, 1
    %p187 = por %p185, %p186
    %p188 = scmp.ne.s32.totalorder %s179, %s180
    %p189 = scmp.eq.s32.totalorder %s28, 0
    %p190 = por %p188, %p189
    %p191 = scmp.ne.s32.totalorder %s179, %s180
    %p192 = scmp.eq.s32.totalorder %s29, 1
    %p193 = por %p191, %p192
    %p195 = scmp.ne.s32.totalorder %s180, %s194
    %p196 = scmp.eq.s32.totalorder %s29, 0
    %p197 = por %p195, %p196
    %s199 = sadd.s32 %s198, 1
    %p202 = scmp.eq.s32.totalorder %s23, 1
    %p203 = scmp.ne.s32.totalorder %s198, %s200
    %p204 = scmp.eq.s32.totalorder %s23, 0
    %p205 = por %p203, %p204
    %p206 = scmp.ne.s32.totalorder %s198, %s200
    %p207 = scmp.eq.s32.totalorder %s28, 1
    %p208 = por %p206, %p207
    %p209 = scmp.ne.s32.totalorder %s200, %s201
    %p210 = scmp.eq.s32.totalorder %s28, 0
    %p211 = por %p209, %p210
    %p212 = scmp.ne.s32.totalorder %s200, %s201
    %p213 = scmp.eq.s32.totalorder %s29, 1
    %p214 = por %p212, %p213
    %p216 = scmp.ne.s32.totalorder %s201, %s215
    %p217 = scmp.eq.s32.totalorder %s29, 0
    %p218 = por %p216, %p217
    %s220 = sadd.s32 %s219, 1
    %p223 = scmp.eq.s32.totalorder %s23, 1
    %p224 = scmp.ne.s32.totalorder %s219, %s221
    %p225 = scmp.eq.s32.totalorder %s23, 0
    %p226 = por %p224, %p225
    %p227 = scmp.ne.s32.totalorder %s219, %s221
    %p228 = scmp.eq.s32.totalorder %s28, 1
    %p229 = por %p227, %p228
    %p230 = scmp.ne.s32.totalorder %s221, %s222
    %p231 = scmp.eq.s32.totalorder %s28, 0
    %p232 = por %p230, %p231
    %p233 = scmp.ne.s32.totalorder %s221, %s222
    %p234 = scmp.eq.s32.totalorder %s29, 1
    %p235 = por %p233, %p234
    %p237 = scmp.ne.s32.totalorder %s222, %s236
    %p238 = scmp.eq.s32.totalorder %s29, 0
    %p239 = por %p237, %p238
    %s241 = sadd.s32 %s240, 1
    %p244 = scmp.eq.s32.totalorder %s23, 1
    %p245 = scmp.ne.s32.totalorder %s240, %s242
    %p246 = scmp.eq.s32.totalorder %s23, 0
    %p247 = por %p245, %p246
    %p248 = scmp.ne.s32.totalorder %s240, %s242
    %p249 = scmp.eq.s32.totalorder %s28, 1
    %p250 = por %p248, %p249
    %p251 = scmp.ne.s32.totalorder %s242, %s243
    %p252 = scmp.eq.s32.totalorder %s28, 0
    %p253 = por %p251, %p252
    %p254 = scmp.ne.s32.totalorder %s242, %s243
    %p255 = scmp.eq.s32.totalorder %s29, 1
    %p256 = por %p254, %p255
    %p258 = scmp.ne.s32.totalorder %s243, %s257
    %p259 = scmp.eq.s32.totalorder %s29, 0
    %p260 = por %p258, %p259
    %s262 = sadd.s32 %s261, 1
    %p265 = scmp.eq.s32.totalorder %s23, 1
    %p266 = scmp.ne.s32.totalorder %s261, %s263
    %p267 = scmp.eq.s32.totalorder %s23, 0
    %p268 = por %p266, %p267
    %p269 = scmp.ne.s32.totalorder %s261, %s263
    %p270 = scmp.eq.s32.totalorder %s28, 1
    %p271 = por %p269, %p270
    %p272 = scmp.ne.s32.totalorder %s263, %s264
    %p273 = scmp.eq.s32.totalorder %s28, 0
    %p274 = por %p272, %p273
    %p275 = scmp.ne.s32.totalorder %s263, %s264
    %p276 = scmp.eq.s32.totalorder %s29, 1
    %p277 = por %p275, %p276
    %p279 = scmp.ne.s32.totalorder %s264, %s278
    %p280 = scmp.eq.s32.totalorder %s29, 0
    %p281 = por %p279, %p280
    %s283 = sadd.s32 %s282, 1
    %p286 = scmp.eq.s32.totalorder %s23, 1
    %p287 = scmp.ne.s32.totalorder %s282, %s284
    %p288 = scmp.eq.s32.totalorder %s23, 0
    %p289 = por %p287, %p288
    %p290 = scmp.ne.s32.totalorder %s282, %s284
    %p291 = scmp.eq.s32.totalorder %s28, 1
    %p292 = por %p290, %p291
    %p293 = scmp.ne.s32.totalorder %s284, %s285
    %p294 = scmp.eq.s32.totalorder %s28, 0
    %p295 = por %p293, %p294
    %p296 = scmp.ne.s32.totalorder %s284, %s285
    %p297 = scmp.eq.s32.totalorder %s29, 1
    %p298 = por %p296, %p297
    %p300 = scmp.ne.s32.totalorder %s285, %s299
    %p301 = scmp.eq.s32.totalorder %s29, 0
    %p302 = por %p300, %p301
    %s304 = sadd.s32 %s303, 1
    %p307 = scmp.eq.s32.totalorder %s23, 1
    %p308 = scmp.ne.s32.totalorder %s303, %s305
    %p309 = scmp.eq.s32.totalorder %s23, 0
    %p310 = por %p308, %p309
    %p311 = scmp.ne.s32.totalorder %s303, %s305
    %p312 = scmp.eq.s32.totalorder %s28, 1
    %p313 = por %p311, %p312
    %p314 = scmp.ne.s32.totalorder %s305, %s306
    %p315 = scmp.eq.s32.totalorder %s28, 0
    %p316 = por %p314, %p315
    %p317 = scmp.ne.s32.totalorder %s305, %s306
    %p318 = scmp.eq.s32.totalorder %s29, 1
    %p319 = por %p317, %p318
    %p321 = scmp.ne.s32.totalorder %s306, %s320
    %p322 = scmp.eq.s32.totalorder %s29, 0
    %p323 = por %p321, %p322
    %s325 = sadd.s32 %s324, 1
    %p328 = scmp.eq.s32.totalorder %s23, 1
    %p329 = scmp.ne.s32.totalorder %s324, %s326
    %p330 = scmp.eq.s32.totalorder %s23, 0
    %p331 = por %p329, %p330
    %p332 = scmp.ne.s32.totalorder %s324, %s326
    %p333 = scmp.eq.s32.totalorder %s28, 1
    %p334 = por %p332, %p333
    %p335 = scmp.ne.s32.totalorder %s326, %s327
    %p336 = scmp.eq.s32.totalorder %s28, 0
    %p337 = por %p335, %p336
    %p338 = scmp.ne.s32.totalorder %s326, %s327
    %p339 = scmp.eq.s32.totalorder %s29, 1
    %p340 = por %p338, %p339
    %p342 = scmp.ne.s32.totalorder %s327, %s341
    %p343 = scmp.eq.s32.totalorder %s29, 0
    %p344 = por %p342, %p343
    %s346 = sadd.s32 %s345, 1
    %p349 = scmp.eq.s32.totalorder %s23, 1
    %p350 = scmp.ne.s32.totalorder %s345, %s347
    %p351 = scmp.eq.s32.totalorder %s23, 0
    %p352 = por %p350, %p351
    %p353 = scmp.ne.s32.totalorder %s345, %s347
    %p354 = scmp.eq.s32.totalorder %s28, 1
    %p355 = por %p353, %p354
    %p356 = scmp.ne.s32.totalorder %s347, %s348
    %p357 = scmp.eq.s32.totalorder %s28, 0
    %p358 = por %p356, %p357
    %p359 = scmp.ne.s32.totalorder %s347, %s348
    %p360 = scmp.eq.s32.totalorder %s29, 1
    %p361 = por %p359, %p360
    %p363 = scmp.ne.s32.totalorder %s348, %s362
    %p364 = scmp.eq.s32.totalorder %s29, 0
    %p365 = por %p363, %p364
    %s367 = sadd.s32 %s366, 1
    %p370 = scmp.eq.s32.totalorder %s23, 1
    %p371 = scmp.ne.s32.totalorder %s366, %s368
    %p372 = scmp.eq.s32.totalorder %s23, 0
    %p373 = por %p371, %p372
    %p374 = scmp.ne.s32.totalorder %s366, %s368
    %p375 = scmp.eq.s32.totalorder %s28, 1
    %p376 = por %p374, %p375
    %p377 = scmp.ne.s32.totalorder %s368, %s369
    %p378 = scmp.eq.s32.totalorder %s28, 0
    %p379 = por %p377, %p378
    %p380 = scmp.ne.s32.totalorder %s368, %s369
    %p381 = scmp.eq.s32.totalorder %s29, 1
    %p382 = por %p380, %p381
    %p384 = scmp.ne.s32.totalorder %s369, %s383
    %p385 = scmp.eq.s32.totalorder %s29, 0
    %p386 = por %p384, %p385
    %s388 = sadd.s32 %s387, 1
    %p391 = scmp.eq.s32.totalorder %s23, 1
    %p392 = scmp.ne.s32.totalorder %s387, %s389
    %p393 = scmp.eq.s32.totalorder %s23, 0
    %p394 = por %p392, %p393
    %p395 = scmp.ne.s32.totalorder %s387, %s389
    %p396 = scmp.eq.s32.totalorder %s28, 1
    %p397 = por %p395, %p396
    %p398 = scmp.ne.s32.totalorder %s389, %s390
    %p399 = scmp.eq.s32.totalorder %s28, 0
    %p400 = por %p398, %p399
    %p401 = scmp.ne.s32.totalorder %s389, %s390
    %p402 = scmp.eq.s32.totalorder %s29, 1
    %p403 = por %p401, %p402
    %p405 = scmp.ne.s32.totalorder %s390, %s404
    %p406 = scmp.eq.s32.totalorder %s29, 0
    %p407 = por %p405, %p406
    %s409 = sadd.s32 %s408, 1
    %p412 = scmp.eq.s32.totalorder %s23, 1
    %p413 = scmp.ne.s32.totalorder %s408, %s410
    %p414 = scmp.eq.s32.totalorder %s23, 0
    %p415 = por %p413, %p414
    %p416 = scmp.ne.s32.totalorder %s408, %s410
    %p417 = scmp.eq.s32.totalorder %s28, 1
    %p418 = por %p416, %p417
    %p419 = scmp.ne.s32.totalorder %s410, %s411
    %p420 = scmp.eq.s32.totalorder %s28, 0
    %p421 = por %p419, %p420
    %p422 = scmp.ne.s32.totalorder %s410, %s411
    %p423 = scmp.eq.s32.totalorder %s29, 1
    %p424 = por %p422, %p423
    %p426 = scmp.ne.s32.totalorder %s411, %s425
    %p427 = scmp.eq.s32.totalorder %s29, 0
    %p428 = por %p426, %p427
    %p429 = scmp.le.s32.totalorder 1, %s23
    %p430 = scmp.lt.s32.totalorder %s23, 3
    %p431 = pnand %p429, %p430
    %p432 = pneg %p431
    // Predicated region
    $region9: #{tpu_custom_call.1} parent=5 // pred_check
      _
    $region10: #{tpu_custom_call.1} parent=5 // pred_check_branch
      %434 = sbr.rel (%p431) target = $region12
    $region11: #{tpu_custom_call.1} parent=5 // pred_region
      %s435 = ssub.s32 %s23, 1
      // Predicated region
      $region13: #{tpu_custom_call.1} parent=11 // pred_check
        %p436 = pneg %p44
      $region14: #{tpu_custom_call.1} parent=11 // pred_check_branch
        %438 = sbr.rel (%p436) target = $region16
      $region15: #{tpu_custom_call.1} parent=11 // pred_region
        _
      $region16: #{tpu_custom_call.1} parent=11 // pred_fallthru
        _
      // Predicated region
      $region17: #{tpu_custom_call.1} parent=11 // pred_check
        %p439 = pneg %p169
      $region18: #{tpu_custom_call.1} parent=11 // pred_check_branch
        %441 = sbr.rel (%p439) target = $region20
      $region19: #{tpu_custom_call.1} parent=11 // pred_region
        _
      $region20: #{tpu_custom_call.1} parent=11 // pred_fallthru
        _
      // Predicated region
      $region21: #{tpu_custom_call.1} parent=11 // pred_check
        %p442 = pneg %p190
      $region22: #{tpu_custom_call.1} parent=11 // pred_check_branch
        %444 = sbr.rel (%p442) target = $region24
      $region23: #{tpu_custom_call.1} parent=11 // pred_region
        _
      $region24: #{tpu_custom_call.1} parent=11 // pred_fallthru
        _
      // Predicated region
      $region25: #{tpu_custom_call.1} parent=11 // pred_check
        %p445 = pneg %p211
      $region26: #{tpu_custom_call.1} parent=11 // pred_check_branch
        %447 = sbr.rel (%p445) target = $region28
      $region27: #{tpu_custom_call.1} parent=11 // pred_region
        _
      $region28: #{tpu_custom_call.1} parent=11 // pred_fallthru
        _
      // Predicated region
      $region29: #{tpu_custom_call.1} parent=11 // pred_check
        %p448 = pneg %p232
      $region30: #{tpu_custom_call.1} parent=11 // pred_check_branch
        %450 = sbr.rel (%p448) target = $region32
      $region31: #{tpu_custom_call.1} parent=11 // pred_region
        _
      $region32: #{tpu_custom_call.1} parent=11 // pred_fallthru
        _
      // Predicated region
      $region33: #{tpu_custom_call.1} parent=11 // pred_check
        %p451 = pneg %p253
      $region34: #{tpu_custom_call.1} parent=11 // pred_check_branch
        %453 = sbr.rel (%p451) target = $region36
      $region35: #{tpu_custom_call.1} parent=11 // pred_region
        _
      $region36: #{tpu_custom_call.1} parent=11 // pred_fallthru
        _
      // Predicated region
      $region37: #{tpu_custom_call.1} parent=11 // pred_check
        %p454 = pneg %p274
      $region38: #{tpu_custom_call.1} parent=11 // pred_check_branch
        %456 = sbr.rel (%p454) target = $region40
      $region39: #{tpu_custom_call.1} parent=11 // pred_region
        _
      $region40: #{tpu_custom_call.1} parent=11 // pred_fallthru
        _
      // Predicated region
      $region41: #{tpu_custom_call.1} parent=11 // pred_check
        %p457 = pneg %p295
      $region42: #{tpu_custom_call.1} parent=11 // pred_check_branch
        %459 = sbr.rel (%p457) target = $region44
      $region43: #{tpu_custom_call.1} parent=11 // pred_region
        _
      $region44: #{tpu_custom_call.1} parent=11 // pred_fallthru
        _
      // Predicated region
      $region45: #{tpu_custom_call.1} parent=11 // pred_check
        %p460 = pneg %p316
      $region46: #{tpu_custom_call.1} parent=11 // pred_check_branch
        %462 = sbr.rel (%p460) target = $region48
      $region47: #{tpu_custom_call.1} parent=11 // pred_region
        _
      $region48: #{tpu_custom_call.1} parent=11 // pred_fallthru
        _
      // Predicated region
      $region49: #{tpu_custom_call.1} parent=11 // pred_check
        %p463 = pneg %p337
      $region50: #{tpu_custom_call.1} parent=11 // pred_check_branch
        %465 = sbr.rel (%p463) target = $region52
      $region51: #{tpu_custom_call.1} parent=11 // pred_region
        _
      $region52: #{tpu_custom_call.1} parent=11 // pred_fallthru
        _
      // Predicated region
      $region53: #{tpu_custom_call.1} parent=11 // pred_check
        %p466 = pneg %p358
      $region54: #{tpu_custom_call.1} parent=11 // pred_check_branch
        %468 = sbr.rel (%p466) target = $region56
      $region55: #{tpu_custom_call.1} parent=11 // pred_region
        _
      $region56: #{tpu_custom_call.1} parent=11 // pred_fallthru
        _
      // Predicated region
      $region57: #{tpu_custom_call.1} parent=11 // pred_check
        %p469 = pneg %p379
      $region58: #{tpu_custom_call.1} parent=11 // pred_check_branch
        %471 = sbr.rel (%p469) target = $region60
      $region59: #{tpu_custom_call.1} parent=11 // pred_region
        _
      $region60: #{tpu_custom_call.1} parent=11 // pred_fallthru
        _
      // Predicated region
      $region61: #{tpu_custom_call.1} parent=11 // pred_check
        %p472 = pneg %p400
      $region62: #{tpu_custom_call.1} parent=11 // pred_check_branch
        %474 = sbr.rel (%p472) target = $region64
      $region63: #{tpu_custom_call.1} parent=11 // pred_region
        _
      $region64: #{tpu_custom_call.1} parent=11 // pred_fallthru
        _
    $region12: #{tpu_custom_call.1} parent=5 // pred_fallthru
      _
    %p475 = scmp.lt.s32.totalorder %s23, 2
    // Predicated region
    $region65: #{tpu_custom_call.1} parent=5 // pred_check
      %p476 = pneg %p475
    $region66: #{tpu_custom_call.1} parent=5 // pred_check_branch
      %478 = sbr.rel (%p476) target = $region68
    $region67: #{tpu_custom_call.1} parent=5 // pred_region
      // Predicated region
      $region69: #{tpu_custom_call.1} parent=67 // pred_check
        %p479 = pneg %p64
      $region70: #{tpu_custom_call.1} parent=67 // pred_check_branch
        %481 = sbr.rel (%p479) target = $region72
      $region71: #{tpu_custom_call.1} parent=67 // pred_region
        %s482 = smul.u32 16, %s23
        %s483 = ssub.s32 25, %s482
        %p484 = scmp.lt.s32.totalorder %s483, 16
        %s485 = scalar_select %p484, %s483, 16
        %s486 = smul.u32 128, %s485
        %p487 = scmp.lt.s32.totalorder %s482, 24
        %s488 = scalar_select %p487, %s482, 24
        %s489 = smul.addr %s488, 8
        %s490 = scalar_lea.vmem %s1, %s489
        %s491 = smul.u32 16, %s23
        %s492 = ssub.s32 25, %s491
        %p493 = scmp.lt.s32.totalorder %s492, 16
        %s494 = scalar_select %p493, %s492, 16
        %s495 = smul.u32 128, %s494
      $region72: #{tpu_custom_call.1} parent=67 // pred_fallthru
        _
      // Predicated region
      $region73: #{tpu_custom_call.1} parent=67 // pred_check
        %p496 = pneg %p90
      $region74: #{tpu_custom_call.1} parent=67 // pred_check_branch
        %498 = sbr.rel (%p496) target = $region76
      $region75: #{tpu_custom_call.1} parent=67 // pred_region
        %s499 = smul.u32 16, %s23
        %s500 = ssub.s32 25, %s499
        %p501 = scmp.lt.s32.totalorder %s500, 16
        %s502 = scalar_select %p501, %s500, 16
        %s503 = smul.u32 128, %s502
        %p504 = scmp.lt.s32.totalorder %s499, 24
        %s505 = scalar_select %p504, %s499, 24
        %s506 = smul.addr %s505, 8
        %s507 = scalar_lea.vmem %s2, %s506
        %s508 = smul.u32 16, %s23
        %s509 = ssub.s32 25, %s508
        %p510 = scmp.lt.s32.totalorder %s509, 16
        %s511 = scalar_select %p510, %s509, 16
        %s512 = smul.u32 128, %s511
      $region76: #{tpu_custom_call.1} parent=67 // pred_fallthru
        _
      // Predicated region
      $region77: #{tpu_custom_call.1} parent=67 // pred_check
        %p513 = pneg %p116
      $region78: #{tpu_custom_call.1} parent=67 // pred_check_branch
        %515 = sbr.rel (%p513) target = $region80
      $region79: #{tpu_custom_call.1} parent=67 // pred_region
        %p516 = scmp.lt.s32.totalorder %s23, 1
        %s517 = scalar_select %p516, %s23, 1
        %s518 = scalar_lea.vmem %s3, %s517
      $region80: #{tpu_custom_call.1} parent=67 // pred_fallthru
        _
      // Predicated region
      $region81: #{tpu_custom_call.1} parent=67 // pred_check
        %p519 = pneg %p142
      $region82: #{tpu_custom_call.1} parent=67 // pred_check_branch
        %521 = sbr.rel (%p519) target = $region84
      $region83: #{tpu_custom_call.1} parent=67 // pred_region
        %s522 = smul.u32 16, %s23
        %s523 = ssub.s32 25, %s522
        %p524 = scmp.lt.s32.totalorder %s523, 16
        %s525 = scalar_select %p524, %s523, 16
        %s526 = smul.u32 128, %s525
        %p527 = scmp.lt.s32.totalorder %s522, 24
        %s528 = scalar_select %p527, %s522, 24
        %s529 = smul.addr %s528, 8
        %s530 = scalar_lea.vmem %s4, %s529
        %s531 = smul.u32 16, %s23
        %s532 = ssub.s32 25, %s531
        %p533 = scmp.lt.s32.totalorder %s532, 16
        %s534 = scalar_select %p533, %s532, 16
        %s535 = smul.u32 128, %s534
      $region84: #{tpu_custom_call.1} parent=67 // pred_fallthru
        _
    $region68: #{tpu_custom_call.1} parent=5 // pred_fallthru
      _
    %p536 = scmp.le.s32.totalorder 1, %s23
    %p537 = scmp.lt.s32.totalorder %s23, 3
    %p538 = pnand %p536, %p537
    %p539 = pneg %p538
    // Predicated region
    $region85: #{tpu_custom_call.1} parent=5 // pred_check
      _
    $region86: #{tpu_custom_call.1} parent=5 // pred_check_branch
      %541 = sbr.rel (%p538) target = $region88
    $region87: #{tpu_custom_call.1} parent=5 // pred_region
      %s542 = ssub.s32 %s23, 1
      %p543 = pneg %p44
      %p544 = pneg %p41
      %s545 = smul.u32 16, %s28
      %s546 = ssub.s32 25, %s545
      %p547 = scmp.lt.s32.totalorder %s546, 16
      %s548 = scalar_select %p547, %s546, 16
      %s549 = smul.u32 128, %s548
      %p550 = scmp.lt.s32.totalorder %s545, 24
      %s551 = scalar_select %p550, %s545, 24
      %s552 = smul.addr %s551, 8
      %s553 = scalar_lea.vmem %s1, %s552
      %p554 = pneg %p70
      %p555 = pneg %p67
      %s556 = smul.u32 16, %s28
      %s557 = ssub.s32 25, %s556
      %p558 = scmp.lt.s32.totalorder %s557, 16
      %s559 = scalar_select %p558, %s557, 16
      %s560 = smul.u32 128, %s559
      %p561 = scmp.lt.s32.totalorder %s556, 24
      %s562 = scalar_select %p561, %s556, 24
      %s563 = smul.addr %s562, 8
      %s564 = scalar_lea.vmem %s2, %s563
      %p565 = pneg %p96
      %p566 = pneg %p93
      %p567 = scmp.lt.s32.totalorder %s28, 1
      %s568 = scalar_select %p567, %s28, 1
      %s569 = scalar_lea.vmem %s3, %s568
      %p570 = pneg %p122
      %p571 = pneg %p119
      %s572 = smul.u32 16, %s28
      %s573 = ssub.s32 25, %s572
      %p574 = scmp.lt.s32.totalorder %s573, 16
      %s575 = scalar_select %p574, %s573, 16
      %s576 = smul.u32 128, %s575
      %p577 = scmp.lt.s32.totalorder %s572, 24
      %s578 = scalar_select %p577, %s572, 24
      %s579 = smul.addr %s578, 8
      %s580 = scalar_lea.vmem %s4, %s579
      %p581 = pneg %p148
      %p582 = pneg %p145
      %p583 = pneg %p169
      %p584 = pneg %p166
      %p585 = pneg %p190
      %p586 = pneg %p187
      %p587 = pneg %p211
      %p588 = pneg %p208
      %p589 = pneg %p232
      %p590 = pneg %p229
      %p591 = pneg %p253
      %p592 = pneg %p250
      %p593 = pneg %p274
      %p594 = pneg %p271
      %p595 = pneg %p295
      %p596 = pneg %p292
      %p597 = pneg %p316
      %p598 = pneg %p313
      %p599 = pneg %p337
      %p600 = pneg %p334
      %p601 = pneg %p358
      %p602 = pneg %p355
      %p603 = pneg %p379
      %p604 = pneg %p376
      %p605 = pneg %p400
      %p606 = pneg %p397
      %p607 = pneg %p421
      %p608 = pneg %p418
      %s609 = smul.u32 16, %s28
      %s610 = ssub.s32 25, %s609
      %p611 = scmp.lt.s32.totalorder %s610, 16
      %s612 = scalar_select %p611, %s610, 16
      %s613 = smul.u32 128, %s612
      %p614 = scmp.lt.s32.totalorder %s609, 24
      %s615 = scalar_select %p614, %s609, 24
      %s616 = smul.addr %s615, 8
      %s617 = scalar_lea.vmem %s1, %s616
      %s618 = smul.u32 16, %s28
      %s619 = ssub.s32 25, %s618
      %p620 = scmp.lt.s32.totalorder %s619, 16
      %s621 = scalar_select %p620, %s619, 16
      %s622 = smul.u32 128, %s621
      %s623 = smul.u32 16, %s28
      %s624 = ssub.s32 25, %s623
      %p625 = scmp.lt.s32.totalorder %s624, 16
      %s626 = scalar_select %p625, %s624, 16
      %s627 = smul.u32 128, %s626
      %p628 = scmp.lt.s32.totalorder %s623, 24
      %s629 = scalar_select %p628, %s623, 24
      %s630 = smul.addr %s629, 8
      %s631 = scalar_lea.vmem %s2, %s630
      %s632 = smul.u32 16, %s28
      %s633 = ssub.s32 25, %s632
      %p634 = scmp.lt.s32.totalorder %s633, 16
      %s635 = scalar_select %p634, %s633, 16
      %s636 = smul.u32 128, %s635
      %p637 = scmp.lt.s32.totalorder %s28, 1
      %s638 = scalar_select %p637, %s28, 1
      %s639 = scalar_lea.vmem %s3, %s638
      %s640 = smul.u32 16, %s28
      %s641 = ssub.s32 25, %s640
      %p642 = scmp.lt.s32.totalorder %s641, 16
      %s643 = scalar_select %p642, %s641, 16
      %s644 = smul.u32 128, %s643
      %p645 = scmp.lt.s32.totalorder %s640, 24
      %s646 = scalar_select %p645, %s640, 24
      %s647 = smul.addr %s646, 8
      %s648 = scalar_lea.vmem %s4, %s647
      %s649 = smul.u32 16, %s28
      %s650 = ssub.s32 25, %s649
      %p651 = scmp.lt.s32.totalorder %s650, 16
      %s652 = scalar_select %p651, %s650, 16
      %s653 = smul.u32 128, %s652
      %p654 = scmp.eq.s32.totalorder %s28, 0
      // Predicated region
      $region89: #{tpu_custom_call.1} parent=87 // pred_check
        %p655 = pneg %p654
      $region90: #{tpu_custom_call.1} parent=87 // pred_check_branch
        %657 = sbr.rel (%p655) target = $region92
      $region91: #{tpu_custom_call.1} parent=87 // pred_region
        %v658 = vld [vmem:[%s0] sm:$0xff]
        %v659 = vld [vmem:[%s0 + $0x8] sm:$0xff]
        %v660 = vld [vmem:[%s0 + $0x10] sm:$0xff]
        %v661 = vld [vmem:[%s0 + $0x18] sm:$0xff]
        %v662 = vld [vmem:[%s0 + $0x20] sm:$0xff]
        %v663 = vld [vmem:[%s0 + $0x28] sm:$0xff]
        %v664 = vld [vmem:[%s0 + $0x30] sm:$0xff]
        %v665 = vld [vmem:[%s0 + $0x38] sm:$0xff]
        %v666 = vld [vmem:[%s5] sm:$0xff]
        %v667 = vld [vmem:[%s5 + $0x8] sm:$0xff]
        %v668 = vld [vmem:[%s5 + $0x10] sm:$0xff]
        %v669 = vld [vmem:[%s5 + $0x18] sm:$0xff]
        %v670 = vld [vmem:[%s6] sm:$0x1]
        %v672 = vlaneseq
        %v673 = vshrl.u32 %v672, 7
        %v674 = vsub.s32 0, %v673
        %v675 = vrot.slane %v670, %v674
        %vm677 = vcmask 261120
        %v679 = vsel %vm677, %v658, 0
        %v682 = vsel %vm677, %v659, 0
        %v685 = vsel %vm677, %v660, 0
        %v688 = vsel %vm677, %v661, 0
        %v691 = vsel %vm677, %v662, 0
        %v694 = vsel %vm677, %v663, 0
        %v697 = vsel %vm677, %v664, 0
        %v700 = vsel %vm677, %v665, 0
        %702 = vmatprep.subr.mxu0 0.0
        %v703 = vand.u32 %v666, 4294901760
        %704 = vmatpush1.msra.mxu0 %v703
        %705 = vmatprep.subr.mxu0 0.0
        %v706 = vand.u32 %v667, 4294901760
        %707 = vmatpush1.msra.mxu0 %v706
        %708 = vmatprep.subr.mxu0 0.0
        %v709 = vand.u32 %v668, 4294901760
        %710 = vmatpush1.msra.mxu0 %v709
        %711 = vmatprep.subr.mxu0 0.0
        %v712 = vand.u32 %v669, 4294901760
        %713 = vmatpush1.msra.mxu0 %v712
        %714 = vmatprep.subr.mxu0 0.0
        %715 = vmatpush1.msra.mxu0 0.0
        %716 = vmatprep.subr.mxu0 0.0
        %717 = vmatpush1.msra.mxu0 0.0
        %718 = vmatprep.subr.mxu0 0.0
        %719 = vmatpush1.msra.mxu0 0.0
        %720 = vmatprep.subr.mxu0 0.0
        %721 = vmatpush1.msra.mxu0 0.0
        %722 = vmatprep.subr.mxu0 0.0
        %723 = vmatpush1.msra.mxu0 0.0
        %724 = vmatprep.subr.mxu0 0.0
        %725 = vmatpush1.msra.mxu0 0.0
        %726 = vmatprep.subr.mxu0 0.0
        %727 = vmatpush1.msra.mxu0 0.0
        %728 = vmatprep.subr.mxu0 0.0
        %729 = vmatpush1.msra.mxu0 0.0
        %730 = vmatprep.subr.mxu0 0.0
        %731 = vmatpush1.msra.mxu0 0.0
        %732 = vmatprep.subr.mxu0 0.0
        %733 = vmatpush1.msra.mxu0 0.0
        %734 = vmatprep.subr.mxu0 0.0
        %735 = vmatpush1.msra.mxu0 0.0
        %736 = vmatprep.subr.mxu0 0.0
        %737 = vmatpush1.msra.mxu0 0.0
        %738 = vmatprep.subr.mxu0 0.0
        %739 = vmatpush1.msra.mxu0 0.0
        %740 = vmatprep.subr.mxu0 0.0
        %741 = vmatpush1.msra.mxu0 0.0
        %742 = vmatprep.subr.mxu0 0.0
        %743 = vmatpush1.msra.mxu0 0.0
        %744 = vmatprep.subr.mxu0 0.0
        %745 = vmatpush1.msra.mxu0 0.0
        %746 = vmatprep.subr.mxu0 0.0
        %747 = vmatpush1.msra.mxu0 0.0
        %748 = vmatprep.subr.mxu0 0.0
        %749 = vmatpush1.msra.mxu0 0.0
        %750 = vmatprep.subr.mxu0 0.0
        %751 = vmatpush1.msra.mxu0 0.0
        %752 = vmatprep.subr.mxu0 0.0
        %753 = vmatpush1.msra.mxu0 0.0
        %754 = vmatprep.subr.mxu0 0.0
        %755 = vmatpush1.msra.mxu0 0.0
        %756 = vmatprep.subr.mxu0 0.0
        %757 = vmatpush1.msra.mxu0 0.0
        %758 = vmatprep.subr.mxu0 0.0
        %759 = vmatpush1.msra.mxu0 0.0
        %760 = vmatprep.subr.mxu0 0.0
        %761 = vmatpush1.msra.mxu0 0.0
        %762 = vmatprep.subr.mxu0 0.0
        %763 = vmatpush1.msra.mxu0 0.0
        %764 = vmatprep.subr.mxu0 0.0
        %765 = vmatpush1.msra.mxu0 0.0
        %766 = vmatprep.subr.mxu0 0.0
        %767 = vmatpush1.msra.mxu0 0.0
        %768 = vmatprep.subr.mxu0 0.0
        %769 = vmatpush1.msra.mxu0 0.0
        %770 = vmatprep.mubr.f32.mxu0 0.0
        %v771 = vand.u32 %v679, 4294901760
        %v772 = vsub.f32 %v679, %v771
        %v773 = vand.u32 %v772, 4294901760
        %v774 = vsub.f32 %v772, %v773
        %v775 = vand.u32 %v774, 4294901760
        %776 = vmatmul.mubr.f32.gmra.mrb[0].mxu0 %v775
        %v777 = vpop.f32.mrb[0].mxu0
        %v778 = vadd.f32 %v675, %v777
        %v779 = vpop.f32.mrb[0].mxu0
        %780 = vmatprep.mubr.f32.mxu0 0.0
        %v781 = vand.u32 %v682, 4294901760
        %v782 = vsub.f32 %v682, %v781
        %v783 = vand.u32 %v782, 4294901760
        %v784 = vsub.f32 %v782, %v783
        %v785 = vand.u32 %v784, 4294901760
        %786 = vmatmul.mubr.f32.gmra.mrb[0].mxu0 %v785
        %v787 = vpop.f32.mrb[0].mxu0
        %v788 = vadd.f32 %v675, %v787
        %v789 = vpop.f32.mrb[0].mxu0
        %790 = vmatprep.mubr.f32.mxu0 0.0
        %v791 = vand.u32 %v685, 4294901760
        %v792 = vsub.f32 %v685, %v791
        %v793 = vand.u32 %v792, 4294901760
        %v794 = vsub.f32 %v792, %v793
        %v795 = vand.u32 %v794, 4294901760
        %796 = vmatmul.mubr.f32.gmra.mrb[0].mxu0 %v795
        %v797 = vpop.f32.mrb[0].mxu0
        %v798 = vadd.f32 %v675, %v797
        %v799 = vpop.f32.mrb[0].mxu0
        %800 = vmatprep.mubr.f32.mxu0 0.0
        %v801 = vand.u32 %v688, 4294901760
        %v802 = vsub.f32 %v688, %v801
        %v803 = vand.u32 %v802, 4294901760
        %v804 = vsub.f32 %v802, %v803
        %v805 = vand.u32 %v804, 4294901760
        %806 = vmatmul.mubr.f32.gmra.mrb[0].mxu0 %v805
        %v807 = vpop.f32.mrb[0].mxu0
        %v808 = vadd.f32 %v675, %v807
        %v809 = vpop.f32.mrb[0].mxu0
        %810 = vmatprep.mubr.f32.mxu0 0.0
        %v811 = vand.u32 %v691, 4294901760
        %v812 = vsub.f32 %v691, %v811
        %v813 = vand.u32 %v812, 4294901760
        %v814 = vsub.f32 %v812, %v813
        %v815 = vand.u32 %v814, 4294901760
        %816 = vmatmul.mubr.f32.gmra.mrb[0].mxu0 %v815
        %v817 = vpop.f32.mrb[0].mxu0
        %v818 = vadd.f32 %v675, %v817
        %v819 = vpop.f32.mrb[0].mxu0
        %820 = vmatprep.mubr.f32.mxu0 0.0
        %v821 = vand.u32 %v694, 4294901760
        %v822 = vsub.f32 %v694, %v821
        %v823 = vand.u32 %v822, 4294901760
        %v824 = vsub.f32 %v822, %v823
        %v825 = vand.u32 %v824, 4294901760
        %826 = vmatmul.mubr.f32.gmra.mrb[0].mxu0 %v825
        %v827 = vpop.f32.mrb[0].mxu0
        %v828 = vadd.f32 %v675, %v827
        %v829 = vpop.f32.mrb[0].mxu0
        %830 = vmatprep.mubr.f32.mxu0 0.0
        %v831 = vand.u32 %v697, 4294901760
        %v832 = vsub.f32 %v697, %v831
        %v833 = vand.u32 %v832, 4294901760
        %v834 = vsub.f32 %v832, %v833
        %v835 = vand.u32 %v834, 4294901760
        %836 = vmatmul.mubr.f32.gmra.mrb[0].mxu0 %v835
        %v837 = vpop.f32.mrb[0].mxu0
        %v838 = vadd.f32 %v675, %v837
        %v839 = vpop.f32.mrb[0].mxu0
        %840 = vmatprep.mubr.f32.mxu0 0.0
        %v841 = vand.u32 %v700, 4294901760
        %v842 = vsub.f32 %v700, %v841
        %v843 = vand.u32 %v842, 4294901760
        %v844 = vsub.f32 %v842, %v843
        %v845 = vand.u32 %v844, 4294901760
        %846 = vmatmul.mubr.f32.gmra.mrb[0].mxu0 %v845
        %v847 = vpop.f32.mrb[0].mxu0
        %v848 = vadd.f32 %v675, %v847
        %v849 = vpop.f32.mrb[0].mxu0
        %850 = vdwg.mxu0
        %851 = vmatprep.subr.mxu0 0.0
        %v852 = vand.u32 %v666, 4294901760
        %v853 = vsub.f32 %v666, %v852
        %v854 = vand.u32 %v853, 4294901760
        %v855 = vsub.f32 %v853, %v854
        %v856 = vand.u32 %v855, 4294901760
        %857 = vmatpush1.msra.mxu0 %v856
        %858 = vmatprep.subr.mxu0 0.0
        %v859 = vand.u32 %v667, 4294901760
        %v860 = vsub.f32 %v667, %v859
        %v861 = vand.u32 %v860, 4294901760
        %v862 = vsub.f32 %v860, %v861
        %v863 = vand.u32 %v862, 4294901760
        %864 = vmatpush1.msra.mxu0 %v863
        %865 = vmatprep.subr.mxu0 0.0
        %v866 = vand.u32 %v668, 4294901760
        %v867 = vsub.f32 %v668, %v866
        %v868 = vand.u32 %v867, 4294901760
        %v869 = vsub.f32 %v867, %v868
        %v870 = vand.u32 %v869, 4294901760
        %871 = vmatpush1.msra.mxu0 %v870
        %872 = vmatprep.subr.mxu0 0.0
        %v873 = vand.u32 %v669, 4294901760
        %v874 = vsub.f32 %v669, %v873
        %v875 = vand.u32 %v874, 4294901760
        %v876 = vsub.f32 %v874, %v875
        %v877 = vand.u32 %v876, 4294901760
        %878 = vmatpush1.msra.mxu0 %v877
        %879 = vmatprep.subr.mxu0 0.0
        %880 = vmatpush1.msra.mxu0 0.0
        %881 = vmatprep.subr.mxu0 0.0
        %882 = vmatpush1.msra.mxu0 0.0
        %883 = vmatprep.subr.mxu0 0.0
        %884 = vmatpush1.msra.mxu0 0.0
        %885 = vmatprep.subr.mxu0 0.0
        %886 = vmatpush1.msra.mxu0 0.0
        %887 = vmatprep.subr.mxu0 0.0
        %888 = vmatpush1.msra.mxu0 0.0
        %889 = vmatprep.subr.mxu0 0.0
        %890 = vmatpush1.msra.mxu0 0.0
        %891 = vmatprep.subr.mxu0 0.0
        %892 = vmatpush1.msra.mxu0 0.0
        %893 = vmatprep.subr.mxu0 0.0
        %894 = vmatpush1.msra.mxu0 0.0
        %895 = vmatprep.subr.mxu0 0.0
        %896 = vmatpush1.msra.mxu0 0.0
        %897 = vmatprep.subr.mxu0 0.0
        %898 = vmatpush1.msra.mxu0 0.0
        %899 = vmatprep.subr.mxu0 0.0
        %900 = vmatpush1.msra.mxu0 0.0
        %901 = vmatprep.subr.mxu0 0.0
        %902 = vmatpush1.msra.mxu0 0.0
        %903 = vmatprep.subr.mxu0 0.0
        %904 = vmatpush1.msra.mxu0 0.0
        %905 = vmatprep.subr.mxu0 0.0
        %906 = vmatpush1.msra.mxu0 0.0
        %907 = vmatprep.subr.mxu0 0.0
        %908 = vmatpush1.msra.mxu0 0.0
        %909 = vmatprep.subr.mxu0 0.0
        %910 = vmatpush1.msra.mxu0 0.0
        %911 = vmatprep.subr.mxu0 0.0
        %912 = vmatpush1.msra.mxu0 0.0
        %913 = vmatprep.subr.mxu0 0.0
        %914 = vmatpush1.msra.mxu0 0.0
        %915 = vmatprep.subr.mxu0 0.0
        %916 = vmatpush1.msra.mxu0 0.0
        %917 = vmatprep.subr.mxu0 0.0
        %918 = vmatpush1.msra.mxu0 0.0
        %919 = vmatprep.subr.mxu0 0.0
        %920 = vmatpush1.msra.mxu0 0.0
        %921 = vmatprep.subr.mxu0 0.0
        %922 = vmatpush1.msra.mxu0 0.0
        %923 = vmatprep.subr.mxu0 0.0
        %924 = vmatpush1.msra.mxu0 0.0
        %925 = vmatprep.subr.mxu0 0.0
        %926 = vmatpush1.msra.mxu0 0.0
        %927 = vmatprep.subr.mxu0 0.0
        %928 = vmatpush1.msra.mxu0 0.0
        %929 = vmatprep.subr.mxu0 0.0
        %930 = vmatpush1.msra.mxu0 0.0
        %931 = vmatprep.subr.mxu0 0.0
        %932 = vmatpush1.msra.mxu0 0.0
        %933 = vmatprep.subr.mxu0 0.0
        %934 = vmatpush1.msra.mxu0 0.0
        %935 = vmatprep.mubr.f32.mxu0 0.0
        %v936 = vand.u32 %v679, 4294901760
        %937 = vmatmul.mubr.f32.gmra.mrb[0].mxu0 %v936
        %v938 = vpop.f32.mrb[0].mxu0
        %v939 = vadd.f32 %v778, %v938
        %v940 = vpop.f32.mrb[0].mxu0
        %941 = vmatprep.mubr.f32.mxu0 0.0
        %v942 = vand.u32 %v682, 4294901760
        %943 = vmatmul.mubr.f32.gmra.mrb[0].mxu0 %v942
        %v944 = vpop.f32.mrb[0].mxu0
        %v945 = vadd.f32 %v788, %v944
        %v946 = vpop.f32.mrb[0].mxu0
        %947 = vmatprep.mubr.f32.mxu0 0.0
        %v948 = vand.u32 %v685, 4294901760
        %949 = vmatmul.mubr.f32.gmra.mrb[0].mxu0 %v948
        %v950 = vpop.f32.mrb[0].mxu0
        %v951 = vadd.f32 %v798, %v950
        %v952 = vpop.f32.mrb[0].mxu0
        %953 = vmatprep.mubr.f32.mxu0 0.0
        %v954 = vand.u32 %v688, 4294901760
        %955 = vmatmul.mubr.f32.gmra.mrb[0].mxu0 %v954
        %v956 = vpop.f32.mrb[0].mxu0
        %v957 = vadd.f32 %v808, %v956
        %v958 = vpop.f32.mrb[0].mxu0
        %959 = vmatprep.mubr.f32.mxu0 0.0
        %v960 = vand.u32 %v691, 4294901760
        %961 = vmatmul.mubr.f32.gmra.mrb[0].mxu0 %v960
        %v962 = vpop.f32.mrb[0].mxu0
        %v963 = vadd.f32 %v818, %v962
        %v964 = vpop.f32.mrb[0].mxu0
        %965 = vmatprep.mubr.f32.mxu0 0.0
        %v966 = vand.u32 %v694, 4294901760
        %967 = vmatmul.mubr.f32.gmra.mrb[0].mxu0 %v966
        %v968 = vpop.f32.mrb[0].mxu0
        %v969 = vadd.f32 %v828, %v968
        %v970 = vpop.f32.mrb[0].mxu0
        %971 = vmatprep.mubr.f32.mxu0 0.0
        %v972 = vand.u32 %v697, 4294901760
        %973 = vmatmul.mubr.f32.gmra.mrb[0].mxu0 %v972
        %v974 = vpop.f32.mrb[0].mxu0
        %v975 = vadd.f32 %v838, %v974
        %v976 = vpop.f32.mrb[0].mxu0
        %977 = vmatprep.mubr.f32.mxu0 0.0
        %v978 = vand.u32 %v700, 4294901760
        %979 = vmatmul.mubr.f32.gmra.mrb[0].mxu0 %v978
        %v980 = vpop.f32.mrb[0].mxu0
        %v981 = vadd.f32 %v848, %v980
        %v982 = vpop.f32.mrb[0].mxu0
        %983 = vdwg.mxu0
        %984 = vmatprep.subr.mxu0 0.0
        %v985 = vand.u32 %v666, 4294901760
        %v986 = vsub.f32 %v666, %v985
        %987 = vmatpush1.msra.mxu0 %v986
        %988 = vmatprep.subr.mxu0 0.0
        %v989 = vand.u32 %v667, 4294901760
        %v990 = vsub.f32 %v667, %v989
        %991 = vmatpush1.msra.mxu0 %v990
        %992 = vmatprep.subr.mxu0 0.0
        %v993 = vand.u32 %v668, 4294901760
        %v994 = vsub.f32 %v668, %v993
        %995 = vmatpush1.msra.mxu0 %v994
        %996 = vmatprep.subr.mxu0 0.0
        %v997 = vand.u32 %v669, 4294901760
        %v998 = vsub.f32 %v669, %v997
        %999 = vmatpush1.msra.mxu0 %v998
        %1000 = vmatprep.subr.mxu0 0.0
        %1001 = vmatpush1.msra.mxu0 0.0
        %1002 = vmatprep.subr.mxu0 0.0
        %1003 = vmatpush1.msra.mxu0 0.0
        %1004 = vmatprep.subr.mxu0 0.0
        %1005 = vmatpush1.msra.mxu0 0.0
        %1006 = vmatprep.subr.mxu0 0.0
        %1007 = vmatpush1.msra.mxu0 0.0
        %1008 = vmatprep.subr.mxu0 0.0
        %1009 = vmatpush1.msra.mxu0 0.0
        %1010 = vmatprep.subr.mxu0 0.0
        %1011 = vmatpush1.msra.mxu0 0.0
        %1012 = vmatprep.subr.mxu0 0.0
        %1013 = vmatpush1.msra.mxu0 0.0
        %1014 = vmatprep.subr.mxu0 0.0
        %1015 = vmatpush1.msra.mxu0 0.0
        %1016 = vmatprep.subr.mxu0 0.0
        %1017 = vmatpush1.msra.mxu0 0.0
        %1018 = vmatprep.subr.mxu0 0.0
        %1019 = vmatpush1.msra.mxu0 0.0
        %1020 = vmatprep.subr.mxu0 0.0
        %1021 = vmatpush1.msra.mxu0 0.0
        %1022 = vmatprep.subr.mxu0 0.0
        %1023 = vmatpush1.msra.mxu0 0.0
        %1024 = vmatprep.subr.mxu0 0.0
        %1025 = vmatpush1.msra.mxu0 0.0
        %1026 = vmatprep.subr.mxu0 0.0
        %1027 = vmatpush1.msra.mxu0 0.0
        %1028 = vmatprep.subr.mxu0 0.0
        %1029 = vmatpush1.msra.mxu0 0.0
        %1030 = vmatprep.subr.mxu0 0.0
        %1031 = vmatpush1.msra.mxu0 0.0
        %1032 = vmatprep.subr.mxu0 0.0
        %1033 = vmatpush1.msra.mxu0 0.0
        %1034 = vmatprep.subr.mxu0 0.0
        %1035 = vmatpush1.msra.mxu0 0.0
        %1036 = vmatprep.subr.mxu0 0.0
        %1037 = vmatpush1.msra.mxu0 0.0
        %1038 = vmatprep.subr.mxu0 0.0
        %1039 = vmatpush1.msra.mxu0 0.0
        %1040 = vmatprep.subr.mxu0 0.0
        %1041 = vmatpush1.msra.mxu0 0.0
        %1042 = vmatprep.subr.mxu0 0.0
        %1043 = vmatpush1.msra.mxu0 0.0
        %1044 = vmatprep.subr.mxu0 0.0
        %1045 = vmatpush1.msra.mxu0 0.0
        %1046 = vmatprep.subr.mxu0 0.0
        %1047 = vmatpush1.msra.mxu0 0.0
        %1048 = vmatprep.subr.mxu0 0.0
        %1049 = vmatpush1.msra.mxu0 0.0
        %1050 = vmatprep.subr.mxu0 0.0
        %1051 = vmatpush1.msra.mxu0 0.0
        %1052 = vmatprep.subr.mxu0 0.0
        %1053 = vmatpush1.msra.mxu0 0.0
        %1054 = vmatprep.subr.mxu0 0.0
        %1055 = vmatpush1.msra.mxu0 0.0
        %1056 = vmatprep.mubr.f32.mxu0 0.0
        %v1057 = vand.u32 %v679, 4294901760
        %v1058 = vsub.f32 %v679, %v1057
        %1059 = vmatmul.mubr.f32.gmra.mrb[0].mxu0 %v1058
        %v1060 = vpop.f32.mrb[0].mxu0
        %v1061 = vadd.f32 %v939, %v1060
        %v1062 = vpop.f32.mrb[0].mxu0
        %1063 = vmatprep.mubr.f32.mxu0 0.0
        %v1064 = vand.u32 %v682, 4294901760
        %v1065 = vsub.f32 %v682, %v1064
        %1066 = vmatmul.mubr.f32.gmra.mrb[0].mxu0 %v1065
        %v1067 = vpop.f32.mrb[0].mxu0
        %v1068 = vadd.f32 %v945, %v1067
        %v1069 = vpop.f32.mrb[0].mxu0
        %1070 = vmatprep.mubr.f32.mxu0 0.0
        %v1071 = vand.u32 %v685, 4294901760
        %v1072 = vsub.f32 %v685, %v1071
        %1073 = vmatmul.mubr.f32.gmra.mrb[0].mxu0 %v1072
        %v1074 = vpop.f32.mrb[0].mxu0
        %v1075 = vadd.f32 %v951, %v1074
        %v1076 = vpop.f32.mrb[0].mxu0
        %1077 = vmatprep.mubr.f32.mxu0 0.0
        %v1078 = vand.u32 %v688, 4294901760
        %v1079 = vsub.f32 %v688, %v1078
        %1080 = vmatmul.mubr.f32.gmra.mrb[0].mxu0 %v1079
        %v1081 = vpop.f32.mrb[0].mxu0
        %v1082 = vadd.f32 %v957, %v1081
        %v1083 = vpop.f32.mrb[0].mxu0
        %1084 = vmatprep.mubr.f32.mxu0 0.0
        %v1085 = vand.u32 %v691, 4294901760
        %v1086 = vsub.f32 %v691, %v1085
        %1087 = vmatmul.mubr.f32.gmra.mrb[0].mxu0 %v1086
        %v1088 = vpop.f32.mrb[0].mxu0
        %v1089 = vadd.f32 %v963, %v1088
        %v1090 = vpop.f32.mrb[0].mxu0
        %1091 = vmatprep.mubr.f32.mxu0 0.0
        %v1092 = vand.u32 %v694, 4294901760
        %v1093 = vsub.f32 %v694, %v1092
        %1094 = vmatmul.mubr.f32.gmra.mrb[0].mxu0 %v1093
        %v1095 = vpop.f32.mrb[0].mxu0
        %v1096 = vadd.f32 %v969, %v1095
        %v1097 = vpop.f32.mrb[0].mxu0
        %1098 = vmatprep.mubr.f32.mxu0 0.0
        %v1099 = vand.u32 %v697, 4294901760
        %v1100 = vsub.f32 %v697, %v1099
        %1101 = vmatmul.mubr.f32.gmra.mrb[0].mxu0 %v1100
        %v1102 = vpop.f32.mrb[0].mxu0
        %v1103 = vadd.f32 %v975, %v1102
        %v1104 = vpop.f32.mrb[0].mxu0
        %1105 = vmatprep.mubr.f32.mxu0 0.0
        %v1106 = vand.u32 %v700, 4294901760
        %v1107 = vsub.f32 %v700, %v1106
        %1108 = vmatmul.mubr.f32.gmra.mrb[0].mxu0 %v1107
        %v1109 = vpop.f32.mrb[0].mxu0
        %v1110 = vadd.f32 %v981, %v1109
        %v1111 = vpop.f32.mrb[0].mxu0
        %1112 = vdwg.mxu0
        %1113 = vmatprep.subr.mxu0 0.0
        %v1114 = vand.u32 %v666, 4294901760
        %1115 = vmatpush1.msra.mxu0 %v1114
        %1116 = vmatprep.subr.mxu0 0.0
        %v1117 = vand.u32 %v667, 4294901760
        %1118 = vmatpush1.msra.mxu0 %v1117
        %1119 = vmatprep.subr.mxu0 0.0
        %v1120 = vand.u32 %v668, 4294901760
        %1121 = vmatpush1.msra.mxu0 %v1120
        %1122 = vmatprep.subr.mxu0 0.0
        %v1123 = vand.u32 %v669, 4294901760
        %1124 = vmatpush1.msra.mxu0 %v1123
        %1125 = vmatprep.subr.mxu0 0.0
        %1126 = vmatpush1.msra.mxu0 0.0
        %1127 = vmatprep.subr.mxu0 0.0
        %1128 = vmatpush1.msra.mxu0 0.0
        %1129 = vmatprep.subr.mxu0 0.0
        %1130 = vmatpush1.msra.mxu0 0.0
        %1131 = vmatprep.subr.mxu0 0.0
        %1132 = vmatpush1.msra.mxu0 0.0
        %1133 = vmatprep.subr.mxu0 0.0
        %1134 = vmatpush1.msra.mxu0 0.0
        %1135 = vmatprep.subr.mxu0 0.0
        %1136 = vmatpush1.msra.mxu0 0.0
        %1137 = vmatprep.subr.mxu0 0.0
        %1138 = vmatpush1.msra.mxu0 0.0
        %1139 = vmatprep.subr.mxu0 0.0
        %1140 = vmatpush1.msra.mxu0 0.0
        %1141 = vmatprep.subr.mxu0 0.0
        %1142 = vmatpush1.msra.mxu0 0.0
        %1143 = vmatprep.subr.mxu0 0.0
        %1144 = vmatpush1.msra.mxu0 0.0
        %1145 = vmatprep.subr.mxu0 0.0
        %1146 = vmatpush1.msra.mxu0 0.0
        %1147 = vmatprep.subr.mxu0 0.0
        %1148 = vmatpush1.msra.mxu0 0.0
        %1149 = vmatprep.subr.mxu0 0.0
        %1150 = vmatpush1.msra.mxu0 0.0
        %1151 = vmatprep.subr.mxu0 0.0
        %1152 = vmatpush1.msra.mxu0 0.0
        %1153 = vmatprep.subr.mxu0 0.0
        %1154 = vmatpush1.msra.mxu0 0.0
        %1155 = vmatprep.subr.mxu0 0.0
        %1156 = vmatpush1.msra.mxu0 0.0
        %1157 = vmatprep.subr.mxu0 0.0
        %1158 = vmatpush1.msra.mxu0 0.0
        %1159 = vmatprep.subr.mxu0 0.0
        %1160 = vmatpush1.msra.mxu0 0.0
        %1161 = vmatprep.subr.mxu0 0.0
        %1162 = vmatpush1.msra.mxu0 0.0
        %1163 = vmatprep.subr.mxu0 0.0
        %1164 = vmatpush1.msra.mxu0 0.0
        %1165 = vmatprep.subr.mxu0 0.0
        %1166 = vmatpush1.msra.mxu0 0.0
        %1167 = vmatprep.subr.mxu0 0.0
        %1168 = vmatpush1.msra.mxu0 0.0
        %1169 = vmatprep.subr.mxu0 0.0
        %1170 = vmatpush1.msra.mxu0 0.0
        %1171 = vmatprep.subr.mxu0 0.0
        %1172 = vmatpush1.msra.mxu0 0.0
        %1173 = vmatprep.subr.mxu0 0.0
        %1174 = vmatpush1.msra.mxu0 0.0
        %1175 = vmatprep.subr.mxu0 0.0
        %1176 = vmatpush1.msra.mxu0 0.0
        %1177 = vmatprep.subr.mxu0 0.0
        %1178 = vmatpush1.msra.mxu0 0.0
        %1179 = vmatprep.subr.mxu0 0.0
        %1180 = vmatpush1.msra.mxu0 0.0
        %1181 = vmatprep.mubr.f32.mxu0 0.0
        %v1182 = vand.u32 %v679, 4294901760
        %v1183 = vsub.f32 %v679, %v1182
        %v1184 = vand.u32 %v1183, 4294901760
        %1185 = vmatmul.mubr.f32.gmra.mrb[0].mxu0 %v1184
        %v1186 = vpop.f32.mrb[0].mxu0
        %v1187 = vadd.f32 %v1061, %v1186
        %v1188 = vpop.f32.mrb[0].mxu0
        %1189 = vmatprep.mubr.f32.mxu0 0.0
        %v1190 = vand.u32 %v682, 4294901760
        %v1191 = vsub.f32 %v682, %v1190
        %v1192 = vand.u32 %v1191, 4294901760
        %1193 = vmatmul.mubr.f32.gmra.mrb[0].mxu0 %v1192
        %v1194 = vpop.f32.mrb[0].mxu0
        %v1195 = vadd.f32 %v1068, %v1194
        %v1196 = vpop.f32.mrb[0].mxu0
        %1197 = vmatprep.mubr.f32.mxu0 0.0
        %v1198 = vand.u32 %v685, 4294901760
        %v1199 = vsub.f32 %v685, %v1198
        %v1200 = vand.u32 %v1199, 4294901760
        %1201 = vmatmul.mubr.f32.gmra.mrb[0].mxu0 %v1200
        %v1202 = vpop.f32.mrb[0].mxu0
        %v1203 = vadd.f32 %v1075, %v1202
        %v1204 = vpop.f32.mrb[0].mxu0
        %1205 = vmatprep.mubr.f32.mxu0 0.0
        %v1206 = vand.u32 %v688, 4294901760
        %v1207 = vsub.f32 %v688, %v1206
        %v1208 = vand.u32 %v1207, 4294901760
        %1209 = vmatmul.mubr.f32.gmra.mrb[0].mxu0 %v1208
        %v1210 = vpop.f32.mrb[0].mxu0
        %v1211 = vadd.f32 %v1082, %v1210
        %v1212 = vpop.f32.mrb[0].mxu0
        %1213 = vmatprep.mubr.f32.mxu0 0.0
        %v1214 = vand.u32 %v691, 4294901760
        %v1215 = vsub.f32 %v691, %v1214
        %v1216 = vand.u32 %v1215, 4294901760
        %1217 = vmatmul.mubr.f32.gmra.mrb[0].mxu0 %v1216
        %v1218 = vpop.f32.mrb[0].mxu0
        %v1219 = vadd.f32 %v1089, %v1218
        %v1220 = vpop.f32.mrb[0].mxu0
        %1221 = vmatprep.mubr.f32.mxu0 0.0
        %v1222 = vand.u32 %v694, 4294901760
        %v1223 = vsub.f32 %v694, %v1222
        %v1224 = vand.u32 %v1223, 4294901760
        %1225 = vmatmul.mubr.f32.gmra.mrb[0].mxu0 %v1224
        %v1226 = vpop.f32.mrb[0].mxu0
        %v1227 = vadd.f32 %v1096, %v1226
        %v1228 = vpop.f32.mrb[0].mxu0
        %1229 = vmatprep.mubr.f32.mxu0 0.0
        %v1230 = vand.u32 %v697, 4294901760
        %v1231 = vsub.f32 %v697, %v1230
        %v1232 = vand.u32 %v1231, 4294901760
        %1233 = vmatmul.mubr.f32.gmra.mrb[0].mxu0 %v1232
        %v1234 = vpop.f32.mrb[0].mxu0
        %v1235 = vadd.f32 %v1103, %v1234
        %v1236 = vpop.f32.mrb[0].mxu0
        %1237 = vmatprep.mubr.f32.mxu0 0.0
        %v1238 = vand.u32 %v700, 4294901760
        %v1239 = vsub.f32 %v700, %v1238
        %v1240 = vand.u32 %v1239, 4294901760
        %1241 = vmatmul.mubr.f32.gmra.mrb[0].mxu0 %v1240
        %v1242 = vpop.f32.mrb[0].mxu0
        %v1243 = vadd.f32 %v1110, %v1242
        %v1244 = vpop.f32.mrb[0].mxu0
        %1245 = vdwg.mxu0
        %1246 = vmatprep.subr.mxu0 0.0
        %v1247 = vand.u32 %v666, 4294901760
        %v1248 = vsub.f32 %v666, %v1247
        %v1249 = vand.u32 %v1248, 4294901760
        %1250 = vmatpush1.msra.mxu0 %v1249
        %1251 = vmatprep.subr.mxu0 0.0
        %v1252 = vand.u32 %v667, 4294901760
        %v1253 = vsub.f32 %v667, %v1252
        %v1254 = vand.u32 %v1253, 4294901760
        %1255 = vmatpush1.msra.mxu0 %v1254
        %1256 = vmatprep.subr.mxu0 0.0
        %v1257 = vand.u32 %v668, 4294901760
        %v1258 = vsub.f32 %v668, %v1257
        %v1259 = vand.u32 %v1258, 4294901760
        %1260 = vmatpush1.msra.mxu0 %v1259
        %1261 = vmatprep.subr.mxu0 0.0
        %v1262 = vand.u32 %v669, 4294901760
        %v1263 = vsub.f32 %v669, %v1262
        %v1264 = vand.u32 %v1263, 4294901760
        %1265 = vmatpush1.msra.mxu0 %v1264
        %1266 = vmatprep.subr.mxu0 0.0
        %1267 = vmatpush1.msra.mxu0 0.0
        %1268 = vmatprep.subr.mxu0 0.0
        %1269 = vmatpush1.msra.mxu0 0.0
        %1270 = vmatprep.subr.mxu0 0.0
        %1271 = vmatpush1.msra.mxu0 0.0
        %1272 = vmatprep.subr.mxu0 0.0
        %1273 = vmatpush1.msra.mxu0 0.0
        %1274 = vmatprep.subr.mxu0 0.0
        %1275 = vmatpush1.msra.mxu0 0.0
        %1276 = vmatprep.subr.mxu0 0.0
        %1277 = vmatpush1.msra.mxu0 0.0
        %1278 = vmatprep.subr.mxu0 0.0
        %1279 = vmatpush1.msra.mxu0 0.0
        %1280 = vmatprep.subr.mxu0 0.0
        %1281 = vmatpush1.msra.mxu0 0.0
        %1282 = vmatprep.subr.mxu0 0.0
        %1283 = vmatpush1.msra.mxu0 0.0
        %1284 = vmatprep.subr.mxu0 0.0
        %1285 = vmatpush1.msra.mxu0 0.0
        %1286 = vmatprep.subr.mxu0 0.0
        %1287 = vmatpush1.msra.mxu0 0.0
        %1288 = vmatprep.subr.mxu0 0.0
        %1289 = vmatpush1.msra.mxu0 0.0
        %1290 = vmatprep.subr.mxu0 0.0
        %1291 = vmatpush1.msra.mxu0 0.0
        %1292 = vmatprep.subr.mxu0 0.0
        %1293 = vmatpush1.msra.mxu0 0.0
        %1294 = vmatprep.subr.mxu0 0.0
        %1295 = vmatpush1.msra.mxu0 0.0
        %1296 = vmatprep.subr.mxu0 0.0
        %1297 = vmatpush1.msra.mxu0 0.0
        %1298 = vmatprep.subr.mxu0 0.0
        %1299 = vmatpush1.msra.mxu0 0.0
        %1300 = vmatprep.subr.mxu0 0.0
        %1301 = vmatpush1.msra.mxu0 0.0
        %1302 = vmatprep.subr.mxu0 0.0
        %1303 = vmatpush1.msra.mxu0 0.0
        %1304 = vmatprep.subr.mxu0 0.0
        %1305 = vmatpush1.msra.mxu0 0.0
        %1306 = vmatprep.subr.mxu0 0.0
        %1307 = vmatpush1.msra.mxu0 0.0
        %1308 = vmatprep.subr.mxu0 0.0
        %1309 = vmatpush1.msra.mxu0 0.0
        %1310 = vmatprep.subr.mxu0 0.0
        %1311 = vmatpush1.msra.mxu0 0.0
        %1312 = vmatprep.subr.mxu0 0.0
        %1313 = vmatpush1.msra.mxu0 0.0
        %1314 = vmatprep.subr.mxu0 0.0
        %1315 = vmatpush1.msra.mxu0 0.0
        %1316 = vmatprep.subr.mxu0 0.0
        %1317 = vmatpush1.msra.mxu0 0.0
        %1318 = vmatprep.subr.mxu0 0.0
        %1319 = vmatpush1.msra.mxu0 0.0
        %1320 = vmatprep.subr.mxu0 0.0
        %1321 = vmatpush1.msra.mxu0 0.0
        %1322 = vmatprep.mubr.f32.mxu0 0.0
        %v1323 = vand.u32 %v679, 4294901760
        %1324 = vmatmul.mubr.f32.gmra.mrb[0].mxu0 %v1323
        %v1325 = vpop.f32.mrb[0].mxu0
        %v1326 = vadd.f32 %v1187, %v1325
        %v1327 = vpop.f32.mrb[0].mxu0
        %1328 = vmatprep.mubr.f32.mxu0 0.0
        %v1329 = vand.u32 %v682, 4294901760
        %1330 = vmatmul.mubr.f32.gmra.mrb[0].mxu0 %v1329
        %v1331 = vpop.f32.mrb[0].mxu0
        %v1332 = vadd.f32 %v1195, %v1331
        %v1333 = vpop.f32.mrb[0].mxu0
        %1334 = vmatprep.mubr.f32.mxu0 0.0
        %v1335 = vand.u32 %v685, 4294901760
        %1336 = vmatmul.mubr.f32.gmra.mrb[0].mxu0 %v1335
        %v1337 = vpop.f32.mrb[0].mxu0
        %v1338 = vadd.f32 %v1203, %v1337
        %v1339 = vpop.f32.mrb[0].mxu0
        %1340 = vmatprep.mubr.f32.mxu0 0.0
        %v1341 = vand.u32 %v688, 4294901760
        %1342 = vmatmul.mubr.f32.gmra.mrb[0].mxu0 %v1341
        %v1343 = vpop.f32.mrb[0].mxu0
        %v1344 = vadd.f32 %v1211, %v1343
        %v1345 = vpop.f32.mrb[0].mxu0
        %1346 = vmatprep.mubr.f32.mxu0 0.0
        %v1347 = vand.u32 %v691, 4294901760
        %1348 = vmatmul.mubr.f32.gmra.mrb[0].mxu0 %v1347
        %v1349 = vpop.f32.mrb[0].mxu0
        %v1350 = vadd.f32 %v1219, %v1349
        %v1351 = vpop.f32.mrb[0].mxu0
        %1352 = vmatprep.mubr.f32.mxu0 0.0
        %v1353 = vand.u32 %v694, 4294901760
        %1354 = vmatmul.mubr.f32.gmra.mrb[0].mxu0 %v1353
        %v1355 = vpop.f32.mrb[0].mxu0
        %v1356 = vadd.f32 %v1227, %v1355
        %v1357 = vpop.f32.mrb[0].mxu0
        %1358 = vmatprep.mubr.f32.mxu0 0.0
        %v1359 = vand.u32 %v697, 4294901760
        %1360 = vmatmul.mubr.f32.gmra.mrb[0].mxu0 %v1359
        %v1361 = vpop.f32.mrb[0].mxu0
        %v1362 = vadd.f32 %v1235, %v1361
        %v1363 = vpop.f32.mrb[0].mxu0
        %1364 = vmatprep.mubr.f32.mxu0 0.0
        %v1365 = vand.u32 %v700, 4294901760
        %1366 = vmatmul.mubr.f32.gmra.mrb[0].mxu0 %v1365
        %v1367 = vpop.f32.mrb[0].mxu0
        %v1368 = vadd.f32 %v1243, %v1367
        %v1369 = vpop.f32.mrb[0].mxu0
        %1370 = vdwg.mxu0
        %1371 = vmatprep.subr.mxu0 0.0
        %v1372 = vand.u32 %v666, 4294901760
        %1373 = vmatpush1.msra.mxu0 %v1372
        %1374 = vmatprep.subr.mxu0 0.0
        %v1375 = vand.u32 %v667, 4294901760
        %1376 = vmatpush1.msra.mxu0 %v1375
        %1377 = vmatprep.subr.mxu0 0.0
        %v1378 = vand.u32 %v668, 4294901760
        %1379 = vmatpush1.msra.mxu0 %v1378
        %1380 = vmatprep.subr.mxu0 0.0
        %v1381 = vand.u32 %v669, 4294901760
        %1382 = vmatpush1.msra.mxu0 %v1381
        %1383 = vmatprep.subr.mxu0 0.0
        %1384 = vmatpush1.msra.mxu0 0.0
        %1385 = vmatprep.subr.mxu0 0.0
        %1386 = vmatpush1.msra.mxu0 0.0
        %1387 = vmatprep.subr.mxu0 0.0
        %1388 = vmatpush1.msra.mxu0 0.0
        %1389 = vmatprep.subr.mxu0 0.0
        %1390 = vmatpush1.msra.mxu0 0.0
        %1391 = vmatprep.subr.mxu0 0.0
        %1392 = vmatpush1.msra.mxu0 0.0
        %1393 = vmatprep.subr.mxu0 0.0
        %1394 = vmatpush1.msra.mxu0 0.0
        %1395 = vmatprep.subr.mxu0 0.0
        %1396 = vmatpush1.msra.mxu0 0.0
        %1397 = vmatprep.subr.mxu0 0.0
        %1398 = vmatpush1.msra.mxu0 0.0
        %1399 = vmatprep.subr.mxu0 0.0
        %1400 = vmatpush1.msra.mxu0 0.0
        %1401 = vmatprep.subr.mxu0 0.0
        %1402 = vmatpush1.msra.mxu0 0.0
        %1403 = vmatprep.subr.mxu0 0.0
        %1404 = vmatpush1.msra.mxu0 0.0
        %1405 = vmatprep.subr.mxu0 0.0
        %1406 = vmatpush1.msra.mxu0 0.0
        %1407 = vmatprep.subr.mxu0 0.0
        %1408 = vmatpush1.msra.mxu0 0.0
        %1409 = vmatprep.subr.mxu0 0.0
        %1410 = vmatpush1.msra.mxu0 0.0
        %1411 = vmatprep.subr.mxu0 0.0
        %1412 = vmatpush1.msra.mxu0 0.0
        %1413 = vmatprep.subr.mxu0 0.0
        %1414 = vmatpush1.msra.mxu0 0.0
        %1415 = vmatprep.subr.mxu0 0.0
        %1416 = vmatpush1.msra.mxu0 0.0
        %1417 = vmatprep.subr.mxu0 0.0
        %1418 = vmatpush1.msra.mxu0 0.0
        %1419 = vmatprep.subr.mxu0 0.0
        %1420 = vmatpush1.msra.mxu0 0.0
        %1421 = vmatprep.subr.mxu0 0.0
        %1422 = vmatpush1.msra.mxu0 0.0
        %1423 = vmatprep.subr.mxu0 0.0
        %1424 = vmatpush1.msra.mxu0 0.0
        %1425 = vmatprep.subr.mxu0 0.0
        %1426 = vmatpush1.msra.mxu0 0.0
        %1427 = vmatprep.subr.mxu0 0.0
        %1428 = vmatpush1.msra.mxu0 0.0
        %1429 = vmatprep.subr.mxu0 0.0
        %1430 = vmatpush1.msra.mxu0 0.0
        %1431 = vmatprep.subr.mxu0 0.0
        %1432 = vmatpush1.msra.mxu0 0.0
        %1433 = vmatprep.subr.mxu0 0.0
        %1434 = vmatpush1.msra.mxu0 0.0
        %1435 = vmatprep.subr.mxu0 0.0
        %1436 = vmatpush1.msra.mxu0 0.0
        %1437 = vmatprep.subr.mxu0 0.0
        %1438 = vmatpush1.msra.mxu0 0.0
        %1439 = vmatprep.mubr.f32.mxu0 0.0
        %v1440 = vand.u32 %v679, 4294901760
        %1441 = vmatmul.mubr.f32.gmra.mrb[0].mxu0 %v1440
        %v1442 = vpop.f32.mrb[0].mxu0
        %v1443 = vadd.f32 %v1326, %v1442
        %v1444 = vpop.f32.mrb[0].mxu0
        %1445 = vmatprep.mubr.f32.mxu0 0.0
        %v1446 = vand.u32 %v682, 4294901760
        %1447 = vmatmul.mubr.f32.gmra.mrb[0].mxu0 %v1446
        %v1448 = vpop.f32.mrb[0].mxu0
        %v1449 = vadd.f32 %v1332, %v1448
        %v1450 = vpop.f32.mrb[0].mxu0
        %1451 = vmatprep.mubr.f32.mxu0 0.0
        %v1452 = vand.u32 %v685, 4294901760
        %1453 = vmatmul.mubr.f32.gmra.mrb[0].mxu0 %v1452
        %v1454 = vpop.f32.mrb[0].mxu0
        %v1455 = vadd.f32 %v1338, %v1454
        %v1456 = vpop.f32.mrb[0].mxu0
        %1457 = vmatprep.mubr.f32.mxu0 0.0
        %v1458 = vand.u32 %v688, 4294901760
        %1459 = vmatmul.mubr.f32.gmra.mrb[0].mxu0 %v1458
        %v1460 = vpop.f32.mrb[0].mxu0
        %v1461 = vadd.f32 %v1344, %v1460
        %v1462 = vpop.f32.mrb[0].mxu0
        %1463 = vmatprep.mubr.f32.mxu0 0.0
        %v1464 = vand.u32 %v691, 4294901760
        %1465 = vmatmul.mubr.f32.gmra.mrb[0].mxu0 %v1464
        %v1466 = vpop.f32.mrb[0].mxu0
        %v1467 = vadd.f32 %v1350, %v1466
        %v1468 = vpop.f32.mrb[0].mxu0
        %1469 = vmatprep.mubr.f32.mxu0 0.0
        %v1470 = vand.u32 %v694, 4294901760
        %1471 = vmatmul.mubr.f32.gmra.mrb[0].mxu0 %v1470
        %v1472 = vpop.f32.mrb[0].mxu0
        %v1473 = vadd.f32 %v1356, %v1472
        %v1474 = vpop.f32.mrb[0].mxu0
        %1475 = vmatprep.mubr.f32.mxu0 0.0
        %v1476 = vand.u32 %v697, 4294901760
        %1477 = vmatmul.mubr.f32.gmra.mrb[0].mxu0 %v1476
        %v1478 = vpop.f32.mrb[0].mxu0
        %v1479 = vadd.f32 %v1362, %v1478
        %v1480 = vpop.f32.mrb[0].mxu0
        %1481 = vmatprep.mubr.f32.mxu0 0.0
        %v1482 = vand.u32 %v700, 4294901760
        %1483 = vmatmul.mubr.f32.gmra.mrb[0].mxu0 %v1482
        %v1484 = vpop.f32.mrb[0].mxu0
        %v1485 = vadd.f32 %v1368, %v1484
        %v1486 = vpop.f32.mrb[0].mxu0
        %1487 = vdwg.mxu0
        %v1488 = vtanh.pop %v1443
        %v1489 = vtanh.pop %v1449
        %v1490 = vtanh.pop %v1455
        %v1491 = vtanh.pop %v1461
        %v1492 = vtanh.pop %v1467
        %v1493 = vtanh.pop %v1473
        %v1494 = vtanh.pop %v1479
        %v1495 = vtanh.pop %v1485
        %v1496 = vld [vmem:[%s7] sm:$0xff]
        %v1497 = vld [vmem:[%s7 + $0x8] sm:$0xff]
        %v1498 = vld [vmem:[%s7 + $0x10] sm:$0xff]
        %v1499 = vld [vmem:[%s7 + $0x18] sm:$0xff]
        %v1500 = vld [vmem:[%s7 + $0x20] sm:$0xff]
        %v1501 = vld [vmem:[%s7 + $0x28] sm:$0xff]
        %v1502 = vld [vmem:[%s7 + $0x30] sm:$0xff]
        %v1503 = vld [vmem:[%s7 + $0x38] sm:$0xff]
        %v1504 = vld [vmem:[%s8] sm:$0x1]
        %v1506 = vlaneseq
        %v1507 = vshrl.u32 %v1506, 7
        %v1508 = vsub.s32 0, %v1507
        %v1509 = vrot.slane %v1504, %v1508
        %vm1511 = vcmask 523264
        %v1513 = vsel %vm1511, %v1488, 0
        %v1516 = vsel %vm1511, %v1489, 0
        %v1519 = vsel %vm1511, %v1490, 0
        %v1522 = vsel %vm1511, %v1491, 0
        %v1525 = vsel %vm1511, %v1492, 0
        %v1528 = vsel %vm1511, %v1493, 0
        %v1531 = vsel %vm1511, %v1494, 0
        %v1534 = vsel %vm1511, %v1495, 0
        %1536 = vmatprep.subr.mxu0 0.0
        %v1537 = vand.u32 %v1496, 4294901760
        %1538 = vmatpush1.msra.mxu0 %v1537
        %1539 = vmatprep.subr.mxu0 0.0
        %v1540 = vand.u32 %v1497, 4294901760
        %1541 = vmatpush1.msra.mxu0 %v1540
        %1542 = vmatprep.subr.mxu0 0.0
        %v1543 = vand.u32 %v1498, 4294901760
        %1544 = vmatpush1.msra.mxu0 %v1543
        %1545 = vmatprep.subr.mxu0 0.0
        %v1546 = vand.u32 %v1499, 4294901760
        %1547 = vmatpush1.msra.mxu0 %v1546
        %1548 = vmatprep.subr.mxu0 0.0
        %v1549 = vand.u32 %v1500, 4294901760
        %1550 = vmatpush1.msra.mxu0 %v1549
        %1551 = vmatprep.subr.mxu0 0.0
        %v1552 = vand.u32 %v1501, 4294901760
        %1553 = vmatpush1.msra.mxu0 %v1552
        %1554 = vmatprep.subr.mxu0 0.0
        %v1555 = vand.u32 %v1502, 4294901760
        %1556 = vmatpush1.msra.mxu0 %v1555
        %1557 = vmatprep.subr.mxu0 0.0
        %v1558 = vand.u32 %v1503, 4294901760
        %1559 = vmatpush1.msra.mxu0 %v1558
        %1560 = vmatprep.subr.mxu0 0.0
        %1561 = vmatpush1.msra.mxu0 0.0
        %1562 = vmatprep.subr.mxu0 0.0
        %1563 = vmatpush1.msra.mxu0 0.0
        %1564 = vmatprep.subr.mxu0 0.0
        %1565 = vmatpush1.msra.mxu0 0.0
        %1566 = vmatprep.subr.mxu0 0.0
        %1567 = vmatpush1.msra.mxu0 0.0
        %1568 = vmatprep.subr.mxu0 0.0
        %1569 = vmatpush1.msra.mxu0 0.0
        %1570 = vmatprep.subr.mxu0 0.0
        %1571 = vmatpush1.msra.mxu0 0.0
        %1572 = vmatprep.subr.mxu0 0.0
        %1573 = vmatpush1.msra.mxu0 0.0
        %1574 = vmatprep.subr.mxu0 0.0
        %1575 = vmatpush1.msra.mxu0 0.0
        %1576 = vmatprep.subr.mxu0 0.0
        %1577 = vmatpush1.msra.mxu0 0.0
        %1578 = vmatprep.subr.mxu0 0.0
        %1579 = vmatpush1.msra.mxu0 0.0
        %1580 = vmatprep.subr.mxu0 0.0
        %1581 = vmatpush1.msra.mxu0 0.0
        %1582 = vmatprep.subr.mxu0 0.0
        %1583 = vmatpush1.msra.mxu0 0.0
        %1584 = vmatprep.subr.mxu0 0.0
        %1585 = vmatpush1.msra.mxu0 0.0
        %1586 = vmatprep.subr.mxu0 0.0
        %1587 = vmatpush1.msra.mxu0 0.0
        %1588 = vmatprep.subr.mxu0 0.0
        %1589 = vmatpush1.msra.mxu0 0.0
        %1590 = vmatprep.subr.mxu0 0.0
        %1591 = vmatpush1.msra.mxu0 0.0
        %1592 = vmatprep.subr.mxu0 0.0
        %1593 = vmatpush1.msra.mxu0 0.0
        %1594 = vmatprep.subr.mxu0 0.0
        %1595 = vmatpush1.msra.mxu0 0.0
        %1596 = vmatprep.subr.mxu0 0.0
        %1597 = vmatpush1.msra.mxu0 0.0
        %1598 = vmatprep.subr.mxu0 0.0
        %1599 = vmatpush1.msra.mxu0 0.0
        %1600 = vmatprep.subr.mxu0 0.0
        %1601 = vmatpush1.msra.mxu0 0.0
        %1602 = vmatprep.subr.mxu0 0.0
        %1603 = vmatpush1.msra.mxu0 0.0
        %1604 = vmatprep.subr.mxu0 0.0
        %1605 = vmatpush1.msra.mxu0 0.0
        %1606 = vmatprep.subr.mxu0 0.0
        %1607 = vmatpush1.msra.mxu0 0.0
        %1608 = vmatprep.mubr.f32.mxu0 0.0
        %v1609 = vand.u32 %v1513, 4294901760
        %v1610 = vsub.f32 %v1513, %v1609
        %v1611 = vand.u32 %v1610, 4294901760
        %v1612 = vsub.f32 %v1610, %v1611
        %v1613 = vand.u32 %v1612, 4294901760
        %1614 = vmatmul.mubr.f32.gmra.mrb[0].mxu0 %v1613
        %v1615 = vpop.f32.mrb[0].mxu0
        %v1616 = vadd.f32 %v1509, %v1615
        %v1617 = vpop.f32.mrb[0].mxu0
        %1618 = vmatprep.mubr.f32.mxu0 0.0
        %v1619 = vand.u32 %v1516, 4294901760
        %v1620 = vsub.f32 %v1516, %v1619
        %v1621 = vand.u32 %v1620, 4294901760
        %v1622 = vsub.f32 %v1620, %v1621
        %v1623 = vand.u32 %v1622, 4294901760
        %1624 = vmatmul.mubr.f32.gmra.mrb[0].mxu0 %v1623
        %v1625 = vpop.f32.mrb[0].mxu0
        %v1626 = vadd.f32 %v1509, %v1625
        %v1627 = vpop.f32.mrb[0].mxu0
        %1628 = vmatprep.mubr.f32.mxu0 0.0
        %v1629 = vand.u32 %v1519, 4294901760
        %v1630 = vsub.f32 %v1519, %v1629
        %v1631 = vand.u32 %v1630, 4294901760
        %v1632 = vsub.f32 %v1630, %v1631
        %v1633 = vand.u32 %v1632, 4294901760
        %1634 = vmatmul.mubr.f32.gmra.mrb[0].mxu0 %v1633
        %v1635 = vpop.f32.mrb[0].mxu0
        %v1636 = vadd.f32 %v1509, %v1635
        %v1637 = vpop.f32.mrb[0].mxu0
        %1638 = vmatprep.mubr.f32.mxu0 0.0
        %v1639 = vand.u32 %v1522, 4294901760
        %v1640 = vsub.f32 %v1522, %v1639
        %v1641 = vand.u32 %v1640, 4294901760
        %v1642 = vsub.f32 %v1640, %v1641
        %v1643 = vand.u32 %v1642, 4294901760
        %1644 = vmatmul.mubr.f32.gmra.mrb[0].mxu0 %v1643
        %v1645 = vpop.f32.mrb[0].mxu0
        %v1646 = vadd.f32 %v1509, %v1645
        %v1647 = vpop.f32.mrb[0].mxu0
        %1648 = vmatprep.mubr.f32.mxu0 0.0
        %v1649 = vand.u32 %v1525, 4294901760
        %v1650 = vsub.f32 %v1525, %v1649
        %v1651 = vand.u32 %v1650, 4294901760
        %v1652 = vsub.f32 %v1650, %v1651
        %v1653 = vand.u32 %v1652, 4294901760
        %1654 = vmatmul.mubr.f32.gmra.mrb[0].mxu0 %v1653
        %v1655 = vpop.f32.mrb[0].mxu0
        %v1656 = vadd.f32 %v1509, %v1655
        %v1657 = vpop.f32.mrb[0].mxu0
        %1658 = vmatprep.mubr.f32.mxu0 0.0
        %v1659 = vand.u32 %v1528, 4294901760
        %v1660 = vsub.f32 %v1528, %v1659
        %v1661 = vand.u32 %v1660, 4294901760
        %v1662 = vsub.f32 %v1660, %v1661
        %v1663 = vand.u32 %v1662, 4294901760
        %1664 = vmatmul.mubr.f32.gmra.mrb[0].mxu0 %v1663
        %v1665 = vpop.f32.mrb[0].mxu0
        %v1666 = vadd.f32 %v1509, %v1665
        %v1667 = vpop.f32.mrb[0].mxu0
        %1668 = vmatprep.mubr.f32.mxu0 0.0
        %v1669 = vand.u32 %v1531, 4294901760
        %v1670 = vsub.f32 %v1531, %v1669
        %v1671 = vand.u32 %v1670, 4294901760
        %v1672 = vsub.f32 %v1670, %v1671
        %v1673 = vand.u32 %v1672, 4294901760
        %1674 = vmatmul.mubr.f32.gmra.mrb[0].mxu0 %v1673
        %v1675 = vpop.f32.mrb[0].mxu0
        %v1676 = vadd.f32 %v1509, %v1675
        %v1677 = vpop.f32.mrb[0].mxu0
        %1678 = vmatprep.mubr.f32.mxu0 0.0
        %v1679 = vand.u32 %v1534, 4294901760
        %v1680 = vsub.f32 %v1534, %v1679
        %v1681 = vand.u32 %v1680, 4294901760
        %v1682 = vsub.f32 %v1680, %v1681
        %v1683 = vand.u32 %v1682, 4294901760
        %1684 = vmatmul.mubr.f32.gmra.mrb[0].mxu0 %v1683
        %v1685 = vpop.f32.mrb[0].mxu0
        %v1686 = vadd.f32 %v1509, %v1685
        %v1687 = vpop.f32.mrb[0].mxu0
        %1688 = vdwg.mxu0
        %1689 = vmatprep.subr.mxu0 0.0
        %v1690 = vand.u32 %v1496, 4294901760
        %v1691 = vsub.f32 %v1496, %v1690
        %v1692 = vand.u32 %v1691, 4294901760
        %v1693 = vsub.f32 %v1691, %v1692
        %v1694 = vand.u32 %v1693, 4294901760
        %1695 = vmatpush1.msra.mxu0 %v1694
        %1696 = vmatprep.subr.mxu0 0.0
        %v1697 = vand.u32 %v1497, 4294901760
        %v1698 = vsub.f32 %v1497, %v1697
        %v1699 = vand.u32 %v1698, 4294901760
        %v1700 = vsub.f32 %v1698, %v1699
        %v1701 = vand.u32 %v1700, 4294901760
        %1702 = vmatpush1.msra.mxu0 %v1701
        %1703 = vmatprep.subr.mxu0 0.0
        %v1704 = vand.u32 %v1498, 4294901760
        %v1705 = vsub.f32 %v1498, %v1704
        %v1706 = vand.u32 %v1705, 4294901760
        %v1707 = vsub.f32 %v1705, %v1706
        %v1708 = vand.u32 %v1707, 4294901760
        %1709 = vmatpush1.msra.mxu0 %v1708
        %1710 = vmatprep.subr.mxu0 0.0
        %v1711 = vand.u32 %v1499, 4294901760
        %v1712 = vsub.f32 %v1499, %v1711
        %v1713 = vand.u32 %v1712, 4294901760
        %v1714 = vsub.f32 %v1712, %v1713
        %v1715 = vand.u32 %v1714, 4294901760
        %1716 = vmatpush1.msra.mxu0 %v1715
        %1717 = vmatprep.subr.mxu0 0.0
        %v1718 = vand.u32 %v1500, 4294901760
        %v1719 = vsub.f32 %v1500, %v1718
        %v1720 = vand.u32 %v1719, 4294901760
        %v1721 = vsub.f32 %v1719, %v1720
        %v1722 = vand.u32 %v1721, 4294901760
        %1723 = vmatpush1.msra.mxu0 %v1722
        %1724 = vmatprep.subr.mxu0 0.0
        %v1725 = vand.u32 %v1501, 4294901760
        %v1726 = vsub.f32 %v1501, %v1725
        %v1727 = vand.u32 %v1726, 4294901760
        %v1728 = vsub.f32 %v1726, %v1727
        %v1729 = vand.u32 %v1728, 4294901760
        %1730 = vmatpush1.msra.mxu0 %v1729
        %1731 = vmatprep.subr.mxu0 0.0
        %v1732 = vand.u32 %v1502, 4294901760
        %v1733 = vsub.f32 %v1502, %v1732
        %v1734 = vand.u32 %v1733, 4294901760
        %v1735 = vsub.f32 %v1733, %v1734
        %v1736 = vand.u32 %v1735, 4294901760
        %1737 = vmatpush1.msra.mxu0 %v1736
        %1738 = vmatprep.subr.mxu0 0.0
        %v1739 = vand.u32 %v1503, 4294901760
        %v1740 = vsub.f32 %v1503, %v1739
        %v1741 = vand.u32 %v1740, 4294901760
        %v1742 = vsub.f32 %v1740, %v1741
        %v1743 = vand.u32 %v1742, 4294901760
        %1744 = vmatpush1.msra.mxu0 %v1743
        %1745 = vmatprep.subr.mxu0 0.0
        %1746 = vmatpush1.msra.mxu0 0.0
        %1747 = vmatprep.subr.mxu0 0.0
        %1748 = vmatpush1.msra.mxu0 0.0
        %1749 = vmatprep.subr.mxu0 0.0
        %1750 = vmatpush1.msra.mxu0 0.0
        %1751 = vmatprep.subr.mxu0 0.0
        %1752 = vmatpush1.msra.mxu0 0.0
        %1753 = vmatprep.subr.mxu0 0.0
        %1754 = vmatpush1.msra.mxu0 0.0
        %1755 = vmatprep.subr.mxu0 0.0
        %1756 = vmatpush1.msra.mxu0 0.0
        %1757 = vmatprep.subr.mxu0 0.0
        %1758 = vmatpush1.msra.mxu0 0.0
        %1759 = vmatprep.subr.mxu0 0.0
        %1760 = vmatpush1.msra.mxu0 0.0
        %1761 = vmatprep.subr.mxu0 0.0
        %1762 = vmatpush1.msra.mxu0 0.0
        %1763 = vmatprep.subr.mxu0 0.0
        %1764 = vmatpush1.msra.mxu0 0.0
        %1765 = vmatprep.subr.mxu0 0.0
        %1766 = vmatpush1.msra.mxu0 0.0
        %1767 = vmatprep.subr.mxu0 0.0
        %1768 = vmatpush1.msra.mxu0 0.0
        %1769 = vmatprep.subr.mxu0 0.0
        %1770 = vmatpush1.msra.mxu0 0.0
        %1771 = vmatprep.subr.mxu0 0.0
        %1772 = vmatpush1.msra.mxu0 0.0
        %1773 = vmatprep.subr.mxu0 0.0
        %1774 = vmatpush1.msra.mxu0 0.0
        %1775 = vmatprep.subr.mxu0 0.0
        %1776 = vmatpush1.msra.mxu0 0.0
        %1777 = vmatprep.subr.mxu0 0.0
        %1778 = vmatpush1.msra.mxu0 0.0
        %1779 = vmatprep.subr.mxu0 0.0
        %1780 = vmatpush1.msra.mxu0 0.0
        %1781 = vmatprep.subr.mxu0 0.0
        %1782 = vmatpush1.msra.mxu0 0.0
        %1783 = vmatprep.subr.mxu0 0.0
        %1784 = vmatpush1.msra.mxu0 0.0
        %1785 = vmatprep.subr.mxu0 0.0
        %1786 = vmatpush1.msra.mxu0 0.0
        %1787 = vmatprep.subr.mxu0 0.0
        %1788 = vmatpush1.msra.mxu0 0.0
        %1789 = vmatprep.subr.mxu0 0.0
        %1790 = vmatpush1.msra.mxu0 0.0
        %1791 = vmatprep.subr.mxu0 0.0
        %1792 = vmatpush1.msra.mxu0 0.0
        %1793 = vmatprep.mubr.f32.mxu0 0.0
        %v1794 = vand.u32 %v1513, 4294901760
        %1795 = vmatmul.mubr.f32.gmra.mrb[0].mxu0 %v1794
        %v1796 = vpop.f32.mrb[0].mxu0
        %v1797 = vadd.f32 %v1616, %v1796
        %v1798 = vpop.f32.mrb[0].mxu0
        %1799 = vmatprep.mubr.f32.mxu0 0.0
        %v1800 = vand.u32 %v1516, 4294901760
        %1801 = vmatmul.mubr.f32.gmra.mrb[0].mxu0 %v1800
        %v1802 = vpop.f32.mrb[0].mxu0
        %v1803 = vadd.f32 %v1626, %v1802
        %v1804 = vpop.f32.mrb[0].mxu0
        %1805 = vmatprep.mubr.f32.mxu0 0.0
        %v1806 = vand.u32 %v1519, 4294901760
        %1807 = vmatmul.mubr.f32.gmra.mrb[0].mxu0 %v1806
        %v1808 = vpop.f32.mrb[0].mxu0
        %v1809 = vadd.f32 %v1636, %v1808
        %v1810 = vpop.f32.mrb[0].mxu0
        %1811 = vmatprep.mubr.f32.mxu0 0.0
        %v1812 = vand.u32 %v1522, 4294901760
        %1813 = vmatmul.mubr.f32.gmra.mrb[0].mxu0 %v1812
        %v1814 = vpop.f32.mrb[0].mxu0
        %v1815 = vadd.f32 %v1646, %v1814
        %v1816 = vpop.f32.mrb[0].mxu0
        %1817 = vmatprep.mubr.f32.mxu0 0.0
        %v1818 = vand.u32 %v1525, 4294901760
        %1819 = vmatmul.mubr.f32.gmra.mrb[0].mxu0 %v1818
        %v1820 = vpop.f32.mrb[0].mxu0
        %v1821 = vadd.f32 %v1656, %v1820
        %v1822 = vpop.f32.mrb[0].mxu0
        %1823 = vmatprep.mubr.f32.mxu0 0.0
        %v1824 = vand.u32 %v1528, 4294901760
        %1825 = vmatmul.mubr.f32.gmra.mrb[0].mxu0 %v1824
        %v1826 = vpop.f32.mrb[0].mxu0
        %v1827 = vadd.f32 %v1666, %v1826
        %v1828 = vpop.f32.mrb[0].mxu0
        %1829 = vmatprep.mubr.f32.mxu0 0.0
        %v1830 = vand.u32 %v1531, 4294901760
        %1831 = vmatmul.mubr.f32.gmra.mrb[0].mxu0 %v1830
        %v1832 = vpop.f32.mrb[0].mxu0
        %v1833 = vadd.f32 %v1676, %v1832
        %v1834 = vpop.f32.mrb[0].mxu0
        %1835 = vmatprep.mubr.f32.mxu0 0.0
        %v1836 = vand.u32 %v1534, 4294901760
        %1837 = vmatmul.mubr.f32.gmra.mrb[0].mxu0 %v1836
        %v1838 = vpop.f32.mrb[0].mxu0
        %v1839 = vadd.f32 %v1686, %v1838
        %v1840 = vpop.f32.mrb[0].mxu0
        %1841 = vdwg.mxu0
        %1842 = vmatprep.subr.mxu0 0.0
        %v1843 = vand.u32 %v1496, 4294901760
        %v1844 = vsub.f32 %v1496, %v1843
        %1845 = vmatpush1.msra.mxu0 %v1844
        %1846 = vmatprep.subr.mxu0 0.0
        %v1847 = vand.u32 %v1497, 4294901760
        %v1848 = vsub.f32 %v1497, %v1847
        %1849 = vmatpush1.msra.mxu0 %v1848
        %1850 = vmatprep.subr.mxu0 0.0
        %v1851 = vand.u32 %v1498, 4294901760
        %v1852 = vsub.f32 %v1498, %v1851
        %1853 = vmatpush1.msra.mxu0 %v1852
        %1854 = vmatprep.subr.mxu0 0.0
        %v1855 = vand.u32 %v1499, 4294901760
        %v1856 = vsub.f32 %v1499, %v1855
        %1857 = vmatpush1.msra.mxu0 %v1856
        %1858 = vmatprep.subr.mxu0 0.0
        %v1859 = vand.u32 %v1500, 4294901760
        %v1860 = vsub.f32 %v1500, %v1859
        %1861 = vmatpush1.msra.mxu0 %v1860
        %1862 = vmatprep.subr.mxu0 0.0
        %v1863 = vand.u32 %v1501, 4294901760
        %v1864 = vsub.f32 %v1501, %v1863
        %1865 = vmatpush1.msra.mxu0 %v1864
        %1866 = vmatprep.subr.mxu0 0.0
        %v1867 = vand.u32 %v1502, 4294901760
        %v1868 = vsub.f32 %v1502, %v1867
        %1869 = vmatpush1.msra.mxu0 %v1868
        %1870 = vmatprep.subr.mxu0 0.0
        %v1871 = vand.u32 %v1503, 4294901760
        %v1872 = vsub.f32 %v1503, %v1871
        %1873 = vmatpush1.msra.mxu0 %v1872
        %1874 = vmatprep.subr.mxu0 0.0
        %1875 = vmatpush1.msra.mxu0 0.0
        %1876 = vmatprep.subr.mxu0 0.0
        %1877 = vmatpush1.msra.mxu0 0.0
        %1878 = vmatprep.subr.mxu0 0.0
        %1879 = vmatpush1.msra.mxu0 0.0
        %1880 = vmatprep.subr.mxu0 0.0
        %1881 = vmatpush1.msra.mxu0 0.0
        %1882 = vmatprep.subr.mxu0 0.0
        %1883 = vmatpush1.msra.mxu0 0.0
        %1884 = vmatprep.subr.mxu0 0.0
        %1885 = vmatpush1.msra.mxu0 0.0
        %1886 = vmatprep.subr.mxu0 0.0
        %1887 = vmatpush1.msra.mxu0 0.0
        %1888 = vmatprep.subr.mxu0 0.0
        %1889 = vmatpush1.msra.mxu0 0.0
        %1890 = vmatprep.subr.mxu0 0.0
        %1891 = vmatpush1.msra.mxu0 0.0
        %1892 = vmatprep.subr.mxu0 0.0
        %1893 = vmatpush1.msra.mxu0 0.0
        %1894 = vmatprep.subr.mxu0 0.0
        %1895 = vmatpush1.msra.mxu0 0.0
        %1896 = vmatprep.subr.mxu0 0.0
        %1897 = vmatpush1.msra.mxu0 0.0
        %1898 = vmatprep.subr.mxu0 0.0
        %1899 = vmatpush1.msra.mxu0 0.0
        %1900 = vmatprep.subr.mxu0 0.0
        %1901 = vmatpush1.msra.mxu0 0.0
        %1902 = vmatprep.subr.mxu0 0.0
        %1903 = vmatpush1.msra.mxu0 0.0
        %1904 = vmatprep.subr.mxu0 0.0
        %1905 = vmatpush1.msra.mxu0 0.0
        %1906 = vmatprep.subr.mxu0 0.0
        %1907 = vmatpush1.msra.mxu0 0.0
        %1908 = vmatprep.subr.mxu0 0.0
        %1909 = vmatpush1.msra.mxu0 0.0
        %1910 = vmatprep.subr.mxu0 0.0
        %1911 = vmatpush1.msra.mxu0 0.0
        %1912 = vmatprep.subr.mxu0 0.0
        %1913 = vmatpush1.msra.mxu0 0.0
        %1914 = vmatprep.subr.mxu0 0.0
        %1915 = vmatpush1.msra.mxu0 0.0
        %1916 = vmatprep.subr.mxu0 0.0
        %1917 = vmatpush1.msra.mxu0 0.0
        %1918 = vmatprep.subr.mxu0 0.0
        %1919 = vmatpush1.msra.mxu0 0.0
        %1920 = vmatprep.subr.mxu0 0.0
        %1921 = vmatpush1.msra.mxu0 0.0
        %1922 = vmatprep.mubr.f32.mxu0 0.0
        %v1923 = vand.u32 %v1513, 4294901760
        %v1924 = vsub.f32 %v1513, %v1923
        %1925 = vmatmul.mubr.f32.gmra.mrb[0].mxu0 %v1924
        %v1926 = vpop.f32.mrb[0].mxu0
        %v1927 = vadd.f32 %v1797, %v1926
        %v1928 = vpop.f32.mrb[0].mxu0
        %1929 = vmatprep.mubr.f32.mxu0 0.0
        %v1930 = vand.u32 %v1516, 4294901760
        %v1931 = vsub.f32 %v1516, %v1930
        %1932 = vmatmul.mubr.f32.gmra.mrb[0].mxu0 %v1931
        %v1933 = vpop.f32.mrb[0].mxu0
        %v1934 = vadd.f32 %v1803, %v1933
        %v1935 = vpop.f32.mrb[0].mxu0
        %1936 = vmatprep.mubr.f32.mxu0 0.0
        %v1937 = vand.u32 %v1519, 4294901760
        %v1938 = vsub.f32 %v1519, %v1937
        %1939 = vmatmul.mubr.f32.gmra.mrb[0].mxu0 %v1938
        %v1940 = vpop.f32.mrb[0].mxu0
        %v1941 = vadd.f32 %v1809, %v1940
        %v1942 = vpop.f32.mrb[0].mxu0
        %1943 = vmatprep.mubr.f32.mxu0 0.0
        %v1944 = vand.u32 %v1522, 4294901760
        %v1945 = vsub.f32 %v1522, %v1944
        %1946 = vmatmul.mubr.f32.gmra.mrb[0].mxu0 %v1945
        %v1947 = vpop.f32.mrb[0].mxu0
        %v1948 = vadd.f32 %v1815, %v1947
        %v1949 = vpop.f32.mrb[0].mxu0
        %1950 = vmatprep.mubr.f32.mxu0 0.0
        %v1951 = vand.u32 %v1525, 4294901760
        %v1952 = vsub.f32 %v1525, %v1951
        %1953 = vmatmul.mubr.f32.gmra.mrb[0].mxu0 %v1952
        %v1954 = vpop.f32.mrb[0].mxu0
        %v1955 = vadd.f32 %v1821, %v1954
        %v1956 = vpop.f32.mrb[0].mxu0
        %1957 = vmatprep.mubr.f32.mxu0 0.0
        %v1958 = vand.u32 %v1528, 4294901760
        %v1959 = vsub.f32 %v1528, %v1958
        %1960 = vmatmul.mubr.f32.gmra.mrb[0].mxu0 %v1959
        %v1961 = vpop.f32.mrb[0].mxu0
        %v1962 = vadd.f32 %v1827, %v1961
        %v1963 = vpop.f32.mrb[0].mxu0
        %1964 = vmatprep.mubr.f32.mxu0 0.0
        %v1965 = vand.u32 %v1531, 4294901760
        %v1966 = vsub.f32 %v1531, %v1965
        %1967 = vmatmul.mubr.f32.gmra.mrb[0].mxu0 %v1966
        %v1968 = vpop.f32.mrb[0].mxu0
        %v1969 = vadd.f32 %v1833, %v1968
        %v1970 = vpop.f32.mrb[0].mxu0
        %1971 = vmatprep.mubr.f32.mxu0 0.0
        %v1972 = vand.u32 %v1534, 4294901760
        %v1973 = vsub.f32 %v1534, %v1972
        %1974 = vmatmul.mubr.f32.gmra.mrb[0].mxu0 %v1973
        %v1975 = vpop.f32.mrb[0].mxu0
        %v1976 = vadd.f32 %v1839, %v1975
        %v1977 = vpop.f32.mrb[0].mxu0
        %1978 = vdwg.mxu0
        %1979 = vmatprep.subr.mxu0 0.0
        %v1980 = vand.u32 %v1496, 4294901760
        %1981 = vmatpush1.msra.mxu0 %v1980
        %1982 = vmatprep.subr.mxu0 0.0
        %v1983 = vand.u32 %v1497, 4294901760
        %1984 = vmatpush1.msra.mxu0 %v1983
        %1985 = vmatprep.subr.mxu0 0.0
        %v1986 = vand.u32 %v1498, 4294901760
        %1987 = vmatpush1.msra.mxu0 %v1986
        %1988 = vmatprep.subr.mxu0 0.0
        %v1989 = vand.u32 %v1499, 4294901760
        %1990 = vmatpush1.msra.mxu0 %v1989
        %1991 = vmatprep.subr.mxu0 0.0
        %v1992 = vand.u32 %v1500, 4294901760
        %1993 = vmatpush1.msra.mxu0 %v1992
        %1994 = vmatprep.subr.mxu0 0.0
        %v1995 = vand.u32 %v1501, 4294901760
        %1996 = vmatpush1.msra.mxu0 %v1995
        %1997 = vmatprep.subr.mxu0 0.0
        %v1998 = vand.u32 %v1502, 4294901760
        %1999 = vmatpush1.msra.mxu0 %v1998
        %2000 = vmatprep.subr.mxu0 0.0
        %v2001 = vand.u32 %v1503, 4294901760
        %2002 = vmatpush1.msra.mxu0 %v2001
        %2003 = vmatprep.subr.mxu0 0.0
        %2004 = vmatpush1.msra.mxu0 0.0
        %2005 = vmatprep.subr.mxu0 0.0
        %2006 = vmatpush1.msra.mxu0 0.0
        %2007 = vmatprep.subr.mxu0 0.0
        %2008 = vmatpush1.msra.mxu0 0.0
        %2009 = vmatprep.subr.mxu0 0.0
        %2010 = vmatpush1.msra.mxu0 0.0
        %2011 = vmatprep.subr.mxu0 0.0
        %2012 = vmatpush1.msra.mxu0 0.0
        %2013 = vmatprep.subr.mxu0 0.0
        %2014 = vmatpush1.msra.mxu0 0.0
        %2015 = vmatprep.subr.mxu0 0.0
        %2016 = vmatpush1.msra.mxu0 0.0
        %2017 = vmatprep.subr.mxu0 0.0
        %2018 = vmatpush1.msra.mxu0 0.0
        %2019 = vmatprep.subr.mxu0 0.0
        %2020 = vmatpush1.msra.mxu0 0.0
        %2021 = vmatprep.subr.mxu0 0.0
        %2022 = vmatpush1.msra.mxu0 0.0
        %2023 = vmatprep.subr.mxu0 0.0
        %2024 = vmatpush1.msra.mxu0 0.0
        %2025 = vmatprep.subr.mxu0 0.0
        %2026 = vmatpush1.msra.mxu0 0.0
        %2027 = vmatprep.subr.mxu0 0.0
        %2028 = vmatpush1.msra.mxu0 0.0
        %2029 = vmatprep.subr.mxu0 0.0
        %2030 = vmatpush1.msra.mxu0 0.0
        %2031 = vmatprep.subr.mxu0 0.0
        %2032 = vmatpush1.msra.mxu0 0.0
        %2033 = vmatprep.subr.mxu0 0.0
        %2034 = vmatpush1.msra.mxu0 0.0
        %2035 = vmatprep.subr.mxu0 0.0
        %2036 = vmatpush1.msra.mxu0 0.0
        %2037 = vmatprep.subr.mxu0 0.0
        %2038 = vmatpush1.msra.mxu0 0.0
        %2039 = vmatprep.subr.mxu0 0.0
        %2040 = vmatpush1.msra.mxu0 0.0
        %2041 = vmatprep.subr.mxu0 0.0
        %2042 = vmatpush1.msra.mxu0 0.0
        %2043 = vmatprep.subr.mxu0 0.0
        %2044 = vmatpush1.msra.mxu0 0.0
        %2045 = vmatprep.subr.mxu0 0.0
        %2046 = vmatpush1.msra.mxu0 0.0
        %2047 = vmatprep.subr.mxu0 0.0
        %2048 = vmatpush1.msra.mxu0 0.0
        %2049 = vmatprep.subr.mxu0 0.0
        %2050 = vmatpush1.msra.mxu0 0.0
        %2051 = vmatprep.mubr.f32.mxu0 0.0
        %v2052 = vand.u32 %v1513, 4294901760
        %v2053 = vsub.f32 %v1513, %v2052
        %v2054 = vand.u32 %v2053, 4294901760
        %2055 = vmatmul.mubr.f32.gmra.mrb[0].mxu0 %v2054
        %v2056 = vpop.f32.mrb[0].mxu0
        %v2057 = vadd.f32 %v1927, %v2056
        %v2058 = vpop.f32.mrb[0].mxu0
        %2059 = vmatprep.mubr.f32.mxu0 0.0
        %v2060 = vand.u32 %v1516, 4294901760
        %v2061 = vsub.f32 %v1516, %v2060
        %v2062 = vand.u32 %v2061, 4294901760
        %2063 = vmatmul.mubr.f32.gmra.mrb[0].mxu0 %v2062
        %v2064 = vpop.f32.mrb[0].mxu0
        %v2065 = vadd.f32 %v1934, %v2064
        %v2066 = vpop.f32.mrb[0].mxu0
        %2067 = vmatprep.mubr.f32.mxu0 0.0
        %v2068 = vand.u32 %v1519, 4294901760
        %v2069 = vsub.f32 %v1519, %v2068
        %v2070 = vand.u32 %v2069, 4294901760
        %2071 = vmatmul.mubr.f32.gmra.mrb[0].mxu0 %v2070
        %v2072 = vpop.f32.mrb[0].mxu0
        %v2073 = vadd.f32 %v1941, %v2072
        %v2074 = vpop.f32.mrb[0].mxu0
        %2075 = vmatprep.mubr.f32.mxu0 0.0
        %v2076 = vand.u32 %v1522, 4294901760
        %v2077 = vsub.f32 %v1522, %v2076
        %v2078 = vand.u32 %v2077, 4294901760
        %2079 = vmatmul.mubr.f32.gmra.mrb[0].mxu0 %v2078
        %v2080 = vpop.f32.mrb[0].mxu0
        %v2081 = vadd.f32 %v1948, %v2080
        %v2082 = vpop.f32.mrb[0].mxu0
        %2083 = vmatprep.mubr.f32.mxu0 0.0
        %v2084 = vand.u32 %v1525, 4294901760
        %v2085 = vsub.f32 %v1525, %v2084
        %v2086 = vand.u32 %v2085, 4294901760
        %2087 = vmatmul.mubr.f32.gmra.mrb[0].mxu0 %v2086
        %v2088 = vpop.f32.mrb[0].mxu0
        %v2089 = vadd.f32 %v1955, %v2088
        %v2090 = vpop.f32.mrb[0].mxu0
        %2091 = vmatprep.mubr.f32.mxu0 0.0
        %v2092 = vand.u32 %v1528, 4294901760
        %v2093 = vsub.f32 %v1528, %v2092
        %v2094 = vand.u32 %v2093, 4294901760
        %2095 = vmatmul.mubr.f32.gmra.mrb[0].mxu0 %v2094
        %v2096 = vpop.f32.mrb[0].mxu0
        %v2097 = vadd.f32 %v1962, %v2096
        %v2098 = vpop.f32.mrb[0].mxu0
        %2099 = vmatprep.mubr.f32.mxu0 0.0
        %v2100 = vand.u32 %v1531, 4294901760
        %v2101 = vsub.f32 %v1531, %v2100
        %v2102 = vand.u32 %v2101, 4294901760
        %2103 = vmatmul.mubr.f32.gmra.mrb[0].mxu0 %v2102
        %v2104 = vpop.f32.mrb[0].mxu0
        %v2105 = vadd.f32 %v1969, %v2104
        %v2106 = vpop.f32.mrb[0].mxu0
        %2107 = vmatprep.mubr.f32.mxu0 0.0
        %v2108 = vand.u32 %v1534, 4294901760
        %v2109 = vsub.f32 %v1534, %v2108
        %v2110 = vand.u32 %v2109, 4294901760
        %2111 = vmatmul.mubr.f32.gmra.mrb[0].mxu0 %v2110
        %v2112 = vpop.f32.mrb[0].mxu0
        %v2113 = vadd.f32 %v1976, %v2112
        %v2114 = vpop.f32.mrb[0].mxu0
        %2115 = vdwg.mxu0
        %2116 = vmatprep.subr.mxu0 0.0
        %v2117 = vand.u32 %v1496, 4294901760
        %v2118 = vsub.f32 %v1496, %v2117
        %v2119 = vand.u32 %v2118, 4294901760
        %2120 = vmatpush1.msra.mxu0 %v2119
        %2121 = vmatprep.subr.mxu0 0.0
        %v2122 = vand.u32 %v1497, 4294901760
        %v2123 = vsub.f32 %v1497, %v2122
        %v2124 = vand.u32 %v2123, 4294901760
        %2125 = vmatpush1.msra.mxu0 %v2124
        %2126 = vmatprep.subr.mxu0 0.0
        %v2127 = vand.u32 %v1498, 4294901760
        %v2128 = vsub.f32 %v1498, %v2127
        %v2129 = vand.u32 %v2128, 4294901760
        %2130 = vmatpush1.msra.mxu0 %v2129
        %2131 = vmatprep.subr.mxu0 0.0
        %v2132 = vand.u32 %v1499, 4294901760
        %v2133 = vsub.f32 %v1499, %v2132
        %v2134 = vand.u32 %v2133, 4294901760
        %2135 = vmatpush1.msra.mxu0 %v2134
        %2136 = vmatprep.subr.mxu0 0.0
        %v2137 = vand.u32 %v1500, 4294901760
        %v2138 = vsub.f32 %v1500, %v2137
        %v2139 = vand.u32 %v2138, 4294901760
        %2140 = vmatpush1.msra.mxu0 %v2139
        %2141 = vmatprep.subr.mxu0 0.0
        %v2142 = vand.u32 %v1501, 4294901760
        %v2143 = vsub.f32 %v1501, %v2142
        %v2144 = vand.u32 %v2143, 4294901760
        %2145 = vmatpush1.msra.mxu0 %v2144
        %2146 = vmatprep.subr.mxu0 0.0
        %v2147 = vand.u32 %v1502, 4294901760
        %v2148 = vsub.f32 %v1502, %v2147
        %v2149 = vand.u32 %v2148, 4294901760
        %2150 = vmatpush1.msra.mxu0 %v2149
        %2151 = vmatprep.subr.mxu0 0.0
        %v2152 = vand.u32 %v1503, 4294901760
        %v2153 = vsub.f32 %v1503, %v2152
        %v2154 = vand.u32 %v2153, 4294901760
        %2155 = vmatpush1.msra.mxu0 %v2154
        %2156 = vmatprep.subr.mxu0 0.0
        %2157 = vmatpush1.msra.mxu0 0.0
        %2158 = vmatprep.subr.mxu0 0.0
        %2159 = vmatpush1.msra.mxu0 0.0
        %2160 = vmatprep.subr.mxu0 0.0
        %2161 = vmatpush1.msra.mxu0 0.0
        %2162 = vmatprep.subr.mxu0 0.0
        %2163 = vmatpush1.msra.mxu0 0.0
        %2164 = vmatprep.subr.mxu0 0.0
        %2165 = vmatpush1.msra.mxu0 0.0
        %2166 = vmatprep.subr.mxu0 0.0
        %2167 = vmatpush1.msra.mxu0 0.0
        %2168 = vmatprep.subr.mxu0 0.0
        %2169 = vmatpush1.msra.mxu0 0.0
        %2170 = vmatprep.subr.mxu0 0.0
        %2171 = vmatpush1.msra.mxu0 0.0
        %2172 = vmatprep.subr.mxu0 0.0
        %2173 = vmatpush1.msra.mxu0 0.0
        %2174 = vmatprep.subr.mxu0 0.0
        %2175 = vmatpush1.msra.mxu0 0.0
        %2176 = vmatprep.subr.mxu0 0.0
        %2177 = vmatpush1.msra.mxu0 0.0
        %2178 = vmatprep.subr.mxu0 0.0
        %2179 = vmatpush1.msra.mxu0 0.0
        %2180 = vmatprep.subr.mxu0 0.0
        %2181 = vmatpush1.msra.mxu0 0.0
        %2182 = vmatprep.subr.mxu0 0.0
        %2183 = vmatpush1.msra.mxu0 0.0
        %2184 = vmatprep.subr.mxu0 0.0
        %2185 = vmatpush1.msra.mxu0 0.0
        %2186 = vmatprep.subr.mxu0 0.0
        %2187 = vmatpush1.msra.mxu0 0.0
        %2188 = vmatprep.subr.mxu0 0.0
        %2189 = vmatpush1.msra.mxu0 0.0
        %2190 = vmatprep.subr.mxu0 0.0
        %2191 = vmatpush1.msra.mxu0 0.0
        %2192 = vmatprep.subr.mxu0 0.0
        %2193 = vmatpush1.msra.mxu0 0.0
        %2194 = vmatprep.subr.mxu0 0.0
        %2195 = vmatpush1.msra.mxu0 0.0
        %2196 = vmatprep.subr.mxu0 0.0
        %2197 = vmatpush1.msra.mxu0 0.0
        %2198 = vmatprep.subr.mxu0 0.0
        %2199 = vmatpush1.msra.mxu0 0.0
        %2200 = vmatprep.subr.mxu0 0.0
        %2201 = vmatpush1.msra.mxu0 0.0
        %2202 = vmatprep.subr.mxu0 0.0
        %2203 = vmatpush1.msra.mxu0 0.0
        %2204 = vmatprep.mubr.f32.mxu0 0.0
        %v2205 = vand.u32 %v1513, 4294901760
        %2206 = vmatmul.mubr.f32.gmra.mrb[0].mxu0 %v2205
        %v2207 = vpop.f32.mrb[0].mxu0
        %v2208 = vadd.f32 %v2057, %v2207
        %v2209 = vpop.f32.mrb[0].mxu0
        %2210 = vmatprep.mubr.f32.mxu0 0.0
        %v2211 = vand.u32 %v1516, 4294901760
        %2212 = vmatmul.mubr.f32.gmra.mrb[0].mxu0 %v2211
        %v2213 = vpop.f32.mrb[0].mxu0
        %v2214 = vadd.f32 %v2065, %v2213
        %v2215 = vpop.f32.mrb[0].mxu0
        %2216 = vmatprep.mubr.f32.mxu0 0.0
        %v2217 = vand.u32 %v1519, 4294901760
        %2218 = vmatmul.mubr.f32.gmra.mrb[0].mxu0 %v2217
        %v2219 = vpop.f32.mrb[0].mxu0
        %v2220 = vadd.f32 %v2073, %v2219
        %v2221 = vpop.f32.mrb[0].mxu0
        %2222 = vmatprep.mubr.f32.mxu0 0.0
        %v2223 = vand.u32 %v1522, 4294901760
        %2224 = vmatmul.mubr.f32.gmra.mrb[0].mxu0 %v2223
        %v2225 = vpop.f32.mrb[0].mxu0
        %v2226 = vadd.f32 %v2081, %v2225
        %v2227 = vpop.f32.mrb[0].mxu0
        %2228 = vmatprep.mubr.f32.mxu0 0.0
        %v2229 = vand.u32 %v1525, 4294901760
        %2230 = vmatmul.mubr.f32.gmra.mrb[0].mxu0 %v2229
        %v2231 = vpop.f32.mrb[0].mxu0
        %v2232 = vadd.f32 %v2089, %v2231
        %v2233 = vpop.f32.mrb[0].mxu0
        %2234 = vmatprep.mubr.f32.mxu0 0.0
        %v2235 = vand.u32 %v1528, 4294901760
        %2236 = vmatmul.mubr.f32.gmra.mrb[0].mxu0 %v2235
        %v2237 = vpop.f32.mrb[0].mxu0
        %v2238 = vadd.f32 %v2097, %v2237
        %v2239 = vpop.f32.mrb[0].mxu0
        %2240 = vmatprep.mubr.f32.mxu0 0.0
        %v2241 = vand.u32 %v1531, 4294901760
        %2242 = vmatmul.mubr.f32.gmra.mrb[0].mxu0 %v2241
        %v2243 = vpop.f32.mrb[0].mxu0
        %v2244 = vadd.f32 %v2105, %v2243
        %v2245 = vpop.f32.mrb[0].mxu0
        %2246 = vmatprep.mubr.f32.mxu0 0.0
        %v2247 = vand.u32 %v1534, 4294901760
        %2248 = vmatmul.mubr.f32.gmra.mrb[0].mxu0 %v2247
        %v2249 = vpop.f32.mrb[0].mxu0
        %v2250 = vadd.f32 %v2113, %v2249
        %v2251 = vpop.f32.mrb[0].mxu0
        %2252 = vdwg.mxu0
        %2253 = vmatprep.subr.mxu0 0.0
        %v2254 = vand.u32 %v1496, 4294901760
        %2255 = vmatpush1.msra.mxu0 %v2254
        %2256 = vmatprep.subr.mxu0 0.0
        %v2257 = vand.u32 %v1497, 4294901760
        %2258 = vmatpush1.msra.mxu0 %v2257
        %2259 = vmatprep.subr.mxu0 0.0
        %v2260 = vand.u32 %v1498, 4294901760
        %2261 = vmatpush1.msra.mxu0 %v2260
        %2262 = vmatprep.subr.mxu0 0.0
        %v2263 = vand.u32 %v1499, 4294901760
        %2264 = vmatpush1.msra.mxu0 %v2263
        %2265 = vmatprep.subr.mxu0 0.0
        %v2266 = vand.u32 %v1500, 4294901760
        %2267 = vmatpush1.msra.mxu0 %v2266
        %2268 = vmatprep.subr.mxu0 0.0
        %v2269 = vand.u32 %v1501, 4294901760
        %2270 = vmatpush1.msra.mxu0 %v2269
        %2271 = vmatprep.subr.mxu0 0.0
        %v2272 = vand.u32 %v1502, 4294901760
        %2273 = vmatpush1.msra.mxu0 %v2272
        %2274 = vmatprep.subr.mxu0 0.0
        %v2275 = vand.u32 %v1503, 4294901760
        %2276 = vmatpush1.msra.mxu0 %v2275
        %2277 = vmatprep.subr.mxu0 0.0
        %2278 = vmatpush1.msra.mxu0 0.0
        %2279 = vmatprep.subr.mxu0 0.0
        %2280 = vmatpush1.msra.mxu0 0.0
        %2281 = vmatprep.subr.mxu0 0.0
        %2282 = vmatpush1.msra.mxu0 0.0
        %2283 = vmatprep.subr.mxu0 0.0
        %2284 = vmatpush1.msra.mxu0 0.0
        %2285 = vmatprep.subr.mxu0 0.0
        %2286 = vmatpush1.msra.mxu0 0.0
        %2287 = vmatprep.subr.mxu0 0.0
        %2288 = vmatpush1.msra.mxu0 0.0
        %2289 = vmatprep.subr.mxu0 0.0
        %2290 = vmatpush1.msra.mxu0 0.0
        %2291 = vmatprep.subr.mxu0 0.0
        %2292 = vmatpush1.msra.mxu0 0.0
        %2293 = vmatprep.subr.mxu0 0.0
        %2294 = vmatpush1.msra.mxu0 0.0
        %2295 = vmatprep.subr.mxu0 0.0
        %2296 = vmatpush1.msra.mxu0 0.0
        %2297 = vmatprep.subr.mxu0 0.0
        %2298 = vmatpush1.msra.mxu0 0.0
        %2299 = vmatprep.subr.mxu0 0.0
        %2300 = vmatpush1.msra.mxu0 0.0
        %2301 = vmatprep.subr.mxu0 0.0
        %2302 = vmatpush1.msra.mxu0 0.0
        %2303 = vmatprep.subr.mxu0 0.0
        %2304 = vmatpush1.msra.mxu0 0.0
        %2305 = vmatprep.subr.mxu0 0.0
        %2306 = vmatpush1.msra.mxu0 0.0
        %2307 = vmatprep.subr.mxu0 0.0
        %2308 = vmatpush1.msra.mxu0 0.0
        %2309 = vmatprep.subr.mxu0 0.0
        %2310 = vmatpush1.msra.mxu0 0.0
        %2311 = vmatprep.subr.mxu0 0.0
        %2312 = vmatpush1.msra.mxu0 0.0
        %2313 = vmatprep.subr.mxu0 0.0
        %2314 = vmatpush1.msra.mxu0 0.0
        %2315 = vmatprep.subr.mxu0 0.0
        %2316 = vmatpush1.msra.mxu0 0.0
        %2317 = vmatprep.subr.mxu0 0.0
        %2318 = vmatpush1.msra.mxu0 0.0
        %2319 = vmatprep.subr.mxu0 0.0
        %2320 = vmatpush1.msra.mxu0 0.0
        %2321 = vmatprep.subr.mxu0 0.0
        %2322 = vmatpush1.msra.mxu0 0.0
        %2323 = vmatprep.subr.mxu0 0.0
        %2324 = vmatpush1.msra.mxu0 0.0
        %2325 = vmatprep.mubr.f32.mxu0 0.0
        %v2326 = vand.u32 %v1513, 4294901760
        %2327 = vmatmul.mubr.f32.gmra.mrb[0].mxu0 %v2326
        %v2328 = vpop.f32.mrb[0].mxu0
        %v2329 = vadd.f32 %v2208, %v2328
        %v2330 = vpop.f32.mrb[0].mxu0
        %2331 = vmatprep.mubr.f32.mxu0 0.0
        %v2332 = vand.u32 %v1516, 4294901760
        %2333 = vmatmul.mubr.f32.gmra.mrb[0].mxu0 %v2332
        %v2334 = vpop.f32.mrb[0].mxu0
        %v2335 = vadd.f32 %v2214, %v2334
        %v2336 = vpop.f32.mrb[0].mxu0
        %2337 = vmatprep.mubr.f32.mxu0 0.0
        %v2338 = vand.u32 %v1519, 4294901760
        %2339 = vmatmul.mubr.f32.gmra.mrb[0].mxu0 %v2338
        %v2340 = vpop.f32.mrb[0].mxu0
        %v2341 = vadd.f32 %v2220, %v2340
        %v2342 = vpop.f32.mrb[0].mxu0
        %2343 = vmatprep.mubr.f32.mxu0 0.0
        %v2344 = vand.u32 %v1522, 4294901760
        %2345 = vmatmul.mubr.f32.gmra.mrb[0].mxu0 %v2344
        %v2346 = vpop.f32.mrb[0].mxu0
        %v2347 = vadd.f32 %v2226, %v2346
        %v2348 = vpop.f32.mrb[0].mxu0
        %2349 = vmatprep.mubr.f32.mxu0 0.0
        %v2350 = vand.u32 %v1525, 4294901760
        %2351 = vmatmul.mubr.f32.gmra.mrb[0].mxu0 %v2350
        %v2352 = vpop.f32.mrb[0].mxu0
        %v2353 = vadd.f32 %v2232, %v2352
        %v2354 = vpop.f32.mrb[0].mxu0
        %2355 = vmatprep.mubr.f32.mxu0 0.0
        %v2356 = vand.u32 %v1528, 4294901760
        %2357 = vmatmul.mubr.f32.gmra.mrb[0].mxu0 %v2356
        %v2358 = vpop.f32.mrb[0].mxu0
        %v2359 = vadd.f32 %v2238, %v2358
        %v2360 = vpop.f32.mrb[0].mxu0
        %2361 = vmatprep.mubr.f32.mxu0 0.0
        %v2362 = vand.u32 %v1531, 4294901760
        %2363 = vmatmul.mubr.f32.gmra.mrb[0].mxu0 %v2362
        %v2364 = vpop.f32.mrb[0].mxu0
        %v2365 = vadd.f32 %v2244, %v2364
        %v2366 = vpop.f32.mrb[0].mxu0
        %2367 = vmatprep.mubr.f32.mxu0 0.0
        %v2368 = vand.u32 %v1534, 4294901760
        %2369 = vmatmul.mubr.f32.gmra.mrb[0].mxu0 %v2368
        %v2370 = vpop.f32.mrb[0].mxu0
        %v2371 = vadd.f32 %v2250, %v2370
        %v2372 = vpop.f32.mrb[0].mxu0
        %2373 = vdwg.mxu0
        %2374 = vst.msk [vmem:[#allocation2] sm:$0xff] %vm677, %v2329
        %2375 = vst.msk [vmem:[#allocation2 + $0x8] sm:$0xff] %vm677, %v2335
        %2376 = vst.msk [vmem:[#allocation2 + $0x10] sm:$0xff] %vm677, %v2341
        %2377 = vst.msk [vmem:[#allocation2 + $0x18] sm:$0xff] %vm677, %v2347
        %2378 = vst.msk [vmem:[#allocation2 + $0x20] sm:$0xff] %vm677, %v2353
        %2379 = vst.msk [vmem:[#allocation2 + $0x28] sm:$0xff] %vm677, %v2359
        %2380 = vst.msk [vmem:[#allocation2 + $0x30] sm:$0xff] %vm677, %v2365
        %2381 = vst.msk [vmem:[#allocation2 + $0x38] sm:$0xff] %vm677, %v2371
        %2382 = vst.msk [vmem:[%s17] sm:$0xff] %vm677, 0.0
        %2383 = vst.msk [vmem:[%s17 + $0x8] sm:$0xff] %vm677, 0.0
        %2384 = vst.msk [vmem:[%s17 + $0x10] sm:$0xff] %vm677, 0.0
        %2385 = vst.msk [vmem:[%s17 + $0x18] sm:$0xff] %vm677, 0.0
        %2386 = vst.msk [vmem:[%s17 + $0x20] sm:$0xff] %vm677, 0.0
        %2387 = vst.msk [vmem:[%s17 + $0x28] sm:$0xff] %vm677, 0.0
        %2388 = vst.msk [vmem:[%s17 + $0x30] sm:$0xff] %vm677, 0.0
        %2389 = vst.msk [vmem:[%s17 + $0x38] sm:$0xff] %vm677, 0.0
      $region92: #{tpu_custom_call.1} parent=87 // pred_fallthru
        _
      %v2390 = vld [vmem:[#allocation2] sm:$0xff]
      %v2391 = vld [vmem:[#allocation2 + $0x8] sm:$0xff]
      %v2392 = vld [vmem:[#allocation2 + $0x10] sm:$0xff]
      %v2393 = vld [vmem:[#allocation2 + $0x18] sm:$0xff]
      %v2394 = vld [vmem:[#allocation2 + $0x20] sm:$0xff]
      %v2395 = vld [vmem:[#allocation2 + $0x28] sm:$0xff]
      %v2396 = vld [vmem:[#allocation2 + $0x30] sm:$0xff]
      %v2397 = vld [vmem:[#allocation2 + $0x38] sm:$0xff]
      %v2398 = vld [vmem:[%s617] sm:$0xff]
      %v2399 = vld [vmem:[%s617 + $0x8] sm:$0xff]
      %v2400 = vld [vmem:[%s617 + $0x10] sm:$0xff]
      %v2401 = vld [vmem:[%s617 + $0x18] sm:$0xff]
      %v2402 = vld [vmem:[%s617 + $0x20] sm:$0xff]
      %v2403 = vld [vmem:[%s617 + $0x28] sm:$0xff]
      %v2404 = vld [vmem:[%s617 + $0x30] sm:$0xff]
      %v2405 = vld [vmem:[%s617 + $0x38] sm:$0xff]
      %v2406 = vld [vmem:[%s617 + $0x40] sm:$0xff]
      %v2407 = vld [vmem:[%s617 + $0x48] sm:$0xff]
      %v2408 = vld [vmem:[%s617 + $0x50] sm:$0xff]
      %v2409 = vld [vmem:[%s617 + $0x58] sm:$0xff]
      %v2410 = vld [vmem:[%s617 + $0x60] sm:$0xff]
      %v2411 = vld [vmem:[%s617 + $0x68] sm:$0xff]
      %v2412 = vld [vmem:[%s617 + $0x70] sm:$0xff]
      %v2413 = vld [vmem:[%s617 + $0x78] sm:$0xff]
      %v2414 = vld [vmem:[%s631] sm:$0xff]
      %v2415 = vld [vmem:[%s631 + $0x8] sm:$0xff]
      %v2416 = vld [vmem:[%s631 + $0x10] sm:$0xff]
      %v2417 = vld [vmem:[%s631 + $0x18] sm:$0xff]
      %v2418 = vld [vmem:[%s631 + $0x20] sm:$0xff]
      %v2419 = vld [vmem:[%s631 + $0x28] sm:$0xff]
      %v2420 = vld [vmem:[%s631 + $0x30] sm:$0xff]
      %v2421 = vld [vmem:[%s631 + $0x38] sm:$0xff]
      %v2422 = vld [vmem:[%s631 + $0x40] sm:$0xff]
      %v2423 = vld [vmem:[%s631 + $0x48] sm:$0xff]
      %v2424 = vld [vmem:[%s631 + $0x50] sm:$0xff]
      %v2425 = vld [vmem:[%s631 + $0x58] sm:$0xff]
      %v2426 = vld [vmem:[%s631 + $0x60] sm:$0xff]
      %v2427 = vld [vmem:[%s631 + $0x68] sm:$0xff]
      %v2428 = vld [vmem:[%s631 + $0x70] sm:$0xff]
      %v2429 = vld [vmem:[%s631 + $0x78] sm:$0xff]
      %v2430 = vlaneseq
      %v2431 = vand.u32 %v2430, 127
      %2432 = vset.pattern.permute.xlu0 0
      %2433 = vperm.xlu0 %2432, %v2398
      %v2434 = vpop.permute.xlu0 %2433
      %2435 = vset.pattern.permute.xlu0 0
      %2436 = vperm.xlu0 %2435, %v2399
      %v2437 = vpop.permute.xlu0 %2436
      %2438 = vset.pattern.permute.xlu0 0
      %2439 = vperm.xlu0 %2438, %v2400
      %v2440 = vpop.permute.xlu0 %2439
      %2441 = vset.pattern.permute.xlu0 0
      %2442 = vperm.xlu0 %2441, %v2401
      %v2443 = vpop.permute.xlu0 %2442
      %2444 = vset.pattern.permute.xlu0 0
      %2445 = vperm.xlu0 %2444, %v2402
      %v2446 = vpop.permute.xlu0 %2445
      %2447 = vset.pattern.permute.xlu0 0
      %2448 = vperm.xlu0 %2447, %v2403
      %v2449 = vpop.permute.xlu0 %2448
      %2450 = vset.pattern.permute.xlu0 0
      %2451 = vperm.xlu0 %2450, %v2404
      %v2452 = vpop.permute.xlu0 %2451
      %2453 = vset.pattern.permute.xlu0 0
      %2454 = vperm.xlu0 %2453, %v2405
      %v2455 = vpop.permute.xlu0 %2454
      %2456 = vset.pattern.permute.xlu0 0
      %2457 = vperm.xlu0 %2456, %v2406
      %v2458 = vpop.permute.xlu0 %2457
      %2459 = vset.pattern.permute.xlu0 0
      %2460 = vperm.xlu0 %2459, %v2407
      %v2461 = vpop.permute.xlu0 %2460
      %2462 = vset.pattern.permute.xlu0 0
      %2463 = vperm.xlu0 %2462, %v2408
      %v2464 = vpop.permute.xlu0 %2463
      %2465 = vset.pattern.permute.xlu0 0
      %2466 = vperm.xlu0 %2465, %v2409
      %v2467 = vpop.permute.xlu0 %2466
      %2468 = vset.pattern.permute.xlu0 0
      %2469 = vperm.xlu0 %2468, %v2410
      %v2470 = vpop.permute.xlu0 %2469
      %2471 = vset.pattern.permute.xlu0 0
      %2472 = vperm.xlu0 %2471, %v2411
      %v2473 = vpop.permute.xlu0 %2472
      %2474 = vset.pattern.permute.xlu0 0
      %2475 = vperm.xlu0 %2474, %v2412
      %v2476 = vpop.permute.xlu0 %2475
      %2477 = vset.pattern.permute.xlu0 0
      %2478 = vperm.xlu0 %2477, %v2413
      %v2479 = vpop.permute.xlu0 %2478
      %vm2480 = vcmp.eq.s32.totalorder %v2434, %v2431
      %vm2481 = vcmp.eq.s32.totalorder %v2437, %v2431
      %vm2482 = vcmp.eq.s32.totalorder %v2440, %v2431
      %vm2483 = vcmp.eq.s32.totalorder %v2443, %v2431
      %vm2484 = vcmp.eq.s32.totalorder %v2446, %v2431
      %vm2485 = vcmp.eq.s32.totalorder %v2449, %v2431
      %vm2486 = vcmp.eq.s32.totalorder %v2452, %v2431
      %vm2487 = vcmp.eq.s32.totalorder %v2455, %v2431
      %vm2488 = vcmp.eq.s32.totalorder %v2458, %v2431
      %vm2489 = vcmp.eq.s32.totalorder %v2461, %v2431
      %vm2490 = vcmp.eq.s32.totalorder %v2464, %v2431
      %vm2491 = vcmp.eq.s32.totalorder %v2467, %v2431
      %vm2492 = vcmp.eq.s32.totalorder %v2470, %v2431
      %vm2493 = vcmp.eq.s32.totalorder %v2473, %v2431
      %vm2494 = vcmp.eq.s32.totalorder %v2476, %v2431
      %vm2495 = vcmp.eq.s32.totalorder %v2479, %v2431
      %v2496 = vsel %vm2480, 1, 0
      %v2497 = vsel %vm2481, 1, 0
      %v2498 = vsel %vm2482, 1, 0
      %v2499 = vsel %vm2483, 1, 0
      %v2500 = vsel %vm2484, 1, 0
      %v2501 = vsel %vm2485, 1, 0
      %v2502 = vsel %vm2486, 1, 0
      %v2503 = vsel %vm2487, 1, 0
      %v2504 = vsel %vm2488, 1, 0
      %v2505 = vsel %vm2489, 1, 0
      %v2506 = vsel %vm2490, 1, 0
      %v2507 = vsel %vm2491, 1, 0
      %v2508 = vsel %vm2492, 1, 0
      %v2509 = vsel %vm2493, 1, 0
      %v2510 = vsel %vm2494, 1, 0
      %v2511 = vsel %vm2495, 1, 0
      %v2512 = vcvt.s32.f32 %v2496
      %v2513 = vcvt.s32.f32 %v2497
      %v2514 = vcvt.s32.f32 %v2498
      %v2515 = vcvt.s32.f32 %v2499
      %v2516 = vcvt.s32.f32 %v2500
      %v2517 = vcvt.s32.f32 %v2501
      %v2518 = vcvt.s32.f32 %v2502
      %v2519 = vcvt.s32.f32 %v2503
      %v2520 = vcvt.s32.f32 %v2504
      %v2521 = vcvt.s32.f32 %v2505
      %v2522 = vcvt.s32.f32 %v2506
      %v2523 = vcvt.s32.f32 %v2507
      %v2524 = vcvt.s32.f32 %v2508
      %v2525 = vcvt.s32.f32 %v2509
      %v2526 = vcvt.s32.f32 %v2510
      %v2527 = vcvt.s32.f32 %v2511
      %2528 = vset.pattern.permute.xlu0 0
      %2529 = vperm.xlu0 %2528, %v2414
      %v2530 = vpop.permute.xlu0 %2529
      %2531 = vset.pattern.permute.xlu0 0
      %2532 = vperm.xlu0 %2531, %v2415
      %v2533 = vpop.permute.xlu0 %2532
      %2534 = vset.pattern.permute.xlu0 0
      %2535 = vperm.xlu0 %2534, %v2416
      %v2536 = vpop.permute.xlu0 %2535
      %2537 = vset.pattern.permute.xlu0 0
      %2538 = vperm.xlu0 %2537, %v2417
      %v2539 = vpop.permute.xlu0 %2538
      %2540 = vset.pattern.permute.xlu0 0
      %2541 = vperm.xlu0 %2540, %v2418
      %v2542 = vpop.permute.xlu0 %2541
      %2543 = vset.pattern.permute.xlu0 0
      %2544 = vperm.xlu0 %2543, %v2419
      %v2545 = vpop.permute.xlu0 %2544
      %2546 = vset.pattern.permute.xlu0 0
      %2547 = vperm.xlu0 %2546, %v2420
      %v2548 = vpop.permute.xlu0 %2547
      %2549 = vset.pattern.permute.xlu0 0
      %2550 = vperm.xlu0 %2549, %v2421
      %v2551 = vpop.permute.xlu0 %2550
      %2552 = vset.pattern.permute.xlu0 0
      %2553 = vperm.xlu0 %2552, %v2422
      %v2554 = vpop.permute.xlu0 %2553
      %2555 = vset.pattern.permute.xlu0 0
      %2556 = vperm.xlu0 %2555, %v2423
      %v2557 = vpop.permute.xlu0 %2556
      %2558 = vset.pattern.permute.xlu0 0
      %2559 = vperm.xlu0 %2558, %v2424
      %v2560 = vpop.permute.xlu0 %2559
      %2561 = vset.pattern.permute.xlu0 0
      %2562 = vperm.xlu0 %2561, %v2425
      %v2563 = vpop.permute.xlu0 %2562
      %2564 = vset.pattern.permute.xlu0 0
      %2565 = vperm.xlu0 %2564, %v2426
      %v2566 = vpop.permute.xlu0 %2565
      %2567 = vset.pattern.permute.xlu0 0
      %2568 = vperm.xlu0 %2567, %v2427
      %v2569 = vpop.permute.xlu0 %2568
      %2570 = vset.pattern.permute.xlu0 0
      %2571 = vperm.xlu0 %2570, %v2428
      %v2572 = vpop.permute.xlu0 %2571
      %2573 = vset.pattern.permute.xlu0 0
      %2574 = vperm.xlu0 %2573, %v2429
      %v2575 = vpop.permute.xlu0 %2574
      %vm2576 = vcmp.eq.s32.totalorder %v2530, %v2431
      %vm2577 = vcmp.eq.s32.totalorder %v2533, %v2431
      %vm2578 = vcmp.eq.s32.totalorder %v2536, %v2431
      %vm2579 = vcmp.eq.s32.totalorder %v2539, %v2431
      %vm2580 = vcmp.eq.s32.totalorder %v2542, %v2431
      %vm2581 = vcmp.eq.s32.totalorder %v2545, %v2431
      %vm2582 = vcmp.eq.s32.totalorder %v2548, %v2431
      %vm2583 = vcmp.eq.s32.totalorder %v2551, %v2431
      %vm2584 = vcmp.eq.s32.totalorder %v2554, %v2431
      %vm2585 = vcmp.eq.s32.totalorder %v2557, %v2431
      %vm2586 = vcmp.eq.s32.totalorder %v2560, %v2431
      %vm2587 = vcmp.eq.s32.totalorder %v2563, %v2431
      %vm2588 = vcmp.eq.s32.totalorder %v2566, %v2431
      %vm2589 = vcmp.eq.s32.totalorder %v2569, %v2431
      %vm2590 = vcmp.eq.s32.totalorder %v2572, %v2431
      %vm2591 = vcmp.eq.s32.totalorder %v2575, %v2431
      %v2592 = vsel %vm2576, 1, 0
      %v2593 = vsel %vm2577, 1, 0
      %v2594 = vsel %vm2578, 1, 0
      %v2595 = vsel %vm2579, 1, 0
      %v2596 = vsel %vm2580, 1, 0
      %v2597 = vsel %vm2581, 1, 0
      %v2598 = vsel %vm2582, 1, 0
      %v2599 = vsel %vm2583, 1, 0
      %v2600 = vsel %vm2584, 1, 0
      %v2601 = vsel %vm2585, 1, 0
      %v2602 = vsel %vm2586, 1, 0
      %v2603 = vsel %vm2587, 1, 0
      %v2604 = vsel %vm2588, 1, 0
      %v2605 = vsel %vm2589, 1, 0
      %v2606 = vsel %vm2590, 1, 0
      %v2607 = vsel %vm2591, 1, 0
      %v2608 = vcvt.s32.f32 %v2592
      %v2609 = vcvt.s32.f32 %v2593
      %v2610 = vcvt.s32.f32 %v2594
      %v2611 = vcvt.s32.f32 %v2595
      %v2612 = vcvt.s32.f32 %v2596
      %v2613 = vcvt.s32.f32 %v2597
      %v2614 = vcvt.s32.f32 %v2598
      %v2615 = vcvt.s32.f32 %v2599
      %v2616 = vcvt.s32.f32 %v2600
      %v2617 = vcvt.s32.f32 %v2601
      %v2618 = vcvt.s32.f32 %v2602
      %v2619 = vcvt.s32.f32 %v2603
      %v2620 = vcvt.s32.f32 %v2604
      %v2621 = vcvt.s32.f32 %v2605
      %v2622 = vcvt.s32.f32 %v2606
      %v2623 = vcvt.s32.f32 %v2607
      %v2624 = vadd.f32 %v2512, %v2608
      %v2625 = vadd.f32 %v2513, %v2609
      %v2626 = vadd.f32 %v2514, %v2610
      %v2627 = vadd.f32 %v2515, %v2611
      %v2628 = vadd.f32 %v2516, %v2612
      %v2629 = vadd.f32 %v2517, %v2613
      %v2630 = vadd.f32 %v2518, %v2614
      %v2631 = vadd.f32 %v2519, %v2615
      %v2632 = vadd.f32 %v2520, %v2616
      %v2633 = vadd.f32 %v2521, %v2617
      %v2634 = vadd.f32 %v2522, %v2618
      %v2635 = vadd.f32 %v2523, %v2619
      %v2636 = vadd.f32 %v2524, %v2620
      %v2637 = vadd.f32 %v2525, %v2621
      %v2638 = vadd.f32 %v2526, %v2622
      %v2639 = vadd.f32 %v2527, %v2623
      %v2640 = vld [vmem:[%s648] sm:$0xff]
      %v2641 = vld [vmem:[%s648 + $0x8] sm:$0xff]
      %v2642 = vld [vmem:[%s648 + $0x10] sm:$0xff]
      %v2643 = vld [vmem:[%s648 + $0x18] sm:$0xff]
      %v2644 = vld [vmem:[%s648 + $0x20] sm:$0xff]
      %v2645 = vld [vmem:[%s648 + $0x28] sm:$0xff]
      %v2646 = vld [vmem:[%s648 + $0x30] sm:$0xff]
      %v2647 = vld [vmem:[%s648 + $0x38] sm:$0xff]
      %v2648 = vld [vmem:[%s648 + $0x40] sm:$0xff]
      %v2649 = vld [vmem:[%s648 + $0x48] sm:$0xff]
      %v2650 = vld [vmem:[%s648 + $0x50] sm:$0xff]
      %v2651 = vld [vmem:[%s648 + $0x58] sm:$0xff]
      %v2652 = vld [vmem:[%s648 + $0x60] sm:$0xff]
      %v2653 = vld [vmem:[%s648 + $0x68] sm:$0xff]
      %v2654 = vld [vmem:[%s648 + $0x70] sm:$0xff]
      %v2655 = vld [vmem:[%s648 + $0x78] sm:$0xff]
      %vm2656 = vcmask 523264
      %v2658 = vsel %vm2656, %v2624, 0
      %v2661 = vsel %vm2656, %v2625, 0
      %v2664 = vsel %vm2656, %v2626, 0
      %v2667 = vsel %vm2656, %v2627, 0
      %v2670 = vsel %vm2656, %v2628, 0
      %v2673 = vsel %vm2656, %v2629, 0
      %v2676 = vsel %vm2656, %v2630, 0
      %v2679 = vsel %vm2656, %v2631, 0
      %v2682 = vsel %vm2656, %v2632, 0
      %v2685 = vsel %vm2656, %v2633, 0
      %v2688 = vsel %vm2656, %v2634, 0
      %v2691 = vsel %vm2656, %v2635, 0
      %v2694 = vsel %vm2656, %v2636, 0
      %v2697 = vsel %vm2656, %v2637, 0
      %v2700 = vsel %vm2656, %v2638, 0
      %v2703 = vsel %vm2656, %v2639, 0
      %2705 = vmatprep.subr.mxu0 0.0
      %v2706 = vand.u32 %v2390, 4294901760
      %2707 = vmatpush1.msra.mxu0 %v2706
      %2708 = vmatprep.subr.mxu0 0.0
      %v2709 = vand.u32 %v2391, 4294901760
      %2710 = vmatpush1.msra.mxu0 %v2709
      %2711 = vmatprep.subr.mxu0 0.0
      %v2712 = vand.u32 %v2392, 4294901760
      %2713 = vmatpush1.msra.mxu0 %v2712
      %2714 = vmatprep.subr.mxu0 0.0
      %v2715 = vand.u32 %v2393, 4294901760
      %2716 = vmatpush1.msra.mxu0 %v2715
      %2717 = vmatprep.subr.mxu0 0.0
      %v2718 = vand.u32 %v2394, 4294901760
      %2719 = vmatpush1.msra.mxu0 %v2718
      %2720 = vmatprep.subr.mxu0 0.0
      %v2721 = vand.u32 %v2395, 4294901760
      %2722 = vmatpush1.msra.mxu0 %v2721
      %2723 = vmatprep.subr.mxu0 0.0
      %v2724 = vand.u32 %v2396, 4294901760
      %2725 = vmatpush1.msra.mxu0 %v2724
      %2726 = vmatprep.subr.mxu0 0.0
      %v2727 = vand.u32 %v2397, 4294901760
      %2728 = vmatpush1.msra.mxu0 %v2727
      %2729 = vmatprep.subr.mxu0 0.0
      %2730 = vmatpush1.msra.mxu0 0.0
      %2731 = vmatprep.subr.mxu0 0.0
      %2732 = vmatpush1.msra.mxu0 0.0
      %2733 = vmatprep.subr.mxu0 0.0
      %2734 = vmatpush1.msra.mxu0 0.0
      %2735 = vmatprep.subr.mxu0 0.0
      %2736 = vmatpush1.msra.mxu0 0.0
      %2737 = vmatprep.subr.mxu0 0.0
      %2738 = vmatpush1.msra.mxu0 0.0
      %2739 = vmatprep.subr.mxu0 0.0
      %2740 = vmatpush1.msra.mxu0 0.0
      %2741 = vmatprep.subr.mxu0 0.0
      %2742 = vmatpush1.msra.mxu0 0.0
      %2743 = vmatprep.subr.mxu0 0.0
      %2744 = vmatpush1.msra.mxu0 0.0
      %2745 = vmatprep.subr.mxu0 0.0
      %2746 = vmatpush1.msra.mxu0 0.0
      %2747 = vmatprep.subr.mxu0 0.0
      %2748 = vmatpush1.msra.mxu0 0.0
      %2749 = vmatprep.subr.mxu0 0.0
      %2750 = vmatpush1.msra.mxu0 0.0
      %2751 = vmatprep.subr.mxu0 0.0
      %2752 = vmatpush1.msra.mxu0 0.0
      %2753 = vmatprep.subr.mxu0 0.0
      %2754 = vmatpush1.msra.mxu0 0.0
      %2755 = vmatprep.subr.mxu0 0.0
      %2756 = vmatpush1.msra.mxu0 0.0
      %2757 = vmatprep.subr.mxu0 0.0
      %2758 = vmatpush1.msra.mxu0 0.0
      %2759 = vmatprep.subr.mxu0 0.0
      %2760 = vmatpush1.msra.mxu0 0.0
      %2761 = vmatprep.subr.mxu0 0.0
      %2762 = vmatpush1.msra.mxu0 0.0
      %2763 = vmatprep.subr.mxu0 0.0
      %2764 = vmatpush1.msra.mxu0 0.0
      %2765 = vmatprep.subr.mxu0 0.0
      %2766 = vmatpush1.msra.mxu0 0.0
      %2767 = vmatprep.subr.mxu0 0.0
      %2768 = vmatpush1.msra.mxu0 0.0
      %2769 = vmatprep.subr.mxu0 0.0
      %2770 = vmatpush1.msra.mxu0 0.0
      %2771 = vmatprep.subr.mxu0 0.0
      %2772 = vmatpush1.msra.mxu0 0.0
      %2773 = vmatprep.subr.mxu0 0.0
      %2774 = vmatpush1.msra.mxu0 0.0
      %2775 = vmatprep.subr.mxu0 0.0
      %2776 = vmatpush1.msra.mxu0 0.0
      %2777 = vmatprep.mubr.f32.mxu0 0.0
      %v2778 = vand.u32 %v2658, 4294901760
      %v2779 = vsub.f32 %v2658, %v2778
      %v2780 = vand.u32 %v2779, 4294901760
      %v2781 = vsub.f32 %v2779, %v2780
      %v2782 = vand.u32 %v2781, 4294901760
      %2783 = vmatmul.mubr.f32.gmra.mrb[0].mxu0 %v2782
      %v2784 = vpop.f32.mrb[0].mxu0
      %v2785 = vadd.f32 %v2640, %v2784
      %v2786 = vpop.f32.mrb[0].mxu0
      %2787 = vmatprep.mubr.f32.mxu0 0.0
      %v2788 = vand.u32 %v2661, 4294901760
      %v2789 = vsub.f32 %v2661, %v2788
      %v2790 = vand.u32 %v2789, 4294901760
      %v2791 = vsub.f32 %v2789, %v2790
      %v2792 = vand.u32 %v2791, 4294901760
      %2793 = vmatmul.mubr.f32.gmra.mrb[0].mxu0 %v2792
      %v2794 = vpop.f32.mrb[0].mxu0
      %v2795 = vadd.f32 %v2641, %v2794
      %v2796 = vpop.f32.mrb[0].mxu0
      %2797 = vmatprep.mubr.f32.mxu0 0.0
      %v2798 = vand.u32 %v2664, 4294901760
      %v2799 = vsub.f32 %v2664, %v2798
      %v2800 = vand.u32 %v2799, 4294901760
      %v2801 = vsub.f32 %v2799, %v2800
      %v2802 = vand.u32 %v2801, 4294901760
      %2803 = vmatmul.mubr.f32.gmra.mrb[0].mxu0 %v2802
      %v2804 = vpop.f32.mrb[0].mxu0
      %v2805 = vadd.f32 %v2642, %v2804
      %v2806 = vpop.f32.mrb[0].mxu0
      %2807 = vmatprep.mubr.f32.mxu0 0.0
      %v2808 = vand.u32 %v2667, 4294901760
      %v2809 = vsub.f32 %v2667, %v2808
      %v2810 = vand.u32 %v2809, 4294901760
      %v2811 = vsub.f32 %v2809, %v2810
      %v2812 = vand.u32 %v2811, 4294901760
      %2813 = vmatmul.mubr.f32.gmra.mrb[0].mxu0 %v2812
      %v2814 = vpop.f32.mrb[0].mxu0
      %v2815 = vadd.f32 %v2643, %v2814
      %v2816 = vpop.f32.mrb[0].mxu0
      %2817 = vmatprep.mubr.f32.mxu0 0.0
      %v2818 = vand.u32 %v2670, 4294901760
      %v2819 = vsub.f32 %v2670, %v2818
      %v2820 = vand.u32 %v2819, 4294901760
      %v2821 = vsub.f32 %v2819, %v2820
      %v2822 = vand.u32 %v2821, 4294901760
      %2823 = vmatmul.mubr.f32.gmra.mrb[0].mxu0 %v2822
      %v2824 = vpop.f32.mrb[0].mxu0
      %v2825 = vadd.f32 %v2644, %v2824
      %v2826 = vpop.f32.mrb[0].mxu0
      %2827 = vmatprep.mubr.f32.mxu0 0.0
      %v2828 = vand.u32 %v2673, 4294901760
      %v2829 = vsub.f32 %v2673, %v2828
      %v2830 = vand.u32 %v2829, 4294901760
      %v2831 = vsub.f32 %v2829, %v2830
      %v2832 = vand.u32 %v2831, 4294901760
      %2833 = vmatmul.mubr.f32.gmra.mrb[0].mxu0 %v2832
      %v2834 = vpop.f32.mrb[0].mxu0
      %v2835 = vadd.f32 %v2645, %v2834
      %v2836 = vpop.f32.mrb[0].mxu0
      %2837 = vmatprep.mubr.f32.mxu0 0.0
      %v2838 = vand.u32 %v2676, 4294901760
      %v2839 = vsub.f32 %v2676, %v2838
      %v2840 = vand.u32 %v2839, 4294901760
      %v2841 = vsub.f32 %v2839, %v2840
      %v2842 = vand.u32 %v2841, 4294901760
      %2843 = vmatmul.mubr.f32.gmra.mrb[0].mxu0 %v2842
      %v2844 = vpop.f32.mrb[0].mxu0
      %v2845 = vadd.f32 %v2646, %v2844
      %v2846 = vpop.f32.mrb[0].mxu0
      %2847 = vmatprep.mubr.f32.mxu0 0.0
      %v2848 = vand.u32 %v2679, 4294901760
      %v2849 = vsub.f32 %v2679, %v2848
      %v2850 = vand.u32 %v2849, 4294901760
      %v2851 = vsub.f32 %v2849, %v2850
      %v2852 = vand.u32 %v2851, 4294901760
      %2853 = vmatmul.mubr.f32.gmra.mrb[0].mxu0 %v2852
      %v2854 = vpop.f32.mrb[0].mxu0
      %v2855 = vadd.f32 %v2647, %v2854
      %v2856 = vpop.f32.mrb[0].mxu0
      %2857 = vmatprep.mubr.f32.mxu0 0.0
      %v2858 = vand.u32 %v2682, 4294901760
      %v2859 = vsub.f32 %v2682, %v2858
      %v2860 = vand.u32 %v2859, 4294901760
      %v2861 = vsub.f32 %v2859, %v2860
      %v2862 = vand.u32 %v2861, 4294901760
      %2863 = vmatmul.mubr.f32.gmra.mrb[0].mxu0 %v2862
      %v2864 = vpop.f32.mrb[0].mxu0
      %v2865 = vadd.f32 %v2648, %v2864
      %v2866 = vpop.f32.mrb[0].mxu0
      %2867 = vmatprep.mubr.f32.mxu0 0.0
      %v2868 = vand.u32 %v2685, 4294901760
      %v2869 = vsub.f32 %v2685, %v2868
      %v2870 = vand.u32 %v2869, 4294901760
      %v2871 = vsub.f32 %v2869, %v2870
      %v2872 = vand.u32 %v2871, 4294901760
      %2873 = vmatmul.mubr.f32.gmra.mrb[0].mxu0 %v2872
      %v2874 = vpop.f32.mrb[0].mxu0
      %v2875 = vadd.f32 %v2649, %v2874
      %v2876 = vpop.f32.mrb[0].mxu0
      %2877 = vmatprep.mubr.f32.mxu0 0.0
      %v2878 = vand.u32 %v2688, 4294901760
      %v2879 = vsub.f32 %v2688, %v2878
      %v2880 = vand.u32 %v2879, 4294901760
      %v2881 = vsub.f32 %v2879, %v2880
      %v2882 = vand.u32 %v2881, 4294901760
      %2883 = vmatmul.mubr.f32.gmra.mrb[0].mxu0 %v2882
      %v2884 = vpop.f32.mrb[0].mxu0
      %v2885 = vadd.f32 %v2650, %v2884
      %v2886 = vpop.f32.mrb[0].mxu0
      %2887 = vmatprep.mubr.f32.mxu0 0.0
      %v2888 = vand.u32 %v2691, 4294901760
      %v2889 = vsub.f32 %v2691, %v2888
      %v2890 = vand.u32 %v2889, 4294901760
      %v2891 = vsub.f32 %v2889, %v2890
      %v2892 = vand.u32 %v2891, 4294901760
      %2893 = vmatmul.mubr.f32.gmra.mrb[0].mxu0 %v2892
      %v2894 = vpop.f32.mrb[0].mxu0
      %v2895 = vadd.f32 %v2651, %v2894
      %v2896 = vpop.f32.mrb[0].mxu0
      %2897 = vmatprep.mubr.f32.mxu0 0.0
      %v2898 = vand.u32 %v2694, 4294901760
      %v2899 = vsub.f32 %v2694, %v2898
      %v2900 = vand.u32 %v2899, 4294901760
      %v2901 = vsub.f32 %v2899, %v2900
      %v2902 = vand.u32 %v2901, 4294901760
      %2903 = vmatmul.mubr.f32.gmra.mrb[0].mxu0 %v2902
      %v2904 = vpop.f32.mrb[0].mxu0
      %v2905 = vadd.f32 %v2652, %v2904
      %v2906 = vpop.f32.mrb[0].mxu0
      %2907 = vmatprep.mubr.f32.mxu0 0.0
      %v2908 = vand.u32 %v2697, 4294901760
      %v2909 = vsub.f32 %v2697, %v2908
      %v2910 = vand.u32 %v2909, 4294901760
      %v2911 = vsub.f32 %v2909, %v2910
      %v2912 = vand.u32 %v2911, 4294901760
      %2913 = vmatmul.mubr.f32.gmra.mrb[0].mxu0 %v2912
      %v2914 = vpop.f32.mrb[0].mxu0
      %v2915 = vadd.f32 %v2653, %v2914
      %v2916 = vpop.f32.mrb[0].mxu0
      %2917 = vmatprep.mubr.f32.mxu0 0.0
      %v2918 = vand.u32 %v2700, 4294901760
      %v2919 = vsub.f32 %v2700, %v2918
      %v2920 = vand.u32 %v2919, 4294901760
      %v2921 = vsub.f32 %v2919, %v2920
      %v2922 = vand.u32 %v2921, 4294901760
      %2923 = vmatmul.mubr.f32.gmra.mrb[0].mxu0 %v2922
      %v2924 = vpop.f32.mrb[0].mxu0
      %v2925 = vadd.f32 %v2654, %v2924
      %v2926 = vpop.f32.mrb[0].mxu0
      %2927 = vmatprep.mubr.f32.mxu0 0.0
      %v2928 = vand.u32 %v2703, 4294901760
      %v2929 = vsub.f32 %v2703, %v2928
      %v2930 = vand.u32 %v2929, 4294901760
      %v2931 = vsub.f32 %v2929, %v2930
      %v2932 = vand.u32 %v2931, 4294901760
      %2933 = vmatmul.mubr.f32.gmra.mrb[0].mxu0 %v2932
      %v2934 = vpop.f32.mrb[0].mxu0
      %v2935 = vadd.f32 %v2655, %v2934
      %v2936 = vpop.f32.mrb[0].mxu0
      %2937 = vdwg.mxu0
      %2938 = vmatprep.subr.mxu0 0.0
      %v2939 = vand.u32 %v2390, 4294901760
      %v2940 = vsub.f32 %v2390, %v2939
      %v2941 = vand.u32 %v2940, 4294901760
      %v2942 = vsub.f32 %v2940, %v2941
      %v2943 = vand.u32 %v2942, 4294901760
      %2944 = vmatpush1.msra.mxu0 %v2943
      %2945 = vmatprep.subr.mxu0 0.0
      %v2946 = vand.u32 %v2391, 4294901760
      %v2947 = vsub.f32 %v2391, %v2946
      %v2948 = vand.u32 %v2947, 4294901760
      %v2949 = vsub.f32 %v2947, %v2948
      %v2950 = vand.u32 %v2949, 4294901760
      %2951 = vmatpush1.msra.mxu0 %v2950
      %2952 = vmatprep.subr.mxu0 0.0
      %v2953 = vand.u32 %v2392, 4294901760
      %v2954 = vsub.f32 %v2392, %v2953
      %v2955 = vand.u32 %v2954, 4294901760
      %v2956 = vsub.f32 %v2954, %v2955
      %v2957 = vand.u32 %v2956, 4294901760
      %2958 = vmatpush1.msra.mxu0 %v2957
      %2959 = vmatprep.subr.mxu0 0.0
      %v2960 = vand.u32 %v2393, 4294901760
      %v2961 = vsub.f32 %v2393, %v2960
      %v2962 = vand.u32 %v2961, 4294901760
      %v2963 = vsub.f32 %v2961, %v2962
      %v2964 = vand.u32 %v2963, 4294901760
      %2965 = vmatpush1.msra.mxu0 %v2964
      %2966 = vmatprep.subr.mxu0 0.0
      %v2967 = vand.u32 %v2394, 4294901760
      %v2968 = vsub.f32 %v2394, %v2967
      %v2969 = vand.u32 %v2968, 4294901760
      %v2970 = vsub.f32 %v2968, %v2969
      %v2971 = vand.u32 %v2970, 4294901760
      %2972 = vmatpush1.msra.mxu0 %v2971
      %2973 = vmatprep.subr.mxu0 0.0
      %v2974 = vand.u32 %v2395, 4294901760
      %v2975 = vsub.f32 %v2395, %v2974
      %v2976 = vand.u32 %v2975, 4294901760
      %v2977 = vsub.f32 %v2975, %v2976
      %v2978 = vand.u32 %v2977, 4294901760
      %2979 = vmatpush1.msra.mxu0 %v2978
      %2980 = vmatprep.subr.mxu0 0.0
      %v2981 = vand.u32 %v2396, 4294901760
      %v2982 = vsub.f32 %v2396, %v2981
      %v2983 = vand.u32 %v2982, 4294901760
      %v2984 = vsub.f32 %v2982, %v2983
      %v2985 = vand.u32 %v2984, 4294901760
      %2986 = vmatpush1.msra.mxu0 %v2985
      %2987 = vmatprep.subr.mxu0 0.0
      %v2988 = vand.u32 %v2397, 4294901760
      %v2989 = vsub.f32 %v2397, %v2988
      %v2990 = vand.u32 %v2989, 4294901760
      %v2991 = vsub.f32 %v2989, %v2990
      %v2992 = vand.u32 %v2991, 4294901760
      %2993 = vmatpush1.msra.mxu0 %v2992
      %2994 = vmatprep.subr.mxu0 0.0
      %2995 = vmatpush1.msra.mxu0 0.0
      %2996 = vmatprep.subr.mxu0 0.0
      %2997 = vmatpush1.msra.mxu0 0.0
      %2998 = vmatprep.subr.mxu0 0.0
      %2999 = vmatpush1.msra.mxu0 0.0
      %3000 = vmatprep.subr.mxu0 0.0
      %3001 = vmatpush1.msra.mxu0 0.0
      %3002 = vmatprep.subr.mxu0 0.0
      %3003 = vmatpush1.msra.mxu0 0.0
      %3004 = vmatprep.subr.mxu0 0.0
      %3005 = vmatpush1.msra.mxu0 0.0
      %3006 = vmatprep.subr.mxu0 0.0
      %3007 = vmatpush1.msra.mxu0 0.0
      %3008 = vmatprep.subr.mxu0 0.0
      %3009 = vmatpush1.msra.mxu0 0.0
      %3010 = vmatprep.subr.mxu0 0.0
      %3011 = vmatpush1.msra.mxu0 0.0
      %3012 = vmatprep.subr.mxu0 0.0
      %3013 = vmatpush1.msra.mxu0 0.0
      %3014 = vmatprep.subr.mxu0 0.0
      %3015 = vmatpush1.msra.mxu0 0.0
      %3016 = vmatprep.subr.mxu0 0.0
      %3017 = vmatpush1.msra.mxu0 0.0
      %3018 = vmatprep.subr.mxu0 0.0
      %3019 = vmatpush1.msra.mxu0 0.0
      %3020 = vmatprep.subr.mxu0 0.0
      %3021 = vmatpush1.msra.mxu0 0.0
      %3022 = vmatprep.subr.mxu0 0.0
      %3023 = vmatpush1.msra.mxu0 0.0
      %3024 = vmatprep.subr.mxu0 0.0
      %3025 = vmatpush1.msra.mxu0 0.0
      %3026 = vmatprep.subr.mxu0 0.0
      %3027 = vmatpush1.msra.mxu0 0.0
      %3028 = vmatprep.subr.mxu0 0.0
      %3029 = vmatpush1.msra.mxu0 0.0
      %3030 = vmatprep.subr.mxu0 0.0
      %3031 = vmatpush1.msra.mxu0 0.0
      %3032 = vmatprep.subr.mxu0 0.0
      %3033 = vmatpush1.msra.mxu0 0.0
      %3034 = vmatprep.subr.mxu0 0.0
      %3035 = vmatpush1.msra.mxu0 0.0
      %3036 = vmatprep.subr.mxu0 0.0
      %3037 = vmatpush1.msra.mxu0 0.0
      %3038 = vmatprep.subr.mxu0 0.0
      %3039 = vmatpush1.msra.mxu0 0.0
      %3040 = vmatprep.subr.mxu0 0.0
      %3041 = vmatpush1.msra.mxu0 0.0
      %3042 = vmatprep.mubr.f32.mxu0 0.0
      %v3043 = vand.u32 %v2658, 4294901760
      %3044 = vmatmul.mubr.f32.gmra.mrb[0].mxu0 %v3043
      %v3045 = vpop.f32.mrb[0].mxu0
      %v3046 = vadd.f32 %v2785, %v3045
      %v3047 = vpop.f32.mrb[0].mxu0
      %3048 = vmatprep.mubr.f32.mxu0 0.0
      %v3049 = vand.u32 %v2661, 4294901760
      %3050 = vmatmul.mubr.f32.gmra.mrb[0].mxu0 %v3049
      %v3051 = vpop.f32.mrb[0].mxu0
      %v3052 = vadd.f32 %v2795, %v3051
      %v3053 = vpop.f32.mrb[0].mxu0
      %3054 = vmatprep.mubr.f32.mxu0 0.0
      %v3055 = vand.u32 %v2664, 4294901760
      %3056 = vmatmul.mubr.f32.gmra.mrb[0].mxu0 %v3055
      %v3057 = vpop.f32.mrb[0].mxu0
      %v3058 = vadd.f32 %v2805, %v3057
      %v3059 = vpop.f32.mrb[0].mxu0
      %3060 = vmatprep.mubr.f32.mxu0 0.0
      %v3061 = vand.u32 %v2667, 4294901760
      %3062 = vmatmul.mubr.f32.gmra.mrb[0].mxu0 %v3061
      %v3063 = vpop.f32.mrb[0].mxu0
      %v3064 = vadd.f32 %v2815, %v3063
      %v3065 = vpop.f32.mrb[0].mxu0
      %3066 = vmatprep.mubr.f32.mxu0 0.0
      %v3067 = vand.u32 %v2670, 4294901760
      %3068 = vmatmul.mubr.f32.gmra.mrb[0].mxu0 %v3067
      %v3069 = vpop.f32.mrb[0].mxu0
      %v3070 = vadd.f32 %v2825, %v3069
      %v3071 = vpop.f32.mrb[0].mxu0
      %3072 = vmatprep.mubr.f32.mxu0 0.0
      %v3073 = vand.u32 %v2673, 4294901760
      %3074 = vmatmul.mubr.f32.gmra.mrb[0].mxu0 %v3073
      %v3075 = vpop.f32.mrb[0].mxu0
      %v3076 = vadd.f32 %v2835, %v3075
      %v3077 = vpop.f32.mrb[0].mxu0
      %3078 = vmatprep.mubr.f32.mxu0 0.0
      %v3079 = vand.u32 %v2676, 4294901760
      %3080 = vmatmul.mubr.f32.gmra.mrb[0].mxu0 %v3079
      %v3081 = vpop.f32.mrb[0].mxu0
      %v3082 = vadd.f32 %v2845, %v3081
      %v3083 = vpop.f32.mrb[0].mxu0
      %3084 = vmatprep.mubr.f32.mxu0 0.0
      %v3085 = vand.u32 %v2679, 4294901760
      %3086 = vmatmul.mubr.f32.gmra.mrb[0].mxu0 %v3085
      %v3087 = vpop.f32.mrb[0].mxu0
      %v3088 = vadd.f32 %v2855, %v3087
      %v3089 = vpop.f32.mrb[0].mxu0
      %3090 = vmatprep.mubr.f32.mxu0 0.0
      %v3091 = vand.u32 %v2682, 4294901760
      %3092 = vmatmul.mubr.f32.gmra.mrb[0].mxu0 %v3091
      %v3093 = vpop.f32.mrb[0].mxu0
      %v3094 = vadd.f32 %v2865, %v3093
      %v3095 = vpop.f32.mrb[0].mxu0
      %3096 = vmatprep.mubr.f32.mxu0 0.0
      %v3097 = vand.u32 %v2685, 4294901760
      %3098 = vmatmul.mubr.f32.gmra.mrb[0].mxu0 %v3097
      %v3099 = vpop.f32.mrb[0].mxu0
      %v3100 = vadd.f32 %v2875, %v3099
      %v3101 = vpop.f32.mrb[0].mxu0
      %3102 = vmatprep.mubr.f32.mxu0 0.0
      %v3103 = vand.u32 %v2688, 4294901760
      %3104 = vmatmul.mubr.f32.gmra.mrb[0].mxu0 %v3103
      %v3105 = vpop.f32.mrb[0].mxu0
      %v3106 = vadd.f32 %v2885, %v3105
      %v3107 = vpop.f32.mrb[0].mxu0
      %3108 = vmatprep.mubr.f32.mxu0 0.0
      %v3109 = vand.u32 %v2691, 4294901760
      %3110 = vmatmul.mubr.f32.gmra.mrb[0].mxu0 %v3109
      %v3111 = vpop.f32.mrb[0].mxu0
      %v3112 = vadd.f32 %v2895, %v3111
      %v3113 = vpop.f32.mrb[0].mxu0
      %3114 = vmatprep.mubr.f32.mxu0 0.0
      %v3115 = vand.u32 %v2694, 4294901760
      %3116 = vmatmul.mubr.f32.gmra.mrb[0].mxu0 %v3115
      %v3117 = vpop.f32.mrb[0].mxu0
      %v3118 = vadd.f32 %v2905, %v3117
      %v3119 = vpop.f32.mrb[0].mxu0
      %3120 = vmatprep.mubr.f32.mxu0 0.0
      %v3121 = vand.u32 %v2697, 4294901760
      %3122 = vmatmul.mubr.f32.gmra.mrb[0].mxu0 %v3121
      %v3123 = vpop.f32.mrb[0].mxu0
      %v3124 = vadd.f32 %v2915, %v3123
      %v3125 = vpop.f32.mrb[0].mxu0
      %3126 = vmatprep.mubr.f32.mxu0 0.0
      %v3127 = vand.u32 %v2700, 4294901760
      %3128 = vmatmul.mubr.f32.gmra.mrb[0].mxu0 %v3127
      %v3129 = vpop.f32.mrb[0].mxu0
      %v3130 = vadd.f32 %v2925, %v3129
      %v3131 = vpop.f32.mrb[0].mxu0
      %3132 = vmatprep.mubr.f32.mxu0 0.0
      %v3133 = vand.u32 %v2703, 4294901760
      %3134 = vmatmul.mubr.f32.gmra.mrb[0].mxu0 %v3133
      %v3135 = vpop.f32.mrb[0].mxu0
      %v3136 = vadd.f32 %v2935, %v3135
      %v3137 = vpop.f32.mrb[0].mxu0
      %3138 = vdwg.mxu0
      %3139 = vmatprep.subr.mxu0 0.0
      %v3140 = vand.u32 %v2390, 4294901760
      %v3141 = vsub.f32 %v2390, %v3140
      %3142 = vmatpush1.msra.mxu0 %v3141
      %3143 = vmatprep.subr.mxu0 0.0
      %v3144 = vand.u32 %v2391, 4294901760
      %v3145 = vsub.f32 %v2391, %v3144
      %3146 = vmatpush1.msra.mxu0 %v3145
      %3147 = vmatprep.subr.mxu0 0.0
      %v3148 = vand.u32 %v2392, 4294901760
      %v3149 = vsub.f32 %v2392, %v3148
      %3150 = vmatpush1.msra.mxu0 %v3149
      %3151 = vmatprep.subr.mxu0 0.0
      %v3152 = vand.u32 %v2393, 4294901760
      %v3153 = vsub.f32 %v2393, %v3152
      %3154 = vmatpush1.msra.mxu0 %v3153
      %3155 = vmatprep.subr.mxu0 0.0
      %v3156 = vand.u32 %v2394, 4294901760
      %v3157 = vsub.f32 %v2394, %v3156
      %3158 = vmatpush1.msra.mxu0 %v3157
      %3159 = vmatprep.subr.mxu0 0.0
      %v3160 = vand.u32 %v2395, 4294901760
      %v3161 = vsub.f32 %v2395, %v3160
      %3162 = vmatpush1.msra.mxu0 %v3161
      %3163 = vmatprep.subr.mxu0 0.0
      %v3164 = vand.u32 %v2396, 4294901760
      %v3165 = vsub.f32 %v2396, %v3164
      %3166 = vmatpush1.msra.mxu0 %v3165
      %3167 = vmatprep.subr.mxu0 0.0
      %v3168 = vand.u32 %v2397, 4294901760
      %v3169 = vsub.f32 %v2397, %v3168
      %3170 = vmatpush1.msra.mxu0 %v3169
      %3171 = vmatprep.subr.mxu0 0.0
      %3172 = vmatpush1.msra.mxu0 0.0
      %3173 = vmatprep.subr.mxu0 0.0
      %3174 = vmatpush1.msra.mxu0 0.0
      %3175 = vmatprep.subr.mxu0 0.0
      %3176 = vmatpush1.msra.mxu0 0.0
      %3177 = vmatprep.subr.mxu0 0.0
      %3178 = vmatpush1.msra.mxu0 0.0
      %3179 = vmatprep.subr.mxu0 0.0
      %3180 = vmatpush1.msra.mxu0 0.0
      %3181 = vmatprep.subr.mxu0 0.0
      %3182 = vmatpush1.msra.mxu0 0.0
      %3183 = vmatprep.subr.mxu0 0.0
      %3184 = vmatpush1.msra.mxu0 0.0
      %3185 = vmatprep.subr.mxu0 0.0
      %3186 = vmatpush1.msra.mxu0 0.0
      %3187 = vmatprep.subr.mxu0 0.0
      %3188 = vmatpush1.msra.mxu0 0.0
      %3189 = vmatprep.subr.mxu0 0.0
      %3190 = vmatpush1.msra.mxu0 0.0
      %3191 = vmatprep.subr.mxu0 0.0
      %3192 = vmatpush1.msra.mxu0 0.0
      %3193 = vmatprep.subr.mxu0 0.0
      %3194 = vmatpush1.msra.mxu0 0.0
      %3195 = vmatprep.subr.mxu0 0.0
      %3196 = vmatpush1.msra.mxu0 0.0
      %3197 = vmatprep.subr.mxu0 0.0
      %3198 = vmatpush1.msra.mxu0 0.0
      %3199 = vmatprep.subr.mxu0 0.0
      %3200 = vmatpush1.msra.mxu0 0.0
      %3201 = vmatprep.subr.mxu0 0.0
      %3202 = vmatpush1.msra.mxu0 0.0
      %3203 = vmatprep.subr.mxu0 0.0
      %3204 = vmatpush1.msra.mxu0 0.0
      %3205 = vmatprep.subr.mxu0 0.0
      %3206 = vmatpush1.msra.mxu0 0.0
      %3207 = vmatprep.subr.mxu0 0.0
      %3208 = vmatpush1.msra.mxu0 0.0
      %3209 = vmatprep.subr.mxu0 0.0
      %3210 = vmatpush1.msra.mxu0 0.0
      %3211 = vmatprep.subr.mxu0 0.0
      %3212 = vmatpush1.msra.mxu0 0.0
      %3213 = vmatprep.subr.mxu0 0.0
      %3214 = vmatpush1.msra.mxu0 0.0
      %3215 = vmatprep.subr.mxu0 0.0
      %3216 = vmatpush1.msra.mxu0 0.0
      %3217 = vmatprep.subr.mxu0 0.0
      %3218 = vmatpush1.msra.mxu0 0.0
      %3219 = vmatprep.mubr.f32.mxu0 0.0
      %v3220 = vand.u32 %v2658, 4294901760
      %v3221 = vsub.f32 %v2658, %v3220
      %3222 = vmatmul.mubr.f32.gmra.mrb[0].mxu0 %v3221
      %v3223 = vpop.f32.mrb[0].mxu0
      %v3224 = vadd.f32 %v3046, %v3223
      %v3225 = vpop.f32.mrb[0].mxu0
      %3226 = vmatprep.mubr.f32.mxu0 0.0
      %v3227 = vand.u32 %v2661, 4294901760
      %v3228 = vsub.f32 %v2661, %v3227
      %3229 = vmatmul.mubr.f32.gmra.mrb[0].mxu0 %v3228
      %v3230 = vpop.f32.mrb[0].mxu0
      %v3231 = vadd.f32 %v3052, %v3230
      %v3232 = vpop.f32.mrb[0].mxu0
      %3233 = vmatprep.mubr.f32.mxu0 0.0
      %v3234 = vand.u32 %v2664, 4294901760
      %v3235 = vsub.f32 %v2664, %v3234
      %3236 = vmatmul.mubr.f32.gmra.mrb[0].mxu0 %v3235
      %v3237 = vpop.f32.mrb[0].mxu0
      %v3238 = vadd.f32 %v3058, %v3237
      %v3239 = vpop.f32.mrb[0].mxu0
      %3240 = vmatprep.mubr.f32.mxu0 0.0
      %v3241 = vand.u32 %v2667, 4294901760
      %v3242 = vsub.f32 %v2667, %v3241
      %3243 = vmatmul.mubr.f32.gmra.mrb[0].mxu0 %v3242
      %v3244 = vpop.f32.mrb[0].mxu0
      %v3245 = vadd.f32 %v3064, %v3244
      %v3246 = vpop.f32.mrb[0].mxu0
      %3247 = vmatprep.mubr.f32.mxu0 0.0
      %v3248 = vand.u32 %v2670, 4294901760
      %v3249 = vsub.f32 %v2670, %v3248
      %3250 = vmatmul.mubr.f32.gmra.mrb[0].mxu0 %v3249
      %v3251 = vpop.f32.mrb[0].mxu0
      %v3252 = vadd.f32 %v3070, %v3251
      %v3253 = vpop.f32.mrb[0].mxu0
      %3254 = vmatprep.mubr.f32.mxu0 0.0
      %v3255 = vand.u32 %v2673, 4294901760
      %v3256 = vsub.f32 %v2673, %v3255
      %3257 = vmatmul.mubr.f32.gmra.mrb[0].mxu0 %v3256
      %v3258 = vpop.f32.mrb[0].mxu0
      %v3259 = vadd.f32 %v3076, %v3258
      %v3260 = vpop.f32.mrb[0].mxu0
      %3261 = vmatprep.mubr.f32.mxu0 0.0
      %v3262 = vand.u32 %v2676, 4294901760
      %v3263 = vsub.f32 %v2676, %v3262
      %3264 = vmatmul.mubr.f32.gmra.mrb[0].mxu0 %v3263
      %v3265 = vpop.f32.mrb[0].mxu0
      %v3266 = vadd.f32 %v3082, %v3265
      %v3267 = vpop.f32.mrb[0].mxu0
      %3268 = vmatprep.mubr.f32.mxu0 0.0
      %v3269 = vand.u32 %v2679, 4294901760
      %v3270 = vsub.f32 %v2679, %v3269
      %3271 = vmatmul.mubr.f32.gmra.mrb[0].mxu0 %v3270
      %v3272 = vpop.f32.mrb[0].mxu0
      %v3273 = vadd.f32 %v3088, %v3272
      %v3274 = vpop.f32.mrb[0].mxu0
      %3275 = vmatprep.mubr.f32.mxu0 0.0
      %v3276 = vand.u32 %v2682, 4294901760
      %v3277 = vsub.f32 %v2682, %v3276
      %3278 = vmatmul.mubr.f32.gmra.mrb[0].mxu0 %v3277
      %v3279 = vpop.f32.mrb[0].mxu0
      %v3280 = vadd.f32 %v3094, %v3279
      %v3281 = vpop.f32.mrb[0].mxu0
      %3282 = vmatprep.mubr.f32.mxu0 0.0
      %v3283 = vand.u32 %v2685, 4294901760
      %v3284 = vsub.f32 %v2685, %v3283
      %3285 = vmatmul.mubr.f32.gmra.mrb[0].mxu0 %v3284
      %v3286 = vpop.f32.mrb[0].mxu0
      %v3287 = vadd.f32 %v3100, %v3286
      %v3288 = vpop.f32.mrb[0].mxu0
      %3289 = vmatprep.mubr.f32.mxu0 0.0
      %v3290 = vand.u32 %v2688, 4294901760
      %v3291 = vsub.f32 %v2688, %v3290
      %3292 = vmatmul.mubr.f32.gmra.mrb[0].mxu0 %v3291
      %v3293 = vpop.f32.mrb[0].mxu0
      %v3294 = vadd.f32 %v3106, %v3293
      %v3295 = vpop.f32.mrb[0].mxu0
      %3296 = vmatprep.mubr.f32.mxu0 0.0
      %v3297 = vand.u32 %v2691, 4294901760
      %v3298 = vsub.f32 %v2691, %v3297
      %3299 = vmatmul.mubr.f32.gmra.mrb[0].mxu0 %v3298
      %v3300 = vpop.f32.mrb[0].mxu0
      %v3301 = vadd.f32 %v3112, %v3300
      %v3302 = vpop.f32.mrb[0].mxu0
      %3303 = vmatprep.mubr.f32.mxu0 0.0
      %v3304 = vand.u32 %v2694, 4294901760
      %v3305 = vsub.f32 %v2694, %v3304
      %3306 = vmatmul.mubr.f32.gmra.mrb[0].mxu0 %v3305
      %v3307 = vpop.f32.mrb[0].mxu0
      %v3308 = vadd.f32 %v3118, %v3307
      %v3309 = vpop.f32.mrb[0].mxu0
      %3310 = vmatprep.mubr.f32.mxu0 0.0
      %v3311 = vand.u32 %v2697, 4294901760
      %v3312 = vsub.f32 %v2697, %v3311
      %3313 = vmatmul.mubr.f32.gmra.mrb[0].mxu0 %v3312
      %v3314 = vpop.f32.mrb[0].mxu0
      %v3315 = vadd.f32 %v3124, %v3314
      %v3316 = vpop.f32.mrb[0].mxu0
      %3317 = vmatprep.mubr.f32.mxu0 0.0
      %v3318 = vand.u32 %v2700, 4294901760
      %v3319 = vsub.f32 %v2700, %v3318
      %3320 = vmatmul.mubr.f32.gmra.mrb[0].mxu0 %v3319
      %v3321 = vpop.f32.mrb[0].mxu0
      %v3322 = vadd.f32 %v3130, %v3321
      %v3323 = vpop.f32.mrb[0].mxu0
      %3324 = vmatprep.mubr.f32.mxu0 0.0
      %v3325 = vand.u32 %v2703, 4294901760
      %v3326 = vsub.f32 %v2703, %v3325
      %3327 = vmatmul.mubr.f32.gmra.mrb[0].mxu0 %v3326
      %v3328 = vpop.f32.mrb[0].mxu0
      %v3329 = vadd.f32 %v3136, %v3328
      %v3330 = vpop.f32.mrb[0].mxu0
      %3331 = vdwg.mxu0
      %3332 = vmatprep.subr.mxu0 0.0
      %v3333 = vand.u32 %v2390, 4294901760
      %3334 = vmatpush1.msra.mxu0 %v3333
      %3335 = vmatprep.subr.mxu0 0.0
      %v3336 = vand.u32 %v2391, 4294901760
      %3337 = vmatpush1.msra.mxu0 %v3336
      %3338 = vmatprep.subr.mxu0 0.0
      %v3339 = vand.u32 %v2392, 4294901760
      %3340 = vmatpush1.msra.mxu0 %v3339
      %3341 = vmatprep.subr.mxu0 0.0
      %v3342 = vand.u32 %v2393, 4294901760
      %3343 = vmatpush1.msra.mxu0 %v3342
      %3344 = vmatprep.subr.mxu0 0.0
      %v3345 = vand.u32 %v2394, 4294901760
      %3346 = vmatpush1.msra.mxu0 %v3345
      %3347 = vmatprep.subr.mxu0 0.0
      %v3348 = vand.u32 %v2395, 4294901760
      %3349 = vmatpush1.msra.mxu0 %v3348
      %3350 = vmatprep.subr.mxu0 0.0
      %v3351 = vand.u32 %v2396, 4294901760
      %3352 = vmatpush1.msra.mxu0 %v3351
      %3353 = vmatprep.subr.mxu0 0.0
      %v3354 = vand.u32 %v2397, 4294901760
      %3355 = vmatpush1.msra.mxu0 %v3354
      %3356 = vmatprep.subr.mxu0 0.0
      %3357 = vmatpush1.msra.mxu0 0.0
      %3358 = vmatprep.subr.mxu0 0.0
      %3359 = vmatpush1.msra.mxu0 0.0
      %3360 = vmatprep.subr.mxu0 0.0
      %3361 = vmatpush1.msra.mxu0 0.0
      %3362 = vmatprep.subr.mxu0 0.0
      %3363 = vmatpush1.msra.mxu0 0.0
      %3364 = vmatprep.subr.mxu0 0.0
      %3365 = vmatpush1.msra.mxu0 0.0
      %3366 = vmatprep.subr.mxu0 0.0
      %3367 = vmatpush1.msra.mxu0 0.0
      %3368 = vmatprep.subr.mxu0 0.0
      %3369 = vmatpush1.msra.mxu0 0.0
      %3370 = vmatprep.subr.mxu0 0.0
      %3371 = vmatpush1.msra.mxu0 0.0
      %3372 = vmatprep.subr.mxu0 0.0
      %3373 = vmatpush1.msra.mxu0 0.0
      %3374 = vmatprep.subr.mxu0 0.0
      %3375 = vmatpush1.msra.mxu0 0.0
      %3376 = vmatprep.subr.mxu0 0.0
      %3377 = vmatpush1.msra.mxu0 0.0
      %3378 = vmatprep.subr.mxu0 0.0
      %3379 = vmatpush1.msra.mxu0 0.0
      %3380 = vmatprep.subr.mxu0 0.0
      %3381 = vmatpush1.msra.mxu0 0.0
      %3382 = vmatprep.subr.mxu0 0.0
      %3383 = vmatpush1.msra.mxu0 0.0
      %3384 = vmatprep.subr.mxu0 0.0
      %3385 = vmatpush1.msra.mxu0 0.0
      %3386 = vmatprep.subr.mxu0 0.0
      %3387 = vmatpush1.msra.mxu0 0.0
      %3388 = vmatprep.subr.mxu0 0.0
      %3389 = vmatpush1.msra.mxu0 0.0
      %3390 = vmatprep.subr.mxu0 0.0
      %3391 = vmatpush1.msra.mxu0 0.0
      %3392 = vmatprep.subr.mxu0 0.0
      %3393 = vmatpush1.msra.mxu0 0.0
      %3394 = vmatprep.subr.mxu0 0.0
      %3395 = vmatpush1.msra.mxu0 0.0
      %3396 = vmatprep.subr.mxu0 0.0
      %3397 = vmatpush1.msra.mxu0 0.0
      %3398 = vmatprep.subr.mxu0 0.0
      %3399 = vmatpush1.msra.mxu0 0.0
      %3400 = vmatprep.subr.mxu0 0.0
      %3401 = vmatpush1.msra.mxu0 0.0
      %3402 = vmatprep.subr.mxu0 0.0
      %3403 = vmatpush1.msra.mxu0 0.0
      %3404 = vmatprep.mubr.f32.mxu0 0.0
      %v3405 = vand.u32 %v2658, 4294901760
      %v3406 = vsub.f32 %v2658, %v3405
      %v3407 = vand.u32 %v3406, 4294901760
      %3408 = vmatmul.mubr.f32.gmra.mrb[0].mxu0 %v3407
      %v3409 = vpop.f32.mrb[0].mxu0
      %v3410 = vadd.f32 %v3224, %v3409
      %v3411 = vpop.f32.mrb[0].mxu0
      %3412 = vmatprep.mubr.f32.mxu0 0.0
      %v3413 = vand.u32 %v2661, 4294901760
      %v3414 = vsub.f32 %v2661, %v3413
      %v3415 = vand.u32 %v3414, 4294901760
      %3416 = vmatmul.mubr.f32.gmra.mrb[0].mxu0 %v3415
      %v3417 = vpop.f32.mrb[0].mxu0
      %v3418 = vadd.f32 %v3231, %v3417
      %v3419 = vpop.f32.mrb[0].mxu0
      %3420 = vmatprep.mubr.f32.mxu0 0.0
      %v3421 = vand.u32 %v2664, 4294901760
      %v3422 = vsub.f32 %v2664, %v3421
      %v3423 = vand.u32 %v3422, 4294901760
      %3424 = vmatmul.mubr.f32.gmra.mrb[0].mxu0 %v3423
      %v3425 = vpop.f32.mrb[0].mxu0
      %v3426 = vadd.f32 %v3238, %v3425
      %v3427 = vpop.f32.mrb[0].mxu0
      %3428 = vmatprep.mubr.f32.mxu0 0.0
      %v3429 = vand.u32 %v2667, 4294901760
      %v3430 = vsub.f32 %v2667, %v3429
      %v3431 = vand.u32 %v3430, 4294901760
      %3432 = vmatmul.mubr.f32.gmra.mrb[0].mxu0 %v3431
      %v3433 = vpop.f32.mrb[0].mxu0
      %v3434 = vadd.f32 %v3245, %v3433
      %v3435 = vpop.f32.mrb[0].mxu0
      %3436 = vmatprep.mubr.f32.mxu0 0.0
      %v3437 = vand.u32 %v2670, 4294901760
      %v3438 = vsub.f32 %v2670, %v3437
      %v3439 = vand.u32 %v3438, 4294901760
      %3440 = vmatmul.mubr.f32.gmra.mrb[0].mxu0 %v3439
      %v3441 = vpop.f32.mrb[0].mxu0
      %v3442 = vadd.f32 %v3252, %v3441
      %v3443 = vpop.f32.mrb[0].mxu0
      %3444 = vmatprep.mubr.f32.mxu0 0.0
      %v3445 = vand.u32 %v2673, 4294901760
      %v3446 = vsub.f32 %v2673, %v3445
      %v3447 = vand.u32 %v3446, 4294901760
      %3448 = vmatmul.mubr.f32.gmra.mrb[0].mxu0 %v3447
      %v3449 = vpop.f32.mrb[0].mxu0
      %v3450 = vadd.f32 %v3259, %v3449
      %v3451 = vpop.f32.mrb[0].mxu0
      %3452 = vmatprep.mubr.f32.mxu0 0.0
      %v3453 = vand.u32 %v2676, 4294901760
      %v3454 = vsub.f32 %v2676, %v3453
      %v3455 = vand.u32 %v3454, 4294901760
      %3456 = vmatmul.mubr.f32.gmra.mrb[0].mxu0 %v3455
      %v3457 = vpop.f32.mrb[0].mxu0
      %v3458 = vadd.f32 %v3266, %v3457
      %v3459 = vpop.f32.mrb[0].mxu0
      %3460 = vmatprep.mubr.f32.mxu0 0.0
      %v3461 = vand.u32 %v2679, 4294901760
      %v3462 = vsub.f32 %v2679, %v3461
      %v3463 = vand.u32 %v3462, 4294901760
      %3464 = vmatmul.mubr.f32.gmra.mrb[0].mxu0 %v3463
      %v3465 = vpop.f32.mrb[0].mxu0
      %v3466 = vadd.f32 %v3273, %v3465
      %v3467 = vpop.f32.mrb[0].mxu0
      %3468 = vmatprep.mubr.f32.mxu0 0.0
      %v3469 = vand.u32 %v2682, 4294901760
      %v3470 = vsub.f32 %v2682, %v3469
      %v3471 = vand.u32 %v3470, 4294901760
      %3472 = vmatmul.mubr.f32.gmra.mrb[0].mxu0 %v3471
      %v3473 = vpop.f32.mrb[0].mxu0
      %v3474 = vadd.f32 %v3280, %v3473
      %v3475 = vpop.f32.mrb[0].mxu0
      %3476 = vmatprep.mubr.f32.mxu0 0.0
      %v3477 = vand.u32 %v2685, 4294901760
      %v3478 = vsub.f32 %v2685, %v3477
      %v3479 = vand.u32 %v3478, 4294901760
      %3480 = vmatmul.mubr.f32.gmra.mrb[0].mxu0 %v3479
      %v3481 = vpop.f32.mrb[0].mxu0
      %v3482 = vadd.f32 %v3287, %v3481
      %v3483 = vpop.f32.mrb[0].mxu0
      %3484 = vmatprep.mubr.f32.mxu0 0.0
      %v3485 = vand.u32 %v2688, 4294901760
      %v3486 = vsub.f32 %v2688, %v3485
      %v3487 = vand.u32 %v3486, 4294901760
      %3488 = vmatmul.mubr.f32.gmra.mrb[0].mxu0 %v3487
      %v3489 = vpop.f32.mrb[0].mxu0
      %v3490 = vadd.f32 %v3294, %v3489
      %v3491 = vpop.f32.mrb[0].mxu0
      %3492 = vmatprep.mubr.f32.mxu0 0.0
      %v3493 = vand.u32 %v2691, 4294901760
      %v3494 = vsub.f32 %v2691, %v3493
      %v3495 = vand.u32 %v3494, 4294901760
      %3496 = vmatmul.mubr.f32.gmra.mrb[0].mxu0 %v3495
      %v3497 = vpop.f32.mrb[0].mxu0
      %v3498 = vadd.f32 %v3301, %v3497
      %v3499 = vpop.f32.mrb[0].mxu0
      %3500 = vmatprep.mubr.f32.mxu0 0.0
      %v3501 = vand.u32 %v2694, 4294901760
      %v3502 = vsub.f32 %v2694, %v3501
      %v3503 = vand.u32 %v3502, 4294901760
      %3504 = vmatmul.mubr.f32.gmra.mrb[0].mxu0 %v3503
      %v3505 = vpop.f32.mrb[0].mxu0
      %v3506 = vadd.f32 %v3308, %v3505
      %v3507 = vpop.f32.mrb[0].mxu0
      %3508 = vmatprep.mubr.f32.mxu0 0.0
      %v3509 = vand.u32 %v2697, 4294901760
      %v3510 = vsub.f32 %v2697, %v3509
      %v3511 = vand.u32 %v3510, 4294901760
      %3512 = vmatmul.mubr.f32.gmra.mrb[0].mxu0 %v3511
      %v3513 = vpop.f32.mrb[0].mxu0
      %v3514 = vadd.f32 %v3315, %v3513
      %v3515 = vpop.f32.mrb[0].mxu0
      %3516 = vmatprep.mubr.f32.mxu0 0.0
      %v3517 = vand.u32 %v2700, 4294901760
      %v3518 = vsub.f32 %v2700, %v3517
      %v3519 = vand.u32 %v3518, 4294901760
      %3520 = vmatmul.mubr.f32.gmra.mrb[0].mxu0 %v3519
      %v3521 = vpop.f32.mrb[0].mxu0
      %v3522 = vadd.f32 %v3322, %v3521
      %v3523 = vpop.f32.mrb[0].mxu0
      %3524 = vmatprep.mubr.f32.mxu0 0.0
      %v3525 = vand.u32 %v2703, 4294901760
      %v3526 = vsub.f32 %v2703, %v3525
      %v3527 = vand.u32 %v3526, 4294901760
      %3528 = vmatmul.mubr.f32.gmra.mrb[0].mxu0 %v3527
      %v3529 = vpop.f32.mrb[0].mxu0
      %v3530 = vadd.f32 %v3329, %v3529
      %v3531 = vpop.f32.mrb[0].mxu0
      %3532 = vdwg.mxu0
      %3533 = vmatprep.subr.mxu0 0.0
      %v3534 = vand.u32 %v2390, 4294901760
      %v3535 = vsub.f32 %v2390, %v3534
      %v3536 = vand.u32 %v3535, 4294901760
      %3537 = vmatpush1.msra.mxu0 %v3536
      %3538 = vmatprep.subr.mxu0 0.0
      %v3539 = vand.u32 %v2391, 4294901760
      %v3540 = vsub.f32 %v2391, %v3539
      %v3541 = vand.u32 %v3540, 4294901760
      %3542 = vmatpush1.msra.mxu0 %v3541
      %3543 = vmatprep.subr.mxu0 0.0
      %v3544 = vand.u32 %v2392, 4294901760
      %v3545 = vsub.f32 %v2392, %v3544
      %v3546 = vand.u32 %v3545, 4294901760
      %3547 = vmatpush1.msra.mxu0 %v3546
      %3548 = vmatprep.subr.mxu0 0.0
      %v3549 = vand.u32 %v2393, 4294901760
      %v3550 = vsub.f32 %v2393, %v3549
      %v3551 = vand.u32 %v3550, 4294901760
      %3552 = vmatpush1.msra.mxu0 %v3551
      %3553 = vmatprep.subr.mxu0 0.0
      %v3554 = vand.u32 %v2394, 4294901760
      %v3555 = vsub.f32 %v2394, %v3554
      %v3556 = vand.u32 %v3555, 4294901760
      %3557 = vmatpush1.msra.mxu0 %v3556
      %3558 = vmatprep.subr.mxu0 0.0
      %v3559 = vand.u32 %v2395, 4294901760
      %v3560 = vsub.f32 %v2395, %v3559
      %v3561 = vand.u32 %v3560, 4294901760
      %3562 = vmatpush1.msra.mxu0 %v3561
      %3563 = vmatprep.subr.mxu0 0.0
      %v3564 = vand.u32 %v2396, 4294901760
      %v3565 = vsub.f32 %v2396, %v3564
      %v3566 = vand.u32 %v3565, 4294901760
      %3567 = vmatpush1.msra.mxu0 %v3566
      %3568 = vmatprep.subr.mxu0 0.0
      %v3569 = vand.u32 %v2397, 4294901760
      %v3570 = vsub.f32 %v2397, %v3569
      %v3571 = vand.u32 %v3570, 4294901760
      %3572 = vmatpush1.msra.mxu0 %v3571
      %3573 = vmatprep.subr.mxu0 0.0
      %3574 = vmatpush1.msra.mxu0 0.0
      %3575 = vmatprep.subr.mxu0 0.0
      %3576 = vmatpush1.msra.mxu0 0.0
      %3577 = vmatprep.subr.mxu0 0.0
      %3578 = vmatpush1.msra.mxu0 0.0
      %3579 = vmatprep.subr.mxu0 0.0
      %3580 = vmatpush1.msra.mxu0 0.0
      %3581 = vmatprep.subr.mxu0 0.0
      %3582 = vmatpush1.msra.mxu0 0.0
      %3583 = vmatprep.subr.mxu0 0.0
      %3584 = vmatpush1.msra.mxu0 0.0
      %3585 = vmatprep.subr.mxu0 0.0
      %3586 = vmatpush1.msra.mxu0 0.0
      %3587 = vmatprep.subr.mxu0 0.0
      %3588 = vmatpush1.msra.mxu0 0.0
      %3589 = vmatprep.subr.mxu0 0.0
      %3590 = vmatpush1.msra.mxu0 0.0
      %3591 = vmatprep.subr.mxu0 0.0
      %3592 = vmatpush1.msra.mxu0 0.0
      %3593 = vmatprep.subr.mxu0 0.0
      %3594 = vmatpush1.msra.mxu0 0.0
      %3595 = vmatprep.subr.mxu0 0.0
      %3596 = vmatpush1.msra.mxu0 0.0
      %3597 = vmatprep.subr.mxu0 0.0
      %3598 = vmatpush1.msra.mxu0 0.0
      %3599 = vmatprep.subr.mxu0 0.0
      %3600 = vmatpush1.msra.mxu0 0.0
      %3601 = vmatprep.subr.mxu0 0.0
      %3602 = vmatpush1.msra.mxu0 0.0
      %3603 = vmatprep.subr.mxu0 0.0
      %3604 = vmatpush1.msra.mxu0 0.0
      %3605 = vmatprep.subr.mxu0 0.0
      %3606 = vmatpush1.msra.mxu0 0.0
      %3607 = vmatprep.subr.mxu0 0.0
      %3608 = vmatpush1.msra.mxu0 0.0
      %3609 = vmatprep.subr.mxu0 0.0
      %3610 = vmatpush1.msra.mxu0 0.0
      %3611 = vmatprep.subr.mxu0 0.0
      %3612 = vmatpush1.msra.mxu0 0.0
      %3613 = vmatprep.subr.mxu0 0.0
      %3614 = vmatpush1.msra.mxu0 0.0
      %3615 = vmatprep.subr.mxu0 0.0
      %3616 = vmatpush1.msra.mxu0 0.0
      %3617 = vmatprep.subr.mxu0 0.0
      %3618 = vmatpush1.msra.mxu0 0.0
      %3619 = vmatprep.subr.mxu0 0.0
      %3620 = vmatpush1.msra.mxu0 0.0
      %3621 = vmatprep.mubr.f32.mxu0 0.0
      %v3622 = vand.u32 %v2658, 4294901760
      %3623 = vmatmul.mubr.f32.gmra.mrb[0].mxu0 %v3622
      %v3624 = vpop.f32.mrb[0].mxu0
      %v3625 = vadd.f32 %v3410, %v3624
      %v3626 = vpop.f32.mrb[0].mxu0
      %3627 = vmatprep.mubr.f32.mxu0 0.0
      %v3628 = vand.u32 %v2661, 4294901760
      %3629 = vmatmul.mubr.f32.gmra.mrb[0].mxu0 %v3628
      %v3630 = vpop.f32.mrb[0].mxu0
      %v3631 = vadd.f32 %v3418, %v3630
      %v3632 = vpop.f32.mrb[0].mxu0
      %3633 = vmatprep.mubr.f32.mxu0 0.0
      %v3634 = vand.u32 %v2664, 4294901760
      %3635 = vmatmul.mubr.f32.gmra.mrb[0].mxu0 %v3634
      %v3636 = vpop.f32.mrb[0].mxu0
      %v3637 = vadd.f32 %v3426, %v3636
      %v3638 = vpop.f32.mrb[0].mxu0
      %3639 = vmatprep.mubr.f32.mxu0 0.0
      %v3640 = vand.u32 %v2667, 4294901760
      %3641 = vmatmul.mubr.f32.gmra.mrb[0].mxu0 %v3640
      %v3642 = vpop.f32.mrb[0].mxu0
      %v3643 = vadd.f32 %v3434, %v3642
      %v3644 = vpop.f32.mrb[0].mxu0
      %3645 = vmatprep.mubr.f32.mxu0 0.0
      %v3646 = vand.u32 %v2670, 4294901760
      %3647 = vmatmul.mubr.f32.gmra.mrb[0].mxu0 %v3646
      %v3648 = vpop.f32.mrb[0].mxu0
      %v3649 = vadd.f32 %v3442, %v3648
      %v3650 = vpop.f32.mrb[0].mxu0
      %3651 = vmatprep.mubr.f32.mxu0 0.0
      %v3652 = vand.u32 %v2673, 4294901760
      %3653 = vmatmul.mubr.f32.gmra.mrb[0].mxu0 %v3652
      %v3654 = vpop.f32.mrb[0].mxu0
      %v3655 = vadd.f32 %v3450, %v3654
      %v3656 = vpop.f32.mrb[0].mxu0
      %3657 = vmatprep.mubr.f32.mxu0 0.0
      %v3658 = vand.u32 %v2676, 4294901760
      %3659 = vmatmul.mubr.f32.gmra.mrb[0].mxu0 %v3658
      %v3660 = vpop.f32.mrb[0].mxu0
      %v3661 = vadd.f32 %v3458, %v3660
      %v3662 = vpop.f32.mrb[0].mxu0
      %3663 = vmatprep.mubr.f32.mxu0 0.0
      %v3664 = vand.u32 %v2679, 4294901760
      %3665 = vmatmul.mubr.f32.gmra.mrb[0].mxu0 %v3664
      %v3666 = vpop.f32.mrb[0].mxu0
      %v3667 = vadd.f32 %v3466, %v3666
      %v3668 = vpop.f32.mrb[0].mxu0
      %3669 = vmatprep.mubr.f32.mxu0 0.0
      %v3670 = vand.u32 %v2682, 4294901760
      %3671 = vmatmul.mubr.f32.gmra.mrb[0].mxu0 %v3670
      %v3672 = vpop.f32.mrb[0].mxu0
      %v3673 = vadd.f32 %v3474, %v3672
      %v3674 = vpop.f32.mrb[0].mxu0
      %3675 = vmatprep.mubr.f32.mxu0 0.0
      %v3676 = vand.u32 %v2685, 4294901760
      %3677 = vmatmul.mubr.f32.gmra.mrb[0].mxu0 %v3676
      %v3678 = vpop.f32.mrb[0].mxu0
      %v3679 = vadd.f32 %v3482, %v3678
      %v3680 = vpop.f32.mrb[0].mxu0
      %3681 = vmatprep.mubr.f32.mxu0 0.0
      %v3682 = vand.u32 %v2688, 4294901760
      %3683 = vmatmul.mubr.f32.gmra.mrb[0].mxu0 %v3682
      %v3684 = vpop.f32.mrb[0].mxu0
      %v3685 = vadd.f32 %v3490, %v3684
      %v3686 = vpop.f32.mrb[0].mxu0
      %3687 = vmatprep.mubr.f32.mxu0 0.0
      %v3688 = vand.u32 %v2691, 4294901760
      %3689 = vmatmul.mubr.f32.gmra.mrb[0].mxu0 %v3688
      %v3690 = vpop.f32.mrb[0].mxu0
      %v3691 = vadd.f32 %v3498, %v3690
      %v3692 = vpop.f32.mrb[0].mxu0
      %3693 = vmatprep.mubr.f32.mxu0 0.0
      %v3694 = vand.u32 %v2694, 4294901760
      %3695 = vmatmul.mubr.f32.gmra.mrb[0].mxu0 %v3694
      %v3696 = vpop.f32.mrb[0].mxu0
      %v3697 = vadd.f32 %v3506, %v3696
      %v3698 = vpop.f32.mrb[0].mxu0
      %3699 = vmatprep.mubr.f32.mxu0 0.0
      %v3700 = vand.u32 %v2697, 4294901760
      %3701 = vmatmul.mubr.f32.gmra.mrb[0].mxu0 %v3700
      %v3702 = vpop.f32.mrb[0].mxu0
      %v3703 = vadd.f32 %v3514, %v3702
      %v3704 = vpop.f32.mrb[0].mxu0
      %3705 = vmatprep.mubr.f32.mxu0 0.0
      %v3706 = vand.u32 %v2700, 4294901760
      %3707 = vmatmul.mubr.f32.gmra.mrb[0].mxu0 %v3706
      %v3708 = vpop.f32.mrb[0].mxu0
      %v3709 = vadd.f32 %v3522, %v3708
      %v3710 = vpop.f32.mrb[0].mxu0
      %3711 = vmatprep.mubr.f32.mxu0 0.0
      %v3712 = vand.u32 %v2703, 4294901760
      %3713 = vmatmul.mubr.f32.gmra.mrb[0].mxu0 %v3712
      %v3714 = vpop.f32.mrb[0].mxu0
      %v3715 = vadd.f32 %v3530, %v3714
      %v3716 = vpop.f32.mrb[0].mxu0
      %3717 = vdwg.mxu0
      %3718 = vmatprep.subr.mxu0 0.0
      %v3719 = vand.u32 %v2390, 4294901760
      %3720 = vmatpush1.msra.mxu0 %v3719
      %3721 = vmatprep.subr.mxu0 0.0
      %v3722 = vand.u32 %v2391, 4294901760
      %3723 = vmatpush1.msra.mxu0 %v3722
      %3724 = vmatprep.subr.mxu0 0.0
      %v3725 = vand.u32 %v2392, 4294901760
      %3726 = vmatpush1.msra.mxu0 %v3725
      %3727 = vmatprep.subr.mxu0 0.0
      %v3728 = vand.u32 %v2393, 4294901760
      %3729 = vmatpush1.msra.mxu0 %v3728
      %3730 = vmatprep.subr.mxu0 0.0
      %v3731 = vand.u32 %v2394, 4294901760
      %3732 = vmatpush1.msra.mxu0 %v3731
      %3733 = vmatprep.subr.mxu0 0.0
      %v3734 = vand.u32 %v2395, 4294901760
      %3735 = vmatpush1.msra.mxu0 %v3734
      %3736 = vmatprep.subr.mxu0 0.0
      %v3737 = vand.u32 %v2396, 4294901760
      %3738 = vmatpush1.msra.mxu0 %v3737
      %3739 = vmatprep.subr.mxu0 0.0
      %v3740 = vand.u32 %v2397, 4294901760
      %3741 = vmatpush1.msra.mxu0 %v3740
      %3742 = vmatprep.subr.mxu0 0.0
      %3743 = vmatpush1.msra.mxu0 0.0
      %3744 = vmatprep.subr.mxu0 0.0
      %3745 = vmatpush1.msra.mxu0 0.0
      %3746 = vmatprep.subr.mxu0 0.0
      %3747 = vmatpush1.msra.mxu0 0.0
      %3748 = vmatprep.subr.mxu0 0.0
      %3749 = vmatpush1.msra.mxu0 0.0
      %3750 = vmatprep.subr.mxu0 0.0
      %3751 = vmatpush1.msra.mxu0 0.0
      %3752 = vmatprep.subr.mxu0 0.0
      %3753 = vmatpush1.msra.mxu0 0.0
      %3754 = vmatprep.subr.mxu0 0.0
      %3755 = vmatpush1.msra.mxu0 0.0
      %3756 = vmatprep.subr.mxu0 0.0
      %3757 = vmatpush1.msra.mxu0 0.0
      %3758 = vmatprep.subr.mxu0 0.0
      %3759 = vmatpush1.msra.mxu0 0.0
      %3760 = vmatprep.subr.mxu0 0.0
      %3761 = vmatpush1.msra.mxu0 0.0
      %3762 = vmatprep.subr.mxu0 0.0
      %3763 = vmatpush1.msra.mxu0 0.0
      %3764 = vmatprep.subr.mxu0 0.0
      %3765 = vmatpush1.msra.mxu0 0.0
      %3766 = vmatprep.subr.mxu0 0.0
      %3767 = vmatpush1.msra.mxu0 0.0
      %3768 = vmatprep.subr.mxu0 0.0
      %3769 = vmatpush1.msra.mxu0 0.0
      %3770 = vmatprep.subr.mxu0 0.0
      %3771 = vmatpush1.msra.mxu0 0.0
      %3772 = vmatprep.subr.mxu0 0.0
      %3773 = vmatpush1.msra.mxu0 0.0
      %3774 = vmatprep.subr.mxu0 0.0
      %3775 = vmatpush1.msra.mxu0 0.0
      %3776 = vmatprep.subr.mxu0 0.0
      %3777 = vmatpush1.msra.mxu0 0.0
      %3778 = vmatprep.subr.mxu0 0.0
      %3779 = vmatpush1.msra.mxu0 0.0
      %3780 = vmatprep.subr.mxu0 0.0
      %3781 = vmatpush1.msra.mxu0 0.0
      %3782 = vmatprep.subr.mxu0 0.0
      %3783 = vmatpush1.msra.mxu0 0.0
      %3784 = vmatprep.subr.mxu0 0.0
      %3785 = vmatpush1.msra.mxu0 0.0
      %3786 = vmatprep.subr.mxu0 0.0
      %3787 = vmatpush1.msra.mxu0 0.0
      %3788 = vmatprep.subr.mxu0 0.0
      %3789 = vmatpush1.msra.mxu0 0.0
      %3790 = vmatprep.mubr.f32.mxu0 0.0
      %v3791 = vand.u32 %v2658, 4294901760
      %3792 = vmatmul.mubr.f32.gmra.mrb[0].mxu0 %v3791
      %v3793 = vpop.f32.mrb[0].mxu0
      %v3794 = vadd.f32 %v3625, %v3793
      %v3795 = vpop.f32.mrb[0].mxu0
      %3796 = vmatprep.mubr.f32.mxu0 0.0
      %v3797 = vand.u32 %v2661, 4294901760
      %3798 = vmatmul.mubr.f32.gmra.mrb[0].mxu0 %v3797
      %v3799 = vpop.f32.mrb[0].mxu0
      %v3800 = vadd.f32 %v3631, %v3799
      %v3801 = vpop.f32.mrb[0].mxu0
      %3802 = vmatprep.mubr.f32.mxu0 0.0
      %v3803 = vand.u32 %v2664, 4294901760
      %3804 = vmatmul.mubr.f32.gmra.mrb[0].mxu0 %v3803
      %v3805 = vpop.f32.mrb[0].mxu0
      %v3806 = vadd.f32 %v3637, %v3805
      %v3807 = vpop.f32.mrb[0].mxu0
      %3808 = vmatprep.mubr.f32.mxu0 0.0
      %v3809 = vand.u32 %v2667, 4294901760
      %3810 = vmatmul.mubr.f32.gmra.mrb[0].mxu0 %v3809
      %v3811 = vpop.f32.mrb[0].mxu0
      %v3812 = vadd.f32 %v3643, %v3811
      %v3813 = vpop.f32.mrb[0].mxu0
      %3814 = vmatprep.mubr.f32.mxu0 0.0
      %v3815 = vand.u32 %v2670, 4294901760
      %3816 = vmatmul.mubr.f32.gmra.mrb[0].mxu0 %v3815
      %v3817 = vpop.f32.mrb[0].mxu0
      %v3818 = vadd.f32 %v3649, %v3817
      %v3819 = vpop.f32.mrb[0].mxu0
      %3820 = vmatprep.mubr.f32.mxu0 0.0
      %v3821 = vand.u32 %v2673, 4294901760
      %3822 = vmatmul.mubr.f32.gmra.mrb[0].mxu0 %v3821
      %v3823 = vpop.f32.mrb[0].mxu0
      %v3824 = vadd.f32 %v3655, %v3823
      %v3825 = vpop.f32.mrb[0].mxu0
      %3826 = vmatprep.mubr.f32.mxu0 0.0
      %v3827 = vand.u32 %v2676, 4294901760
      %3828 = vmatmul.mubr.f32.gmra.mrb[0].mxu0 %v3827
      %v3829 = vpop.f32.mrb[0].mxu0
      %v3830 = vadd.f32 %v3661, %v3829
      %v3831 = vpop.f32.mrb[0].mxu0
      %3832 = vmatprep.mubr.f32.mxu0 0.0
      %v3833 = vand.u32 %v2679, 4294901760
      %3834 = vmatmul.mubr.f32.gmra.mrb[0].mxu0 %v3833
      %v3835 = vpop.f32.mrb[0].mxu0
      %v3836 = vadd.f32 %v3667, %v3835
      %v3837 = vpop.f32.mrb[0].mxu0
      %3838 = vmatprep.mubr.f32.mxu0 0.0
      %v3839 = vand.u32 %v2682, 4294901760
      %3840 = vmatmul.mubr.f32.gmra.mrb[0].mxu0 %v3839
      %v3841 = vpop.f32.mrb[0].mxu0
      %v3842 = vadd.f32 %v3673, %v3841
      %v3843 = vpop.f32.mrb[0].mxu0
      %3844 = vmatprep.mubr.f32.mxu0 0.0
      %v3845 = vand.u32 %v2685, 4294901760
      %3846 = vmatmul.mubr.f32.gmra.mrb[0].mxu0 %v3845
      %v3847 = vpop.f32.mrb[0].mxu0
      %v3848 = vadd.f32 %v3679, %v3847
      %v3849 = vpop.f32.mrb[0].mxu0
      %3850 = vmatprep.mubr.f32.mxu0 0.0
      %v3851 = vand.u32 %v2688, 4294901760
      %3852 = vmatmul.mubr.f32.gmra.mrb[0].mxu0 %v3851
      %v3853 = vpop.f32.mrb[0].mxu0
      %v3854 = vadd.f32 %v3685, %v3853
      %v3855 = vpop.f32.mrb[0].mxu0
      %3856 = vmatprep.mubr.f32.mxu0 0.0
      %v3857 = vand.u32 %v2691, 4294901760
      %3858 = vmatmul.mubr.f32.gmra.mrb[0].mxu0 %v3857
      %v3859 = vpop.f32.mrb[0].mxu0
      %v3860 = vadd.f32 %v3691, %v3859
      %v3861 = vpop.f32.mrb[0].mxu0
      %3862 = vmatprep.mubr.f32.mxu0 0.0
      %v3863 = vand.u32 %v2694, 4294901760
      %3864 = vmatmul.mubr.f32.gmra.mrb[0].mxu0 %v3863
      %v3865 = vpop.f32.mrb[0].mxu0
      %v3866 = vadd.f32 %v3697, %v3865
      %v3867 = vpop.f32.mrb[0].mxu0
      %3868 = vmatprep.mubr.f32.mxu0 0.0
      %v3869 = vand.u32 %v2697, 4294901760
      %3870 = vmatmul.mubr.f32.gmra.mrb[0].mxu0 %v3869
      %v3871 = vpop.f32.mrb[0].mxu0
      %v3872 = vadd.f32 %v3703, %v3871
      %v3873 = vpop.f32.mrb[0].mxu0
      %3874 = vmatprep.mubr.f32.mxu0 0.0
      %v3875 = vand.u32 %v2700, 4294901760
      %3876 = vmatmul.mubr.f32.gmra.mrb[0].mxu0 %v3875
      %v3877 = vpop.f32.mrb[0].mxu0
      %v3878 = vadd.f32 %v3709, %v3877
      %v3879 = vpop.f32.mrb[0].mxu0
      %3880 = vmatprep.mubr.f32.mxu0 0.0
      %v3881 = vand.u32 %v2703, 4294901760
      %3882 = vmatmul.mubr.f32.gmra.mrb[0].mxu0 %v3881
      %v3883 = vpop.f32.mrb[0].mxu0
      %v3884 = vadd.f32 %v3715, %v3883
      %v3885 = vpop.f32.mrb[0].mxu0
      %3886 = vdwg.mxu0
      %v3887 = vld [vmem:[%s9] sm:$0xff]
      %v3888 = vld [vmem:[%s9 + $0x8] sm:$0xff]
      %v3889 = vld [vmem:[%s9 + $0x10] sm:$0xff]
      %v3890 = vld [vmem:[%s9 + $0x18] sm:$0xff]
      %v3891 = vld [vmem:[%s10] sm:$0x1]
      %v3893 = vlaneseq
      %v3894 = vshrl.u32 %v3893, 7
      %v3895 = vsub.s32 0, %v3894
      %v3896 = vrot.slane %v3891, %v3895
      %vm3898 = vcmask 261120
      %v3900 = vsel %vm3898, %v3794, 0
      %v3903 = vsel %vm3898, %v3800, 0
      %v3906 = vsel %vm3898, %v3806, 0
      %v3909 = vsel %vm3898, %v3812, 0
      %v3912 = vsel %vm3898, %v3818, 0
      %v3915 = vsel %vm3898, %v3824, 0
      %v3918 = vsel %vm3898, %v3830, 0
      %v3921 = vsel %vm3898, %v3836, 0
      %v3924 = vsel %vm3898, %v3842, 0
      %v3927 = vsel %vm3898, %v3848, 0
      %v3930 = vsel %vm3898, %v3854, 0
      %v3933 = vsel %vm3898, %v3860, 0
      %v3936 = vsel %vm3898, %v3866, 0
      %v3939 = vsel %vm3898, %v3872, 0
      %v3942 = vsel %vm3898, %v3878, 0
      %v3945 = vsel %vm3898, %v3884, 0
      %3947 = vmatprep.subr.mxu0 0.0
      %v3948 = vand.u32 %v3887, 4294901760
      %3949 = vmatpush1.msra.mxu0 %v3948
      %3950 = vmatprep.subr.mxu0 0.0
      %v3951 = vand.u32 %v3888, 4294901760
      %3952 = vmatpush1.msra.mxu0 %v3951
      %3953 = vmatprep.subr.mxu0 0.0
      %v3954 = vand.u32 %v3889, 4294901760
      %3955 = vmatpush1.msra.mxu0 %v3954
      %3956 = vmatprep.subr.mxu0 0.0
      %v3957 = vand.u32 %v3890, 4294901760
      %3958 = vmatpush1.msra.mxu0 %v3957
      %3959 = vmatprep.subr.mxu0 0.0
      %3960 = vmatpush1.msra.mxu0 0.0
      %3961 = vmatprep.subr.mxu0 0.0
      %3962 = vmatpush1.msra.mxu0 0.0
      %3963 = vmatprep.subr.mxu0 0.0
      %3964 = vmatpush1.msra.mxu0 0.0
      %3965 = vmatprep.subr.mxu0 0.0
      %3966 = vmatpush1.msra.mxu0 0.0
      %3967 = vmatprep.subr.mxu0 0.0
      %3968 = vmatpush1.msra.mxu0 0.0
      %3969 = vmatprep.subr.mxu0 0.0
      %3970 = vmatpush1.msra.mxu0 0.0
      %3971 = vmatprep.subr.mxu0 0.0
      %3972 = vmatpush1.msra.mxu0 0.0
      %3973 = vmatprep.subr.mxu0 0.0
      %3974 = vmatpush1.msra.mxu0 0.0
      %3975 = vmatprep.subr.mxu0 0.0
      %3976 = vmatpush1.msra.mxu0 0.0
      %3977 = vmatprep.subr.mxu0 0.0
      %3978 = vmatpush1.msra.mxu0 0.0
      %3979 = vmatprep.subr.mxu0 0.0
      %3980 = vmatpush1.msra.mxu0 0.0
      %3981 = vmatprep.subr.mxu0 0.0
      %3982 = vmatpush1.msra.mxu0 0.0
      %3983 = vmatprep.subr.mxu0 0.0
      %3984 = vmatpush1.msra.mxu0 0.0
      %3985 = vmatprep.subr.mxu0 0.0
      %3986 = vmatpush1.msra.mxu0 0.0
      %3987 = vmatprep.subr.mxu0 0.0
      %3988 = vmatpush1.msra.mxu0 0.0
      %3989 = vmatprep.subr.mxu0 0.0
      %3990 = vmatpush1.msra.mxu0 0.0
      %3991 = vmatprep.subr.mxu0 0.0
      %3992 = vmatpush1.msra.mxu0 0.0
      %3993 = vmatprep.subr.mxu0 0.0
      %3994 = vmatpush1.msra.mxu0 0.0
      %3995 = vmatprep.subr.mxu0 0.0
      %3996 = vmatpush1.msra.mxu0 0.0
      %3997 = vmatprep.subr.mxu0 0.0
      %3998 = vmatpush1.msra.mxu0 0.0
      %3999 = vmatprep.subr.mxu0 0.0
      %4000 = vmatpush1.msra.mxu0 0.0
      %4001 = vmatprep.subr.mxu0 0.0
      %4002 = vmatpush1.msra.mxu0 0.0
      %4003 = vmatprep.subr.mxu0 0.0
      %4004 = vmatpush1.msra.mxu0 0.0
      %4005 = vmatprep.subr.mxu0 0.0
      %4006 = vmatpush1.msra.mxu0 0.0
      %4007 = vmatprep.subr.mxu0 0.0
      %4008 = vmatpush1.msra.mxu0 0.0
      %4009 = vmatprep.subr.mxu0 0.0
      %4010 = vmatpush1.msra.mxu0 0.0
      %4011 = vmatprep.subr.mxu0 0.0
      %4012 = vmatpush1.msra.mxu0 0.0
      %4013 = vmatprep.subr.mxu0 0.0
      %4014 = vmatpush1.msra.mxu0 0.0
      %4015 = vmatprep.mubr.f32.mxu0 0.0
      %v4016 = vand.u32 %v3900, 4294901760
      %v4017 = vsub.f32 %v3900, %v4016
      %v4018 = vand.u32 %v4017, 4294901760
      %v4019 = vsub.f32 %v4017, %v4018
      %v4020 = vand.u32 %v4019, 4294901760
      %4021 = vmatmul.mubr.f32.gmra.mrb[0].mxu0 %v4020
      %v4022 = vpop.f32.mrb[0].mxu0
      %v4023 = vadd.f32 %v3896, %v4022
      %v4024 = vpop.f32.mrb[0].mxu0
      %4025 = vmatprep.mubr.f32.mxu0 0.0
      %v4026 = vand.u32 %v3903, 4294901760
      %v4027 = vsub.f32 %v3903, %v4026
      %v4028 = vand.u32 %v4027, 4294901760
      %v4029 = vsub.f32 %v4027, %v4028
      %v4030 = vand.u32 %v4029, 4294901760
      %4031 = vmatmul.mubr.f32.gmra.mrb[0].mxu0 %v4030
      %v4032 = vpop.f32.mrb[0].mxu0
      %v4033 = vadd.f32 %v3896, %v4032
      %v4034 = vpop.f32.mrb[0].mxu0
      %4035 = vmatprep.mubr.f32.mxu0 0.0
      %v4036 = vand.u32 %v3906, 4294901760
      %v4037 = vsub.f32 %v3906, %v4036
      %v4038 = vand.u32 %v4037, 4294901760
      %v4039 = vsub.f32 %v4037, %v4038
      %v4040 = vand.u32 %v4039, 4294901760
      %4041 = vmatmul.mubr.f32.gmra.mrb[0].mxu0 %v4040
      %v4042 = vpop.f32.mrb[0].mxu0
      %v4043 = vadd.f32 %v3896, %v4042
      %v4044 = vpop.f32.mrb[0].mxu0
      %4045 = vmatprep.mubr.f32.mxu0 0.0
      %v4046 = vand.u32 %v3909, 4294901760
      %v4047 = vsub.f32 %v3909, %v4046
      %v4048 = vand.u32 %v4047, 4294901760
      %v4049 = vsub.f32 %v4047, %v4048
      %v4050 = vand.u32 %v4049, 4294901760
      %4051 = vmatmul.mubr.f32.gmra.mrb[0].mxu0 %v4050
      %v4052 = vpop.f32.mrb[0].mxu0
      %v4053 = vadd.f32 %v3896, %v4052
      %v4054 = vpop.f32.mrb[0].mxu0
      %4055 = vmatprep.mubr.f32.mxu0 0.0
      %v4056 = vand.u32 %v3912, 4294901760
      %v4057 = vsub.f32 %v3912, %v4056
      %v4058 = vand.u32 %v4057, 4294901760
      %v4059 = vsub.f32 %v4057, %v4058
      %v4060 = vand.u32 %v4059, 4294901760
      %4061 = vmatmul.mubr.f32.gmra.mrb[0].mxu0 %v4060
      %v4062 = vpop.f32.mrb[0].mxu0
      %v4063 = vadd.f32 %v3896, %v4062
      %v4064 = vpop.f32.mrb[0].mxu0
      %4065 = vmatprep.mubr.f32.mxu0 0.0
      %v4066 = vand.u32 %v3915, 4294901760
      %v4067 = vsub.f32 %v3915, %v4066
      %v4068 = vand.u32 %v4067, 4294901760
      %v4069 = vsub.f32 %v4067, %v4068
      %v4070 = vand.u32 %v4069, 4294901760
      %4071 = vmatmul.mubr.f32.gmra.mrb[0].mxu0 %v4070
      %v4072 = vpop.f32.mrb[0].mxu0
      %v4073 = vadd.f32 %v3896, %v4072
      %v4074 = vpop.f32.mrb[0].mxu0
      %4075 = vmatprep.mubr.f32.mxu0 0.0
      %v4076 = vand.u32 %v3918, 4294901760
      %v4077 = vsub.f32 %v3918, %v4076
      %v4078 = vand.u32 %v4077, 4294901760
      %v4079 = vsub.f32 %v4077, %v4078
      %v4080 = vand.u32 %v4079, 4294901760
      %4081 = vmatmul.mubr.f32.gmra.mrb[0].mxu0 %v4080
      %v4082 = vpop.f32.mrb[0].mxu0
      %v4083 = vadd.f32 %v3896, %v4082
      %v4084 = vpop.f32.mrb[0].mxu0
      %4085 = vmatprep.mubr.f32.mxu0 0.0
      %v4086 = vand.u32 %v3921, 4294901760
      %v4087 = vsub.f32 %v3921, %v4086
      %v4088 = vand.u32 %v4087, 4294901760
      %v4089 = vsub.f32 %v4087, %v4088
      %v4090 = vand.u32 %v4089, 4294901760
      %4091 = vmatmul.mubr.f32.gmra.mrb[0].mxu0 %v4090
      %v4092 = vpop.f32.mrb[0].mxu0
      %v4093 = vadd.f32 %v3896, %v4092
      %v4094 = vpop.f32.mrb[0].mxu0
      %4095 = vmatprep.mubr.f32.mxu0 0.0
      %v4096 = vand.u32 %v3924, 4294901760
      %v4097 = vsub.f32 %v3924, %v4096
      %v4098 = vand.u32 %v4097, 4294901760
      %v4099 = vsub.f32 %v4097, %v4098
      %v4100 = vand.u32 %v4099, 4294901760
      %4101 = vmatmul.mubr.f32.gmra.mrb[0].mxu0 %v4100
      %v4102 = vpop.f32.mrb[0].mxu0
      %v4103 = vadd.f32 %v3896, %v4102
      %v4104 = vpop.f32.mrb[0].mxu0
      %4105 = vmatprep.mubr.f32.mxu0 0.0
      %v4106 = vand.u32 %v3927, 4294901760
      %v4107 = vsub.f32 %v3927, %v4106
      %v4108 = vand.u32 %v4107, 4294901760
      %v4109 = vsub.f32 %v4107, %v4108
      %v4110 = vand.u32 %v4109, 4294901760
      %4111 = vmatmul.mubr.f32.gmra.mrb[0].mxu0 %v4110
      %v4112 = vpop.f32.mrb[0].mxu0
      %v4113 = vadd.f32 %v3896, %v4112
      %v4114 = vpop.f32.mrb[0].mxu0
      %4115 = vmatprep.mubr.f32.mxu0 0.0
      %v4116 = vand.u32 %v3930, 4294901760
      %v4117 = vsub.f32 %v3930, %v4116
      %v4118 = vand.u32 %v4117, 4294901760
      %v4119 = vsub.f32 %v4117, %v4118
      %v4120 = vand.u32 %v4119, 4294901760
      %4121 = vmatmul.mubr.f32.gmra.mrb[0].mxu0 %v4120
      %v4122 = vpop.f32.mrb[0].mxu0
      %v4123 = vadd.f32 %v3896, %v4122
      %v4124 = vpop.f32.mrb[0].mxu0
      %4125 = vmatprep.mubr.f32.mxu0 0.0
      %v4126 = vand.u32 %v3933, 4294901760
      %v4127 = vsub.f32 %v3933, %v4126
      %v4128 = vand.u32 %v4127, 4294901760
      %v4129 = vsub.f32 %v4127, %v4128
      %v4130 = vand.u32 %v4129, 4294901760
      %4131 = vmatmul.mubr.f32.gmra.mrb[0].mxu0 %v4130
      %v4132 = vpop.f32.mrb[0].mxu0
      %v4133 = vadd.f32 %v3896, %v4132
      %v4134 = vpop.f32.mrb[0].mxu0
      %4135 = vmatprep.mubr.f32.mxu0 0.0
      %v4136 = vand.u32 %v3936, 4294901760
      %v4137 = vsub.f32 %v3936, %v4136
      %v4138 = vand.u32 %v4137, 4294901760
      %v4139 = vsub.f32 %v4137, %v4138
      %v4140 = vand.u32 %v4139, 4294901760
      %4141 = vmatmul.mubr.f32.gmra.mrb[0].mxu0 %v4140
      %v4142 = vpop.f32.mrb[0].mxu0
      %v4143 = vadd.f32 %v3896, %v4142
      %v4144 = vpop.f32.mrb[0].mxu0
      %4145 = vmatprep.mubr.f32.mxu0 0.0
      %v4146 = vand.u32 %v3939, 4294901760
      %v4147 = vsub.f32 %v3939, %v4146
      %v4148 = vand.u32 %v4147, 4294901760
      %v4149 = vsub.f32 %v4147, %v4148
      %v4150 = vand.u32 %v4149, 4294901760
      %4151 = vmatmul.mubr.f32.gmra.mrb[0].mxu0 %v4150
      %v4152 = vpop.f32.mrb[0].mxu0
      %v4153 = vadd.f32 %v3896, %v4152
      %v4154 = vpop.f32.mrb[0].mxu0
      %4155 = vmatprep.mubr.f32.mxu0 0.0
      %v4156 = vand.u32 %v3942, 4294901760
      %v4157 = vsub.f32 %v3942, %v4156
      %v4158 = vand.u32 %v4157, 4294901760
      %v4159 = vsub.f32 %v4157, %v4158
      %v4160 = vand.u32 %v4159, 4294901760
      %4161 = vmatmul.mubr.f32.gmra.mrb[0].mxu0 %v4160
      %v4162 = vpop.f32.mrb[0].mxu0
      %v4163 = vadd.f32 %v3896, %v4162
      %v4164 = vpop.f32.mrb[0].mxu0
      %4165 = vmatprep.mubr.f32.mxu0 0.0
      %v4166 = vand.u32 %v3945, 4294901760
      %v4167 = vsub.f32 %v3945, %v4166
      %v4168 = vand.u32 %v4167, 4294901760
      %v4169 = vsub.f32 %v4167, %v4168
      %v4170 = vand.u32 %v4169, 4294901760
      %4171 = vmatmul.mubr.f32.gmra.mrb[0].mxu0 %v4170
      %v4172 = vpop.f32.mrb[0].mxu0
      %v4173 = vadd.f32 %v3896, %v4172
      %v4174 = vpop.f32.mrb[0].mxu0
      %4175 = vdwg.mxu0
      %4176 = vmatprep.subr.mxu0 0.0
      %v4177 = vand.u32 %v3887, 4294901760
      %v4178 = vsub.f32 %v3887, %v4177
      %v4179 = vand.u32 %v4178, 4294901760
      %v4180 = vsub.f32 %v4178, %v4179
      %v4181 = vand.u32 %v4180, 4294901760
      %4182 = vmatpush1.msra.mxu0 %v4181
      %4183 = vmatprep.subr.mxu0 0.0
      %v4184 = vand.u32 %v3888, 4294901760
      %v4185 = vsub.f32 %v3888, %v4184
      %v4186 = vand.u32 %v4185, 4294901760
      %v4187 = vsub.f32 %v4185, %v4186
      %v4188 = vand.u32 %v4187, 4294901760
      %4189 = vmatpush1.msra.mxu0 %v4188
      %4190 = vmatprep.subr.mxu0 0.0
      %v4191 = vand.u32 %v3889, 4294901760
      %v4192 = vsub.f32 %v3889, %v4191
      %v4193 = vand.u32 %v4192, 4294901760
      %v4194 = vsub.f32 %v4192, %v4193
      %v4195 = vand.u32 %v4194, 4294901760
      %4196 = vmatpush1.msra.mxu0 %v4195
      %4197 = vmatprep.subr.mxu0 0.0
      %v4198 = vand.u32 %v3890, 4294901760
      %v4199 = vsub.f32 %v3890, %v4198
      %v4200 = vand.u32 %v4199, 4294901760
      %v4201 = vsub.f32 %v4199, %v4200
      %v4202 = vand.u32 %v4201, 4294901760
      %4203 = vmatpush1.msra.mxu0 %v4202
      %4204 = vmatprep.subr.mxu0 0.0
      %4205 = vmatpush1.msra.mxu0 0.0
      %4206 = vmatprep.subr.mxu0 0.0
      %4207 = vmatpush1.msra.mxu0 0.0
      %4208 = vmatprep.subr.mxu0 0.0
      %4209 = vmatpush1.msra.mxu0 0.0
      %4210 = vmatprep.subr.mxu0 0.0
      %4211 = vmatpush1.msra.mxu0 0.0
      %4212 = vmatprep.subr.mxu0 0.0
      %4213 = vmatpush1.msra.mxu0 0.0
      %4214 = vmatprep.subr.mxu0 0.0
      %4215 = vmatpush1.msra.mxu0 0.0
      %4216 = vmatprep.subr.mxu0 0.0
      %4217 = vmatpush1.msra.mxu0 0.0
      %4218 = vmatprep.subr.mxu0 0.0
      %4219 = vmatpush1.msra.mxu0 0.0
      %4220 = vmatprep.subr.mxu0 0.0
      %4221 = vmatpush1.msra.mxu0 0.0
      %4222 = vmatprep.subr.mxu0 0.0
      %4223 = vmatpush1.msra.mxu0 0.0
      %4224 = vmatprep.subr.mxu0 0.0
      %4225 = vmatpush1.msra.mxu0 0.0
      %4226 = vmatprep.subr.mxu0 0.0
      %4227 = vmatpush1.msra.mxu0 0.0
      %4228 = vmatprep.subr.mxu0 0.0
      %4229 = vmatpush1.msra.mxu0 0.0
      %4230 = vmatprep.subr.mxu0 0.0
      %4231 = vmatpush1.msra.mxu0 0.0
      %4232 = vmatprep.subr.mxu0 0.0
      %4233 = vmatpush1.msra.mxu0 0.0
      %4234 = vmatprep.subr.mxu0 0.0
      %4235 = vmatpush1.msra.mxu0 0.0
      %4236 = vmatprep.subr.mxu0 0.0
      %4237 = vmatpush1.msra.mxu0 0.0
      %4238 = vmatprep.subr.mxu0 0.0
      %4239 = vmatpush1.msra.mxu0 0.0
      %4240 = vmatprep.subr.mxu0 0.0
      %4241 = vmatpush1.msra.mxu0 0.0
      %4242 = vmatprep.subr.mxu0 0.0
      %4243 = vmatpush1.msra.mxu0 0.0
      %4244 = vmatprep.subr.mxu0 0.0
      %4245 = vmatpush1.msra.mxu0 0.0
      %4246 = vmatprep.subr.mxu0 0.0
      %4247 = vmatpush1.msra.mxu0 0.0
      %4248 = vmatprep.subr.mxu0 0.0
      %4249 = vmatpush1.msra.mxu0 0.0
      %4250 = vmatprep.subr.mxu0 0.0
      %4251 = vmatpush1.msra.mxu0 0.0
      %4252 = vmatprep.subr.mxu0 0.0
      %4253 = vmatpush1.msra.mxu0 0.0
      %4254 = vmatprep.subr.mxu0 0.0
      %4255 = vmatpush1.msra.mxu0 0.0
      %4256 = vmatprep.subr.mxu0 0.0
      %4257 = vmatpush1.msra.mxu0 0.0
      %4258 = vmatprep.subr.mxu0 0.0
      %4259 = vmatpush1.msra.mxu0 0.0
      %4260 = vmatprep.mubr.f32.mxu0 0.0
      %v4261 = vand.u32 %v3900, 4294901760
      %4262 = vmatmul.mubr.f32.gmra.mrb[0].mxu0 %v4261
      %v4263 = vpop.f32.mrb[0].mxu0
      %v4264 = vadd.f32 %v4023, %v4263
      %v4265 = vpop.f32.mrb[0].mxu0
      %4266 = vmatprep.mubr.f32.mxu0 0.0
      %v4267 = vand.u32 %v3903, 4294901760
      %4268 = vmatmul.mubr.f32.gmra.mrb[0].mxu0 %v4267
      %v4269 = vpop.f32.mrb[0].mxu0
      %v4270 = vadd.f32 %v4033, %v4269
      %v4271 = vpop.f32.mrb[0].mxu0
      %4272 = vmatprep.mubr.f32.mxu0 0.0
      %v4273 = vand.u32 %v3906, 4294901760
      %4274 = vmatmul.mubr.f32.gmra.mrb[0].mxu0 %v4273
      %v4275 = vpop.f32.mrb[0].mxu0
      %v4276 = vadd.f32 %v4043, %v4275
      %v4277 = vpop.f32.mrb[0].mxu0
      %4278 = vmatprep.mubr.f32.mxu0 0.0
      %v4279 = vand.u32 %v3909, 4294901760
      %4280 = vmatmul.mubr.f32.gmra.mrb[0].mxu0 %v4279
      %v4281 = vpop.f32.mrb[0].mxu0
      %v4282 = vadd.f32 %v4053, %v4281
      %v4283 = vpop.f32.mrb[0].mxu0
      %4284 = vmatprep.mubr.f32.mxu0 0.0
      %v4285 = vand.u32 %v3912, 4294901760
      %4286 = vmatmul.mubr.f32.gmra.mrb[0].mxu0 %v4285
      %v4287 = vpop.f32.mrb[0].mxu0
      %v4288 = vadd.f32 %v4063, %v4287
      %v4289 = vpop.f32.mrb[0].mxu0
      %4290 = vmatprep.mubr.f32.mxu0 0.0
      %v4291 = vand.u32 %v3915, 4294901760
      %4292 = vmatmul.mubr.f32.gmra.mrb[0].mxu0 %v4291
      %v4293 = vpop.f32.mrb[0].mxu0
      %v4294 = vadd.f32 %v4073, %v4293
      %v4295 = vpop.f32.mrb[0].mxu0
      %4296 = vmatprep.mubr.f32.mxu0 0.0
      %v4297 = vand.u32 %v3918, 4294901760
      %4298 = vmatmul.mubr.f32.gmra.mrb[0].mxu0 %v4297
      %v4299 = vpop.f32.mrb[0].mxu0
      %v4300 = vadd.f32 %v4083, %v4299
      %v4301 = vpop.f32.mrb[0].mxu0
      %4302 = vmatprep.mubr.f32.mxu0 0.0
      %v4303 = vand.u32 %v3921, 4294901760
      %4304 = vmatmul.mubr.f32.gmra.mrb[0].mxu0 %v4303
      %v4305 = vpop.f32.mrb[0].mxu0
      %v4306 = vadd.f32 %v4093, %v4305
      %v4307 = vpop.f32.mrb[0].mxu0
      %4308 = vmatprep.mubr.f32.mxu0 0.0
      %v4309 = vand.u32 %v3924, 4294901760
      %4310 = vmatmul.mubr.f32.gmra.mrb[0].mxu0 %v4309
      %v4311 = vpop.f32.mrb[0].mxu0
      %v4312 = vadd.f32 %v4103, %v4311
      %v4313 = vpop.f32.mrb[0].mxu0
      %4314 = vmatprep.mubr.f32.mxu0 0.0
      %v4315 = vand.u32 %v3927, 4294901760
      %4316 = vmatmul.mubr.f32.gmra.mrb[0].mxu0 %v4315
      %v4317 = vpop.f32.mrb[0].mxu0
      %v4318 = vadd.f32 %v4113, %v4317
      %v4319 = vpop.f32.mrb[0].mxu0
      %4320 = vmatprep.mubr.f32.mxu0 0.0
      %v4321 = vand.u32 %v3930, 4294901760
      %4322 = vmatmul.mubr.f32.gmra.mrb[0].mxu0 %v4321
      %v4323 = vpop.f32.mrb[0].mxu0
      %v4324 = vadd.f32 %v4123, %v4323
      %v4325 = vpop.f32.mrb[0].mxu0
      %4326 = vmatprep.mubr.f32.mxu0 0.0
      %v4327 = vand.u32 %v3933, 4294901760
      %4328 = vmatmul.mubr.f32.gmra.mrb[0].mxu0 %v4327
      %v4329 = vpop.f32.mrb[0].mxu0
      %v4330 = vadd.f32 %v4133, %v4329
      %v4331 = vpop.f32.mrb[0].mxu0
      %4332 = vmatprep.mubr.f32.mxu0 0.0
      %v4333 = vand.u32 %v3936, 4294901760
      %4334 = vmatmul.mubr.f32.gmra.mrb[0].mxu0 %v4333
      %v4335 = vpop.f32.mrb[0].mxu0
      %v4336 = vadd.f32 %v4143, %v4335
      %v4337 = vpop.f32.mrb[0].mxu0
      %4338 = vmatprep.mubr.f32.mxu0 0.0
      %v4339 = vand.u32 %v3939, 4294901760
      %4340 = vmatmul.mubr.f32.gmra.mrb[0].mxu0 %v4339
      %v4341 = vpop.f32.mrb[0].mxu0
      %v4342 = vadd.f32 %v4153, %v4341
      %v4343 = vpop.f32.mrb[0].mxu0
      %4344 = vmatprep.mubr.f32.mxu0 0.0
      %v4345 = vand.u32 %v3942, 4294901760
      %4346 = vmatmul.mubr.f32.gmra.mrb[0].mxu0 %v4345
      %v4347 = vpop.f32.mrb[0].mxu0
      %v4348 = vadd.f32 %v4163, %v4347
      %v4349 = vpop.f32.mrb[0].mxu0
      %4350 = vmatprep.mubr.f32.mxu0 0.0
      %v4351 = vand.u32 %v3945, 4294901760
      %4352 = vmatmul.mubr.f32.gmra.mrb[0].mxu0 %v4351
      %v4353 = vpop.f32.mrb[0].mxu0
      %v4354 = vadd.f32 %v4173, %v4353
      %v4355 = vpop.f32.mrb[0].mxu0
      %4356 = vdwg.mxu0
      %4357 = vmatprep.subr.mxu0 0.0
      %v4358 = vand.u32 %v3887, 4294901760
      %v4359 = vsub.f32 %v3887, %v4358
      %4360 = vmatpush1.msra.mxu0 %v4359
      %4361 = vmatprep.subr.mxu0 0.0
      %v4362 = vand.u32 %v3888, 4294901760
      %v4363 = vsub.f32 %v3888, %v4362
      %4364 = vmatpush1.msra.mxu0 %v4363
      %4365 = vmatprep.subr.mxu0 0.0
      %v4366 = vand.u32 %v3889, 4294901760
      %v4367 = vsub.f32 %v3889, %v4366
      %4368 = vmatpush1.msra.mxu0 %v4367
      %4369 = vmatprep.subr.mxu0 0.0
      %v4370 = vand.u32 %v3890, 4294901760
      %v4371 = vsub.f32 %v3890, %v4370
      %4372 = vmatpush1.msra.mxu0 %v4371
      %4373 = vmatprep.subr.mxu0 0.0
      %4374 = vmatpush1.msra.mxu0 0.0
      %4375 = vmatprep.subr.mxu0 0.0
      %4376 = vmatpush1.msra.mxu0 0.0
      %4377 = vmatprep.subr.mxu0 0.0
      %4378 = vmatpush1.msra.mxu0 0.0
      %4379 = vmatprep.subr.mxu0 0.0
      %4380 = vmatpush1.msra.mxu0 0.0
      %4381 = vmatprep.subr.mxu0 0.0
      %4382 = vmatpush1.msra.mxu0 0.0
      %4383 = vmatprep.subr.mxu0 0.0
      %4384 = vmatpush1.msra.mxu0 0.0
      %4385 = vmatprep.subr.mxu0 0.0
      %4386 = vmatpush1.msra.mxu0 0.0
      %4387 = vmatprep.subr.mxu0 0.0
      %4388 = vmatpush1.msra.mxu0 0.0
      %4389 = vmatprep.subr.mxu0 0.0
      %4390 = vmatpush1.msra.mxu0 0.0
      %4391 = vmatprep.subr.mxu0 0.0
      %4392 = vmatpush1.msra.mxu0 0.0
      %4393 = vmatprep.subr.mxu0 0.0
      %4394 = vmatpush1.msra.mxu0 0.0
      %4395 = vmatprep.subr.mxu0 0.0
      %4396 = vmatpush1.msra.mxu0 0.0
      %4397 = vmatprep.subr.mxu0 0.0
      %4398 = vmatpush1.msra.mxu0 0.0
      %4399 = vmatprep.subr.mxu0 0.0
      %4400 = vmatpush1.msra.mxu0 0.0
      %4401 = vmatprep.subr.mxu0 0.0
      %4402 = vmatpush1.msra.mxu0 0.0
      %4403 = vmatprep.subr.mxu0 0.0
      %4404 = vmatpush1.msra.mxu0 0.0
      %4405 = vmatprep.subr.mxu0 0.0
      %4406 = vmatpush1.msra.mxu0 0.0
      %4407 = vmatprep.subr.mxu0 0.0
      %4408 = vmatpush1.msra.mxu0 0.0
      %4409 = vmatprep.subr.mxu0 0.0
      %4410 = vmatpush1.msra.mxu0 0.0
      %4411 = vmatprep.subr.mxu0 0.0
      %4412 = vmatpush1.msra.mxu0 0.0
      %4413 = vmatprep.subr.mxu0 0.0
      %4414 = vmatpush1.msra.mxu0 0.0
      %4415 = vmatprep.subr.mxu0 0.0
      %4416 = vmatpush1.msra.mxu0 0.0
      %4417 = vmatprep.subr.mxu0 0.0
      %4418 = vmatpush1.msra.mxu0 0.0
      %4419 = vmatprep.subr.mxu0 0.0
      %4420 = vmatpush1.msra.mxu0 0.0
      %4421 = vmatprep.subr.mxu0 0.0
      %4422 = vmatpush1.msra.mxu0 0.0
      %4423 = vmatprep.subr.mxu0 0.0
      %4424 = vmatpush1.msra.mxu0 0.0
      %4425 = vmatprep.subr.mxu0 0.0
      %4426 = vmatpush1.msra.mxu0 0.0
      %4427 = vmatprep.subr.mxu0 0.0
      %4428 = vmatpush1.msra.mxu0 0.0
      %4429 = vmatprep.mubr.f32.mxu0 0.0
      %v4430 = vand.u32 %v3900, 4294901760
      %v4431 = vsub.f32 %v3900, %v4430
      %4432 = vmatmul.mubr.f32.gmra.mrb[0].mxu0 %v4431
      %v4433 = vpop.f32.mrb[0].mxu0
      %v4434 = vadd.f32 %v4264, %v4433
      %v4435 = vpop.f32.mrb[0].mxu0
      %4436 = vmatprep.mubr.f32.mxu0 0.0
      %v4437 = vand.u32 %v3903, 4294901760
      %v4438 = vsub.f32 %v3903, %v4437
      %4439 = vmatmul.mubr.f32.gmra.mrb[0].mxu0 %v4438
      %v4440 = vpop.f32.mrb[0].mxu0
      %v4441 = vadd.f32 %v4270, %v4440
      %v4442 = vpop.f32.mrb[0].mxu0
      %4443 = vmatprep.mubr.f32.mxu0 0.0
      %v4444 = vand.u32 %v3906, 4294901760
      %v4445 = vsub.f32 %v3906, %v4444
      %4446 = vmatmul.mubr.f32.gmra.mrb[0].mxu0 %v4445
      %v4447 = vpop.f32.mrb[0].mxu0
      %v4448 = vadd.f32 %v4276, %v4447
      %v4449 = vpop.f32.mrb[0].mxu0
      %4450 = vmatprep.mubr.f32.mxu0 0.0
      %v4451 = vand.u32 %v3909, 4294901760
      %v4452 = vsub.f32 %v3909, %v4451
      %4453 = vmatmul.mubr.f32.gmra.mrb[0].mxu0 %v4452
      %v4454 = vpop.f32.mrb[0].mxu0
      %v4455 = vadd.f32 %v4282, %v4454
      %v4456 = vpop.f32.mrb[0].mxu0
      %4457 = vmatprep.mubr.f32.mxu0 0.0
      %v4458 = vand.u32 %v3912, 4294901760
      %v4459 = vsub.f32 %v3912, %v4458
      %4460 = vmatmul.mubr.f32.gmra.mrb[0].mxu0 %v4459
      %v4461 = vpop.f32.mrb[0].mxu0
      %v4462 = vadd.f32 %v4288, %v4461
      %v4463 = vpop.f32.mrb[0].mxu0
      %4464 = vmatprep.mubr.f32.mxu0 0.0
      %v4465 = vand.u32 %v3915, 4294901760
      %v4466 = vsub.f32 %v3915, %v4465
      %4467 = vmatmul.mubr.f32.gmra.mrb[0].mxu0 %v4466
      %v4468 = vpop.f32.mrb[0].mxu0
      %v4469 = vadd.f32 %v4294, %v4468
      %v4470 = vpop.f32.mrb[0].mxu0
      %4471 = vmatprep.mubr.f32.mxu0 0.0
      %v4472 = vand.u32 %v3918, 4294901760
      %v4473 = vsub.f32 %v3918, %v4472
      %4474 = vmatmul.mubr.f32.gmra.mrb[0].mxu0 %v4473
      %v4475 = vpop.f32.mrb[0].mxu0
      %v4476 = vadd.f32 %v4300, %v4475
      %v4477 = vpop.f32.mrb[0].mxu0
      %4478 = vmatprep.mubr.f32.mxu0 0.0
      %v4479 = vand.u32 %v3921, 4294901760
      %v4480 = vsub.f32 %v3921, %v4479
      %4481 = vmatmul.mubr.f32.gmra.mrb[0].mxu0 %v4480
      %v4482 = vpop.f32.mrb[0].mxu0
      %v4483 = vadd.f32 %v4306, %v4482
      %v4484 = vpop.f32.mrb[0].mxu0
      %4485 = vmatprep.mubr.f32.mxu0 0.0
      %v4486 = vand.u32 %v3924, 4294901760
      %v4487 = vsub.f32 %v3924, %v4486
      %4488 = vmatmul.mubr.f32.gmra.mrb[0].mxu0 %v4487
      %v4489 = vpop.f32.mrb[0].mxu0
      %v4490 = vadd.f32 %v4312, %v4489
      %v4491 = vpop.f32.mrb[0].mxu0
      %4492 = vmatprep.mubr.f32.mxu0 0.0
      %v4493 = vand.u32 %v3927, 4294901760
      %v4494 = vsub.f32 %v3927, %v4493
      %4495 = vmatmul.mubr.f32.gmra.mrb[0].mxu0 %v4494
      %v4496 = vpop.f32.mrb[0].mxu0
      %v4497 = vadd.f32 %v4318, %v4496
      %v4498 = vpop.f32.mrb[0].mxu0
      %4499 = vmatprep.mubr.f32.mxu0 0.0
      %v4500 = vand.u32 %v3930, 4294901760
      %v4501 = vsub.f32 %v3930, %v4500
      %4502 = vmatmul.mubr.f32.gmra.mrb[0].mxu0 %v4501
      %v4503 = vpop.f32.mrb[0].mxu0
      %v4504 = vadd.f32 %v4324, %v4503
      %v4505 = vpop.f32.mrb[0].mxu0
      %4506 = vmatprep.mubr.f32.mxu0 0.0
      %v4507 = vand.u32 %v3933, 4294901760
      %v4508 = vsub.f32 %v3933, %v4507
      %4509 = vmatmul.mubr.f32.gmra.mrb[0].mxu0 %v4508
      %v4510 = vpop.f32.mrb[0].mxu0
      %v4511 = vadd.f32 %v4330, %v4510
      %v4512 = vpop.f32.mrb[0].mxu0
      %4513 = vmatprep.mubr.f32.mxu0 0.0
      %v4514 = vand.u32 %v3936, 4294901760
      %v4515 = vsub.f32 %v3936, %v4514
      %4516 = vmatmul.mubr.f32.gmra.mrb[0].mxu0 %v4515
      %v4517 = vpop.f32.mrb[0].mxu0
      %v4518 = vadd.f32 %v4336, %v4517
      %v4519 = vpop.f32.mrb[0].mxu0
      %4520 = vmatprep.mubr.f32.mxu0 0.0
      %v4521 = vand.u32 %v3939, 4294901760
      %v4522 = vsub.f32 %v3939, %v4521
      %4523 = vmatmul.mubr.f32.gmra.mrb[0].mxu0 %v4522
      %v4524 = vpop.f32.mrb[0].mxu0
      %v4525 = vadd.f32 %v4342, %v4524
      %v4526 = vpop.f32.mrb[0].mxu0
      %4527 = vmatprep.mubr.f32.mxu0 0.0
      %v4528 = vand.u32 %v3942, 4294901760
      %v4529 = vsub.f32 %v3942, %v4528
      %4530 = vmatmul.mubr.f32.gmra.mrb[0].mxu0 %v4529
      %v4531 = vpop.f32.mrb[0].mxu0
      %v4532 = vadd.f32 %v4348, %v4531
      %v4533 = vpop.f32.mrb[0].mxu0
      %4534 = vmatprep.mubr.f32.mxu0 0.0
      %v4535 = vand.u32 %v3945, 4294901760
      %v4536 = vsub.f32 %v3945, %v4535
      %4537 = vmatmul.mubr.f32.gmra.mrb[0].mxu0 %v4536
      %v4538 = vpop.f32.mrb[0].mxu0
      %v4539 = vadd.f32 %v4354, %v4538
      %v4540 = vpop.f32.mrb[0].mxu0
      %4541 = vdwg.mxu0
      %4542 = vmatprep.subr.mxu0 0.0
      %v4543 = vand.u32 %v3887, 4294901760
      %4544 = vmatpush1.msra.mxu0 %v4543
      %4545 = vmatprep.subr.mxu0 0.0
      %v4546 = vand.u32 %v3888, 4294901760
      %4547 = vmatpush1.msra.mxu0 %v4546
      %4548 = vmatprep.subr.mxu0 0.0
      %v4549 = vand.u32 %v3889, 4294901760
      %4550 = vmatpush1.msra.mxu0 %v4549
      %4551 = vmatprep.subr.mxu0 0.0
      %v4552 = vand.u32 %v3890, 4294901760
      %4553 = vmatpush1.msra.mxu0 %v4552
      %4554 = vmatprep.subr.mxu0 0.0
      %4555 = vmatpush1.msra.mxu0 0.0
      %4556 = vmatprep.subr.mxu0 0.0
      %4557 = vmatpush1.msra.mxu0 0.0
      %4558 = vmatprep.subr.mxu0 0.0
      %4559 = vmatpush1.msra.mxu0 0.0
      %4560 = vmatprep.subr.mxu0 0.0
      %4561 = vmatpush1.msra.mxu0 0.0
      %4562 = vmatprep.subr.mxu0 0.0
      %4563 = vmatpush1.msra.mxu0 0.0
      %4564 = vmatprep.subr.mxu0 0.0
      %4565 = vmatpush1.msra.mxu0 0.0
      %4566 = vmatprep.subr.mxu0 0.0
      %4567 = vmatpush1.msra.mxu0 0.0
      %4568 = vmatprep.subr.mxu0 0.0
      %4569 = vmatpush1.msra.mxu0 0.0
      %4570 = vmatprep.subr.mxu0 0.0
      %4571 = vmatpush1.msra.mxu0 0.0
      %4572 = vmatprep.subr.mxu0 0.0
      %4573 = vmatpush1.msra.mxu0 0.0
      %4574 = vmatprep.subr.mxu0 0.0
      %4575 = vmatpush1.msra.mxu0 0.0
      %4576 = vmatprep.subr.mxu0 0.0
      %4577 = vmatpush1.msra.mxu0 0.0
      %4578 = vmatprep.subr.mxu0 0.0
      %4579 = vmatpush1.msra.mxu0 0.0
      %4580 = vmatprep.subr.mxu0 0.0
      %4581 = vmatpush1.msra.mxu0 0.0
      %4582 = vmatprep.subr.mxu0 0.0
      %4583 = vmatpush1.msra.mxu0 0.0
      %4584 = vmatprep.subr.mxu0 0.0
      %4585 = vmatpush1.msra.mxu0 0.0
      %4586 = vmatprep.subr.mxu0 0.0
      %4587 = vmatpush1.msra.mxu0 0.0
      %4588 = vmatprep.subr.mxu0 0.0
      %4589 = vmatpush1.msra.mxu0 0.0
      %4590 = vmatprep.subr.mxu0 0.0
      %4591 = vmatpush1.msra.mxu0 0.0
      %4592 = vmatprep.subr.mxu0 0.0
      %4593 = vmatpush1.msra.mxu0 0.0
      %4594 = vmatprep.subr.mxu0 0.0
      %4595 = vmatpush1.msra.mxu0 0.0
      %4596 = vmatprep.subr.mxu0 0.0
      %4597 = vmatpush1.msra.mxu0 0.0
      %4598 = vmatprep.subr.mxu0 0.0
      %4599 = vmatpush1.msra.mxu0 0.0
      %4600 = vmatprep.subr.mxu0 0.0
      %4601 = vmatpush1.msra.mxu0 0.0
      %4602 = vmatprep.subr.mxu0 0.0
      %4603 = vmatpush1.msra.mxu0 0.0
      %4604 = vmatprep.subr.mxu0 0.0
      %4605 = vmatpush1.msra.mxu0 0.0
      %4606 = vmatprep.subr.mxu0 0.0
      %4607 = vmatpush1.msra.mxu0 0.0
      %4608 = vmatprep.subr.mxu0 0.0
      %4609 = vmatpush1.msra.mxu0 0.0
      %4610 = vmatprep.mubr.f32.mxu0 0.0
      %v4611 = vand.u32 %v3900, 4294901760
      %v4612 = vsub.f32 %v3900, %v4611
      %v4613 = vand.u32 %v4612, 4294901760
      %4614 = vmatmul.mubr.f32.gmra.mrb[0].mxu0 %v4613
      %v4615 = vpop.f32.mrb[0].mxu0
      %v4616 = vadd.f32 %v4434, %v4615
      %v4617 = vpop.f32.mrb[0].mxu0
      %4618 = vmatprep.mubr.f32.mxu0 0.0
      %v4619 = vand.u32 %v3903, 4294901760
      %v4620 = vsub.f32 %v3903, %v4619
      %v4621 = vand.u32 %v4620, 4294901760
      %4622 = vmatmul.mubr.f32.gmra.mrb[0].mxu0 %v4621
      %v4623 = vpop.f32.mrb[0].mxu0
      %v4624 = vadd.f32 %v4441, %v4623
      %v4625 = vpop.f32.mrb[0].mxu0
      %4626 = vmatprep.mubr.f32.mxu0 0.0
      %v4627 = vand.u32 %v3906, 4294901760
      %v4628 = vsub.f32 %v3906, %v4627
      %v4629 = vand.u32 %v4628, 4294901760
      %4630 = vmatmul.mubr.f32.gmra.mrb[0].mxu0 %v4629
      %v4631 = vpop.f32.mrb[0].mxu0
      %v4632 = vadd.f32 %v4448, %v4631
      %v4633 = vpop.f32.mrb[0].mxu0
      %4634 = vmatprep.mubr.f32.mxu0 0.0
      %v4635 = vand.u32 %v3909, 4294901760
      %v4636 = vsub.f32 %v3909, %v4635
      %v4637 = vand.u32 %v4636, 4294901760
      %4638 = vmatmul.mubr.f32.gmra.mrb[0].mxu0 %v4637
      %v4639 = vpop.f32.mrb[0].mxu0
      %v4640 = vadd.f32 %v4455, %v4639
      %v4641 = vpop.f32.mrb[0].mxu0
      %4642 = vmatprep.mubr.f32.mxu0 0.0
      %v4643 = vand.u32 %v3912, 4294901760
      %v4644 = vsub.f32 %v3912, %v4643
      %v4645 = vand.u32 %v4644, 4294901760
      %4646 = vmatmul.mubr.f32.gmra.mrb[0].mxu0 %v4645
      %v4647 = vpop.f32.mrb[0].mxu0
      %v4648 = vadd.f32 %v4462, %v4647
      %v4649 = vpop.f32.mrb[0].mxu0
      %4650 = vmatprep.mubr.f32.mxu0 0.0
      %v4651 = vand.u32 %v3915, 4294901760
      %v4652 = vsub.f32 %v3915, %v4651
      %v4653 = vand.u32 %v4652, 4294901760
      %4654 = vmatmul.mubr.f32.gmra.mrb[0].mxu0 %v4653
      %v4655 = vpop.f32.mrb[0].mxu0
      %v4656 = vadd.f32 %v4469, %v4655
      %v4657 = vpop.f32.mrb[0].mxu0
      %4658 = vmatprep.mubr.f32.mxu0 0.0
      %v4659 = vand.u32 %v3918, 4294901760
      %v4660 = vsub.f32 %v3918, %v4659
      %v4661 = vand.u32 %v4660, 4294901760
      %4662 = vmatmul.mubr.f32.gmra.mrb[0].mxu0 %v4661
      %v4663 = vpop.f32.mrb[0].mxu0
      %v4664 = vadd.f32 %v4476, %v4663
      %v4665 = vpop.f32.mrb[0].mxu0
      %4666 = vmatprep.mubr.f32.mxu0 0.0
      %v4667 = vand.u32 %v3921, 4294901760
      %v4668 = vsub.f32 %v3921, %v4667
      %v4669 = vand.u32 %v4668, 4294901760
      %4670 = vmatmul.mubr.f32.gmra.mrb[0].mxu0 %v4669
      %v4671 = vpop.f32.mrb[0].mxu0
      %v4672 = vadd.f32 %v4483, %v4671
      %v4673 = vpop.f32.mrb[0].mxu0
      %4674 = vmatprep.mubr.f32.mxu0 0.0
      %v4675 = vand.u32 %v3924, 4294901760
      %v4676 = vsub.f32 %v3924, %v4675
      %v4677 = vand.u32 %v4676, 4294901760
      %4678 = vmatmul.mubr.f32.gmra.mrb[0].mxu0 %v4677
      %v4679 = vpop.f32.mrb[0].mxu0
      %v4680 = vadd.f32 %v4490, %v4679
      %v4681 = vpop.f32.mrb[0].mxu0
      %4682 = vmatprep.mubr.f32.mxu0 0.0
      %v4683 = vand.u32 %v3927, 4294901760
      %v4684 = vsub.f32 %v3927, %v4683
      %v4685 = vand.u32 %v4684, 4294901760
      %4686 = vmatmul.mubr.f32.gmra.mrb[0].mxu0 %v4685
      %v4687 = vpop.f32.mrb[0].mxu0
      %v4688 = vadd.f32 %v4497, %v4687
      %v4689 = vpop.f32.mrb[0].mxu0
      %4690 = vmatprep.mubr.f32.mxu0 0.0
      %v4691 = vand.u32 %v3930, 4294901760
      %v4692 = vsub.f32 %v3930, %v4691
      %v4693 = vand.u32 %v4692, 4294901760
      %4694 = vmatmul.mubr.f32.gmra.mrb[0].mxu0 %v4693
      %v4695 = vpop.f32.mrb[0].mxu0
      %v4696 = vadd.f32 %v4504, %v4695
      %v4697 = vpop.f32.mrb[0].mxu0
      %4698 = vmatprep.mubr.f32.mxu0 0.0
      %v4699 = vand.u32 %v3933, 4294901760
      %v4700 = vsub.f32 %v3933, %v4699
      %v4701 = vand.u32 %v4700, 4294901760
      %4702 = vmatmul.mubr.f32.gmra.mrb[0].mxu0 %v4701
      %v4703 = vpop.f32.mrb[0].mxu0
      %v4704 = vadd.f32 %v4511, %v4703
      %v4705 = vpop.f32.mrb[0].mxu0
      %4706 = vmatprep.mubr.f32.mxu0 0.0
      %v4707 = vand.u32 %v3936, 4294901760
      %v4708 = vsub.f32 %v3936, %v4707
      %v4709 = vand.u32 %v4708, 4294901760
      %4710 = vmatmul.mubr.f32.gmra.mrb[0].mxu0 %v4709
      %v4711 = vpop.f32.mrb[0].mxu0
      %v4712 = vadd.f32 %v4518, %v4711
      %v4713 = vpop.f32.mrb[0].mxu0
      %4714 = vmatprep.mubr.f32.mxu0 0.0
      %v4715 = vand.u32 %v3939, 4294901760
      %v4716 = vsub.f32 %v3939, %v4715
      %v4717 = vand.u32 %v4716, 4294901760
      %4718 = vmatmul.mubr.f32.gmra.mrb[0].mxu0 %v4717
      %v4719 = vpop.f32.mrb[0].mxu0
      %v4720 = vadd.f32 %v4525, %v4719
      %v4721 = vpop.f32.mrb[0].mxu0
      %4722 = vmatprep.mubr.f32.mxu0 0.0
      %v4723 = vand.u32 %v3942, 4294901760
      %v4724 = vsub.f32 %v3942, %v4723
      %v4725 = vand.u32 %v4724, 4294901760
      %4726 = vmatmul.mubr.f32.gmra.mrb[0].mxu0 %v4725
      %v4727 = vpop.f32.mrb[0].mxu0
      %v4728 = vadd.f32 %v4532, %v4727
      %v4729 = vpop.f32.mrb[0].mxu0
      %4730 = vmatprep.mubr.f32.mxu0 0.0
      %v4731 = vand.u32 %v3945, 4294901760
      %v4732 = vsub.f32 %v3945, %v4731
      %v4733 = vand.u32 %v4732, 4294901760
      %4734 = vmatmul.mubr.f32.gmra.mrb[0].mxu0 %v4733
      %v4735 = vpop.f32.mrb[0].mxu0
      %v4736 = vadd.f32 %v4539, %v4735
      %v4737 = vpop.f32.mrb[0].mxu0
      %4738 = vdwg.mxu0
      %4739 = vmatprep.subr.mxu0 0.0
      %v4740 = vand.u32 %v3887, 4294901760
      %v4741 = vsub.f32 %v3887, %v4740
      %v4742 = vand.u32 %v4741, 4294901760
      %4743 = vmatpush1.msra.mxu0 %v4742
      %4744 = vmatprep.subr.mxu0 0.0
      %v4745 = vand.u32 %v3888, 4294901760
      %v4746 = vsub.f32 %v3888, %v4745
      %v4747 = vand.u32 %v4746, 4294901760
      %4748 = vmatpush1.msra.mxu0 %v4747
      %4749 = vmatprep.subr.mxu0 0.0
      %v4750 = vand.u32 %v3889, 4294901760
      %v4751 = vsub.f32 %v3889, %v4750
      %v4752 = vand.u32 %v4751, 4294901760
      %4753 = vmatpush1.msra.mxu0 %v4752
      %4754 = vmatprep.subr.mxu0 0.0
      %v4755 = vand.u32 %v3890, 4294901760
      %v4756 = vsub.f32 %v3890, %v4755
      %v4757 = vand.u32 %v4756, 4294901760
      %4758 = vmatpush1.msra.mxu0 %v4757
      %4759 = vmatprep.subr.mxu0 0.0
      %4760 = vmatpush1.msra.mxu0 0.0
      %4761 = vmatprep.subr.mxu0 0.0
      %4762 = vmatpush1.msra.mxu0 0.0
      %4763 = vmatprep.subr.mxu0 0.0
      %4764 = vmatpush1.msra.mxu0 0.0
      %4765 = vmatprep.subr.mxu0 0.0
      %4766 = vmatpush1.msra.mxu0 0.0
      %4767 = vmatprep.subr.mxu0 0.0
      %4768 = vmatpush1.msra.mxu0 0.0
      %4769 = vmatprep.subr.mxu0 0.0
      %4770 = vmatpush1.msra.mxu0 0.0
      %4771 = vmatprep.subr.mxu0 0.0
      %4772 = vmatpush1.msra.mxu0 0.0
      %4773 = vmatprep.subr.mxu0 0.0
      %4774 = vmatpush1.msra.mxu0 0.0
      %4775 = vmatprep.subr.mxu0 0.0
      %4776 = vmatpush1.msra.mxu0 0.0
      %4777 = vmatprep.subr.mxu0 0.0
      %4778 = vmatpush1.msra.mxu0 0.0
      %4779 = vmatprep.subr.mxu0 0.0
      %4780 = vmatpush1.msra.mxu0 0.0
      %4781 = vmatprep.subr.mxu0 0.0
      %4782 = vmatpush1.msra.mxu0 0.0
      %4783 = vmatprep.subr.mxu0 0.0
      %4784 = vmatpush1.msra.mxu0 0.0
      %4785 = vmatprep.subr.mxu0 0.0
      %4786 = vmatpush1.msra.mxu0 0.0
      %4787 = vmatprep.subr.mxu0 0.0
      %4788 = vmatpush1.msra.mxu0 0.0
      %4789 = vmatprep.subr.mxu0 0.0
      %4790 = vmatpush1.msra.mxu0 0.0
      %4791 = vmatprep.subr.mxu0 0.0
      %4792 = vmatpush1.msra.mxu0 0.0
      %4793 = vmatprep.subr.mxu0 0.0
      %4794 = vmatpush1.msra.mxu0 0.0
      %4795 = vmatprep.subr.mxu0 0.0
      %4796 = vmatpush1.msra.mxu0 0.0
      %4797 = vmatprep.subr.mxu0 0.0
      %4798 = vmatpush1.msra.mxu0 0.0
      %4799 = vmatprep.subr.mxu0 0.0
      %4800 = vmatpush1.msra.mxu0 0.0
      %4801 = vmatprep.subr.mxu0 0.0
      %4802 = vmatpush1.msra.mxu0 0.0
      %4803 = vmatprep.subr.mxu0 0.0
      %4804 = vmatpush1.msra.mxu0 0.0
      %4805 = vmatprep.subr.mxu0 0.0
      %4806 = vmatpush1.msra.mxu0 0.0
      %4807 = vmatprep.subr.mxu0 0.0
      %4808 = vmatpush1.msra.mxu0 0.0
      %4809 = vmatprep.subr.mxu0 0.0
      %4810 = vmatpush1.msra.mxu0 0.0
      %4811 = vmatprep.subr.mxu0 0.0
      %4812 = vmatpush1.msra.mxu0 0.0
      %4813 = vmatprep.subr.mxu0 0.0
      %4814 = vmatpush1.msra.mxu0 0.0
      %4815 = vmatprep.mubr.f32.mxu0 0.0
      %v4816 = vand.u32 %v3900, 4294901760
      %4817 = vmatmul.mubr.f32.gmra.mrb[0].mxu0 %v4816
      %v4818 = vpop.f32.mrb[0].mxu0
      %v4819 = vadd.f32 %v4616, %v4818
      %v4820 = vpop.f32.mrb[0].mxu0
      %4821 = vmatprep.mubr.f32.mxu0 0.0
      %v4822 = vand.u32 %v3903, 4294901760
      %4823 = vmatmul.mubr.f32.gmra.mrb[0].mxu0 %v4822
      %v4824 = vpop.f32.mrb[0].mxu0
      %v4825 = vadd.f32 %v4624, %v4824
      %v4826 = vpop.f32.mrb[0].mxu0
      %4827 = vmatprep.mubr.f32.mxu0 0.0
      %v4828 = vand.u32 %v3906, 4294901760
      %4829 = vmatmul.mubr.f32.gmra.mrb[0].mxu0 %v4828
      %v4830 = vpop.f32.mrb[0].mxu0
      %v4831 = vadd.f32 %v4632, %v4830
      %v4832 = vpop.f32.mrb[0].mxu0
      %4833 = vmatprep.mubr.f32.mxu0 0.0
      %v4834 = vand.u32 %v3909, 4294901760
      %4835 = vmatmul.mubr.f32.gmra.mrb[0].mxu0 %v4834
      %v4836 = vpop.f32.mrb[0].mxu0
      %v4837 = vadd.f32 %v4640, %v4836
      %v4838 = vpop.f32.mrb[0].mxu0
      %4839 = vmatprep.mubr.f32.mxu0 0.0
      %v4840 = vand.u32 %v3912, 4294901760
      %4841 = vmatmul.mubr.f32.gmra.mrb[0].mxu0 %v4840
      %v4842 = vpop.f32.mrb[0].mxu0
      %v4843 = vadd.f32 %v4648, %v4842
      %v4844 = vpop.f32.mrb[0].mxu0
      %4845 = vmatprep.mubr.f32.mxu0 0.0
      %v4846 = vand.u32 %v3915, 4294901760
      %4847 = vmatmul.mubr.f32.gmra.mrb[0].mxu0 %v4846
      %v4848 = vpop.f32.mrb[0].mxu0
      %v4849 = vadd.f32 %v4656, %v4848
      %v4850 = vpop.f32.mrb[0].mxu0
      %4851 = vmatprep.mubr.f32.mxu0 0.0
      %v4852 = vand.u32 %v3918, 4294901760
      %4853 = vmatmul.mubr.f32.gmra.mrb[0].mxu0 %v4852
      %v4854 = vpop.f32.mrb[0].mxu0
      %v4855 = vadd.f32 %v4664, %v4854
      %v4856 = vpop.f32.mrb[0].mxu0
      %4857 = vmatprep.mubr.f32.mxu0 0.0
      %v4858 = vand.u32 %v3921, 4294901760
      %4859 = vmatmul.mubr.f32.gmra.mrb[0].mxu0 %v4858
      %v4860 = vpop.f32.mrb[0].mxu0
      %v4861 = vadd.f32 %v4672, %v4860
      %v4862 = vpop.f32.mrb[0].mxu0
      %4863 = vmatprep.mubr.f32.mxu0 0.0
      %v4864 = vand.u32 %v3924, 4294901760
      %4865 = vmatmul.mubr.f32.gmra.mrb[0].mxu0 %v4864
      %v4866 = vpop.f32.mrb[0].mxu0
      %v4867 = vadd.f32 %v4680, %v4866
      %v4868 = vpop.f32.mrb[0].mxu0
      %4869 = vmatprep.mubr.f32.mxu0 0.0
      %v4870 = vand.u32 %v3927, 4294901760
      %4871 = vmatmul.mubr.f32.gmra.mrb[0].mxu0 %v4870
      %v4872 = vpop.f32.mrb[0].mxu0
      %v4873 = vadd.f32 %v4688, %v4872
      %v4874 = vpop.f32.mrb[0].mxu0
      %4875 = vmatprep.mubr.f32.mxu0 0.0
      %v4876 = vand.u32 %v3930, 4294901760
      %4877 = vmatmul.mubr.f32.gmra.mrb[0].mxu0 %v4876
      %v4878 = vpop.f32.mrb[0].mxu0
      %v4879 = vadd.f32 %v4696, %v4878
      %v4880 = vpop.f32.mrb[0].mxu0
      %4881 = vmatprep.mubr.f32.mxu0 0.0
      %v4882 = vand.u32 %v3933, 4294901760
      %4883 = vmatmul.mubr.f32.gmra.mrb[0].mxu0 %v4882
      %v4884 = vpop.f32.mrb[0].mxu0
      %v4885 = vadd.f32 %v4704, %v4884
      %v4886 = vpop.f32.mrb[0].mxu0
      %4887 = vmatprep.mubr.f32.mxu0 0.0
      %v4888 = vand.u32 %v3936, 4294901760
      %4889 = vmatmul.mubr.f32.gmra.mrb[0].mxu0 %v4888
      %v4890 = vpop.f32.mrb[0].mxu0
      %v4891 = vadd.f32 %v4712, %v4890
      %v4892 = vpop.f32.mrb[0].mxu0
      %4893 = vmatprep.mubr.f32.mxu0 0.0
      %v4894 = vand.u32 %v3939, 4294901760
      %4895 = vmatmul.mubr.f32.gmra.mrb[0].mxu0 %v4894
      %v4896 = vpop.f32.mrb[0].mxu0
      %v4897 = vadd.f32 %v4720, %v4896
      %v4898 = vpop.f32.mrb[0].mxu0
      %4899 = vmatprep.mubr.f32.mxu0 0.0
      %v4900 = vand.u32 %v3942, 4294901760
      %4901 = vmatmul.mubr.f32.gmra.mrb[0].mxu0 %v4900
      %v4902 = vpop.f32.mrb[0].mxu0
      %v4903 = vadd.f32 %v4728, %v4902
      %v4904 = vpop.f32.mrb[0].mxu0
      %4905 = vmatprep.mubr.f32.mxu0 0.0
      %v4906 = vand.u32 %v3945, 4294901760
      %4907 = vmatmul.mubr.f32.gmra.mrb[0].mxu0 %v4906
      %v4908 = vpop.f32.mrb[0].mxu0
      %v4909 = vadd.f32 %v4736, %v4908
      %v4910 = vpop.f32.mrb[0].mxu0
      %4911 = vdwg.mxu0
      %4912 = vmatprep.subr.mxu0 0.0
      %v4913 = vand.u32 %v3887, 4294901760
      %4914 = vmatpush1.msra.mxu0 %v4913
      %4915 = vmatprep.subr.mxu0 0.0
      %v4916 = vand.u32 %v3888, 4294901760
      %4917 = vmatpush1.msra.mxu0 %v4916
      %4918 = vmatprep.subr.mxu0 0.0
      %v4919 = vand.u32 %v3889, 4294901760
      %4920 = vmatpush1.msra.mxu0 %v4919
      %4921 = vmatprep.subr.mxu0 0.0
      %v4922 = vand.u32 %v3890, 4294901760
      %4923 = vmatpush1.msra.mxu0 %v4922
      %4924 = vmatprep.subr.mxu0 0.0
      %4925 = vmatpush1.msra.mxu0 0.0
      %4926 = vmatprep.subr.mxu0 0.0
      %4927 = vmatpush1.msra.mxu0 0.0
      %4928 = vmatprep.subr.mxu0 0.0
      %4929 = vmatpush1.msra.mxu0 0.0
      %4930 = vmatprep.subr.mxu0 0.0
      %4931 = vmatpush1.msra.mxu0 0.0
      %4932 = vmatprep.subr.mxu0 0.0
      %4933 = vmatpush1.msra.mxu0 0.0
      %4934 = vmatprep.subr.mxu0 0.0
      %4935 = vmatpush1.msra.mxu0 0.0
      %4936 = vmatprep.subr.mxu0 0.0
      %4937 = vmatpush1.msra.mxu0 0.0
      %4938 = vmatprep.subr.mxu0 0.0
      %4939 = vmatpush1.msra.mxu0 0.0
      %4940 = vmatprep.subr.mxu0 0.0
      %4941 = vmatpush1.msra.mxu0 0.0
      %4942 = vmatprep.subr.mxu0 0.0
      %4943 = vmatpush1.msra.mxu0 0.0
      %4944 = vmatprep.subr.mxu0 0.0
      %4945 = vmatpush1.msra.mxu0 0.0
      %4946 = vmatprep.subr.mxu0 0.0
      %4947 = vmatpush1.msra.mxu0 0.0
      %4948 = vmatprep.subr.mxu0 0.0
      %4949 = vmatpush1.msra.mxu0 0.0
      %4950 = vmatprep.subr.mxu0 0.0
      %4951 = vmatpush1.msra.mxu0 0.0
      %4952 = vmatprep.subr.mxu0 0.0
      %4953 = vmatpush1.msra.mxu0 0.0
      %4954 = vmatprep.subr.mxu0 0.0
      %4955 = vmatpush1.msra.mxu0 0.0
      %4956 = vmatprep.subr.mxu0 0.0
      %4957 = vmatpush1.msra.mxu0 0.0
      %4958 = vmatprep.subr.mxu0 0.0
      %4959 = vmatpush1.msra.mxu0 0.0
      %4960 = vmatprep.subr.mxu0 0.0
      %4961 = vmatpush1.msra.mxu0 0.0
      %4962 = vmatprep.subr.mxu0 0.0
      %4963 = vmatpush1.msra.mxu0 0.0
      %4964 = vmatprep.subr.mxu0 0.0
      %4965 = vmatpush1.msra.mxu0 0.0
      %4966 = vmatprep.subr.mxu0 0.0
      %4967 = vmatpush1.msra.mxu0 0.0
      %4968 = vmatprep.subr.mxu0 0.0
      %4969 = vmatpush1.msra.mxu0 0.0
      %4970 = vmatprep.subr.mxu0 0.0
      %4971 = vmatpush1.msra.mxu0 0.0
      %4972 = vmatprep.subr.mxu0 0.0
      %4973 = vmatpush1.msra.mxu0 0.0
      %4974 = vmatprep.subr.mxu0 0.0
      %4975 = vmatpush1.msra.mxu0 0.0
      %4976 = vmatprep.subr.mxu0 0.0
      %4977 = vmatpush1.msra.mxu0 0.0
      %4978 = vmatprep.subr.mxu0 0.0
      %4979 = vmatpush1.msra.mxu0 0.0
      %4980 = vmatprep.mubr.f32.mxu0 0.0
      %v4981 = vand.u32 %v3900, 4294901760
      %4982 = vmatmul.mubr.f32.gmra.mrb[0].mxu0 %v4981
      %v4983 = vpop.f32.mrb[0].mxu0
      %v4984 = vadd.f32 %v4819, %v4983
      %v4985 = vpop.f32.mrb[0].mxu0
      %4986 = vmatprep.mubr.f32.mxu0 0.0
      %v4987 = vand.u32 %v3903, 4294901760
      %4988 = vmatmul.mubr.f32.gmra.mrb[0].mxu0 %v4987
      %v4989 = vpop.f32.mrb[0].mxu0
      %v4990 = vadd.f32 %v4825, %v4989
      %v4991 = vpop.f32.mrb[0].mxu0
      %4992 = vmatprep.mubr.f32.mxu0 0.0
      %v4993 = vand.u32 %v3906, 4294901760
      %4994 = vmatmul.mubr.f32.gmra.mrb[0].mxu0 %v4993
      %v4995 = vpop.f32.mrb[0].mxu0
      %v4996 = vadd.f32 %v4831, %v4995
      %v4997 = vpop.f32.mrb[0].mxu0
      %4998 = vmatprep.mubr.f32.mxu0 0.0
      %v4999 = vand.u32 %v3909, 4294901760
      %5000 = vmatmul.mubr.f32.gmra.mrb[0].mxu0 %v4999
      %v5001 = vpop.f32.mrb[0].mxu0
      %v5002 = vadd.f32 %v4837, %v5001
      %v5003 = vpop.f32.mrb[0].mxu0
      %5004 = vmatprep.mubr.f32.mxu0 0.0
      %v5005 = vand.u32 %v3912, 4294901760
      %5006 = vmatmul.mubr.f32.gmra.mrb[0].mxu0 %v5005
      %v5007 = vpop.f32.mrb[0].mxu0
      %v5008 = vadd.f32 %v4843, %v5007
      %v5009 = vpop.f32.mrb[0].mxu0
      %5010 = vmatprep.mubr.f32.mxu0 0.0
      %v5011 = vand.u32 %v3915, 4294901760
      %5012 = vmatmul.mubr.f32.gmra.mrb[0].mxu0 %v5011
      %v5013 = vpop.f32.mrb[0].mxu0
      %v5014 = vadd.f32 %v4849, %v5013
      %v5015 = vpop.f32.mrb[0].mxu0
      %5016 = vmatprep.mubr.f32.mxu0 0.0
      %v5017 = vand.u32 %v3918, 4294901760
      %5018 = vmatmul.mubr.f32.gmra.mrb[0].mxu0 %v5017
      %v5019 = vpop.f32.mrb[0].mxu0
      %v5020 = vadd.f32 %v4855, %v5019
      %v5021 = vpop.f32.mrb[0].mxu0
      %5022 = vmatprep.mubr.f32.mxu0 0.0
      %v5023 = vand.u32 %v3921, 4294901760
      %5024 = vmatmul.mubr.f32.gmra.mrb[0].mxu0 %v5023
      %v5025 = vpop.f32.mrb[0].mxu0
      %v5026 = vadd.f32 %v4861, %v5025
      %v5027 = vpop.f32.mrb[0].mxu0
      %5028 = vmatprep.mubr.f32.mxu0 0.0
      %v5029 = vand.u32 %v3924, 4294901760
      %5030 = vmatmul.mubr.f32.gmra.mrb[0].mxu0 %v5029
      %v5031 = vpop.f32.mrb[0].mxu0
      %v5032 = vadd.f32 %v4867, %v5031
      %v5033 = vpop.f32.mrb[0].mxu0
      %5034 = vmatprep.mubr.f32.mxu0 0.0
      %v5035 = vand.u32 %v3927, 4294901760
      %5036 = vmatmul.mubr.f32.gmra.mrb[0].mxu0 %v5035
      %v5037 = vpop.f32.mrb[0].mxu0
      %v5038 = vadd.f32 %v4873, %v5037
      %v5039 = vpop.f32.mrb[0].mxu0
      %5040 = vmatprep.mubr.f32.mxu0 0.0
      %v5041 = vand.u32 %v3930, 4294901760
      %5042 = vmatmul.mubr.f32.gmra.mrb[0].mxu0 %v5041
      %v5043 = vpop.f32.mrb[0].mxu0
      %v5044 = vadd.f32 %v4879, %v5043
      %v5045 = vpop.f32.mrb[0].mxu0
      %5046 = vmatprep.mubr.f32.mxu0 0.0
      %v5047 = vand.u32 %v3933, 4294901760
      %5048 = vmatmul.mubr.f32.gmra.mrb[0].mxu0 %v5047
      %v5049 = vpop.f32.mrb[0].mxu0
      %v5050 = vadd.f32 %v4885, %v5049
      %v5051 = vpop.f32.mrb[0].mxu0
      %5052 = vmatprep.mubr.f32.mxu0 0.0
      %v5053 = vand.u32 %v3936, 4294901760
      %5054 = vmatmul.mubr.f32.gmra.mrb[0].mxu0 %v5053
      %v5055 = vpop.f32.mrb[0].mxu0
      %v5056 = vadd.f32 %v4891, %v5055
      %v5057 = vpop.f32.mrb[0].mxu0
      %5058 = vmatprep.mubr.f32.mxu0 0.0
      %v5059 = vand.u32 %v3939, 4294901760
      %5060 = vmatmul.mubr.f32.gmra.mrb[0].mxu0 %v5059
      %v5061 = vpop.f32.mrb[0].mxu0
      %v5062 = vadd.f32 %v4897, %v5061
      %v5063 = vpop.f32.mrb[0].mxu0
      %5064 = vmatprep.mubr.f32.mxu0 0.0
      %v5065 = vand.u32 %v3942, 4294901760
      %5066 = vmatmul.mubr.f32.gmra.mrb[0].mxu0 %v5065
      %v5067 = vpop.f32.mrb[0].mxu0
      %v5068 = vadd.f32 %v4903, %v5067
      %v5069 = vpop.f32.mrb[0].mxu0
      %5070 = vmatprep.mubr.f32.mxu0 0.0
      %v5071 = vand.u32 %v3945, 4294901760
      %5072 = vmatmul.mubr.f32.gmra.mrb[0].mxu0 %v5071
      %v5073 = vpop.f32.mrb[0].mxu0
      %v5074 = vadd.f32 %v4909, %v5073
      %v5075 = vpop.f32.mrb[0].mxu0
      %5076 = vdwg.mxu0
      %v5077 = vtanh.pop %v4984
      %v5078 = vtanh.pop %v4990
      %v5079 = vtanh.pop %v4996
      %v5080 = vtanh.pop %v5002
      %v5081 = vtanh.pop %v5008
      %v5082 = vtanh.pop %v5014
      %v5083 = vtanh.pop %v5020
      %v5084 = vtanh.pop %v5026
      %v5085 = vtanh.pop %v5032
      %v5086 = vtanh.pop %v5038
      %v5087 = vtanh.pop %v5044
      %v5088 = vtanh.pop %v5050
      %v5089 = vtanh.pop %v5056
      %v5090 = vtanh.pop %v5062
      %v5091 = vtanh.pop %v5068
      %v5092 = vtanh.pop %v5074
      %v5093 = vld [vmem:[%s11] sm:$0xff]
      %v5094 = vld [vmem:[%s11 + $0x8] sm:$0xff]
      %v5095 = vld [vmem:[%s11 + $0x10] sm:$0xff]
      %v5096 = vld [vmem:[%s11 + $0x18] sm:$0xff]
      %v5097 = vld [vmem:[%s11 + $0x20] sm:$0xff]
      %v5098 = vld [vmem:[%s11 + $0x28] sm:$0xff]
      %v5099 = vld [vmem:[%s11 + $0x30] sm:$0xff]
      %v5100 = vld [vmem:[%s11 + $0x38] sm:$0xff]
      %v5101 = vld [vmem:[%s12] sm:$0x1]
      %v5103 = vlaneseq
      %v5104 = vshrl.u32 %v5103, 7
      %v5105 = vsub.s32 0, %v5104
      %v5106 = vrot.slane %v5101, %v5105
      %v5109 = vsel %vm2656, %v5077, 0
      %v5112 = vsel %vm2656, %v5078, 0
      %v5115 = vsel %vm2656, %v5079, 0
      %v5118 = vsel %vm2656, %v5080, 0
      %v5121 = vsel %vm2656, %v5081, 0
      %v5124 = vsel %vm2656, %v5082, 0
      %v5127 = vsel %vm2656, %v5083, 0
      %v5130 = vsel %vm2656, %v5084, 0
      %v5133 = vsel %vm2656, %v5085, 0
      %v5136 = vsel %vm2656, %v5086, 0
      %v5139 = vsel %vm2656, %v5087, 0
      %v5142 = vsel %vm2656, %v5088, 0
      %v5145 = vsel %vm2656, %v5089, 0
      %v5148 = vsel %vm2656, %v5090, 0
      %v5151 = vsel %vm2656, %v5091, 0
      %v5154 = vsel %vm2656, %v5092, 0
      %5156 = vmatprep.subr.mxu0 0.0
      %v5157 = vand.u32 %v5093, 4294901760
      %5158 = vmatpush1.msra.mxu0 %v5157
      %5159 = vmatprep.subr.mxu0 0.0
      %v5160 = vand.u32 %v5094, 4294901760
      %5161 = vmatpush1.msra.mxu0 %v5160
      %5162 = vmatprep.subr.mxu0 0.0
      %v5163 = vand.u32 %v5095, 4294901760
      %5164 = vmatpush1.msra.mxu0 %v5163
      %5165 = vmatprep.subr.mxu0 0.0
      %v5166 = vand.u32 %v5096, 4294901760
      %5167 = vmatpush1.msra.mxu0 %v5166
      %5168 = vmatprep.subr.mxu0 0.0
      %v5169 = vand.u32 %v5097, 4294901760
      %5170 = vmatpush1.msra.mxu0 %v5169
      %5171 = vmatprep.subr.mxu0 0.0
      %v5172 = vand.u32 %v5098, 4294901760
      %5173 = vmatpush1.msra.mxu0 %v5172
      %5174 = vmatprep.subr.mxu0 0.0
      %v5175 = vand.u32 %v5099, 4294901760
      %5176 = vmatpush1.msra.mxu0 %v5175
      %5177 = vmatprep.subr.mxu0 0.0
      %v5178 = vand.u32 %v5100, 4294901760
      %5179 = vmatpush1.msra.mxu0 %v5178
      %5180 = vmatprep.subr.mxu0 0.0
      %5181 = vmatpush1.msra.mxu0 0.0
      %5182 = vmatprep.subr.mxu0 0.0
      %5183 = vmatpush1.msra.mxu0 0.0
      %5184 = vmatprep.subr.mxu0 0.0
      %5185 = vmatpush1.msra.mxu0 0.0
      %5186 = vmatprep.subr.mxu0 0.0
      %5187 = vmatpush1.msra.mxu0 0.0
      %5188 = vmatprep.subr.mxu0 0.0
      %5189 = vmatpush1.msra.mxu0 0.0
      %5190 = vmatprep.subr.mxu0 0.0
      %5191 = vmatpush1.msra.mxu0 0.0
      %5192 = vmatprep.subr.mxu0 0.0
      %5193 = vmatpush1.msra.mxu0 0.0
      %5194 = vmatprep.subr.mxu0 0.0
      %5195 = vmatpush1.msra.mxu0 0.0
      %5196 = vmatprep.subr.mxu0 0.0
      %5197 = vmatpush1.msra.mxu0 0.0
      %5198 = vmatprep.subr.mxu0 0.0
      %5199 = vmatpush1.msra.mxu0 0.0
      %5200 = vmatprep.subr.mxu0 0.0
      %5201 = vmatpush1.msra.mxu0 0.0
      %5202 = vmatprep.subr.mxu0 0.0
      %5203 = vmatpush1.msra.mxu0 0.0
      %5204 = vmatprep.subr.mxu0 0.0
      %5205 = vmatpush1.msra.mxu0 0.0
      %5206 = vmatprep.subr.mxu0 0.0
      %5207 = vmatpush1.msra.mxu0 0.0
      %5208 = vmatprep.subr.mxu0 0.0
      %5209 = vmatpush1.msra.mxu0 0.0
      %5210 = vmatprep.subr.mxu0 0.0
      %5211 = vmatpush1.msra.mxu0 0.0
      %5212 = vmatprep.subr.mxu0 0.0
      %5213 = vmatpush1.msra.mxu0 0.0
      %5214 = vmatprep.subr.mxu0 0.0
      %5215 = vmatpush1.msra.mxu0 0.0
      %5216 = vmatprep.subr.mxu0 0.0
      %5217 = vmatpush1.msra.mxu0 0.0
      %5218 = vmatprep.subr.mxu0 0.0
      %5219 = vmatpush1.msra.mxu0 0.0
      %5220 = vmatprep.subr.mxu0 0.0
      %5221 = vmatpush1.msra.mxu0 0.0
      %5222 = vmatprep.subr.mxu0 0.0
      %5223 = vmatpush1.msra.mxu0 0.0
      %5224 = vmatprep.subr.mxu0 0.0
      %5225 = vmatpush1.msra.mxu0 0.0
      %5226 = vmatprep.subr.mxu0 0.0
      %5227 = vmatpush1.msra.mxu0 0.0
      %5228 = vmatprep.mubr.f32.mxu0 0.0
      %v5229 = vand.u32 %v5109, 4294901760
      %v5230 = vsub.f32 %v5109, %v5229
      %v5231 = vand.u32 %v5230, 4294901760
      %v5232 = vsub.f32 %v5230, %v5231
      %v5233 = vand.u32 %v5232, 4294901760
      %5234 = vmatmul.mubr.f32.gmra.mrb[0].mxu0 %v5233
      %v5235 = vpop.f32.mrb[0].mxu0
      %v5236 = vadd.f32 %v5106, %v5235
      %v5237 = vpop.f32.mrb[0].mxu0
      %5238 = vmatprep.mubr.f32.mxu0 0.0
      %v5239 = vand.u32 %v5112, 4294901760
      %v5240 = vsub.f32 %v5112, %v5239
      %v5241 = vand.u32 %v5240, 4294901760
      %v5242 = vsub.f32 %v5240, %v5241
      %v5243 = vand.u32 %v5242, 4294901760
      %5244 = vmatmul.mubr.f32.gmra.mrb[0].mxu0 %v5243
      %v5245 = vpop.f32.mrb[0].mxu0
      %v5246 = vadd.f32 %v5106, %v5245
      %v5247 = vpop.f32.mrb[0].mxu0
      %5248 = vmatprep.mubr.f32.mxu0 0.0
      %v5249 = vand.u32 %v5115, 4294901760
      %v5250 = vsub.f32 %v5115, %v5249
      %v5251 = vand.u32 %v5250, 4294901760
      %v5252 = vsub.f32 %v5250, %v5251
      %v5253 = vand.u32 %v5252, 4294901760
      %5254 = vmatmul.mubr.f32.gmra.mrb[0].mxu0 %v5253
      %v5255 = vpop.f32.mrb[0].mxu0
      %v5256 = vadd.f32 %v5106, %v5255
      %v5257 = vpop.f32.mrb[0].mxu0
      %5258 = vmatprep.mubr.f32.mxu0 0.0
      %v5259 = vand.u32 %v5118, 4294901760
      %v5260 = vsub.f32 %v5118, %v5259
      %v5261 = vand.u32 %v5260, 4294901760
      %v5262 = vsub.f32 %v5260, %v5261
      %v5263 = vand.u32 %v5262, 4294901760
      %5264 = vmatmul.mubr.f32.gmra.mrb[0].mxu0 %v5263
      %v5265 = vpop.f32.mrb[0].mxu0
      %v5266 = vadd.f32 %v5106, %v5265
      %v5267 = vpop.f32.mrb[0].mxu0
      %5268 = vmatprep.mubr.f32.mxu0 0.0
      %v5269 = vand.u32 %v5121, 4294901760
      %v5270 = vsub.f32 %v5121, %v5269
      %v5271 = vand.u32 %v5270, 4294901760
      %v5272 = vsub.f32 %v5270, %v5271
      %v5273 = vand.u32 %v5272, 4294901760
      %5274 = vmatmul.mubr.f32.gmra.mrb[0].mxu0 %v5273
      %v5275 = vpop.f32.mrb[0].mxu0
      %v5276 = vadd.f32 %v5106, %v5275
      %v5277 = vpop.f32.mrb[0].mxu0
      %5278 = vmatprep.mubr.f32.mxu0 0.0
      %v5279 = vand.u32 %v5124, 4294901760
      %v5280 = vsub.f32 %v5124, %v5279
      %v5281 = vand.u32 %v5280, 4294901760
      %v5282 = vsub.f32 %v5280, %v5281
      %v5283 = vand.u32 %v5282, 4294901760
      %5284 = vmatmul.mubr.f32.gmra.mrb[0].mxu0 %v5283
      %v5285 = vpop.f32.mrb[0].mxu0
      %v5286 = vadd.f32 %v5106, %v5285
      %v5287 = vpop.f32.mrb[0].mxu0
      %5288 = vmatprep.mubr.f32.mxu0 0.0
      %v5289 = vand.u32 %v5127, 4294901760
      %v5290 = vsub.f32 %v5127, %v5289
      %v5291 = vand.u32 %v5290, 4294901760
      %v5292 = vsub.f32 %v5290, %v5291
      %v5293 = vand.u32 %v5292, 4294901760
      %5294 = vmatmul.mubr.f32.gmra.mrb[0].mxu0 %v5293
      %v5295 = vpop.f32.mrb[0].mxu0
      %v5296 = vadd.f32 %v5106, %v5295
      %v5297 = vpop.f32.mrb[0].mxu0
      %5298 = vmatprep.mubr.f32.mxu0 0.0
      %v5299 = vand.u32 %v5130, 4294901760
      %v5300 = vsub.f32 %v5130, %v5299
      %v5301 = vand.u32 %v5300, 4294901760
      %v5302 = vsub.f32 %v5300, %v5301
      %v5303 = vand.u32 %v5302, 4294901760
      %5304 = vmatmul.mubr.f32.gmra.mrb[0].mxu0 %v5303
      %v5305 = vpop.f32.mrb[0].mxu0
      %v5306 = vadd.f32 %v5106, %v5305
      %v5307 = vpop.f32.mrb[0].mxu0
      %5308 = vmatprep.mubr.f32.mxu0 0.0
      %v5309 = vand.u32 %v5133, 4294901760
      %v5310 = vsub.f32 %v5133, %v5309
      %v5311 = vand.u32 %v5310, 4294901760
      %v5312 = vsub.f32 %v5310, %v5311
      %v5313 = vand.u32 %v5312, 4294901760
      %5314 = vmatmul.mubr.f32.gmra.mrb[0].mxu0 %v5313
      %v5315 = vpop.f32.mrb[0].mxu0
      %v5316 = vadd.f32 %v5106, %v5315
      %v5317 = vpop.f32.mrb[0].mxu0
      %5318 = vmatprep.mubr.f32.mxu0 0.0
      %v5319 = vand.u32 %v5136, 4294901760
      %v5320 = vsub.f32 %v5136, %v5319
      %v5321 = vand.u32 %v5320, 4294901760
      %v5322 = vsub.f32 %v5320, %v5321
      %v5323 = vand.u32 %v5322, 4294901760
      %5324 = vmatmul.mubr.f32.gmra.mrb[0].mxu0 %v5323
      %v5325 = vpop.f32.mrb[0].mxu0
      %v5326 = vadd.f32 %v5106, %v5325
      %v5327 = vpop.f32.mrb[0].mxu0
      %5328 = vmatprep.mubr.f32.mxu0 0.0
      %v5329 = vand.u32 %v5139, 4294901760
      %v5330 = vsub.f32 %v5139, %v5329
      %v5331 = vand.u32 %v5330, 4294901760
      %v5332 = vsub.f32 %v5330, %v5331
      %v5333 = vand.u32 %v5332, 4294901760
      %5334 = vmatmul.mubr.f32.gmra.mrb[0].mxu0 %v5333
      %v5335 = vpop.f32.mrb[0].mxu0
      %v5336 = vadd.f32 %v5106, %v5335
      %v5337 = vpop.f32.mrb[0].mxu0
      %5338 = vmatprep.mubr.f32.mxu0 0.0
      %v5339 = vand.u32 %v5142, 4294901760
      %v5340 = vsub.f32 %v5142, %v5339
      %v5341 = vand.u32 %v5340, 4294901760
      %v5342 = vsub.f32 %v5340, %v5341
      %v5343 = vand.u32 %v5342, 4294901760
      %5344 = vmatmul.mubr.f32.gmra.mrb[0].mxu0 %v5343
      %v5345 = vpop.f32.mrb[0].mxu0
      %v5346 = vadd.f32 %v5106, %v5345
      %v5347 = vpop.f32.mrb[0].mxu0
      %5348 = vmatprep.mubr.f32.mxu0 0.0
      %v5349 = vand.u32 %v5145, 4294901760
      %v5350 = vsub.f32 %v5145, %v5349
      %v5351 = vand.u32 %v5350, 4294901760
      %v5352 = vsub.f32 %v5350, %v5351
      %v5353 = vand.u32 %v5352, 4294901760
      %5354 = vmatmul.mubr.f32.gmra.mrb[0].mxu0 %v5353
      %v5355 = vpop.f32.mrb[0].mxu0
      %v5356 = vadd.f32 %v5106, %v5355
      %v5357 = vpop.f32.mrb[0].mxu0
      %5358 = vmatprep.mubr.f32.mxu0 0.0
      %v5359 = vand.u32 %v5148, 4294901760
      %v5360 = vsub.f32 %v5148, %v5359
      %v5361 = vand.u32 %v5360, 4294901760
      %v5362 = vsub.f32 %v5360, %v5361
      %v5363 = vand.u32 %v5362, 4294901760
      %5364 = vmatmul.mubr.f32.gmra.mrb[0].mxu0 %v5363
      %v5365 = vpop.f32.mrb[0].mxu0
      %v5366 = vadd.f32 %v5106, %v5365
      %v5367 = vpop.f32.mrb[0].mxu0
      %5368 = vmatprep.mubr.f32.mxu0 0.0
      %v5369 = vand.u32 %v5151, 4294901760
      %v5370 = vsub.f32 %v5151, %v5369
      %v5371 = vand.u32 %v5370, 4294901760
      %v5372 = vsub.f32 %v5370, %v5371
      %v5373 = vand.u32 %v5372, 4294901760
      %5374 = vmatmul.mubr.f32.gmra.mrb[0].mxu0 %v5373
      %v5375 = vpop.f32.mrb[0].mxu0
      %v5376 = vadd.f32 %v5106, %v5375
      %v5377 = vpop.f32.mrb[0].mxu0
      %5378 = vmatprep.mubr.f32.mxu0 0.0
      %v5379 = vand.u32 %v5154, 4294901760
      %v5380 = vsub.f32 %v5154, %v5379
      %v5381 = vand.u32 %v5380, 4294901760
      %v5382 = vsub.f32 %v5380, %v5381
      %v5383 = vand.u32 %v5382, 4294901760
      %5384 = vmatmul.mubr.f32.gmra.mrb[0].mxu0 %v5383
      %v5385 = vpop.f32.mrb[0].mxu0
      %v5386 = vadd.f32 %v5106, %v5385
      %v5387 = vpop.f32.mrb[0].mxu0
      %5388 = vdwg.mxu0
      %5389 = vmatprep.subr.mxu0 0.0
      %v5390 = vand.u32 %v5093, 4294901760
      %v5391 = vsub.f32 %v5093, %v5390
      %v5392 = vand.u32 %v5391, 4294901760
      %v5393 = vsub.f32 %v5391, %v5392
      %v5394 = vand.u32 %v5393, 4294901760
      %5395 = vmatpush1.msra.mxu0 %v5394
      %5396 = vmatprep.subr.mxu0 0.0
      %v5397 = vand.u32 %v5094, 4294901760
      %v5398 = vsub.f32 %v5094, %v5397
      %v5399 = vand.u32 %v5398, 4294901760
      %v5400 = vsub.f32 %v5398, %v5399
      %v5401 = vand.u32 %v5400, 4294901760
      %5402 = vmatpush1.msra.mxu0 %v5401
      %5403 = vmatprep.subr.mxu0 0.0
      %v5404 = vand.u32 %v5095, 4294901760
      %v5405 = vsub.f32 %v5095, %v5404
      %v5406 = vand.u32 %v5405, 4294901760
      %v5407 = vsub.f32 %v5405, %v5406
      %v5408 = vand.u32 %v5407, 4294901760
      %5409 = vmatpush1.msra.mxu0 %v5408
      %5410 = vmatprep.subr.mxu0 0.0
      %v5411 = vand.u32 %v5096, 4294901760
      %v5412 = vsub.f32 %v5096, %v5411
      %v5413 = vand.u32 %v5412, 4294901760
      %v5414 = vsub.f32 %v5412, %v5413
      %v5415 = vand.u32 %v5414, 4294901760
      %5416 = vmatpush1.msra.mxu0 %v5415
      %5417 = vmatprep.subr.mxu0 0.0
      %v5418 = vand.u32 %v5097, 4294901760
      %v5419 = vsub.f32 %v5097, %v5418
      %v5420 = vand.u32 %v5419, 4294901760
      %v5421 = vsub.f32 %v5419, %v5420
      %v5422 = vand.u32 %v5421, 4294901760
      %5423 = vmatpush1.msra.mxu0 %v5422
      %5424 = vmatprep.subr.mxu0 0.0
      %v5425 = vand.u32 %v5098, 4294901760
      %v5426 = vsub.f32 %v5098, %v5425
      %v5427 = vand.u32 %v5426, 4294901760
      %v5428 = vsub.f32 %v5426, %v5427
      %v5429 = vand.u32 %v5428, 4294901760
      %5430 = vmatpush1.msra.mxu0 %v5429
      %5431 = vmatprep.subr.mxu0 0.0
      %v5432 = vand.u32 %v5099, 4294901760
      %v5433 = vsub.f32 %v5099, %v5432
      %v5434 = vand.u32 %v5433, 4294901760
      %v5435 = vsub.f32 %v5433, %v5434
      %v5436 = vand.u32 %v5435, 4294901760
      %5437 = vmatpush1.msra.mxu0 %v5436
      %5438 = vmatprep.subr.mxu0 0.0
      %v5439 = vand.u32 %v5100, 4294901760
      %v5440 = vsub.f32 %v5100, %v5439
      %v5441 = vand.u32 %v5440, 4294901760
      %v5442 = vsub.f32 %v5440, %v5441
      %v5443 = vand.u32 %v5442, 4294901760
      %5444 = vmatpush1.msra.mxu0 %v5443
      %5445 = vmatprep.subr.mxu0 0.0
      %5446 = vmatpush1.msra.mxu0 0.0
      %5447 = vmatprep.subr.mxu0 0.0
      %5448 = vmatpush1.msra.mxu0 0.0
      %5449 = vmatprep.subr.mxu0 0.0
      %5450 = vmatpush1.msra.mxu0 0.0
      %5451 = vmatprep.subr.mxu0 0.0
      %5452 = vmatpush1.msra.mxu0 0.0
      %5453 = vmatprep.subr.mxu0 0.0
      %5454 = vmatpush1.msra.mxu0 0.0
      %5455 = vmatprep.subr.mxu0 0.0
      %5456 = vmatpush1.msra.mxu0 0.0
      %5457 = vmatprep.subr.mxu0 0.0
      %5458 = vmatpush1.msra.mxu0 0.0
      %5459 = vmatprep.subr.mxu0 0.0
      %5460 = vmatpush1.msra.mxu0 0.0
      %5461 = vmatprep.subr.mxu0 0.0
      %5462 = vmatpush1.msra.mxu0 0.0
      %5463 = vmatprep.subr.mxu0 0.0
      %5464 = vmatpush1.msra.mxu0 0.0
      %5465 = vmatprep.subr.mxu0 0.0
      %5466 = vmatpush1.msra.mxu0 0.0
      %5467 = vmatprep.subr.mxu0 0.0
      %5468 = vmatpush1.msra.mxu0 0.0
      %5469 = vmatprep.subr.mxu0 0.0
      %5470 = vmatpush1.msra.mxu0 0.0
      %5471 = vmatprep.subr.mxu0 0.0
      %5472 = vmatpush1.msra.mxu0 0.0
      %5473 = vmatprep.subr.mxu0 0.0
      %5474 = vmatpush1.msra.mxu0 0.0
      %5475 = vmatprep.subr.mxu0 0.0
      %5476 = vmatpush1.msra.mxu0 0.0
      %5477 = vmatprep.subr.mxu0 0.0
      %5478 = vmatpush1.msra.mxu0 0.0
      %5479 = vmatprep.subr.mxu0 0.0
      %5480 = vmatpush1.msra.mxu0 0.0
      %5481 = vmatprep.subr.mxu0 0.0
      %5482 = vmatpush1.msra.mxu0 0.0
      %5483 = vmatprep.subr.mxu0 0.0
      %5484 = vmatpush1.msra.mxu0 0.0
      %5485 = vmatprep.subr.mxu0 0.0
      %5486 = vmatpush1.msra.mxu0 0.0
      %5487 = vmatprep.subr.mxu0 0.0
      %5488 = vmatpush1.msra.mxu0 0.0
      %5489 = vmatprep.subr.mxu0 0.0
      %5490 = vmatpush1.msra.mxu0 0.0
      %5491 = vmatprep.subr.mxu0 0.0
      %5492 = vmatpush1.msra.mxu0 0.0
      %5493 = vmatprep.mubr.f32.mxu0 0.0
      %v5494 = vand.u32 %v5109, 4294901760
      %5495 = vmatmul.mubr.f32.gmra.mrb[0].mxu0 %v5494
      %v5496 = vpop.f32.mrb[0].mxu0
      %v5497 = vadd.f32 %v5236, %v5496
      %v5498 = vpop.f32.mrb[0].mxu0
      %5499 = vmatprep.mubr.f32.mxu0 0.0
      %v5500 = vand.u32 %v5112, 4294901760
      %5501 = vmatmul.mubr.f32.gmra.mrb[0].mxu0 %v5500
      %v5502 = vpop.f32.mrb[0].mxu0
      %v5503 = vadd.f32 %v5246, %v5502
      %v5504 = vpop.f32.mrb[0].mxu0
      %5505 = vmatprep.mubr.f32.mxu0 0.0
      %v5506 = vand.u32 %v5115, 4294901760
      %5507 = vmatmul.mubr.f32.gmra.mrb[0].mxu0 %v5506
      %v5508 = vpop.f32.mrb[0].mxu0
      %v5509 = vadd.f32 %v5256, %v5508
      %v5510 = vpop.f32.mrb[0].mxu0
      %5511 = vmatprep.mubr.f32.mxu0 0.0
      %v5512 = vand.u32 %v5118, 4294901760
      %5513 = vmatmul.mubr.f32.gmra.mrb[0].mxu0 %v5512
      %v5514 = vpop.f32.mrb[0].mxu0
      %v5515 = vadd.f32 %v5266, %v5514
      %v5516 = vpop.f32.mrb[0].mxu0
      %5517 = vmatprep.mubr.f32.mxu0 0.0
      %v5518 = vand.u32 %v5121, 4294901760
      %5519 = vmatmul.mubr.f32.gmra.mrb[0].mxu0 %v5518
      %v5520 = vpop.f32.mrb[0].mxu0
      %v5521 = vadd.f32 %v5276, %v5520
      %v5522 = vpop.f32.mrb[0].mxu0
      %5523 = vmatprep.mubr.f32.mxu0 0.0
      %v5524 = vand.u32 %v5124, 4294901760
      %5525 = vmatmul.mubr.f32.gmra.mrb[0].mxu0 %v5524
      %v5526 = vpop.f32.mrb[0].mxu0
      %v5527 = vadd.f32 %v5286, %v5526
      %v5528 = vpop.f32.mrb[0].mxu0
      %5529 = vmatprep.mubr.f32.mxu0 0.0
      %v5530 = vand.u32 %v5127, 4294901760
      %5531 = vmatmul.mubr.f32.gmra.mrb[0].mxu0 %v5530
      %v5532 = vpop.f32.mrb[0].mxu0
      %v5533 = vadd.f32 %v5296, %v5532
      %v5534 = vpop.f32.mrb[0].mxu0
      %5535 = vmatprep.mubr.f32.mxu0 0.0
      %v5536 = vand.u32 %v5130, 4294901760
      %5537 = vmatmul.mubr.f32.gmra.mrb[0].mxu0 %v5536
      %v5538 = vpop.f32.mrb[0].mxu0
      %v5539 = vadd.f32 %v5306, %v5538
      %v5540 = vpop.f32.mrb[0].mxu0
      %5541 = vmatprep.mubr.f32.mxu0 0.0
      %v5542 = vand.u32 %v5133, 4294901760
      %5543 = vmatmul.mubr.f32.gmra.mrb[0].mxu0 %v5542
      %v5544 = vpop.f32.mrb[0].mxu0
      %v5545 = vadd.f32 %v5316, %v5544
      %v5546 = vpop.f32.mrb[0].mxu0
      %5547 = vmatprep.mubr.f32.mxu0 0.0
      %v5548 = vand.u32 %v5136, 4294901760
      %5549 = vmatmul.mubr.f32.gmra.mrb[0].mxu0 %v5548
      %v5550 = vpop.f32.mrb[0].mxu0
      %v5551 = vadd.f32 %v5326, %v5550
      %v5552 = vpop.f32.mrb[0].mxu0
      %5553 = vmatprep.mubr.f32.mxu0 0.0
      %v5554 = vand.u32 %v5139, 4294901760
      %5555 = vmatmul.mubr.f32.gmra.mrb[0].mxu0 %v5554
      %v5556 = vpop.f32.mrb[0].mxu0
      %v5557 = vadd.f32 %v5336, %v5556
      %v5558 = vpop.f32.mrb[0].mxu0
      %5559 = vmatprep.mubr.f32.mxu0 0.0
      %v5560 = vand.u32 %v5142, 4294901760
      %5561 = vmatmul.mubr.f32.gmra.mrb[0].mxu0 %v5560
      %v5562 = vpop.f32.mrb[0].mxu0
      %v5563 = vadd.f32 %v5346, %v5562
      %v5564 = vpop.f32.mrb[0].mxu0
      %5565 = vmatprep.mubr.f32.mxu0 0.0
      %v5566 = vand.u32 %v5145, 4294901760
      %5567 = vmatmul.mubr.f32.gmra.mrb[0].mxu0 %v5566
      %v5568 = vpop.f32.mrb[0].mxu0
      %v5569 = vadd.f32 %v5356, %v5568
      %v5570 = vpop.f32.mrb[0].mxu0
      %5571 = vmatprep.mubr.f32.mxu0 0.0
      %v5572 = vand.u32 %v5148, 4294901760
      %5573 = vmatmul.mubr.f32.gmra.mrb[0].mxu0 %v5572
      %v5574 = vpop.f32.mrb[0].mxu0
      %v5575 = vadd.f32 %v5366, %v5574
      %v5576 = vpop.f32.mrb[0].mxu0
      %5577 = vmatprep.mubr.f32.mxu0 0.0
      %v5578 = vand.u32 %v5151, 4294901760
      %5579 = vmatmul.mubr.f32.gmra.mrb[0].mxu0 %v5578
      %v5580 = vpop.f32.mrb[0].mxu0
      %v5581 = vadd.f32 %v5376, %v5580
      %v5582 = vpop.f32.mrb[0].mxu0
      %5583 = vmatprep.mubr.f32.mxu0 0.0
      %v5584 = vand.u32 %v5154, 4294901760
      %5585 = vmatmul.mubr.f32.gmra.mrb[0].mxu0 %v5584
      %v5586 = vpop.f32.mrb[0].mxu0
      %v5587 = vadd.f32 %v5386, %v5586
      %v5588 = vpop.f32.mrb[0].mxu0
      %5589 = vdwg.mxu0
      %5590 = vmatprep.subr.mxu0 0.0
      %v5591 = vand.u32 %v5093, 4294901760
      %v5592 = vsub.f32 %v5093, %v5591
      %5593 = vmatpush1.msra.mxu0 %v5592
      %5594 = vmatprep.subr.mxu0 0.0
      %v5595 = vand.u32 %v5094, 4294901760
      %v5596 = vsub.f32 %v5094, %v5595
      %5597 = vmatpush1.msra.mxu0 %v5596
      %5598 = vmatprep.subr.mxu0 0.0
      %v5599 = vand.u32 %v5095, 4294901760
      %v5600 = vsub.f32 %v5095, %v5599
      %5601 = vmatpush1.msra.mxu0 %v5600
      %5602 = vmatprep.subr.mxu0 0.0
      %v5603 = vand.u32 %v5096, 4294901760
      %v5604 = vsub.f32 %v5096, %v5603
      %5605 = vmatpush1.msra.mxu0 %v5604
      %5606 = vmatprep.subr.mxu0 0.0
      %v5607 = vand.u32 %v5097, 4294901760
      %v5608 = vsub.f32 %v5097, %v5607
      %5609 = vmatpush1.msra.mxu0 %v5608
      %5610 = vmatprep.subr.mxu0 0.0
      %v5611 = vand.u32 %v5098, 4294901760
      %v5612 = vsub.f32 %v5098, %v5611
      %5613 = vmatpush1.msra.mxu0 %v5612
      %5614 = vmatprep.subr.mxu0 0.0
      %v5615 = vand.u32 %v5099, 4294901760
      %v5616 = vsub.f32 %v5099, %v5615
      %5617 = vmatpush1.msra.mxu0 %v5616
      %5618 = vmatprep.subr.mxu0 0.0
      %v5619 = vand.u32 %v5100, 4294901760
      %v5620 = vsub.f32 %v5100, %v5619
      %5621 = vmatpush1.msra.mxu0 %v5620
      %5622 = vmatprep.subr.mxu0 0.0
      %5623 = vmatpush1.msra.mxu0 0.0
      %5624 = vmatprep.subr.mxu0 0.0
      %5625 = vmatpush1.msra.mxu0 0.0
      %5626 = vmatprep.subr.mxu0 0.0
      %5627 = vmatpush1.msra.mxu0 0.0
      %5628 = vmatprep.subr.mxu0 0.0
      %5629 = vmatpush1.msra.mxu0 0.0
      %5630 = vmatprep.subr.mxu0 0.0
      %5631 = vmatpush1.msra.mxu0 0.0
      %5632 = vmatprep.subr.mxu0 0.0
      %5633 = vmatpush1.msra.mxu0 0.0
      %5634 = vmatprep.subr.mxu0 0.0
      %5635 = vmatpush1.msra.mxu0 0.0
      %5636 = vmatprep.subr.mxu0 0.0
      %5637 = vmatpush1.msra.mxu0 0.0
      %5638 = vmatprep.subr.mxu0 0.0
      %5639 = vmatpush1.msra.mxu0 0.0
      %5640 = vmatprep.subr.mxu0 0.0
      %5641 = vmatpush1.msra.mxu0 0.0
      %5642 = vmatprep.subr.mxu0 0.0
      %5643 = vmatpush1.msra.mxu0 0.0
      %5644 = vmatprep.subr.mxu0 0.0
      %5645 = vmatpush1.msra.mxu0 0.0
      %5646 = vmatprep.subr.mxu0 0.0
      %5647 = vmatpush1.msra.mxu0 0.0
      %5648 = vmatprep.subr.mxu0 0.0
      %5649 = vmatpush1.msra.mxu0 0.0
      %5650 = vmatprep.subr.mxu0 0.0
      %5651 = vmatpush1.msra.mxu0 0.0
      %5652 = vmatprep.subr.mxu0 0.0
      %5653 = vmatpush1.msra.mxu0 0.0
      %5654 = vmatprep.subr.mxu0 0.0
      %5655 = vmatpush1.msra.mxu0 0.0
      %5656 = vmatprep.subr.mxu0 0.0
      %5657 = vmatpush1.msra.mxu0 0.0
      %5658 = vmatprep.subr.mxu0 0.0
      %5659 = vmatpush1.msra.mxu0 0.0
      %5660 = vmatprep.subr.mxu0 0.0
      %5661 = vmatpush1.msra.mxu0 0.0
      %5662 = vmatprep.subr.mxu0 0.0
      %5663 = vmatpush1.msra.mxu0 0.0
      %5664 = vmatprep.subr.mxu0 0.0
      %5665 = vmatpush1.msra.mxu0 0.0
      %5666 = vmatprep.subr.mxu0 0.0
      %5667 = vmatpush1.msra.mxu0 0.0
      %5668 = vmatprep.subr.mxu0 0.0
      %5669 = vmatpush1.msra.mxu0 0.0
      %5670 = vmatprep.mubr.f32.mxu0 0.0
      %v5671 = vand.u32 %v5109, 4294901760
      %v5672 = vsub.f32 %v5109, %v5671
      %5673 = vmatmul.mubr.f32.gmra.mrb[0].mxu0 %v5672
      %v5674 = vpop.f32.mrb[0].mxu0
      %v5675 = vadd.f32 %v5497, %v5674
      %v5676 = vpop.f32.mrb[0].mxu0
      %5677 = vmatprep.mubr.f32.mxu0 0.0
      %v5678 = vand.u32 %v5112, 4294901760
      %v5679 = vsub.f32 %v5112, %v5678
      %5680 = vmatmul.mubr.f32.gmra.mrb[0].mxu0 %v5679
      %v5681 = vpop.f32.mrb[0].mxu0
      %v5682 = vadd.f32 %v5503, %v5681
      %v5683 = vpop.f32.mrb[0].mxu0
      %5684 = vmatprep.mubr.f32.mxu0 0.0
      %v5685 = vand.u32 %v5115, 4294901760
      %v5686 = vsub.f32 %v5115, %v5685
      %5687 = vmatmul.mubr.f32.gmra.mrb[0].mxu0 %v5686
      %v5688 = vpop.f32.mrb[0].mxu0
      %v5689 = vadd.f32 %v5509, %v5688
      %v5690 = vpop.f32.mrb[0].mxu0
      %5691 = vmatprep.mubr.f32.mxu0 0.0
      %v5692 = vand.u32 %v5118, 4294901760
      %v5693 = vsub.f32 %v5118, %v5692
      %5694 = vmatmul.mubr.f32.gmra.mrb[0].mxu0 %v5693
      %v5695 = vpop.f32.mrb[0].mxu0
      %v5696 = vadd.f32 %v5515, %v5695
      %v5697 = vpop.f32.mrb[0].mxu0
      %5698 = vmatprep.mubr.f32.mxu0 0.0
      %v5699 = vand.u32 %v5121, 4294901760
      %v5700 = vsub.f32 %v5121, %v5699
      %5701 = vmatmul.mubr.f32.gmra.mrb[0].mxu0 %v5700
      %v5702 = vpop.f32.mrb[0].mxu0
      %v5703 = vadd.f32 %v5521, %v5702
      %v5704 = vpop.f32.mrb[0].mxu0
      %5705 = vmatprep.mubr.f32.mxu0 0.0
      %v5706 = vand.u32 %v5124, 4294901760
      %v5707 = vsub.f32 %v5124, %v5706
      %5708 = vmatmul.mubr.f32.gmra.mrb[0].mxu0 %v5707
      %v5709 = vpop.f32.mrb[0].mxu0
      %v5710 = vadd.f32 %v5527, %v5709
      %v5711 = vpop.f32.mrb[0].mxu0
      %5712 = vmatprep.mubr.f32.mxu0 0.0
      %v5713 = vand.u32 %v5127, 4294901760
      %v5714 = vsub.f32 %v5127, %v5713
      %5715 = vmatmul.mubr.f32.gmra.mrb[0].mxu0 %v5714
      %v5716 = vpop.f32.mrb[0].mxu0
      %v5717 = vadd.f32 %v5533, %v5716
      %v5718 = vpop.f32.mrb[0].mxu0
      %5719 = vmatprep.mubr.f32.mxu0 0.0
      %v5720 = vand.u32 %v5130, 4294901760
      %v5721 = vsub.f32 %v5130, %v5720
      %5722 = vmatmul.mubr.f32.gmra.mrb[0].mxu0 %v5721
      %v5723 = vpop.f32.mrb[0].mxu0
      %v5724 = vadd.f32 %v5539, %v5723
      %v5725 = vpop.f32.mrb[0].mxu0
      %5726 = vmatprep.mubr.f32.mxu0 0.0
      %v5727 = vand.u32 %v5133, 4294901760
      %v5728 = vsub.f32 %v5133, %v5727
      %5729 = vmatmul.mubr.f32.gmra.mrb[0].mxu0 %v5728
      %v5730 = vpop.f32.mrb[0].mxu0
      %v5731 = vadd.f32 %v5545, %v5730
      %v5732 = vpop.f32.mrb[0].mxu0
      %5733 = vmatprep.mubr.f32.mxu0 0.0
      %v5734 = vand.u32 %v5136, 4294901760
      %v5735 = vsub.f32 %v5136, %v5734
      %5736 = vmatmul.mubr.f32.gmra.mrb[0].mxu0 %v5735
      %v5737 = vpop.f32.mrb[0].mxu0
      %v5738 = vadd.f32 %v5551, %v5737
      %v5739 = vpop.f32.mrb[0].mxu0
      %5740 = vmatprep.mubr.f32.mxu0 0.0
      %v5741 = vand.u32 %v5139, 4294901760
      %v5742 = vsub.f32 %v5139, %v5741
      %5743 = vmatmul.mubr.f32.gmra.mrb[0].mxu0 %v5742
      %v5744 = vpop.f32.mrb[0].mxu0
      %v5745 = vadd.f32 %v5557, %v5744
      %v5746 = vpop.f32.mrb[0].mxu0
      %5747 = vmatprep.mubr.f32.mxu0 0.0
      %v5748 = vand.u32 %v5142, 4294901760
      %v5749 = vsub.f32 %v5142, %v5748
      %5750 = vmatmul.mubr.f32.gmra.mrb[0].mxu0 %v5749
      %v5751 = vpop.f32.mrb[0].mxu0
      %v5752 = vadd.f32 %v5563, %v5751
      %v5753 = vpop.f32.mrb[0].mxu0
      %5754 = vmatprep.mubr.f32.mxu0 0.0
      %v5755 = vand.u32 %v5145, 4294901760
      %v5756 = vsub.f32 %v5145, %v5755
      %5757 = vmatmul.mubr.f32.gmra.mrb[0].mxu0 %v5756
      %v5758 = vpop.f32.mrb[0].mxu0
      %v5759 = vadd.f32 %v5569, %v5758
      %v5760 = vpop.f32.mrb[0].mxu0
      %5761 = vmatprep.mubr.f32.mxu0 0.0
      %v5762 = vand.u32 %v5148, 4294901760
      %v5763 = vsub.f32 %v5148, %v5762
      %5764 = vmatmul.mubr.f32.gmra.mrb[0].mxu0 %v5763
      %v5765 = vpop.f32.mrb[0].mxu0
      %v5766 = vadd.f32 %v5575, %v5765
      %v5767 = vpop.f32.mrb[0].mxu0
      %5768 = vmatprep.mubr.f32.mxu0 0.0
      %v5769 = vand.u32 %v5151, 4294901760
      %v5770 = vsub.f32 %v5151, %v5769
      %5771 = vmatmul.mubr.f32.gmra.mrb[0].mxu0 %v5770
      %v5772 = vpop.f32.mrb[0].mxu0
      %v5773 = vadd.f32 %v5581, %v5772
      %v5774 = vpop.f32.mrb[0].mxu0
      %5775 = vmatprep.mubr.f32.mxu0 0.0
      %v5776 = vand.u32 %v5154, 4294901760
      %v5777 = vsub.f32 %v5154, %v5776
      %5778 = vmatmul.mubr.f32.gmra.mrb[0].mxu0 %v5777
      %v5779 = vpop.f32.mrb[0].mxu0
      %v5780 = vadd.f32 %v5587, %v5779
      %v5781 = vpop.f32.mrb[0].mxu0
      %5782 = vdwg.mxu0
      %5783 = vmatprep.subr.mxu0 0.0
      %v5784 = vand.u32 %v5093, 4294901760
      %5785 = vmatpush1.msra.mxu0 %v5784
      %5786 = vmatprep.subr.mxu0 0.0
      %v5787 = vand.u32 %v5094, 4294901760
      %5788 = vmatpush1.msra.mxu0 %v5787
      %5789 = vmatprep.subr.mxu0 0.0
      %v5790 = vand.u32 %v5095, 4294901760
      %5791 = vmatpush1.msra.mxu0 %v5790
      %5792 = vmatprep.subr.mxu0 0.0
      %v5793 = vand.u32 %v5096, 4294901760
      %5794 = vmatpush1.msra.mxu0 %v5793
      %5795 = vmatprep.subr.mxu0 0.0
      %v5796 = vand.u32 %v5097, 4294901760
      %5797 = vmatpush1.msra.mxu0 %v5796
      %5798 = vmatprep.subr.mxu0 0.0
      %v5799 = vand.u32 %v5098, 4294901760
      %5800 = vmatpush1.msra.mxu0 %v5799
      %5801 = vmatprep.subr.mxu0 0.0
      %v5802 = vand.u32 %v5099, 4294901760
      %5803 = vmatpush1.msra.mxu0 %v5802
      %5804 = vmatprep.subr.mxu0 0.0
      %v5805 = vand.u32 %v5100, 4294901760
      %5806 = vmatpush1.msra.mxu0 %v5805
      %5807 = vmatprep.subr.mxu0 0.0
      %5808 = vmatpush1.msra.mxu0 0.0
      %5809 = vmatprep.subr.mxu0 0.0
      %5810 = vmatpush1.msra.mxu0 0.0
      %5811 = vmatprep.subr.mxu0 0.0
      %5812 = vmatpush1.msra.mxu0 0.0
      %5813 = vmatprep.subr.mxu0 0.0
      %5814 = vmatpush1.msra.mxu0 0.0
      %5815 = vmatprep.subr.mxu0 0.0
      %5816 = vmatpush1.msra.mxu0 0.0
      %5817 = vmatprep.subr.mxu0 0.0
      %5818 = vmatpush1.msra.mxu0 0.0
      %5819 = vmatprep.subr.mxu0 0.0
      %5820 = vmatpush1.msra.mxu0 0.0
      %5821 = vmatprep.subr.mxu0 0.0
      %5822 = vmatpush1.msra.mxu0 0.0
      %5823 = vmatprep.subr.mxu0 0.0
      %5824 = vmatpush1.msra.mxu0 0.0
      %5825 = vmatprep.subr.mxu0 0.0
      %5826 = vmatpush1.msra.mxu0 0.0
      %5827 = vmatprep.subr.mxu0 0.0
      %5828 = vmatpush1.msra.mxu0 0.0
      %5829 = vmatprep.subr.mxu0 0.0
      %5830 = vmatpush1.msra.mxu0 0.0
      %5831 = vmatprep.subr.mxu0 0.0
      %5832 = vmatpush1.msra.mxu0 0.0
      %5833 = vmatprep.subr.mxu0 0.0
      %5834 = vmatpush1.msra.mxu0 0.0
      %5835 = vmatprep.subr.mxu0 0.0
      %5836 = vmatpush1.msra.mxu0 0.0
      %5837 = vmatprep.subr.mxu0 0.0
      %5838 = vmatpush1.msra.mxu0 0.0
      %5839 = vmatprep.subr.mxu0 0.0
      %5840 = vmatpush1.msra.mxu0 0.0
      %5841 = vmatprep.subr.mxu0 0.0
      %5842 = vmatpush1.msra.mxu0 0.0
      %5843 = vmatprep.subr.mxu0 0.0
      %5844 = vmatpush1.msra.mxu0 0.0
      %5845 = vmatprep.subr.mxu0 0.0
      %5846 = vmatpush1.msra.mxu0 0.0
      %5847 = vmatprep.subr.mxu0 0.0
      %5848 = vmatpush1.msra.mxu0 0.0
      %5849 = vmatprep.subr.mxu0 0.0
      %5850 = vmatpush1.msra.mxu0 0.0
      %5851 = vmatprep.subr.mxu0 0.0
      %5852 = vmatpush1.msra.mxu0 0.0
      %5853 = vmatprep.subr.mxu0 0.0
      %5854 = vmatpush1.msra.mxu0 0.0
      %5855 = vmatprep.mubr.f32.mxu0 0.0
      %v5856 = vand.u32 %v5109, 4294901760
      %v5857 = vsub.f32 %v5109, %v5856
      %v5858 = vand.u32 %v5857, 4294901760
      %5859 = vmatmul.mubr.f32.gmra.mrb[0].mxu0 %v5858
      %v5860 = vpop.f32.mrb[0].mxu0
      %v5861 = vadd.f32 %v5675, %v5860
      %v5862 = vpop.f32.mrb[0].mxu0
      %5863 = vmatprep.mubr.f32.mxu0 0.0
      %v5864 = vand.u32 %v5112, 4294901760
      %v5865 = vsub.f32 %v5112, %v5864
      %v5866 = vand.u32 %v5865, 4294901760
      %5867 = vmatmul.mubr.f32.gmra.mrb[0].mxu0 %v5866
      %v5868 = vpop.f32.mrb[0].mxu0
      %v5869 = vadd.f32 %v5682, %v5868
      %v5870 = vpop.f32.mrb[0].mxu0
      %5871 = vmatprep.mubr.f32.mxu0 0.0
      %v5872 = vand.u32 %v5115, 4294901760
      %v5873 = vsub.f32 %v5115, %v5872
      %v5874 = vand.u32 %v5873, 4294901760
      %5875 = vmatmul.mubr.f32.gmra.mrb[0].mxu0 %v5874
      %v5876 = vpop.f32.mrb[0].mxu0
      %v5877 = vadd.f32 %v5689, %v5876
      %v5878 = vpop.f32.mrb[0].mxu0
      %5879 = vmatprep.mubr.f32.mxu0 0.0
      %v5880 = vand.u32 %v5118, 4294901760
      %v5881 = vsub.f32 %v5118, %v5880
      %v5882 = vand.u32 %v5881, 4294901760
      %5883 = vmatmul.mubr.f32.gmra.mrb[0].mxu0 %v5882
      %v5884 = vpop.f32.mrb[0].mxu0
      %v5885 = vadd.f32 %v5696, %v5884
      %v5886 = vpop.f32.mrb[0].mxu0
      %5887 = vmatprep.mubr.f32.mxu0 0.0
      %v5888 = vand.u32 %v5121, 4294901760
      %v5889 = vsub.f32 %v5121, %v5888
      %v5890 = vand.u32 %v5889, 4294901760
      %5891 = vmatmul.mubr.f32.gmra.mrb[0].mxu0 %v5890
      %v5892 = vpop.f32.mrb[0].mxu0
      %v5893 = vadd.f32 %v5703, %v5892
      %v5894 = vpop.f32.mrb[0].mxu0
      %5895 = vmatprep.mubr.f32.mxu0 0.0
      %v5896 = vand.u32 %v5124, 4294901760
      %v5897 = vsub.f32 %v5124, %v5896
      %v5898 = vand.u32 %v5897, 4294901760
      %5899 = vmatmul.mubr.f32.gmra.mrb[0].mxu0 %v5898
      %v5900 = vpop.f32.mrb[0].mxu0
      %v5901 = vadd.f32 %v5710, %v5900
      %v5902 = vpop.f32.mrb[0].mxu0
      %5903 = vmatprep.mubr.f32.mxu0 0.0
      %v5904 = vand.u32 %v5127, 4294901760
      %v5905 = vsub.f32 %v5127, %v5904
      %v5906 = vand.u32 %v5905, 4294901760
      %5907 = vmatmul.mubr.f32.gmra.mrb[0].mxu0 %v5906
      %v5908 = vpop.f32.mrb[0].mxu0
      %v5909 = vadd.f32 %v5717, %v5908
      %v5910 = vpop.f32.mrb[0].mxu0
      %5911 = vmatprep.mubr.f32.mxu0 0.0
      %v5912 = vand.u32 %v5130, 4294901760
      %v5913 = vsub.f32 %v5130, %v5912
      %v5914 = vand.u32 %v5913, 4294901760
      %5915 = vmatmul.mubr.f32.gmra.mrb[0].mxu0 %v5914
      %v5916 = vpop.f32.mrb[0].mxu0
      %v5917 = vadd.f32 %v5724, %v5916
      %v5918 = vpop.f32.mrb[0].mxu0
      %5919 = vmatprep.mubr.f32.mxu0 0.0
      %v5920 = vand.u32 %v5133, 4294901760
      %v5921 = vsub.f32 %v5133, %v5920
      %v5922 = vand.u32 %v5921, 4294901760
      %5923 = vmatmul.mubr.f32.gmra.mrb[0].mxu0 %v5922
      %v5924 = vpop.f32.mrb[0].mxu0
      %v5925 = vadd.f32 %v5731, %v5924
      %v5926 = vpop.f32.mrb[0].mxu0
      %5927 = vmatprep.mubr.f32.mxu0 0.0
      %v5928 = vand.u32 %v5136, 4294901760
      %v5929 = vsub.f32 %v5136, %v5928
      %v5930 = vand.u32 %v5929, 4294901760
      %5931 = vmatmul.mubr.f32.gmra.mrb[0].mxu0 %v5930
      %v5932 = vpop.f32.mrb[0].mxu0
      %v5933 = vadd.f32 %v5738, %v5932
      %v5934 = vpop.f32.mrb[0].mxu0
      %5935 = vmatprep.mubr.f32.mxu0 0.0
      %v5936 = vand.u32 %v5139, 4294901760
      %v5937 = vsub.f32 %v5139, %v5936
      %v5938 = vand.u32 %v5937, 4294901760
      %5939 = vmatmul.mubr.f32.gmra.mrb[0].mxu0 %v5938
      %v5940 = vpop.f32.mrb[0].mxu0
      %v5941 = vadd.f32 %v5745, %v5940
      %v5942 = vpop.f32.mrb[0].mxu0
      %5943 = vmatprep.mubr.f32.mxu0 0.0
      %v5944 = vand.u32 %v5142, 4294901760
      %v5945 = vsub.f32 %v5142, %v5944
      %v5946 = vand.u32 %v5945, 4294901760
      %5947 = vmatmul.mubr.f32.gmra.mrb[0].mxu0 %v5946
      %v5948 = vpop.f32.mrb[0].mxu0
      %v5949 = vadd.f32 %v5752, %v5948
      %v5950 = vpop.f32.mrb[0].mxu0
      %5951 = vmatprep.mubr.f32.mxu0 0.0
      %v5952 = vand.u32 %v5145, 4294901760
      %v5953 = vsub.f32 %v5145, %v5952
      %v5954 = vand.u32 %v5953, 4294901760
      %5955 = vmatmul.mubr.f32.gmra.mrb[0].mxu0 %v5954
      %v5956 = vpop.f32.mrb[0].mxu0
      %v5957 = vadd.f32 %v5759, %v5956
      %v5958 = vpop.f32.mrb[0].mxu0
      %5959 = vmatprep.mubr.f32.mxu0 0.0
      %v5960 = vand.u32 %v5148, 4294901760
      %v5961 = vsub.f32 %v5148, %v5960
      %v5962 = vand.u32 %v5961, 4294901760
      %5963 = vmatmul.mubr.f32.gmra.mrb[0].mxu0 %v5962
      %v5964 = vpop.f32.mrb[0].mxu0
      %v5965 = vadd.f32 %v5766, %v5964
      %v5966 = vpop.f32.mrb[0].mxu0
      %5967 = vmatprep.mubr.f32.mxu0 0.0
      %v5968 = vand.u32 %v5151, 4294901760
      %v5969 = vsub.f32 %v5151, %v5968
      %v5970 = vand.u32 %v5969, 4294901760
      %5971 = vmatmul.mubr.f32.gmra.mrb[0].mxu0 %v5970
      %v5972 = vpop.f32.mrb[0].mxu0
      %v5973 = vadd.f32 %v5773, %v5972
      %v5974 = vpop.f32.mrb[0].mxu0
      %5975 = vmatprep.mubr.f32.mxu0 0.0
      %v5976 = vand.u32 %v5154, 4294901760
      %v5977 = vsub.f32 %v5154, %v5976
      %v5978 = vand.u32 %v5977, 4294901760
      %5979 = vmatmul.mubr.f32.gmra.mrb[0].mxu0 %v5978
      %v5980 = vpop.f32.mrb[0].mxu0
      %v5981 = vadd.f32 %v5780, %v5980
      %v5982 = vpop.f32.mrb[0].mxu0
      %5983 = vdwg.mxu0
      %5984 = vmatprep.subr.mxu0 0.0
      %v5985 = vand.u32 %v5093, 4294901760
      %v5986 = vsub.f32 %v5093, %v5985
      %v5987 = vand.u32 %v5986, 4294901760
      %5988 = vmatpush1.msra.mxu0 %v5987
      %5989 = vmatprep.subr.mxu0 0.0
      %v5990 = vand.u32 %v5094, 4294901760
      %v5991 = vsub.f32 %v5094, %v5990
      %v5992 = vand.u32 %v5991, 4294901760
      %5993 = vmatpush1.msra.mxu0 %v5992
      %5994 = vmatprep.subr.mxu0 0.0
      %v5995 = vand.u32 %v5095, 4294901760
      %v5996 = vsub.f32 %v5095, %v5995
      %v5997 = vand.u32 %v5996, 4294901760
      %5998 = vmatpush1.msra.mxu0 %v5997
      %5999 = vmatprep.subr.mxu0 0.0
      %v6000 = vand.u32 %v5096, 4294901760
      %v6001 = vsub.f32 %v5096, %v6000
      %v6002 = vand.u32 %v6001, 4294901760
      %6003 = vmatpush1.msra.mxu0 %v6002
      %6004 = vmatprep.subr.mxu0 0.0
      %v6005 = vand.u32 %v5097, 4294901760
      %v6006 = vsub.f32 %v5097, %v6005
      %v6007 = vand.u32 %v6006, 4294901760
      %6008 = vmatpush1.msra.mxu0 %v6007
      %6009 = vmatprep.subr.mxu0 0.0
      %v6010 = vand.u32 %v5098, 4294901760
      %v6011 = vsub.f32 %v5098, %v6010
      %v6012 = vand.u32 %v6011, 4294901760
      %6013 = vmatpush1.msra.mxu0 %v6012
      %6014 = vmatprep.subr.mxu0 0.0
      %v6015 = vand.u32 %v5099, 4294901760
      %v6016 = vsub.f32 %v5099, %v6015
      %v6017 = vand.u32 %v6016, 4294901760
      %6018 = vmatpush1.msra.mxu0 %v6017
      %6019 = vmatprep.subr.mxu0 0.0
      %v6020 = vand.u32 %v5100, 4294901760
      %v6021 = vsub.f32 %v5100, %v6020
      %v6022 = vand.u32 %v6021, 4294901760
      %6023 = vmatpush1.msra.mxu0 %v6022
      %6024 = vmatprep.subr.mxu0 0.0
      %6025 = vmatpush1.msra.mxu0 0.0
      %6026 = vmatprep.subr.mxu0 0.0
      %6027 = vmatpush1.msra.mxu0 0.0
      %6028 = vmatprep.subr.mxu0 0.0
      %6029 = vmatpush1.msra.mxu0 0.0
      %6030 = vmatprep.subr.mxu0 0.0
      %6031 = vmatpush1.msra.mxu0 0.0
      %6032 = vmatprep.subr.mxu0 0.0
      %6033 = vmatpush1.msra.mxu0 0.0
      %6034 = vmatprep.subr.mxu0 0.0
      %6035 = vmatpush1.msra.mxu0 0.0
      %6036 = vmatprep.subr.mxu0 0.0
      %6037 = vmatpush1.msra.mxu0 0.0
      %6038 = vmatprep.subr.mxu0 0.0
      %6039 = vmatpush1.msra.mxu0 0.0
      %6040 = vmatprep.subr.mxu0 0.0
      %6041 = vmatpush1.msra.mxu0 0.0
      %6042 = vmatprep.subr.mxu0 0.0
      %6043 = vmatpush1.msra.mxu0 0.0
      %6044 = vmatprep.subr.mxu0 0.0
      %6045 = vmatpush1.msra.mxu0 0.0
      %6046 = vmatprep.subr.mxu0 0.0
      %6047 = vmatpush1.msra.mxu0 0.0
      %6048 = vmatprep.subr.mxu0 0.0
      %6049 = vmatpush1.msra.mxu0 0.0
      %6050 = vmatprep.subr.mxu0 0.0
      %6051 = vmatpush1.msra.mxu0 0.0
      %6052 = vmatprep.subr.mxu0 0.0
      %6053 = vmatpush1.msra.mxu0 0.0
      %6054 = vmatprep.subr.mxu0 0.0
      %6055 = vmatpush1.msra.mxu0 0.0
      %6056 = vmatprep.subr.mxu0 0.0
      %6057 = vmatpush1.msra.mxu0 0.0
      %6058 = vmatprep.subr.mxu0 0.0
      %6059 = vmatpush1.msra.mxu0 0.0
      %6060 = vmatprep.subr.mxu0 0.0
      %6061 = vmatpush1.msra.mxu0 0.0
      %6062 = vmatprep.subr.mxu0 0.0
      %6063 = vmatpush1.msra.mxu0 0.0
      %6064 = vmatprep.subr.mxu0 0.0
      %6065 = vmatpush1.msra.mxu0 0.0
      %6066 = vmatprep.subr.mxu0 0.0
      %6067 = vmatpush1.msra.mxu0 0.0
      %6068 = vmatprep.subr.mxu0 0.0
      %6069 = vmatpush1.msra.mxu0 0.0
      %6070 = vmatprep.subr.mxu0 0.0
      %6071 = vmatpush1.msra.mxu0 0.0
      %6072 = vmatprep.mubr.f32.mxu0 0.0
      %v6073 = vand.u32 %v5109, 4294901760
      %6074 = vmatmul.mubr.f32.gmra.mrb[0].mxu0 %v6073
      %v6075 = vpop.f32.mrb[0].mxu0
      %v6076 = vadd.f32 %v5861, %v6075
      %v6077 = vpop.f32.mrb[0].mxu0
      %6078 = vmatprep.mubr.f32.mxu0 0.0
      %v6079 = vand.u32 %v5112, 4294901760
      %6080 = vmatmul.mubr.f32.gmra.mrb[0].mxu0 %v6079
      %v6081 = vpop.f32.mrb[0].mxu0
      %v6082 = vadd.f32 %v5869, %v6081
      %v6083 = vpop.f32.mrb[0].mxu0
      %6084 = vmatprep.mubr.f32.mxu0 0.0
      %v6085 = vand.u32 %v5115, 4294901760
      %6086 = vmatmul.mubr.f32.gmra.mrb[0].mxu0 %v6085
      %v6087 = vpop.f32.mrb[0].mxu0
      %v6088 = vadd.f32 %v5877, %v6087
      %v6089 = vpop.f32.mrb[0].mxu0
      %6090 = vmatprep.mubr.f32.mxu0 0.0
      %v6091 = vand.u32 %v5118, 4294901760
      %6092 = vmatmul.mubr.f32.gmra.mrb[0].mxu0 %v6091
      %v6093 = vpop.f32.mrb[0].mxu0
      %v6094 = vadd.f32 %v5885, %v6093
      %v6095 = vpop.f32.mrb[0].mxu0
      %6096 = vmatprep.mubr.f32.mxu0 0.0
      %v6097 = vand.u32 %v5121, 4294901760
      %6098 = vmatmul.mubr.f32.gmra.mrb[0].mxu0 %v6097
      %v6099 = vpop.f32.mrb[0].mxu0
      %v6100 = vadd.f32 %v5893, %v6099
      %v6101 = vpop.f32.mrb[0].mxu0
      %6102 = vmatprep.mubr.f32.mxu0 0.0
      %v6103 = vand.u32 %v5124, 4294901760
      %6104 = vmatmul.mubr.f32.gmra.mrb[0].mxu0 %v6103
      %v6105 = vpop.f32.mrb[0].mxu0
      %v6106 = vadd.f32 %v5901, %v6105
      %v6107 = vpop.f32.mrb[0].mxu0
      %6108 = vmatprep.mubr.f32.mxu0 0.0
      %v6109 = vand.u32 %v5127, 4294901760
      %6110 = vmatmul.mubr.f32.gmra.mrb[0].mxu0 %v6109
      %v6111 = vpop.f32.mrb[0].mxu0
      %v6112 = vadd.f32 %v5909, %v6111
      %v6113 = vpop.f32.mrb[0].mxu0
      %6114 = vmatprep.mubr.f32.mxu0 0.0
      %v6115 = vand.u32 %v5130, 4294901760
      %6116 = vmatmul.mubr.f32.gmra.mrb[0].mxu0 %v6115
      %v6117 = vpop.f32.mrb[0].mxu0
      %v6118 = vadd.f32 %v5917, %v6117
      %v6119 = vpop.f32.mrb[0].mxu0
      %6120 = vmatprep.mubr.f32.mxu0 0.0
      %v6121 = vand.u32 %v5133, 4294901760
      %6122 = vmatmul.mubr.f32.gmra.mrb[0].mxu0 %v6121
      %v6123 = vpop.f32.mrb[0].mxu0
      %v6124 = vadd.f32 %v5925, %v6123
      %v6125 = vpop.f32.mrb[0].mxu0
      %6126 = vmatprep.mubr.f32.mxu0 0.0
      %v6127 = vand.u32 %v5136, 4294901760
      %6128 = vmatmul.mubr.f32.gmra.mrb[0].mxu0 %v6127
      %v6129 = vpop.f32.mrb[0].mxu0
      %v6130 = vadd.f32 %v5933, %v6129
      %v6131 = vpop.f32.mrb[0].mxu0
      %6132 = vmatprep.mubr.f32.mxu0 0.0
      %v6133 = vand.u32 %v5139, 4294901760
      %6134 = vmatmul.mubr.f32.gmra.mrb[0].mxu0 %v6133
      %v6135 = vpop.f32.mrb[0].mxu0
      %v6136 = vadd.f32 %v5941, %v6135
      %v6137 = vpop.f32.mrb[0].mxu0
      %6138 = vmatprep.mubr.f32.mxu0 0.0
      %v6139 = vand.u32 %v5142, 4294901760
      %6140 = vmatmul.mubr.f32.gmra.mrb[0].mxu0 %v6139
      %v6141 = vpop.f32.mrb[0].mxu0
      %v6142 = vadd.f32 %v5949, %v6141
      %v6143 = vpop.f32.mrb[0].mxu0
      %6144 = vmatprep.mubr.f32.mxu0 0.0
      %v6145 = vand.u32 %v5145, 4294901760
      %6146 = vmatmul.mubr.f32.gmra.mrb[0].mxu0 %v6145
      %v6147 = vpop.f32.mrb[0].mxu0
      %v6148 = vadd.f32 %v5957, %v6147
      %v6149 = vpop.f32.mrb[0].mxu0
      %6150 = vmatprep.mubr.f32.mxu0 0.0
      %v6151 = vand.u32 %v5148, 4294901760
      %6152 = vmatmul.mubr.f32.gmra.mrb[0].mxu0 %v6151
      %v6153 = vpop.f32.mrb[0].mxu0
      %v6154 = vadd.f32 %v5965, %v6153
      %v6155 = vpop.f32.mrb[0].mxu0
      %6156 = vmatprep.mubr.f32.mxu0 0.0
      %v6157 = vand.u32 %v5151, 4294901760
      %6158 = vmatmul.mubr.f32.gmra.mrb[0].mxu0 %v6157
      %v6159 = vpop.f32.mrb[0].mxu0
      %v6160 = vadd.f32 %v5973, %v6159
      %v6161 = vpop.f32.mrb[0].mxu0
      %6162 = vmatprep.mubr.f32.mxu0 0.0
      %v6163 = vand.u32 %v5154, 4294901760
      %6164 = vmatmul.mubr.f32.gmra.mrb[0].mxu0 %v6163
      %v6165 = vpop.f32.mrb[0].mxu0
      %v6166 = vadd.f32 %v5981, %v6165
      %v6167 = vpop.f32.mrb[0].mxu0
      %6168 = vdwg.mxu0
      %6169 = vmatprep.subr.mxu0 0.0
      %v6170 = vand.u32 %v5093, 4294901760
      %6171 = vmatpush1.msra.mxu0 %v6170
      %6172 = vmatprep.subr.mxu0 0.0
      %v6173 = vand.u32 %v5094, 4294901760
      %6174 = vmatpush1.msra.mxu0 %v6173
      %6175 = vmatprep.subr.mxu0 0.0
      %v6176 = vand.u32 %v5095, 4294901760
      %6177 = vmatpush1.msra.mxu0 %v6176
      %6178 = vmatprep.subr.mxu0 0.0
      %v6179 = vand.u32 %v5096, 4294901760
      %6180 = vmatpush1.msra.mxu0 %v6179
      %6181 = vmatprep.subr.mxu0 0.0
      %v6182 = vand.u32 %v5097, 4294901760
      %6183 = vmatpush1.msra.mxu0 %v6182
      %6184 = vmatprep.subr.mxu0 0.0
      %v6185 = vand.u32 %v5098, 4294901760
      %6186 = vmatpush1.msra.mxu0 %v6185
      %6187 = vmatprep.subr.mxu0 0.0
      %v6188 = vand.u32 %v5099, 4294901760
      %6189 = vmatpush1.msra.mxu0 %v6188
      %6190 = vmatprep.subr.mxu0 0.0
      %v6191 = vand.u32 %v5100, 4294901760
      %6192 = vmatpush1.msra.mxu0 %v6191
      %6193 = vmatprep.subr.mxu0 0.0
      %6194 = vmatpush1.msra.mxu0 0.0
      %6195 = vmatprep.subr.mxu0 0.0
      %6196 = vmatpush1.msra.mxu0 0.0
      %6197 = vmatprep.subr.mxu0 0.0
      %6198 = vmatpush1.msra.mxu0 0.0
      %6199 = vmatprep.subr.mxu0 0.0
      %6200 = vmatpush1.msra.mxu0 0.0
      %6201 = vmatprep.subr.mxu0 0.0
      %6202 = vmatpush1.msra.mxu0 0.0
      %6203 = vmatprep.subr.mxu0 0.0
      %6204 = vmatpush1.msra.mxu0 0.0
      %6205 = vmatprep.subr.mxu0 0.0
      %6206 = vmatpush1.msra.mxu0 0.0
      %6207 = vmatprep.subr.mxu0 0.0
      %6208 = vmatpush1.msra.mxu0 0.0
      %6209 = vmatprep.subr.mxu0 0.0
      %6210 = vmatpush1.msra.mxu0 0.0
      %6211 = vmatprep.subr.mxu0 0.0
      %6212 = vmatpush1.msra.mxu0 0.0
      %6213 = vmatprep.subr.mxu0 0.0
      %6214 = vmatpush1.msra.mxu0 0.0
      %6215 = vmatprep.subr.mxu0 0.0
      %6216 = vmatpush1.msra.mxu0 0.0
      %6217 = vmatprep.subr.mxu0 0.0
      %6218 = vmatpush1.msra.mxu0 0.0
      %6219 = vmatprep.subr.mxu0 0.0
      %6220 = vmatpush1.msra.mxu0 0.0
      %6221 = vmatprep.subr.mxu0 0.0
      %6222 = vmatpush1.msra.mxu0 0.0
      %6223 = vmatprep.subr.mxu0 0.0
      %6224 = vmatpush1.msra.mxu0 0.0
      %6225 = vmatprep.subr.mxu0 0.0
      %6226 = vmatpush1.msra.mxu0 0.0
      %6227 = vmatprep.subr.mxu0 0.0
      %6228 = vmatpush1.msra.mxu0 0.0
      %6229 = vmatprep.subr.mxu0 0.0
      %6230 = vmatpush1.msra.mxu0 0.0
      %6231 = vmatprep.subr.mxu0 0.0
      %6232 = vmatpush1.msra.mxu0 0.0
      %6233 = vmatprep.subr.mxu0 0.0
      %6234 = vmatpush1.msra.mxu0 0.0
      %6235 = vmatprep.subr.mxu0 0.0
      %6236 = vmatpush1.msra.mxu0 0.0
      %6237 = vmatprep.subr.mxu0 0.0
      %6238 = vmatpush1.msra.mxu0 0.0
      %6239 = vmatprep.subr.mxu0 0.0
      %6240 = vmatpush1.msra.mxu0 0.0
      %6241 = vmatprep.mubr.f32.mxu0 0.0
      %v6242 = vand.u32 %v5109, 4294901760
      %6243 = vmatmul.mubr.f32.gmra.mrb[0].mxu0 %v6242
      %v6244 = vpop.f32.mrb[0].mxu0
      %v6245 = vadd.f32 %v6076, %v6244
      %v6246 = vpop.f32.mrb[0].mxu0
      %6247 = vmatprep.mubr.f32.mxu0 0.0
      %v6248 = vand.u32 %v5112, 4294901760
      %6249 = vmatmul.mubr.f32.gmra.mrb[0].mxu0 %v6248
      %v6250 = vpop.f32.mrb[0].mxu0
      %v6251 = vadd.f32 %v6082, %v6250
      %v6252 = vpop.f32.mrb[0].mxu0
      %6253 = vmatprep.mubr.f32.mxu0 0.0
      %v6254 = vand.u32 %v5115, 4294901760
      %6255 = vmatmul.mubr.f32.gmra.mrb[0].mxu0 %v6254
      %v6256 = vpop.f32.mrb[0].mxu0
      %v6257 = vadd.f32 %v6088, %v6256
      %v6258 = vpop.f32.mrb[0].mxu0
      %6259 = vmatprep.mubr.f32.mxu0 0.0
      %v6260 = vand.u32 %v5118, 4294901760
      %6261 = vmatmul.mubr.f32.gmra.mrb[0].mxu0 %v6260
      %v6262 = vpop.f32.mrb[0].mxu0
      %v6263 = vadd.f32 %v6094, %v6262
      %v6264 = vpop.f32.mrb[0].mxu0
      %6265 = vmatprep.mubr.f32.mxu0 0.0
      %v6266 = vand.u32 %v5121, 4294901760
      %6267 = vmatmul.mubr.f32.gmra.mrb[0].mxu0 %v6266
      %v6268 = vpop.f32.mrb[0].mxu0
      %v6269 = vadd.f32 %v6100, %v6268
      %v6270 = vpop.f32.mrb[0].mxu0
      %6271 = vmatprep.mubr.f32.mxu0 0.0
      %v6272 = vand.u32 %v5124, 4294901760
      %6273 = vmatmul.mubr.f32.gmra.mrb[0].mxu0 %v6272
      %v6274 = vpop.f32.mrb[0].mxu0
      %v6275 = vadd.f32 %v6106, %v6274
      %v6276 = vpop.f32.mrb[0].mxu0
      %6277 = vmatprep.mubr.f32.mxu0 0.0
      %v6278 = vand.u32 %v5127, 4294901760
      %6279 = vmatmul.mubr.f32.gmra.mrb[0].mxu0 %v6278
      %v6280 = vpop.f32.mrb[0].mxu0
      %v6281 = vadd.f32 %v6112, %v6280
      %v6282 = vpop.f32.mrb[0].mxu0
      %6283 = vmatprep.mubr.f32.mxu0 0.0
      %v6284 = vand.u32 %v5130, 4294901760
      %6285 = vmatmul.mubr.f32.gmra.mrb[0].mxu0 %v6284
      %v6286 = vpop.f32.mrb[0].mxu0
      %v6287 = vadd.f32 %v6118, %v6286
      %v6288 = vpop.f32.mrb[0].mxu0
      %6289 = vmatprep.mubr.f32.mxu0 0.0
      %v6290 = vand.u32 %v5133, 4294901760
      %6291 = vmatmul.mubr.f32.gmra.mrb[0].mxu0 %v6290
      %v6292 = vpop.f32.mrb[0].mxu0
      %v6293 = vadd.f32 %v6124, %v6292
      %v6294 = vpop.f32.mrb[0].mxu0
      %6295 = vmatprep.mubr.f32.mxu0 0.0
      %v6296 = vand.u32 %v5136, 4294901760
      %6297 = vmatmul.mubr.f32.gmra.mrb[0].mxu0 %v6296
      %v6298 = vpop.f32.mrb[0].mxu0
      %v6299 = vadd.f32 %v6130, %v6298
      %v6300 = vpop.f32.mrb[0].mxu0
      %6301 = vmatprep.mubr.f32.mxu0 0.0
      %v6302 = vand.u32 %v5139, 4294901760
      %6303 = vmatmul.mubr.f32.gmra.mrb[0].mxu0 %v6302
      %v6304 = vpop.f32.mrb[0].mxu0
      %v6305 = vadd.f32 %v6136, %v6304
      %v6306 = vpop.f32.mrb[0].mxu0
      %6307 = vmatprep.mubr.f32.mxu0 0.0
      %v6308 = vand.u32 %v5142, 4294901760
      %6309 = vmatmul.mubr.f32.gmra.mrb[0].mxu0 %v6308
      %v6310 = vpop.f32.mrb[0].mxu0
      %v6311 = vadd.f32 %v6142, %v6310
      %v6312 = vpop.f32.mrb[0].mxu0
      %6313 = vmatprep.mubr.f32.mxu0 0.0
      %v6314 = vand.u32 %v5145, 4294901760
      %6315 = vmatmul.mubr.f32.gmra.mrb[0].mxu0 %v6314
      %v6316 = vpop.f32.mrb[0].mxu0
      %v6317 = vadd.f32 %v6148, %v6316
      %v6318 = vpop.f32.mrb[0].mxu0
      %6319 = vmatprep.mubr.f32.mxu0 0.0
      %v6320 = vand.u32 %v5148, 4294901760
      %6321 = vmatmul.mubr.f32.gmra.mrb[0].mxu0 %v6320
      %v6322 = vpop.f32.mrb[0].mxu0
      %v6323 = vadd.f32 %v6154, %v6322
      %v6324 = vpop.f32.mrb[0].mxu0
      %6325 = vmatprep.mubr.f32.mxu0 0.0
      %v6326 = vand.u32 %v5151, 4294901760
      %6327 = vmatmul.mubr.f32.gmra.mrb[0].mxu0 %v6326
      %v6328 = vpop.f32.mrb[0].mxu0
      %v6329 = vadd.f32 %v6160, %v6328
      %v6330 = vpop.f32.mrb[0].mxu0
      %6331 = vmatprep.mubr.f32.mxu0 0.0
      %v6332 = vand.u32 %v5154, 4294901760
      %6333 = vmatmul.mubr.f32.gmra.mrb[0].mxu0 %v6332
      %v6334 = vpop.f32.mrb[0].mxu0
      %v6335 = vadd.f32 %v6166, %v6334
      %v6336 = vpop.f32.mrb[0].mxu0
      %6337 = vdwg.mxu0
      %v6338 = vld [vmem:[%s13] sm:$0xff]
      %v6339 = vld [vmem:[%s13 + $0x8] sm:$0xff]
      %v6340 = vld [vmem:[%s13 + $0x10] sm:$0xff]
      %v6341 = vld [vmem:[%s13 + $0x18] sm:$0xff]
      %v6342 = vld [vmem:[%s14] sm:$0x1]
      %v6344 = vlaneseq
      %v6345 = vshrl.u32 %v6344, 7
      %v6346 = vsub.s32 0, %v6345
      %v6347 = vrot.slane %v6342, %v6346
      %v6350 = vsel %vm3898, %v6245, 0
      %v6353 = vsel %vm3898, %v6251, 0
      %v6356 = vsel %vm3898, %v6257, 0
      %v6359 = vsel %vm3898, %v6263, 0
      %v6362 = vsel %vm3898, %v6269, 0
      %v6365 = vsel %vm3898, %v6275, 0
      %v6368 = vsel %vm3898, %v6281, 0
      %v6371 = vsel %vm3898, %v6287, 0
      %v6374 = vsel %vm3898, %v6293, 0
      %v6377 = vsel %vm3898, %v6299, 0
      %v6380 = vsel %vm3898, %v6305, 0
      %v6383 = vsel %vm3898, %v6311, 0
      %v6386 = vsel %vm3898, %v6317, 0
      %v6389 = vsel %vm3898, %v6323, 0
      %v6392 = vsel %vm3898, %v6329, 0
      %v6395 = vsel %vm3898, %v6335, 0
      %6397 = vmatprep.subr.mxu0 0.0
      %v6398 = vand.u32 %v6338, 4294901760
      %6399 = vmatpush1.msra.mxu0 %v6398
      %6400 = vmatprep.subr.mxu0 0.0
      %v6401 = vand.u32 %v6339, 4294901760
      %6402 = vmatpush1.msra.mxu0 %v6401
      %6403 = vmatprep.subr.mxu0 0.0
      %v6404 = vand.u32 %v6340, 4294901760
      %6405 = vmatpush1.msra.mxu0 %v6404
      %6406 = vmatprep.subr.mxu0 0.0
      %v6407 = vand.u32 %v6341, 4294901760
      %6408 = vmatpush1.msra.mxu0 %v6407
      %6409 = vmatprep.subr.mxu0 0.0
      %6410 = vmatpush1.msra.mxu0 0.0
      %6411 = vmatprep.subr.mxu0 0.0
      %6412 = vmatpush1.msra.mxu0 0.0
      %6413 = vmatprep.subr.mxu0 0.0
      %6414 = vmatpush1.msra.mxu0 0.0
      %6415 = vmatprep.subr.mxu0 0.0
      %6416 = vmatpush1.msra.mxu0 0.0
      %6417 = vmatprep.subr.mxu0 0.0
      %6418 = vmatpush1.msra.mxu0 0.0
      %6419 = vmatprep.subr.mxu0 0.0
      %6420 = vmatpush1.msra.mxu0 0.0
      %6421 = vmatprep.subr.mxu0 0.0
      %6422 = vmatpush1.msra.mxu0 0.0
      %6423 = vmatprep.subr.mxu0 0.0
      %6424 = vmatpush1.msra.mxu0 0.0
      %6425 = vmatprep.subr.mxu0 0.0
      %6426 = vmatpush1.msra.mxu0 0.0
      %6427 = vmatprep.subr.mxu0 0.0
      %6428 = vmatpush1.msra.mxu0 0.0
      %6429 = vmatprep.subr.mxu0 0.0
      %6430 = vmatpush1.msra.mxu0 0.0
      %6431 = vmatprep.subr.mxu0 0.0
      %6432 = vmatpush1.msra.mxu0 0.0
      %6433 = vmatprep.subr.mxu0 0.0
      %6434 = vmatpush1.msra.mxu0 0.0
      %6435 = vmatprep.subr.mxu0 0.0
      %6436 = vmatpush1.msra.mxu0 0.0
      %6437 = vmatprep.subr.mxu0 0.0
      %6438 = vmatpush1.msra.mxu0 0.0
      %6439 = vmatprep.subr.mxu0 0.0
      %6440 = vmatpush1.msra.mxu0 0.0
      %6441 = vmatprep.subr.mxu0 0.0
      %6442 = vmatpush1.msra.mxu0 0.0
      %6443 = vmatprep.subr.mxu0 0.0
      %6444 = vmatpush1.msra.mxu0 0.0
      %6445 = vmatprep.subr.mxu0 0.0
      %6446 = vmatpush1.msra.mxu0 0.0
      %6447 = vmatprep.subr.mxu0 0.0
      %6448 = vmatpush1.msra.mxu0 0.0
      %6449 = vmatprep.subr.mxu0 0.0
      %6450 = vmatpush1.msra.mxu0 0.0
      %6451 = vmatprep.subr.mxu0 0.0
      %6452 = vmatpush1.msra.mxu0 0.0
      %6453 = vmatprep.subr.mxu0 0.0
      %6454 = vmatpush1.msra.mxu0 0.0
      %6455 = vmatprep.subr.mxu0 0.0
      %6456 = vmatpush1.msra.mxu0 0.0
      %6457 = vmatprep.subr.mxu0 0.0
      %6458 = vmatpush1.msra.mxu0 0.0
      %6459 = vmatprep.subr.mxu0 0.0
      %6460 = vmatpush1.msra.mxu0 0.0
      %6461 = vmatprep.subr.mxu0 0.0
      %6462 = vmatpush1.msra.mxu0 0.0
      %6463 = vmatprep.subr.mxu0 0.0
      %6464 = vmatpush1.msra.mxu0 0.0
      %6465 = vmatprep.mubr.f32.mxu0 0.0
      %v6466 = vand.u32 %v6350, 4294901760
      %v6467 = vsub.f32 %v6350, %v6466
      %v6468 = vand.u32 %v6467, 4294901760
      %v6469 = vsub.f32 %v6467, %v6468
      %v6470 = vand.u32 %v6469, 4294901760
      %6471 = vmatmul.mubr.f32.gmra.mrb[0].mxu0 %v6470
      %v6472 = vpop.f32.mrb[0].mxu0
      %v6473 = vadd.f32 %v6347, %v6472
      %v6474 = vpop.f32.mrb[0].mxu0
      %6475 = vmatprep.mubr.f32.mxu0 0.0
      %v6476 = vand.u32 %v6353, 4294901760
      %v6477 = vsub.f32 %v6353, %v6476
      %v6478 = vand.u32 %v6477, 4294901760
      %v6479 = vsub.f32 %v6477, %v6478
      %v6480 = vand.u32 %v6479, 4294901760
      %6481 = vmatmul.mubr.f32.gmra.mrb[0].mxu0 %v6480
      %v6482 = vpop.f32.mrb[0].mxu0
      %v6483 = vadd.f32 %v6347, %v6482
      %v6484 = vpop.f32.mrb[0].mxu0
      %6485 = vmatprep.mubr.f32.mxu0 0.0
      %v6486 = vand.u32 %v6356, 4294901760
      %v6487 = vsub.f32 %v6356, %v6486
      %v6488 = vand.u32 %v6487, 4294901760
      %v6489 = vsub.f32 %v6487, %v6488
      %v6490 = vand.u32 %v6489, 4294901760
      %6491 = vmatmul.mubr.f32.gmra.mrb[0].mxu0 %v6490
      %v6492 = vpop.f32.mrb[0].mxu0
      %v6493 = vadd.f32 %v6347, %v6492
      %v6494 = vpop.f32.mrb[0].mxu0
      %6495 = vmatprep.mubr.f32.mxu0 0.0
      %v6496 = vand.u32 %v6359, 4294901760
      %v6497 = vsub.f32 %v6359, %v6496
      %v6498 = vand.u32 %v6497, 4294901760
      %v6499 = vsub.f32 %v6497, %v6498
      %v6500 = vand.u32 %v6499, 4294901760
      %6501 = vmatmul.mubr.f32.gmra.mrb[0].mxu0 %v6500
      %v6502 = vpop.f32.mrb[0].mxu0
      %v6503 = vadd.f32 %v6347, %v6502
      %v6504 = vpop.f32.mrb[0].mxu0
      %6505 = vmatprep.mubr.f32.mxu0 0.0
      %v6506 = vand.u32 %v6362, 4294901760
      %v6507 = vsub.f32 %v6362, %v6506
      %v6508 = vand.u32 %v6507, 4294901760
      %v6509 = vsub.f32 %v6507, %v6508
      %v6510 = vand.u32 %v6509, 4294901760
      %6511 = vmatmul.mubr.f32.gmra.mrb[0].mxu0 %v6510
      %v6512 = vpop.f32.mrb[0].mxu0
      %v6513 = vadd.f32 %v6347, %v6512
      %v6514 = vpop.f32.mrb[0].mxu0
      %6515 = vmatprep.mubr.f32.mxu0 0.0
      %v6516 = vand.u32 %v6365, 4294901760
      %v6517 = vsub.f32 %v6365, %v6516
      %v6518 = vand.u32 %v6517, 4294901760
      %v6519 = vsub.f32 %v6517, %v6518
      %v6520 = vand.u32 %v6519, 4294901760
      %6521 = vmatmul.mubr.f32.gmra.mrb[0].mxu0 %v6520
      %v6522 = vpop.f32.mrb[0].mxu0
      %v6523 = vadd.f32 %v6347, %v6522
      %v6524 = vpop.f32.mrb[0].mxu0
      %6525 = vmatprep.mubr.f32.mxu0 0.0
      %v6526 = vand.u32 %v6368, 4294901760
      %v6527 = vsub.f32 %v6368, %v6526
      %v6528 = vand.u32 %v6527, 4294901760
      %v6529 = vsub.f32 %v6527, %v6528
      %v6530 = vand.u32 %v6529, 4294901760
      %6531 = vmatmul.mubr.f32.gmra.mrb[0].mxu0 %v6530
      %v6532 = vpop.f32.mrb[0].mxu0
      %v6533 = vadd.f32 %v6347, %v6532
      %v6534 = vpop.f32.mrb[0].mxu0
      %6535 = vmatprep.mubr.f32.mxu0 0.0
      %v6536 = vand.u32 %v6371, 4294901760
      %v6537 = vsub.f32 %v6371, %v6536
      %v6538 = vand.u32 %v6537, 4294901760
      %v6539 = vsub.f32 %v6537, %v6538
      %v6540 = vand.u32 %v6539, 4294901760
      %6541 = vmatmul.mubr.f32.gmra.mrb[0].mxu0 %v6540
      %v6542 = vpop.f32.mrb[0].mxu0
      %v6543 = vadd.f32 %v6347, %v6542
      %v6544 = vpop.f32.mrb[0].mxu0
      %6545 = vmatprep.mubr.f32.mxu0 0.0
      %v6546 = vand.u32 %v6374, 4294901760
      %v6547 = vsub.f32 %v6374, %v6546
      %v6548 = vand.u32 %v6547, 4294901760
      %v6549 = vsub.f32 %v6547, %v6548
      %v6550 = vand.u32 %v6549, 4294901760
      %6551 = vmatmul.mubr.f32.gmra.mrb[0].mxu0 %v6550
      %v6552 = vpop.f32.mrb[0].mxu0
      %v6553 = vadd.f32 %v6347, %v6552
      %v6554 = vpop.f32.mrb[0].mxu0
      %6555 = vmatprep.mubr.f32.mxu0 0.0
      %v6556 = vand.u32 %v6377, 4294901760
      %v6557 = vsub.f32 %v6377, %v6556
      %v6558 = vand.u32 %v6557, 4294901760
      %v6559 = vsub.f32 %v6557, %v6558
      %v6560 = vand.u32 %v6559, 4294901760
      %6561 = vmatmul.mubr.f32.gmra.mrb[0].mxu0 %v6560
      %v6562 = vpop.f32.mrb[0].mxu0
      %v6563 = vadd.f32 %v6347, %v6562
      %v6564 = vpop.f32.mrb[0].mxu0
      %6565 = vmatprep.mubr.f32.mxu0 0.0
      %v6566 = vand.u32 %v6380, 4294901760
      %v6567 = vsub.f32 %v6380, %v6566
      %v6568 = vand.u32 %v6567, 4294901760
      %v6569 = vsub.f32 %v6567, %v6568
      %v6570 = vand.u32 %v6569, 4294901760
      %6571 = vmatmul.mubr.f32.gmra.mrb[0].mxu0 %v6570
      %v6572 = vpop.f32.mrb[0].mxu0
      %v6573 = vadd.f32 %v6347, %v6572
      %v6574 = vpop.f32.mrb[0].mxu0
      %6575 = vmatprep.mubr.f32.mxu0 0.0
      %v6576 = vand.u32 %v6383, 4294901760
      %v6577 = vsub.f32 %v6383, %v6576
      %v6578 = vand.u32 %v6577, 4294901760
      %v6579 = vsub.f32 %v6577, %v6578
      %v6580 = vand.u32 %v6579, 4294901760
      %6581 = vmatmul.mubr.f32.gmra.mrb[0].mxu0 %v6580
      %v6582 = vpop.f32.mrb[0].mxu0
      %v6583 = vadd.f32 %v6347, %v6582
      %v6584 = vpop.f32.mrb[0].mxu0
      %6585 = vmatprep.mubr.f32.mxu0 0.0
      %v6586 = vand.u32 %v6386, 4294901760
      %v6587 = vsub.f32 %v6386, %v6586
      %v6588 = vand.u32 %v6587, 4294901760
      %v6589 = vsub.f32 %v6587, %v6588
      %v6590 = vand.u32 %v6589, 4294901760
      %6591 = vmatmul.mubr.f32.gmra.mrb[0].mxu0 %v6590
      %v6592 = vpop.f32.mrb[0].mxu0
      %v6593 = vadd.f32 %v6347, %v6592
      %v6594 = vpop.f32.mrb[0].mxu0
      %6595 = vmatprep.mubr.f32.mxu0 0.0
      %v6596 = vand.u32 %v6389, 4294901760
      %v6597 = vsub.f32 %v6389, %v6596
      %v6598 = vand.u32 %v6597, 4294901760
      %v6599 = vsub.f32 %v6597, %v6598
      %v6600 = vand.u32 %v6599, 4294901760
      %6601 = vmatmul.mubr.f32.gmra.mrb[0].mxu0 %v6600
      %v6602 = vpop.f32.mrb[0].mxu0
      %v6603 = vadd.f32 %v6347, %v6602
      %v6604 = vpop.f32.mrb[0].mxu0
      %6605 = vmatprep.mubr.f32.mxu0 0.0
      %v6606 = vand.u32 %v6392, 4294901760
      %v6607 = vsub.f32 %v6392, %v6606
      %v6608 = vand.u32 %v6607, 4294901760
      %v6609 = vsub.f32 %v6607, %v6608
      %v6610 = vand.u32 %v6609, 4294901760
      %6611 = vmatmul.mubr.f32.gmra.mrb[0].mxu0 %v6610
      %v6612 = vpop.f32.mrb[0].mxu0
      %v6613 = vadd.f32 %v6347, %v6612
      %v6614 = vpop.f32.mrb[0].mxu0
      %6615 = vmatprep.mubr.f32.mxu0 0.0
      %v6616 = vand.u32 %v6395, 4294901760
      %v6617 = vsub.f32 %v6395, %v6616
      %v6618 = vand.u32 %v6617, 4294901760
      %v6619 = vsub.f32 %v6617, %v6618
      %v6620 = vand.u32 %v6619, 4294901760
      %6621 = vmatmul.mubr.f32.gmra.mrb[0].mxu0 %v6620
      %v6622 = vpop.f32.mrb[0].mxu0
      %v6623 = vadd.f32 %v6347, %v6622
      %v6624 = vpop.f32.mrb[0].mxu0
      %6625 = vdwg.mxu0
      %6626 = vmatprep.subr.mxu0 0.0
      %v6627 = vand.u32 %v6338, 4294901760
      %v6628 = vsub.f32 %v6338, %v6627
      %v6629 = vand.u32 %v6628, 4294901760
      %v6630 = vsub.f32 %v6628, %v6629
      %v6631 = vand.u32 %v6630, 4294901760
      %6632 = vmatpush1.msra.mxu0 %v6631
      %6633 = vmatprep.subr.mxu0 0.0
      %v6634 = vand.u32 %v6339, 4294901760
      %v6635 = vsub.f32 %v6339, %v6634
      %v6636 = vand.u32 %v6635, 4294901760
      %v6637 = vsub.f32 %v6635, %v6636
      %v6638 = vand.u32 %v6637, 4294901760
      %6639 = vmatpush1.msra.mxu0 %v6638
      %6640 = vmatprep.subr.mxu0 0.0
      %v6641 = vand.u32 %v6340, 4294901760
      %v6642 = vsub.f32 %v6340, %v6641
      %v6643 = vand.u32 %v6642, 4294901760
      %v6644 = vsub.f32 %v6642, %v6643
      %v6645 = vand.u32 %v6644, 4294901760
      %6646 = vmatpush1.msra.mxu0 %v6645
      %6647 = vmatprep.subr.mxu0 0.0
      %v6648 = vand.u32 %v6341, 4294901760
      %v6649 = vsub.f32 %v6341, %v6648
      %v6650 = vand.u32 %v6649, 4294901760
      %v6651 = vsub.f32 %v6649, %v6650
      %v6652 = vand.u32 %v6651, 4294901760
      %6653 = vmatpush1.msra.mxu0 %v6652
      %6654 = vmatprep.subr.mxu0 0.0
      %6655 = vmatpush1.msra.mxu0 0.0
      %6656 = vmatprep.subr.mxu0 0.0
      %6657 = vmatpush1.msra.mxu0 0.0
      %6658 = vmatprep.subr.mxu0 0.0
      %6659 = vmatpush1.msra.mxu0 0.0
      %6660 = vmatprep.subr.mxu0 0.0
      %6661 = vmatpush1.msra.mxu0 0.0
      %6662 = vmatprep.subr.mxu0 0.0
      %6663 = vmatpush1.msra.mxu0 0.0
      %6664 = vmatprep.subr.mxu0 0.0
      %6665 = vmatpush1.msra.mxu0 0.0
      %6666 = vmatprep.subr.mxu0 0.0
      %6667 = vmatpush1.msra.mxu0 0.0
      %6668 = vmatprep.subr.mxu0 0.0
      %6669 = vmatpush1.msra.mxu0 0.0
      %6670 = vmatprep.subr.mxu0 0.0
      %6671 = vmatpush1.msra.mxu0 0.0
      %6672 = vmatprep.subr.mxu0 0.0
      %6673 = vmatpush1.msra.mxu0 0.0
      %6674 = vmatprep.subr.mxu0 0.0
      %6675 = vmatpush1.msra.mxu0 0.0
      %6676 = vmatprep.subr.mxu0 0.0
      %6677 = vmatpush1.msra.mxu0 0.0
      %6678 = vmatprep.subr.mxu0 0.0
      %6679 = vmatpush1.msra.mxu0 0.0
      %6680 = vmatprep.subr.mxu0 0.0
      %6681 = vmatpush1.msra.mxu0 0.0
      %6682 = vmatprep.subr.mxu0 0.0
      %6683 = vmatpush1.msra.mxu0 0.0
      %6684 = vmatprep.subr.mxu0 0.0
      %6685 = vmatpush1.msra.mxu0 0.0
      %6686 = vmatprep.subr.mxu0 0.0
      %6687 = vmatpush1.msra.mxu0 0.0
      %6688 = vmatprep.subr.mxu0 0.0
      %6689 = vmatpush1.msra.mxu0 0.0
      %6690 = vmatprep.subr.mxu0 0.0
      %6691 = vmatpush1.msra.mxu0 0.0
      %6692 = vmatprep.subr.mxu0 0.0
      %6693 = vmatpush1.msra.mxu0 0.0
      %6694 = vmatprep.subr.mxu0 0.0
      %6695 = vmatpush1.msra.mxu0 0.0
      %6696 = vmatprep.subr.mxu0 0.0
      %6697 = vmatpush1.msra.mxu0 0.0
      %6698 = vmatprep.subr.mxu0 0.0
      %6699 = vmatpush1.msra.mxu0 0.0
      %6700 = vmatprep.subr.mxu0 0.0
      %6701 = vmatpush1.msra.mxu0 0.0
      %6702 = vmatprep.subr.mxu0 0.0
      %6703 = vmatpush1.msra.mxu0 0.0
      %6704 = vmatprep.subr.mxu0 0.0
      %6705 = vmatpush1.msra.mxu0 0.0
      %6706 = vmatprep.subr.mxu0 0.0
      %6707 = vmatpush1.msra.mxu0 0.0
      %6708 = vmatprep.subr.mxu0 0.0
      %6709 = vmatpush1.msra.mxu0 0.0
      %6710 = vmatprep.mubr.f32.mxu0 0.0
      %v6711 = vand.u32 %v6350, 4294901760
      %6712 = vmatmul.mubr.f32.gmra.mrb[0].mxu0 %v6711
      %v6713 = vpop.f32.mrb[0].mxu0
      %v6714 = vadd.f32 %v6473, %v6713
      %v6715 = vpop.f32.mrb[0].mxu0
      %6716 = vmatprep.mubr.f32.mxu0 0.0
      %v6717 = vand.u32 %v6353, 4294901760
      %6718 = vmatmul.mubr.f32.gmra.mrb[0].mxu0 %v6717
      %v6719 = vpop.f32.mrb[0].mxu0
      %v6720 = vadd.f32 %v6483, %v6719
      %v6721 = vpop.f32.mrb[0].mxu0
      %6722 = vmatprep.mubr.f32.mxu0 0.0
      %v6723 = vand.u32 %v6356, 4294901760
      %6724 = vmatmul.mubr.f32.gmra.mrb[0].mxu0 %v6723
      %v6725 = vpop.f32.mrb[0].mxu0
      %v6726 = vadd.f32 %v6493, %v6725
      %v6727 = vpop.f32.mrb[0].mxu0
      %6728 = vmatprep.mubr.f32.mxu0 0.0
      %v6729 = vand.u32 %v6359, 4294901760
      %6730 = vmatmul.mubr.f32.gmra.mrb[0].mxu0 %v6729
      %v6731 = vpop.f32.mrb[0].mxu0
      %v6732 = vadd.f32 %v6503, %v6731
      %v6733 = vpop.f32.mrb[0].mxu0
      %6734 = vmatprep.mubr.f32.mxu0 0.0
      %v6735 = vand.u32 %v6362, 4294901760
      %6736 = vmatmul.mubr.f32.gmra.mrb[0].mxu0 %v6735
      %v6737 = vpop.f32.mrb[0].mxu0
      %v6738 = vadd.f32 %v6513, %v6737
      %v6739 = vpop.f32.mrb[0].mxu0
      %6740 = vmatprep.mubr.f32.mxu0 0.0
      %v6741 = vand.u32 %v6365, 4294901760
      %6742 = vmatmul.mubr.f32.gmra.mrb[0].mxu0 %v6741
      %v6743 = vpop.f32.mrb[0].mxu0
      %v6744 = vadd.f32 %v6523, %v6743
      %v6745 = vpop.f32.mrb[0].mxu0
      %6746 = vmatprep.mubr.f32.mxu0 0.0
      %v6747 = vand.u32 %v6368, 4294901760
      %6748 = vmatmul.mubr.f32.gmra.mrb[0].mxu0 %v6747
      %v6749 = vpop.f32.mrb[0].mxu0
      %v6750 = vadd.f32 %v6533, %v6749
      %v6751 = vpop.f32.mrb[0].mxu0
      %6752 = vmatprep.mubr.f32.mxu0 0.0
      %v6753 = vand.u32 %v6371, 4294901760
      %6754 = vmatmul.mubr.f32.gmra.mrb[0].mxu0 %v6753
      %v6755 = vpop.f32.mrb[0].mxu0
      %v6756 = vadd.f32 %v6543, %v6755
      %v6757 = vpop.f32.mrb[0].mxu0
      %6758 = vmatprep.mubr.f32.mxu0 0.0
      %v6759 = vand.u32 %v6374, 4294901760
      %6760 = vmatmul.mubr.f32.gmra.mrb[0].mxu0 %v6759
      %v6761 = vpop.f32.mrb[0].mxu0
      %v6762 = vadd.f32 %v6553, %v6761
      %v6763 = vpop.f32.mrb[0].mxu0
      %6764 = vmatprep.mubr.f32.mxu0 0.0
      %v6765 = vand.u32 %v6377, 4294901760
      %6766 = vmatmul.mubr.f32.gmra.mrb[0].mxu0 %v6765
      %v6767 = vpop.f32.mrb[0].mxu0
      %v6768 = vadd.f32 %v6563, %v6767
      %v6769 = vpop.f32.mrb[0].mxu0
      %6770 = vmatprep.mubr.f32.mxu0 0.0
      %v6771 = vand.u32 %v6380, 4294901760
      %6772 = vmatmul.mubr.f32.gmra.mrb[0].mxu0 %v6771
      %v6773 = vpop.f32.mrb[0].mxu0
      %v6774 = vadd.f32 %v6573, %v6773
      %v6775 = vpop.f32.mrb[0].mxu0
      %6776 = vmatprep.mubr.f32.mxu0 0.0
      %v6777 = vand.u32 %v6383, 4294901760
      %6778 = vmatmul.mubr.f32.gmra.mrb[0].mxu0 %v6777
      %v6779 = vpop.f32.mrb[0].mxu0
      %v6780 = vadd.f32 %v6583, %v6779
      %v6781 = vpop.f32.mrb[0].mxu0
      %6782 = vmatprep.mubr.f32.mxu0 0.0
      %v6783 = vand.u32 %v6386, 4294901760
      %6784 = vmatmul.mubr.f32.gmra.mrb[0].mxu0 %v6783
      %v6785 = vpop.f32.mrb[0].mxu0
      %v6786 = vadd.f32 %v6593, %v6785
      %v6787 = vpop.f32.mrb[0].mxu0
      %6788 = vmatprep.mubr.f32.mxu0 0.0
      %v6789 = vand.u32 %v6389, 4294901760
      %6790 = vmatmul.mubr.f32.gmra.mrb[0].mxu0 %v6789
      %v6791 = vpop.f32.mrb[0].mxu0
      %v6792 = vadd.f32 %v6603, %v6791
      %v6793 = vpop.f32.mrb[0].mxu0
      %6794 = vmatprep.mubr.f32.mxu0 0.0
      %v6795 = vand.u32 %v6392, 4294901760
      %6796 = vmatmul.mubr.f32.gmra.mrb[0].mxu0 %v6795
      %v6797 = vpop.f32.mrb[0].mxu0
      %v6798 = vadd.f32 %v6613, %v6797
      %v6799 = vpop.f32.mrb[0].mxu0
      %6800 = vmatprep.mubr.f32.mxu0 0.0
      %v6801 = vand.u32 %v6395, 4294901760
      %6802 = vmatmul.mubr.f32.gmra.mrb[0].mxu0 %v6801
      %v6803 = vpop.f32.mrb[0].mxu0
      %v6804 = vadd.f32 %v6623, %v6803
      %v6805 = vpop.f32.mrb[0].mxu0
      %6806 = vdwg.mxu0
      %6807 = vmatprep.subr.mxu0 0.0
      %v6808 = vand.u32 %v6338, 4294901760
      %v6809 = vsub.f32 %v6338, %v6808
      %6810 = vmatpush1.msra.mxu0 %v6809
      %6811 = vmatprep.subr.mxu0 0.0
      %v6812 = vand.u32 %v6339, 4294901760
      %v6813 = vsub.f32 %v6339, %v6812
      %6814 = vmatpush1.msra.mxu0 %v6813
      %6815 = vmatprep.subr.mxu0 0.0
      %v6816 = vand.u32 %v6340, 4294901760
      %v6817 = vsub.f32 %v6340, %v6816
      %6818 = vmatpush1.msra.mxu0 %v6817
      %6819 = vmatprep.subr.mxu0 0.0
      %v6820 = vand.u32 %v6341, 4294901760
      %v6821 = vsub.f32 %v6341, %v6820
      %6822 = vmatpush1.msra.mxu0 %v6821
      %6823 = vmatprep.subr.mxu0 0.0
      %6824 = vmatpush1.msra.mxu0 0.0
      %6825 = vmatprep.subr.mxu0 0.0
      %6826 = vmatpush1.msra.mxu0 0.0
      %6827 = vmatprep.subr.mxu0 0.0
      %6828 = vmatpush1.msra.mxu0 0.0
      %6829 = vmatprep.subr.mxu0 0.0
      %6830 = vmatpush1.msra.mxu0 0.0
      %6831 = vmatprep.subr.mxu0 0.0
      %6832 = vmatpush1.msra.mxu0 0.0
      %6833 = vmatprep.subr.mxu0 0.0
      %6834 = vmatpush1.msra.mxu0 0.0
      %6835 = vmatprep.subr.mxu0 0.0
      %6836 = vmatpush1.msra.mxu0 0.0
      %6837 = vmatprep.subr.mxu0 0.0
      %6838 = vmatpush1.msra.mxu0 0.0
      %6839 = vmatprep.subr.mxu0 0.0
      %6840 = vmatpush1.msra.mxu0 0.0
      %6841 = vmatprep.subr.mxu0 0.0
      %6842 = vmatpush1.msra.mxu0 0.0
      %6843 = vmatprep.subr.mxu0 0.0
      %6844 = vmatpush1.msra.mxu0 0.0
      %6845 = vmatprep.subr.mxu0 0.0
      %6846 = vmatpush1.msra.mxu0 0.0
      %6847 = vmatprep.subr.mxu0 0.0
      %6848 = vmatpush1.msra.mxu0 0.0
      %6849 = vmatprep.subr.mxu0 0.0
      %6850 = vmatpush1.msra.mxu0 0.0
      %6851 = vmatprep.subr.mxu0 0.0
      %6852 = vmatpush1.msra.mxu0 0.0
      %6853 = vmatprep.subr.mxu0 0.0
      %6854 = vmatpush1.msra.mxu0 0.0
      %6855 = vmatprep.subr.mxu0 0.0
      %6856 = vmatpush1.msra.mxu0 0.0
      %6857 = vmatprep.subr.mxu0 0.0
      %6858 = vmatpush1.msra.mxu0 0.0
      %6859 = vmatprep.subr.mxu0 0.0
      %6860 = vmatpush1.msra.mxu0 0.0
      %6861 = vmatprep.subr.mxu0 0.0
      %6862 = vmatpush1.msra.mxu0 0.0
      %6863 = vmatprep.subr.mxu0 0.0
      %6864 = vmatpush1.msra.mxu0 0.0
      %6865 = vmatprep.subr.mxu0 0.0
      %6866 = vmatpush1.msra.mxu0 0.0
      %6867 = vmatprep.subr.mxu0 0.0
      %6868 = vmatpush1.msra.mxu0 0.0
      %6869 = vmatprep.subr.mxu0 0.0
      %6870 = vmatpush1.msra.mxu0 0.0
      %6871 = vmatprep.subr.mxu0 0.0
      %6872 = vmatpush1.msra.mxu0 0.0
      %6873 = vmatprep.subr.mxu0 0.0
      %6874 = vmatpush1.msra.mxu0 0.0
      %6875 = vmatprep.subr.mxu0 0.0
      %6876 = vmatpush1.msra.mxu0 0.0
      %6877 = vmatprep.subr.mxu0 0.0
      %6878 = vmatpush1.msra.mxu0 0.0
      %6879 = vmatprep.mubr.f32.mxu0 0.0
      %v6880 = vand.u32 %v6350, 4294901760
      %v6881 = vsub.f32 %v6350, %v6880
      %6882 = vmatmul.mubr.f32.gmra.mrb[0].mxu0 %v6881
      %v6883 = vpop.f32.mrb[0].mxu0
      %v6884 = vadd.f32 %v6714, %v6883
      %v6885 = vpop.f32.mrb[0].mxu0
      %6886 = vmatprep.mubr.f32.mxu0 0.0
      %v6887 = vand.u32 %v6353, 4294901760
      %v6888 = vsub.f32 %v6353, %v6887
      %6889 = vmatmul.mubr.f32.gmra.mrb[0].mxu0 %v6888
      %v6890 = vpop.f32.mrb[0].mxu0
      %v6891 = vadd.f32 %v6720, %v6890
      %v6892 = vpop.f32.mrb[0].mxu0
      %6893 = vmatprep.mubr.f32.mxu0 0.0
      %v6894 = vand.u32 %v6356, 4294901760
      %v6895 = vsub.f32 %v6356, %v6894
      %6896 = vmatmul.mubr.f32.gmra.mrb[0].mxu0 %v6895
      %v6897 = vpop.f32.mrb[0].mxu0
      %v6898 = vadd.f32 %v6726, %v6897
      %v6899 = vpop.f32.mrb[0].mxu0
      %6900 = vmatprep.mubr.f32.mxu0 0.0
      %v6901 = vand.u32 %v6359, 4294901760
      %v6902 = vsub.f32 %v6359, %v6901
      %6903 = vmatmul.mubr.f32.gmra.mrb[0].mxu0 %v6902
      %v6904 = vpop.f32.mrb[0].mxu0
      %v6905 = vadd.f32 %v6732, %v6904
      %v6906 = vpop.f32.mrb[0].mxu0
      %6907 = vmatprep.mubr.f32.mxu0 0.0
      %v6908 = vand.u32 %v6362, 4294901760
      %v6909 = vsub.f32 %v6362, %v6908
      %6910 = vmatmul.mubr.f32.gmra.mrb[0].mxu0 %v6909
      %v6911 = vpop.f32.mrb[0].mxu0
      %v6912 = vadd.f32 %v6738, %v6911
      %v6913 = vpop.f32.mrb[0].mxu0
      %6914 = vmatprep.mubr.f32.mxu0 0.0
      %v6915 = vand.u32 %v6365, 4294901760
      %v6916 = vsub.f32 %v6365, %v6915
      %6917 = vmatmul.mubr.f32.gmra.mrb[0].mxu0 %v6916
      %v6918 = vpop.f32.mrb[0].mxu0
      %v6919 = vadd.f32 %v6744, %v6918
      %v6920 = vpop.f32.mrb[0].mxu0
      %6921 = vmatprep.mubr.f32.mxu0 0.0
      %v6922 = vand.u32 %v6368, 4294901760
      %v6923 = vsub.f32 %v6368, %v6922
      %6924 = vmatmul.mubr.f32.gmra.mrb[0].mxu0 %v6923
      %v6925 = vpop.f32.mrb[0].mxu0
      %v6926 = vadd.f32 %v6750, %v6925
      %v6927 = vpop.f32.mrb[0].mxu0
      %6928 = vmatprep.mubr.f32.mxu0 0.0
      %v6929 = vand.u32 %v6371, 4294901760
      %v6930 = vsub.f32 %v6371, %v6929
      %6931 = vmatmul.mubr.f32.gmra.mrb[0].mxu0 %v6930
      %v6932 = vpop.f32.mrb[0].mxu0
      %v6933 = vadd.f32 %v6756, %v6932
      %v6934 = vpop.f32.mrb[0].mxu0
      %6935 = vmatprep.mubr.f32.mxu0 0.0
      %v6936 = vand.u32 %v6374, 4294901760
      %v6937 = vsub.f32 %v6374, %v6936
      %6938 = vmatmul.mubr.f32.gmra.mrb[0].mxu0 %v6937
      %v6939 = vpop.f32.mrb[0].mxu0
      %v6940 = vadd.f32 %v6762, %v6939
      %v6941 = vpop.f32.mrb[0].mxu0
      %6942 = vmatprep.mubr.f32.mxu0 0.0
      %v6943 = vand.u32 %v6377, 4294901760
      %v6944 = vsub.f32 %v6377, %v6943
      %6945 = vmatmul.mubr.f32.gmra.mrb[0].mxu0 %v6944
      %v6946 = vpop.f32.mrb[0].mxu0
      %v6947 = vadd.f32 %v6768, %v6946
      %v6948 = vpop.f32.mrb[0].mxu0
      %6949 = vmatprep.mubr.f32.mxu0 0.0
      %v6950 = vand.u32 %v6380, 4294901760
      %v6951 = vsub.f32 %v6380, %v6950
      %6952 = vmatmul.mubr.f32.gmra.mrb[0].mxu0 %v6951
      %v6953 = vpop.f32.mrb[0].mxu0
      %v6954 = vadd.f32 %v6774, %v6953
      %v6955 = vpop.f32.mrb[0].mxu0
      %6956 = vmatprep.mubr.f32.mxu0 0.0
      %v6957 = vand.u32 %v6383, 4294901760
      %v6958 = vsub.f32 %v6383, %v6957
      %6959 = vmatmul.mubr.f32.gmra.mrb[0].mxu0 %v6958
      %v6960 = vpop.f32.mrb[0].mxu0
      %v6961 = vadd.f32 %v6780, %v6960
      %v6962 = vpop.f32.mrb[0].mxu0
      %6963 = vmatprep.mubr.f32.mxu0 0.0
      %v6964 = vand.u32 %v6386, 4294901760
      %v6965 = vsub.f32 %v6386, %v6964
      %6966 = vmatmul.mubr.f32.gmra.mrb[0].mxu0 %v6965
      %v6967 = vpop.f32.mrb[0].mxu0
      %v6968 = vadd.f32 %v6786, %v6967
      %v6969 = vpop.f32.mrb[0].mxu0
      %6970 = vmatprep.mubr.f32.mxu0 0.0
      %v6971 = vand.u32 %v6389, 4294901760
      %v6972 = vsub.f32 %v6389, %v6971
      %6973 = vmatmul.mubr.f32.gmra.mrb[0].mxu0 %v6972
      %v6974 = vpop.f32.mrb[0].mxu0
      %v6975 = vadd.f32 %v6792, %v6974
      %v6976 = vpop.f32.mrb[0].mxu0
      %6977 = vmatprep.mubr.f32.mxu0 0.0
      %v6978 = vand.u32 %v6392, 4294901760
      %v6979 = vsub.f32 %v6392, %v6978
      %6980 = vmatmul.mubr.f32.gmra.mrb[0].mxu0 %v6979
      %v6981 = vpop.f32.mrb[0].mxu0
      %v6982 = vadd.f32 %v6798, %v6981
      %v6983 = vpop.f32.mrb[0].mxu0
      %6984 = vmatprep.mubr.f32.mxu0 0.0
      %v6985 = vand.u32 %v6395, 4294901760
      %v6986 = vsub.f32 %v6395, %v6985
      %6987 = vmatmul.mubr.f32.gmra.mrb[0].mxu0 %v6986
      %v6988 = vpop.f32.mrb[0].mxu0
      %v6989 = vadd.f32 %v6804, %v6988
      %v6990 = vpop.f32.mrb[0].mxu0
      %6991 = vdwg.mxu0
      %6992 = vmatprep.subr.mxu0 0.0
      %v6993 = vand.u32 %v6338, 4294901760
      %6994 = vmatpush1.msra.mxu0 %v6993
      %6995 = vmatprep.subr.mxu0 0.0
      %v6996 = vand.u32 %v6339, 4294901760
      %6997 = vmatpush1.msra.mxu0 %v6996
      %6998 = vmatprep.subr.mxu0 0.0
      %v6999 = vand.u32 %v6340, 4294901760
      %7000 = vmatpush1.msra.mxu0 %v6999
      %7001 = vmatprep.subr.mxu0 0.0
      %v7002 = vand.u32 %v6341, 4294901760
      %7003 = vmatpush1.msra.mxu0 %v7002
      %7004 = vmatprep.subr.mxu0 0.0
      %7005 = vmatpush1.msra.mxu0 0.0
      %7006 = vmatprep.subr.mxu0 0.0
      %7007 = vmatpush1.msra.mxu0 0.0
      %7008 = vmatprep.subr.mxu0 0.0
      %7009 = vmatpush1.msra.mxu0 0.0
      %7010 = vmatprep.subr.mxu0 0.0
      %7011 = vmatpush1.msra.mxu0 0.0
      %7012 = vmatprep.subr.mxu0 0.0
      %7013 = vmatpush1.msra.mxu0 0.0
      %7014 = vmatprep.subr.mxu0 0.0
      %7015 = vmatpush1.msra.mxu0 0.0
      %7016 = vmatprep.subr.mxu0 0.0
      %7017 = vmatpush1.msra.mxu0 0.0
      %7018 = vmatprep.subr.mxu0 0.0
      %7019 = vmatpush1.msra.mxu0 0.0
      %7020 = vmatprep.subr.mxu0 0.0
      %7021 = vmatpush1.msra.mxu0 0.0
      %7022 = vmatprep.subr.mxu0 0.0
      %7023 = vmatpush1.msra.mxu0 0.0
      %7024 = vmatprep.subr.mxu0 0.0
      %7025 = vmatpush1.msra.mxu0 0.0
      %7026 = vmatprep.subr.mxu0 0.0
      %7027 = vmatpush1.msra.mxu0 0.0
      %7028 = vmatprep.subr.mxu0 0.0
      %7029 = vmatpush1.msra.mxu0 0.0
      %7030 = vmatprep.subr.mxu0 0.0
      %7031 = vmatpush1.msra.mxu0 0.0
      %7032 = vmatprep.subr.mxu0 0.0
      %7033 = vmatpush1.msra.mxu0 0.0
      %7034 = vmatprep.subr.mxu0 0.0
      %7035 = vmatpush1.msra.mxu0 0.0
      %7036 = vmatprep.subr.mxu0 0.0
      %7037 = vmatpush1.msra.mxu0 0.0
      %7038 = vmatprep.subr.mxu0 0.0
      %7039 = vmatpush1.msra.mxu0 0.0
      %7040 = vmatprep.subr.mxu0 0.0
      %7041 = vmatpush1.msra.mxu0 0.0
      %7042 = vmatprep.subr.mxu0 0.0
      %7043 = vmatpush1.msra.mxu0 0.0
      %7044 = vmatprep.subr.mxu0 0.0
      %7045 = vmatpush1.msra.mxu0 0.0
      %7046 = vmatprep.subr.mxu0 0.0
      %7047 = vmatpush1.msra.mxu0 0.0
      %7048 = vmatprep.subr.mxu0 0.0
      %7049 = vmatpush1.msra.mxu0 0.0
      %7050 = vmatprep.subr.mxu0 0.0
      %7051 = vmatpush1.msra.mxu0 0.0
      %7052 = vmatprep.subr.mxu0 0.0
      %7053 = vmatpush1.msra.mxu0 0.0
      %7054 = vmatprep.subr.mxu0 0.0
      %7055 = vmatpush1.msra.mxu0 0.0
      %7056 = vmatprep.subr.mxu0 0.0
      %7057 = vmatpush1.msra.mxu0 0.0
      %7058 = vmatprep.subr.mxu0 0.0
      %7059 = vmatpush1.msra.mxu0 0.0
      %7060 = vmatprep.mubr.f32.mxu0 0.0
      %v7061 = vand.u32 %v6350, 4294901760
      %v7062 = vsub.f32 %v6350, %v7061
      %v7063 = vand.u32 %v7062, 4294901760
      %7064 = vmatmul.mubr.f32.gmra.mrb[0].mxu0 %v7063
      %v7065 = vpop.f32.mrb[0].mxu0
      %v7066 = vadd.f32 %v6884, %v7065
      %v7067 = vpop.f32.mrb[0].mxu0
      %7068 = vmatprep.mubr.f32.mxu0 0.0
      %v7069 = vand.u32 %v6353, 4294901760
      %v7070 = vsub.f32 %v6353, %v7069
      %v7071 = vand.u32 %v7070, 4294901760
      %7072 = vmatmul.mubr.f32.gmra.mrb[0].mxu0 %v7071
      %v7073 = vpop.f32.mrb[0].mxu0
      %v7074 = vadd.f32 %v6891, %v7073
      %v7075 = vpop.f32.mrb[0].mxu0
      %7076 = vmatprep.mubr.f32.mxu0 0.0
      %v7077 = vand.u32 %v6356, 4294901760
      %v7078 = vsub.f32 %v6356, %v7077
      %v7079 = vand.u32 %v7078, 4294901760
      %7080 = vmatmul.mubr.f32.gmra.mrb[0].mxu0 %v7079
      %v7081 = vpop.f32.mrb[0].mxu0
      %v7082 = vadd.f32 %v6898, %v7081
      %v7083 = vpop.f32.mrb[0].mxu0
      %7084 = vmatprep.mubr.f32.mxu0 0.0
      %v7085 = vand.u32 %v6359, 4294901760
      %v7086 = vsub.f32 %v6359, %v7085
      %v7087 = vand.u32 %v7086, 4294901760
      %7088 = vmatmul.mubr.f32.gmra.mrb[0].mxu0 %v7087
      %v7089 = vpop.f32.mrb[0].mxu0
      %v7090 = vadd.f32 %v6905, %v7089
      %v7091 = vpop.f32.mrb[0].mxu0
      %7092 = vmatprep.mubr.f32.mxu0 0.0
      %v7093 = vand.u32 %v6362, 4294901760
      %v7094 = vsub.f32 %v6362, %v7093
      %v7095 = vand.u32 %v7094, 4294901760
      %7096 = vmatmul.mubr.f32.gmra.mrb[0].mxu0 %v7095
      %v7097 = vpop.f32.mrb[0].mxu0
      %v7098 = vadd.f32 %v6912, %v7097
      %v7099 = vpop.f32.mrb[0].mxu0
      %7100 = vmatprep.mubr.f32.mxu0 0.0
      %v7101 = vand.u32 %v6365, 4294901760
      %v7102 = vsub.f32 %v6365, %v7101
      %v7103 = vand.u32 %v7102, 4294901760
      %7104 = vmatmul.mubr.f32.gmra.mrb[0].mxu0 %v7103
      %v7105 = vpop.f32.mrb[0].mxu0
      %v7106 = vadd.f32 %v6919, %v7105
      %v7107 = vpop.f32.mrb[0].mxu0
      %7108 = vmatprep.mubr.f32.mxu0 0.0
      %v7109 = vand.u32 %v6368, 4294901760
      %v7110 = vsub.f32 %v6368, %v7109
      %v7111 = vand.u32 %v7110, 4294901760
      %7112 = vmatmul.mubr.f32.gmra.mrb[0].mxu0 %v7111
      %v7113 = vpop.f32.mrb[0].mxu0
      %v7114 = vadd.f32 %v6926, %v7113
      %v7115 = vpop.f32.mrb[0].mxu0
      %7116 = vmatprep.mubr.f32.mxu0 0.0
      %v7117 = vand.u32 %v6371, 4294901760
      %v7118 = vsub.f32 %v6371, %v7117
      %v7119 = vand.u32 %v7118, 4294901760
      %7120 = vmatmul.mubr.f32.gmra.mrb[0].mxu0 %v7119
      %v7121 = vpop.f32.mrb[0].mxu0
      %v7122 = vadd.f32 %v6933, %v7121
      %v7123 = vpop.f32.mrb[0].mxu0
      %7124 = vmatprep.mubr.f32.mxu0 0.0
      %v7125 = vand.u32 %v6374, 4294901760
      %v7126 = vsub.f32 %v6374, %v7125
      %v7127 = vand.u32 %v7126, 4294901760
      %7128 = vmatmul.mubr.f32.gmra.mrb[0].mxu0 %v7127
      %v7129 = vpop.f32.mrb[0].mxu0
      %v7130 = vadd.f32 %v6940, %v7129
      %v7131 = vpop.f32.mrb[0].mxu0
      %7132 = vmatprep.mubr.f32.mxu0 0.0
      %v7133 = vand.u32 %v6377, 4294901760
      %v7134 = vsub.f32 %v6377, %v7133
      %v7135 = vand.u32 %v7134, 4294901760
      %7136 = vmatmul.mubr.f32.gmra.mrb[0].mxu0 %v7135
      %v7137 = vpop.f32.mrb[0].mxu0
      %v7138 = vadd.f32 %v6947, %v7137
      %v7139 = vpop.f32.mrb[0].mxu0
      %7140 = vmatprep.mubr.f32.mxu0 0.0
      %v7141 = vand.u32 %v6380, 4294901760
      %v7142 = vsub.f32 %v6380, %v7141
      %v7143 = vand.u32 %v7142, 4294901760
      %7144 = vmatmul.mubr.f32.gmra.mrb[0].mxu0 %v7143
      %v7145 = vpop.f32.mrb[0].mxu0
      %v7146 = vadd.f32 %v6954, %v7145
      %v7147 = vpop.f32.mrb[0].mxu0
      %7148 = vmatprep.mubr.f32.mxu0 0.0
      %v7149 = vand.u32 %v6383, 4294901760
      %v7150 = vsub.f32 %v6383, %v7149
      %v7151 = vand.u32 %v7150, 4294901760
      %7152 = vmatmul.mubr.f32.gmra.mrb[0].mxu0 %v7151
      %v7153 = vpop.f32.mrb[0].mxu0
      %v7154 = vadd.f32 %v6961, %v7153
      %v7155 = vpop.f32.mrb[0].mxu0
      %7156 = vmatprep.mubr.f32.mxu0 0.0
      %v7157 = vand.u32 %v6386, 4294901760
      %v7158 = vsub.f32 %v6386, %v7157
      %v7159 = vand.u32 %v7158, 4294901760
      %7160 = vmatmul.mubr.f32.gmra.mrb[0].mxu0 %v7159
      %v7161 = vpop.f32.mrb[0].mxu0
      %v7162 = vadd.f32 %v6968, %v7161
      %v7163 = vpop.f32.mrb[0].mxu0
      %7164 = vmatprep.mubr.f32.mxu0 0.0
      %v7165 = vand.u32 %v6389, 4294901760
      %v7166 = vsub.f32 %v6389, %v7165
      %v7167 = vand.u32 %v7166, 4294901760
      %7168 = vmatmul.mubr.f32.gmra.mrb[0].mxu0 %v7167
      %v7169 = vpop.f32.mrb[0].mxu0
      %v7170 = vadd.f32 %v6975, %v7169
      %v7171 = vpop.f32.mrb[0].mxu0
      %7172 = vmatprep.mubr.f32.mxu0 0.0
      %v7173 = vand.u32 %v6392, 4294901760
      %v7174 = vsub.f32 %v6392, %v7173
      %v7175 = vand.u32 %v7174, 4294901760
      %7176 = vmatmul.mubr.f32.gmra.mrb[0].mxu0 %v7175
      %v7177 = vpop.f32.mrb[0].mxu0
      %v7178 = vadd.f32 %v6982, %v7177
      %v7179 = vpop.f32.mrb[0].mxu0
      %7180 = vmatprep.mubr.f32.mxu0 0.0
      %v7181 = vand.u32 %v6395, 4294901760
      %v7182 = vsub.f32 %v6395, %v7181
      %v7183 = vand.u32 %v7182, 4294901760
      %7184 = vmatmul.mubr.f32.gmra.mrb[0].mxu0 %v7183
      %v7185 = vpop.f32.mrb[0].mxu0
      %v7186 = vadd.f32 %v6989, %v7185
      %v7187 = vpop.f32.mrb[0].mxu0
      %7188 = vdwg.mxu0
      %7189 = vmatprep.subr.mxu0 0.0
      %v7190 = vand.u32 %v6338, 4294901760
      %v7191 = vsub.f32 %v6338, %v7190
      %v7192 = vand.u32 %v7191, 4294901760
      %7193 = vmatpush1.msra.mxu0 %v7192
      %7194 = vmatprep.subr.mxu0 0.0
      %v7195 = vand.u32 %v6339, 4294901760
      %v7196 = vsub.f32 %v6339, %v7195
      %v7197 = vand.u32 %v7196, 4294901760
      %7198 = vmatpush1.msra.mxu0 %v7197
      %7199 = vmatprep.subr.mxu0 0.0
      %v7200 = vand.u32 %v6340, 4294901760
      %v7201 = vsub.f32 %v6340, %v7200
      %v7202 = vand.u32 %v7201, 4294901760
      %7203 = vmatpush1.msra.mxu0 %v7202
      %7204 = vmatprep.subr.mxu0 0.0
      %v7205 = vand.u32 %v6341, 4294901760
      %v7206 = vsub.f32 %v6341, %v7205
      %v7207 = vand.u32 %v7206, 4294901760
      %7208 = vmatpush1.msra.mxu0 %v7207
      %7209 = vmatprep.subr.mxu0 0.0
      %7210 = vmatpush1.msra.mxu0 0.0
      %7211 = vmatprep.subr.mxu0 0.0
      %7212 = vmatpush1.msra.mxu0 0.0
      %7213 = vmatprep.subr.mxu0 0.0
      %7214 = vmatpush1.msra.mxu0 0.0
      %7215 = vmatprep.subr.mxu0 0.0
      %7216 = vmatpush1.msra.mxu0 0.0
      %7217 = vmatprep.subr.mxu0 0.0
      %7218 = vmatpush1.msra.mxu0 0.0
      %7219 = vmatprep.subr.mxu0 0.0
      %7220 = vmatpush1.msra.mxu0 0.0
      %7221 = vmatprep.subr.mxu0 0.0
      %7222 = vmatpush1.msra.mxu0 0.0
      %7223 = vmatprep.subr.mxu0 0.0
      %7224 = vmatpush1.msra.mxu0 0.0
      %7225 = vmatprep.subr.mxu0 0.0
      %7226 = vmatpush1.msra.mxu0 0.0
      %7227 = vmatprep.subr.mxu0 0.0
      %7228 = vmatpush1.msra.mxu0 0.0
      %7229 = vmatprep.subr.mxu0 0.0
      %7230 = vmatpush1.msra.mxu0 0.0
      %7231 = vmatprep.subr.mxu0 0.0
      %7232 = vmatpush1.msra.mxu0 0.0
      %7233 = vmatprep.subr.mxu0 0.0
      %7234 = vmatpush1.msra.mxu0 0.0
      %7235 = vmatprep.subr.mxu0 0.0
      %7236 = vmatpush1.msra.mxu0 0.0
      %7237 = vmatprep.subr.mxu0 0.0
      %7238 = vmatpush1.msra.mxu0 0.0
      %7239 = vmatprep.subr.mxu0 0.0
      %7240 = vmatpush1.msra.mxu0 0.0
      %7241 = vmatprep.subr.mxu0 0.0
      %7242 = vmatpush1.msra.mxu0 0.0
      %7243 = vmatprep.subr.mxu0 0.0
      %7244 = vmatpush1.msra.mxu0 0.0
      %7245 = vmatprep.subr.mxu0 0.0
      %7246 = vmatpush1.msra.mxu0 0.0
      %7247 = vmatprep.subr.mxu0 0.0
      %7248 = vmatpush1.msra.mxu0 0.0
      %7249 = vmatprep.subr.mxu0 0.0
      %7250 = vmatpush1.msra.mxu0 0.0
      %7251 = vmatprep.subr.mxu0 0.0
      %7252 = vmatpush1.msra.mxu0 0.0
      %7253 = vmatprep.subr.mxu0 0.0
      %7254 = vmatpush1.msra.mxu0 0.0
      %7255 = vmatprep.subr.mxu0 0.0
      %7256 = vmatpush1.msra.mxu0 0.0
      %7257 = vmatprep.subr.mxu0 0.0
      %7258 = vmatpush1.msra.mxu0 0.0
      %7259 = vmatprep.subr.mxu0 0.0
      %7260 = vmatpush1.msra.mxu0 0.0
      %7261 = vmatprep.subr.mxu0 0.0
      %7262 = vmatpush1.msra.mxu0 0.0
      %7263 = vmatprep.subr.mxu0 0.0
      %7264 = vmatpush1.msra.mxu0 0.0
      %7265 = vmatprep.mubr.f32.mxu0 0.0
      %v7266 = vand.u32 %v6350, 4294901760
      %7267 = vmatmul.mubr.f32.gmra.mrb[0].mxu0 %v7266
      %v7268 = vpop.f32.mrb[0].mxu0
      %v7269 = vadd.f32 %v7066, %v7268
      %v7270 = vpop.f32.mrb[0].mxu0
      %7271 = vmatprep.mubr.f32.mxu0 0.0
      %v7272 = vand.u32 %v6353, 4294901760
      %7273 = vmatmul.mubr.f32.gmra.mrb[0].mxu0 %v7272
      %v7274 = vpop.f32.mrb[0].mxu0
      %v7275 = vadd.f32 %v7074, %v7274
      %v7276 = vpop.f32.mrb[0].mxu0
      %7277 = vmatprep.mubr.f32.mxu0 0.0
      %v7278 = vand.u32 %v6356, 4294901760
      %7279 = vmatmul.mubr.f32.gmra.mrb[0].mxu0 %v7278
      %v7280 = vpop.f32.mrb[0].mxu0
      %v7281 = vadd.f32 %v7082, %v7280
      %v7282 = vpop.f32.mrb[0].mxu0
      %7283 = vmatprep.mubr.f32.mxu0 0.0
      %v7284 = vand.u32 %v6359, 4294901760
      %7285 = vmatmul.mubr.f32.gmra.mrb[0].mxu0 %v7284
      %v7286 = vpop.f32.mrb[0].mxu0
      %v7287 = vadd.f32 %v7090, %v7286
      %v7288 = vpop.f32.mrb[0].mxu0
      %7289 = vmatprep.mubr.f32.mxu0 0.0
      %v7290 = vand.u32 %v6362, 4294901760
      %7291 = vmatmul.mubr.f32.gmra.mrb[0].mxu0 %v7290
      %v7292 = vpop.f32.mrb[0].mxu0
      %v7293 = vadd.f32 %v7098, %v7292
      %v7294 = vpop.f32.mrb[0].mxu0
      %7295 = vmatprep.mubr.f32.mxu0 0.0
      %v7296 = vand.u32 %v6365, 4294901760
      %7297 = vmatmul.mubr.f32.gmra.mrb[0].mxu0 %v7296
      %v7298 = vpop.f32.mrb[0].mxu0
      %v7299 = vadd.f32 %v7106, %v7298
      %v7300 = vpop.f32.mrb[0].mxu0
      %7301 = vmatprep.mubr.f32.mxu0 0.0
      %v7302 = vand.u32 %v6368, 4294901760
      %7303 = vmatmul.mubr.f32.gmra.mrb[0].mxu0 %v7302
      %v7304 = vpop.f32.mrb[0].mxu0
      %v7305 = vadd.f32 %v7114, %v7304
      %v7306 = vpop.f32.mrb[0].mxu0
      %7307 = vmatprep.mubr.f32.mxu0 0.0
      %v7308 = vand.u32 %v6371, 4294901760
      %7309 = vmatmul.mubr.f32.gmra.mrb[0].mxu0 %v7308
      %v7310 = vpop.f32.mrb[0].mxu0
      %v7311 = vadd.f32 %v7122, %v7310
      %v7312 = vpop.f32.mrb[0].mxu0
      %7313 = vmatprep.mubr.f32.mxu0 0.0
      %v7314 = vand.u32 %v6374, 4294901760
      %7315 = vmatmul.mubr.f32.gmra.mrb[0].mxu0 %v7314
      %v7316 = vpop.f32.mrb[0].mxu0
      %v7317 = vadd.f32 %v7130, %v7316
      %v7318 = vpop.f32.mrb[0].mxu0
      %7319 = vmatprep.mubr.f32.mxu0 0.0
      %v7320 = vand.u32 %v6377, 4294901760
      %7321 = vmatmul.mubr.f32.gmra.mrb[0].mxu0 %v7320
      %v7322 = vpop.f32.mrb[0].mxu0
      %v7323 = vadd.f32 %v7138, %v7322
      %v7324 = vpop.f32.mrb[0].mxu0
      %7325 = vmatprep.mubr.f32.mxu0 0.0
      %v7326 = vand.u32 %v6380, 4294901760
      %7327 = vmatmul.mubr.f32.gmra.mrb[0].mxu0 %v7326
      %v7328 = vpop.f32.mrb[0].mxu0
      %v7329 = vadd.f32 %v7146, %v7328
      %v7330 = vpop.f32.mrb[0].mxu0
      %7331 = vmatprep.mubr.f32.mxu0 0.0
      %v7332 = vand.u32 %v6383, 4294901760
      %7333 = vmatmul.mubr.f32.gmra.mrb[0].mxu0 %v7332
      %v7334 = vpop.f32.mrb[0].mxu0
      %v7335 = vadd.f32 %v7154, %v7334
      %v7336 = vpop.f32.mrb[0].mxu0
      %7337 = vmatprep.mubr.f32.mxu0 0.0
      %v7338 = vand.u32 %v6386, 4294901760
      %7339 = vmatmul.mubr.f32.gmra.mrb[0].mxu0 %v7338
      %v7340 = vpop.f32.mrb[0].mxu0
      %v7341 = vadd.f32 %v7162, %v7340
      %v7342 = vpop.f32.mrb[0].mxu0
      %7343 = vmatprep.mubr.f32.mxu0 0.0
      %v7344 = vand.u32 %v6389, 4294901760
      %7345 = vmatmul.mubr.f32.gmra.mrb[0].mxu0 %v7344
      %v7346 = vpop.f32.mrb[0].mxu0
      %v7347 = vadd.f32 %v7170, %v7346
      %v7348 = vpop.f32.mrb[0].mxu0
      %7349 = vmatprep.mubr.f32.mxu0 0.0
      %v7350 = vand.u32 %v6392, 4294901760
      %7351 = vmatmul.mubr.f32.gmra.mrb[0].mxu0 %v7350
      %v7352 = vpop.f32.mrb[0].mxu0
      %v7353 = vadd.f32 %v7178, %v7352
      %v7354 = vpop.f32.mrb[0].mxu0
      %7355 = vmatprep.mubr.f32.mxu0 0.0
      %v7356 = vand.u32 %v6395, 4294901760
      %7357 = vmatmul.mubr.f32.gmra.mrb[0].mxu0 %v7356
      %v7358 = vpop.f32.mrb[0].mxu0
      %v7359 = vadd.f32 %v7186, %v7358
      %v7360 = vpop.f32.mrb[0].mxu0
      %7361 = vdwg.mxu0
      %7362 = vmatprep.subr.mxu0 0.0
      %v7363 = vand.u32 %v6338, 4294901760
      %7364 = vmatpush1.msra.mxu0 %v7363
      %7365 = vmatprep.subr.mxu0 0.0
      %v7366 = vand.u32 %v6339, 4294901760
      %7367 = vmatpush1.msra.mxu0 %v7366
      %7368 = vmatprep.subr.mxu0 0.0
      %v7369 = vand.u32 %v6340, 4294901760
      %7370 = vmatpush1.msra.mxu0 %v7369
      %7371 = vmatprep.subr.mxu0 0.0
      %v7372 = vand.u32 %v6341, 4294901760
      %7373 = vmatpush1.msra.mxu0 %v7372
      %7374 = vmatprep.subr.mxu0 0.0
      %7375 = vmatpush1.msra.mxu0 0.0
      %7376 = vmatprep.subr.mxu0 0.0
      %7377 = vmatpush1.msra.mxu0 0.0
      %7378 = vmatprep.subr.mxu0 0.0
      %7379 = vmatpush1.msra.mxu0 0.0
      %7380 = vmatprep.subr.mxu0 0.0
      %7381 = vmatpush1.msra.mxu0 0.0
      %7382 = vmatprep.subr.mxu0 0.0
      %7383 = vmatpush1.msra.mxu0 0.0
      %7384 = vmatprep.subr.mxu0 0.0
      %7385 = vmatpush1.msra.mxu0 0.0
      %7386 = vmatprep.subr.mxu0 0.0
      %7387 = vmatpush1.msra.mxu0 0.0
      %7388 = vmatprep.subr.mxu0 0.0
      %7389 = vmatpush1.msra.mxu0 0.0
      %7390 = vmatprep.subr.mxu0 0.0
      %7391 = vmatpush1.msra.mxu0 0.0
      %7392 = vmatprep.subr.mxu0 0.0
      %7393 = vmatpush1.msra.mxu0 0.0
      %7394 = vmatprep.subr.mxu0 0.0
      %7395 = vmatpush1.msra.mxu0 0.0
      %7396 = vmatprep.subr.mxu0 0.0
      %7397 = vmatpush1.msra.mxu0 0.0
      %7398 = vmatprep.subr.mxu0 0.0
      %7399 = vmatpush1.msra.mxu0 0.0
      %7400 = vmatprep.subr.mxu0 0.0
      %7401 = vmatpush1.msra.mxu0 0.0
      %7402 = vmatprep.subr.mxu0 0.0
      %7403 = vmatpush1.msra.mxu0 0.0
      %7404 = vmatprep.subr.mxu0 0.0
      %7405 = vmatpush1.msra.mxu0 0.0
      %7406 = vmatprep.subr.mxu0 0.0
      %7407 = vmatpush1.msra.mxu0 0.0
      %7408 = vmatprep.subr.mxu0 0.0
      %7409 = vmatpush1.msra.mxu0 0.0
      %7410 = vmatprep.subr.mxu0 0.0
      %7411 = vmatpush1.msra.mxu0 0.0
      %7412 = vmatprep.subr.mxu0 0.0
      %7413 = vmatpush1.msra.mxu0 0.0
      %7414 = vmatprep.subr.mxu0 0.0
      %7415 = vmatpush1.msra.mxu0 0.0
      %7416 = vmatprep.subr.mxu0 0.0
      %7417 = vmatpush1.msra.mxu0 0.0
      %7418 = vmatprep.subr.mxu0 0.0
      %7419 = vmatpush1.msra.mxu0 0.0
      %7420 = vmatprep.subr.mxu0 0.0
      %7421 = vmatpush1.msra.mxu0 0.0
      %7422 = vmatprep.subr.mxu0 0.0
      %7423 = vmatpush1.msra.mxu0 0.0
      %7424 = vmatprep.subr.mxu0 0.0
      %7425 = vmatpush1.msra.mxu0 0.0
      %7426 = vmatprep.subr.mxu0 0.0
      %7427 = vmatpush1.msra.mxu0 0.0
      %7428 = vmatprep.subr.mxu0 0.0
      %7429 = vmatpush1.msra.mxu0 0.0
      %7430 = vmatprep.mubr.f32.mxu0 0.0
      %v7431 = vand.u32 %v6350, 4294901760
      %7432 = vmatmul.mubr.f32.gmra.mrb[0].mxu0 %v7431
      %v7433 = vpop.f32.mrb[0].mxu0
      %v7434 = vadd.f32 %v7269, %v7433
      %v7435 = vpop.f32.mrb[0].mxu0
      %7436 = vmatprep.mubr.f32.mxu0 0.0
      %v7437 = vand.u32 %v6353, 4294901760
      %7438 = vmatmul.mubr.f32.gmra.mrb[0].mxu0 %v7437
      %v7439 = vpop.f32.mrb[0].mxu0
      %v7440 = vadd.f32 %v7275, %v7439
      %v7441 = vpop.f32.mrb[0].mxu0
      %7442 = vmatprep.mubr.f32.mxu0 0.0
      %v7443 = vand.u32 %v6356, 4294901760
      %7444 = vmatmul.mubr.f32.gmra.mrb[0].mxu0 %v7443
      %v7445 = vpop.f32.mrb[0].mxu0
      %v7446 = vadd.f32 %v7281, %v7445
      %v7447 = vpop.f32.mrb[0].mxu0
      %7448 = vmatprep.mubr.f32.mxu0 0.0
      %v7449 = vand.u32 %v6359, 4294901760
      %7450 = vmatmul.mubr.f32.gmra.mrb[0].mxu0 %v7449
      %v7451 = vpop.f32.mrb[0].mxu0
      %v7452 = vadd.f32 %v7287, %v7451
      %v7453 = vpop.f32.mrb[0].mxu0
      %7454 = vmatprep.mubr.f32.mxu0 0.0
      %v7455 = vand.u32 %v6362, 4294901760
      %7456 = vmatmul.mubr.f32.gmra.mrb[0].mxu0 %v7455
      %v7457 = vpop.f32.mrb[0].mxu0
      %v7458 = vadd.f32 %v7293, %v7457
      %v7459 = vpop.f32.mrb[0].mxu0
      %7460 = vmatprep.mubr.f32.mxu0 0.0
      %v7461 = vand.u32 %v6365, 4294901760
      %7462 = vmatmul.mubr.f32.gmra.mrb[0].mxu0 %v7461
      %v7463 = vpop.f32.mrb[0].mxu0
      %v7464 = vadd.f32 %v7299, %v7463
      %v7465 = vpop.f32.mrb[0].mxu0
      %7466 = vmatprep.mubr.f32.mxu0 0.0
      %v7467 = vand.u32 %v6368, 4294901760
      %7468 = vmatmul.mubr.f32.gmra.mrb[0].mxu0 %v7467
      %v7469 = vpop.f32.mrb[0].mxu0
      %v7470 = vadd.f32 %v7305, %v7469
      %v7471 = vpop.f32.mrb[0].mxu0
      %7472 = vmatprep.mubr.f32.mxu0 0.0
      %v7473 = vand.u32 %v6371, 4294901760
      %7474 = vmatmul.mubr.f32.gmra.mrb[0].mxu0 %v7473
      %v7475 = vpop.f32.mrb[0].mxu0
      %v7476 = vadd.f32 %v7311, %v7475
      %v7477 = vpop.f32.mrb[0].mxu0
      %7478 = vmatprep.mubr.f32.mxu0 0.0
      %v7479 = vand.u32 %v6374, 4294901760
      %7480 = vmatmul.mubr.f32.gmra.mrb[0].mxu0 %v7479
      %v7481 = vpop.f32.mrb[0].mxu0
      %v7482 = vadd.f32 %v7317, %v7481
      %v7483 = vpop.f32.mrb[0].mxu0
      %7484 = vmatprep.mubr.f32.mxu0 0.0
      %v7485 = vand.u32 %v6377, 4294901760
      %7486 = vmatmul.mubr.f32.gmra.mrb[0].mxu0 %v7485
      %v7487 = vpop.f32.mrb[0].mxu0
      %v7488 = vadd.f32 %v7323, %v7487
      %v7489 = vpop.f32.mrb[0].mxu0
      %7490 = vmatprep.mubr.f32.mxu0 0.0
      %v7491 = vand.u32 %v6380, 4294901760
      %7492 = vmatmul.mubr.f32.gmra.mrb[0].mxu0 %v7491
      %v7493 = vpop.f32.mrb[0].mxu0
      %v7494 = vadd.f32 %v7329, %v7493
      %v7495 = vpop.f32.mrb[0].mxu0
      %7496 = vmatprep.mubr.f32.mxu0 0.0
      %v7497 = vand.u32 %v6383, 4294901760
      %7498 = vmatmul.mubr.f32.gmra.mrb[0].mxu0 %v7497
      %v7499 = vpop.f32.mrb[0].mxu0
      %v7500 = vadd.f32 %v7335, %v7499
      %v7501 = vpop.f32.mrb[0].mxu0
      %7502 = vmatprep.mubr.f32.mxu0 0.0
      %v7503 = vand.u32 %v6386, 4294901760
      %7504 = vmatmul.mubr.f32.gmra.mrb[0].mxu0 %v7503
      %v7505 = vpop.f32.mrb[0].mxu0
      %v7506 = vadd.f32 %v7341, %v7505
      %v7507 = vpop.f32.mrb[0].mxu0
      %7508 = vmatprep.mubr.f32.mxu0 0.0
      %v7509 = vand.u32 %v6389, 4294901760
      %7510 = vmatmul.mubr.f32.gmra.mrb[0].mxu0 %v7509
      %v7511 = vpop.f32.mrb[0].mxu0
      %v7512 = vadd.f32 %v7347, %v7511
      %v7513 = vpop.f32.mrb[0].mxu0
      %7514 = vmatprep.mubr.f32.mxu0 0.0
      %v7515 = vand.u32 %v6392, 4294901760
      %7516 = vmatmul.mubr.f32.gmra.mrb[0].mxu0 %v7515
      %v7517 = vpop.f32.mrb[0].mxu0
      %v7518 = vadd.f32 %v7353, %v7517
      %v7519 = vpop.f32.mrb[0].mxu0
      %7520 = vmatprep.mubr.f32.mxu0 0.0
      %v7521 = vand.u32 %v6395, 4294901760
      %7522 = vmatmul.mubr.f32.gmra.mrb[0].mxu0 %v7521
      %v7523 = vpop.f32.mrb[0].mxu0
      %v7524 = vadd.f32 %v7359, %v7523
      %v7525 = vpop.f32.mrb[0].mxu0
      %7526 = vdwg.mxu0
      %v7527 = vtanh.pop %v7434
      %v7528 = vtanh.pop %v7440
      %v7529 = vtanh.pop %v7446
      %v7530 = vtanh.pop %v7452
      %v7531 = vtanh.pop %v7458
      %v7532 = vtanh.pop %v7464
      %v7533 = vtanh.pop %v7470
      %v7534 = vtanh.pop %v7476
      %v7535 = vtanh.pop %v7482
      %v7536 = vtanh.pop %v7488
      %v7537 = vtanh.pop %v7494
      %v7538 = vtanh.pop %v7500
      %v7539 = vtanh.pop %v7506
      %v7540 = vtanh.pop %v7512
      %v7541 = vtanh.pop %v7518
      %v7542 = vtanh.pop %v7524
      %v7543 = vld [vmem:[%s15] sm:$0xff]
      %v7544 = vld [vmem:[%s15 + $0x8] sm:$0xff]
      %v7545 = vld [vmem:[%s15 + $0x10] sm:$0xff]
      %v7546 = vld [vmem:[%s15 + $0x18] sm:$0xff]
      %v7547 = vld [vmem:[%s15 + $0x20] sm:$0xff]
      %v7548 = vld [vmem:[%s15 + $0x28] sm:$0xff]
      %v7549 = vld [vmem:[%s15 + $0x30] sm:$0xff]
      %v7550 = vld [vmem:[%s15 + $0x38] sm:$0xff]
      %v7551 = vld [vmem:[%s16] sm:$0x1]
      %v7553 = vlaneseq
      %v7554 = vshrl.u32 %v7553, 7
      %v7555 = vsub.s32 0, %v7554
      %v7556 = vrot.slane %v7551, %v7555
      %v7559 = vsel %vm2656, %v7527, 0
      %v7562 = vsel %vm2656, %v7528, 0
      %v7565 = vsel %vm2656, %v7529, 0
      %v7568 = vsel %vm2656, %v7530, 0
      %v7571 = vsel %vm2656, %v7531, 0
      %v7574 = vsel %vm2656, %v7532, 0
      %v7577 = vsel %vm2656, %v7533, 0
      %v7580 = vsel %vm2656, %v7534, 0
      %v7583 = vsel %vm2656, %v7535, 0
      %v7586 = vsel %vm2656, %v7536, 0
      %v7589 = vsel %vm2656, %v7537, 0
      %v7592 = vsel %vm2656, %v7538, 0
      %v7595 = vsel %vm2656, %v7539, 0
      %v7598 = vsel %vm2656, %v7540, 0
      %v7601 = vsel %vm2656, %v7541, 0
      %v7604 = vsel %vm2656, %v7542, 0
      %7606 = vmatprep.subr.mxu0 0.0
      %v7607 = vand.u32 %v7543, 4294901760
      %7608 = vmatpush1.msra.mxu0 %v7607
      %7609 = vmatprep.subr.mxu0 0.0
      %v7610 = vand.u32 %v7544, 4294901760
      %7611 = vmatpush1.msra.mxu0 %v7610
      %7612 = vmatprep.subr.mxu0 0.0
      %v7613 = vand.u32 %v7545, 4294901760
      %7614 = vmatpush1.msra.mxu0 %v7613
      %7615 = vmatprep.subr.mxu0 0.0
      %v7616 = vand.u32 %v7546, 4294901760
      %7617 = vmatpush1.msra.mxu0 %v7616
      %7618 = vmatprep.subr.mxu0 0.0
      %v7619 = vand.u32 %v7547, 4294901760
      %7620 = vmatpush1.msra.mxu0 %v7619
      %7621 = vmatprep.subr.mxu0 0.0
      %v7622 = vand.u32 %v7548, 4294901760
      %7623 = vmatpush1.msra.mxu0 %v7622
      %7624 = vmatprep.subr.mxu0 0.0
      %v7625 = vand.u32 %v7549, 4294901760
      %7626 = vmatpush1.msra.mxu0 %v7625
      %7627 = vmatprep.subr.mxu0 0.0
      %v7628 = vand.u32 %v7550, 4294901760
      %7629 = vmatpush1.msra.mxu0 %v7628
      %7630 = vmatprep.subr.mxu0 0.0
      %7631 = vmatpush1.msra.mxu0 0.0
      %7632 = vmatprep.subr.mxu0 0.0
      %7633 = vmatpush1.msra.mxu0 0.0
      %7634 = vmatprep.subr.mxu0 0.0
      %7635 = vmatpush1.msra.mxu0 0.0
      %7636 = vmatprep.subr.mxu0 0.0
      %7637 = vmatpush1.msra.mxu0 0.0
      %7638 = vmatprep.subr.mxu0 0.0
      %7639 = vmatpush1.msra.mxu0 0.0
      %7640 = vmatprep.subr.mxu0 0.0
      %7641 = vmatpush1.msra.mxu0 0.0
      %7642 = vmatprep.subr.mxu0 0.0
      %7643 = vmatpush1.msra.mxu0 0.0
      %7644 = vmatprep.subr.mxu0 0.0
      %7645 = vmatpush1.msra.mxu0 0.0
      %7646 = vmatprep.subr.mxu0 0.0
      %7647 = vmatpush1.msra.mxu0 0.0
      %7648 = vmatprep.subr.mxu0 0.0
      %7649 = vmatpush1.msra.mxu0 0.0
      %7650 = vmatprep.subr.mxu0 0.0
      %7651 = vmatpush1.msra.mxu0 0.0
      %7652 = vmatprep.subr.mxu0 0.0
      %7653 = vmatpush1.msra.mxu0 0.0
      %7654 = vmatprep.subr.mxu0 0.0
      %7655 = vmatpush1.msra.mxu0 0.0
      %7656 = vmatprep.subr.mxu0 0.0
      %7657 = vmatpush1.msra.mxu0 0.0
      %7658 = vmatprep.subr.mxu0 0.0
      %7659 = vmatpush1.msra.mxu0 0.0
      %7660 = vmatprep.subr.mxu0 0.0
      %7661 = vmatpush1.msra.mxu0 0.0
      %7662 = vmatprep.subr.mxu0 0.0
      %7663 = vmatpush1.msra.mxu0 0.0
      %7664 = vmatprep.subr.mxu0 0.0
      %7665 = vmatpush1.msra.mxu0 0.0
      %7666 = vmatprep.subr.mxu0 0.0
      %7667 = vmatpush1.msra.mxu0 0.0
      %7668 = vmatprep.subr.mxu0 0.0
      %7669 = vmatpush1.msra.mxu0 0.0
      %7670 = vmatprep.subr.mxu0 0.0
      %7671 = vmatpush1.msra.mxu0 0.0
      %7672 = vmatprep.subr.mxu0 0.0
      %7673 = vmatpush1.msra.mxu0 0.0
      %7674 = vmatprep.subr.mxu0 0.0
      %7675 = vmatpush1.msra.mxu0 0.0
      %7676 = vmatprep.subr.mxu0 0.0
      %7677 = vmatpush1.msra.mxu0 0.0
      %7678 = vmatprep.mubr.f32.mxu0 0.0
      %v7679 = vand.u32 %v7559, 4294901760
      %v7680 = vsub.f32 %v7559, %v7679
      %v7681 = vand.u32 %v7680, 4294901760
      %v7682 = vsub.f32 %v7680, %v7681
      %v7683 = vand.u32 %v7682, 4294901760
      %7684 = vmatmul.mubr.f32.gmra.mrb[0].mxu0 %v7683
      %v7685 = vpop.f32.mrb[0].mxu0
      %v7686 = vadd.f32 %v7556, %v7685
      %v7687 = vpop.f32.mrb[0].mxu0
      %7688 = vmatprep.mubr.f32.mxu0 0.0
      %v7689 = vand.u32 %v7562, 4294901760
      %v7690 = vsub.f32 %v7562, %v7689
      %v7691 = vand.u32 %v7690, 4294901760
      %v7692 = vsub.f32 %v7690, %v7691
      %v7693 = vand.u32 %v7692, 4294901760
      %7694 = vmatmul.mubr.f32.gmra.mrb[0].mxu0 %v7693
      %v7695 = vpop.f32.mrb[0].mxu0
      %v7696 = vadd.f32 %v7556, %v7695
      %v7697 = vpop.f32.mrb[0].mxu0
      %7698 = vmatprep.mubr.f32.mxu0 0.0
      %v7699 = vand.u32 %v7565, 4294901760
      %v7700 = vsub.f32 %v7565, %v7699
      %v7701 = vand.u32 %v7700, 4294901760
      %v7702 = vsub.f32 %v7700, %v7701
      %v7703 = vand.u32 %v7702, 4294901760
      %7704 = vmatmul.mubr.f32.gmra.mrb[0].mxu0 %v7703
      %v7705 = vpop.f32.mrb[0].mxu0
      %v7706 = vadd.f32 %v7556, %v7705
      %v7707 = vpop.f32.mrb[0].mxu0
      %7708 = vmatprep.mubr.f32.mxu0 0.0
      %v7709 = vand.u32 %v7568, 4294901760
      %v7710 = vsub.f32 %v7568, %v7709
      %v7711 = vand.u32 %v7710, 4294901760
      %v7712 = vsub.f32 %v7710, %v7711
      %v7713 = vand.u32 %v7712, 4294901760
      %7714 = vmatmul.mubr.f32.gmra.mrb[0].mxu0 %v7713
      %v7715 = vpop.f32.mrb[0].mxu0
      %v7716 = vadd.f32 %v7556, %v7715
      %v7717 = vpop.f32.mrb[0].mxu0
      %7718 = vmatprep.mubr.f32.mxu0 0.0
      %v7719 = vand.u32 %v7571, 4294901760
      %v7720 = vsub.f32 %v7571, %v7719
      %v7721 = vand.u32 %v7720, 4294901760
      %v7722 = vsub.f32 %v7720, %v7721
      %v7723 = vand.u32 %v7722, 4294901760
      %7724 = vmatmul.mubr.f32.gmra.mrb[0].mxu0 %v7723
      %v7725 = vpop.f32.mrb[0].mxu0
      %v7726 = vadd.f32 %v7556, %v7725
      %v7727 = vpop.f32.mrb[0].mxu0
      %7728 = vmatprep.mubr.f32.mxu0 0.0
      %v7729 = vand.u32 %v7574, 4294901760
      %v7730 = vsub.f32 %v7574, %v7729
      %v7731 = vand.u32 %v7730, 4294901760
      %v7732 = vsub.f32 %v7730, %v7731
      %v7733 = vand.u32 %v7732, 4294901760
      %7734 = vmatmul.mubr.f32.gmra.mrb[0].mxu0 %v7733
      %v7735 = vpop.f32.mrb[0].mxu0
      %v7736 = vadd.f32 %v7556, %v7735
      %v7737 = vpop.f32.mrb[0].mxu0
      %7738 = vmatprep.mubr.f32.mxu0 0.0
      %v7739 = vand.u32 %v7577, 4294901760
      %v7740 = vsub.f32 %v7577, %v7739
      %v7741 = vand.u32 %v7740, 4294901760
      %v7742 = vsub.f32 %v7740, %v7741
      %v7743 = vand.u32 %v7742, 4294901760
      %7744 = vmatmul.mubr.f32.gmra.mrb[0].mxu0 %v7743
      %v7745 = vpop.f32.mrb[0].mxu0
      %v7746 = vadd.f32 %v7556, %v7745
      %v7747 = vpop.f32.mrb[0].mxu0
      %7748 = vmatprep.mubr.f32.mxu0 0.0
      %v7749 = vand.u32 %v7580, 4294901760
      %v7750 = vsub.f32 %v7580, %v7749
      %v7751 = vand.u32 %v7750, 4294901760
      %v7752 = vsub.f32 %v7750, %v7751
      %v7753 = vand.u32 %v7752, 4294901760
      %7754 = vmatmul.mubr.f32.gmra.mrb[0].mxu0 %v7753
      %v7755 = vpop.f32.mrb[0].mxu0
      %v7756 = vadd.f32 %v7556, %v7755
      %v7757 = vpop.f32.mrb[0].mxu0
      %7758 = vmatprep.mubr.f32.mxu0 0.0
      %v7759 = vand.u32 %v7583, 4294901760
      %v7760 = vsub.f32 %v7583, %v7759
      %v7761 = vand.u32 %v7760, 4294901760
      %v7762 = vsub.f32 %v7760, %v7761
      %v7763 = vand.u32 %v7762, 4294901760
      %7764 = vmatmul.mubr.f32.gmra.mrb[0].mxu0 %v7763
      %v7765 = vpop.f32.mrb[0].mxu0
      %v7766 = vadd.f32 %v7556, %v7765
      %v7767 = vpop.f32.mrb[0].mxu0
      %7768 = vmatprep.mubr.f32.mxu0 0.0
      %v7769 = vand.u32 %v7586, 4294901760
      %v7770 = vsub.f32 %v7586, %v7769
      %v7771 = vand.u32 %v7770, 4294901760
      %v7772 = vsub.f32 %v7770, %v7771
      %v7773 = vand.u32 %v7772, 4294901760
      %7774 = vmatmul.mubr.f32.gmra.mrb[0].mxu0 %v7773
      %v7775 = vpop.f32.mrb[0].mxu0
      %v7776 = vadd.f32 %v7556, %v7775
      %v7777 = vpop.f32.mrb[0].mxu0
      %7778 = vmatprep.mubr.f32.mxu0 0.0
      %v7779 = vand.u32 %v7589, 4294901760
      %v7780 = vsub.f32 %v7589, %v7779
      %v7781 = vand.u32 %v7780, 4294901760
      %v7782 = vsub.f32 %v7780, %v7781
      %v7783 = vand.u32 %v7782, 4294901760
      %7784 = vmatmul.mubr.f32.gmra.mrb[0].mxu0 %v7783
      %v7785 = vpop.f32.mrb[0].mxu0
      %v7786 = vadd.f32 %v7556, %v7785
      %v7787 = vpop.f32.mrb[0].mxu0
      %7788 = vmatprep.mubr.f32.mxu0 0.0
      %v7789 = vand.u32 %v7592, 4294901760
      %v7790 = vsub.f32 %v7592, %v7789
      %v7791 = vand.u32 %v7790, 4294901760
      %v7792 = vsub.f32 %v7790, %v7791
      %v7793 = vand.u32 %v7792, 4294901760
      %7794 = vmatmul.mubr.f32.gmra.mrb[0].mxu0 %v7793
      %v7795 = vpop.f32.mrb[0].mxu0
      %v7796 = vadd.f32 %v7556, %v7795
      %v7797 = vpop.f32.mrb[0].mxu0
      %7798 = vmatprep.mubr.f32.mxu0 0.0
      %v7799 = vand.u32 %v7595, 4294901760
      %v7800 = vsub.f32 %v7595, %v7799
      %v7801 = vand.u32 %v7800, 4294901760
      %v7802 = vsub.f32 %v7800, %v7801
      %v7803 = vand.u32 %v7802, 4294901760
      %7804 = vmatmul.mubr.f32.gmra.mrb[0].mxu0 %v7803
      %v7805 = vpop.f32.mrb[0].mxu0
      %v7806 = vadd.f32 %v7556, %v7805
      %v7807 = vpop.f32.mrb[0].mxu0
      %7808 = vmatprep.mubr.f32.mxu0 0.0
      %v7809 = vand.u32 %v7598, 4294901760
      %v7810 = vsub.f32 %v7598, %v7809
      %v7811 = vand.u32 %v7810, 4294901760
      %v7812 = vsub.f32 %v7810, %v7811
      %v7813 = vand.u32 %v7812, 4294901760
      %7814 = vmatmul.mubr.f32.gmra.mrb[0].mxu0 %v7813
      %v7815 = vpop.f32.mrb[0].mxu0
      %v7816 = vadd.f32 %v7556, %v7815
      %v7817 = vpop.f32.mrb[0].mxu0
      %7818 = vmatprep.mubr.f32.mxu0 0.0
      %v7819 = vand.u32 %v7601, 4294901760
      %v7820 = vsub.f32 %v7601, %v7819
      %v7821 = vand.u32 %v7820, 4294901760
      %v7822 = vsub.f32 %v7820, %v7821
      %v7823 = vand.u32 %v7822, 4294901760
      %7824 = vmatmul.mubr.f32.gmra.mrb[0].mxu0 %v7823
      %v7825 = vpop.f32.mrb[0].mxu0
      %v7826 = vadd.f32 %v7556, %v7825
      %v7827 = vpop.f32.mrb[0].mxu0
      %7828 = vmatprep.mubr.f32.mxu0 0.0
      %v7829 = vand.u32 %v7604, 4294901760
      %v7830 = vsub.f32 %v7604, %v7829
      %v7831 = vand.u32 %v7830, 4294901760
      %v7832 = vsub.f32 %v7830, %v7831
      %v7833 = vand.u32 %v7832, 4294901760
      %7834 = vmatmul.mubr.f32.gmra.mrb[0].mxu0 %v7833
      %v7835 = vpop.f32.mrb[0].mxu0
      %v7836 = vadd.f32 %v7556, %v7835
      %v7837 = vpop.f32.mrb[0].mxu0
      %7838 = vdwg.mxu0
      %7839 = vmatprep.subr.mxu0 0.0
      %v7840 = vand.u32 %v7543, 4294901760
      %v7841 = vsub.f32 %v7543, %v7840
      %v7842 = vand.u32 %v7841, 4294901760
      %v7843 = vsub.f32 %v7841, %v7842
      %v7844 = vand.u32 %v7843, 4294901760
      %7845 = vmatpush1.msra.mxu0 %v7844
      %7846 = vmatprep.subr.mxu0 0.0
      %v7847 = vand.u32 %v7544, 4294901760
      %v7848 = vsub.f32 %v7544, %v7847
      %v7849 = vand.u32 %v7848, 4294901760
      %v7850 = vsub.f32 %v7848, %v7849
      %v7851 = vand.u32 %v7850, 4294901760
      %7852 = vmatpush1.msra.mxu0 %v7851
      %7853 = vmatprep.subr.mxu0 0.0
      %v7854 = vand.u32 %v7545, 4294901760
      %v7855 = vsub.f32 %v7545, %v7854
      %v7856 = vand.u32 %v7855, 4294901760
      %v7857 = vsub.f32 %v7855, %v7856
      %v7858 = vand.u32 %v7857, 4294901760
      %7859 = vmatpush1.msra.mxu0 %v7858
      %7860 = vmatprep.subr.mxu0 0.0
      %v7861 = vand.u32 %v7546, 4294901760
      %v7862 = vsub.f32 %v7546, %v7861
      %v7863 = vand.u32 %v7862, 4294901760
      %v7864 = vsub.f32 %v7862, %v7863
      %v7865 = vand.u32 %v7864, 4294901760
      %7866 = vmatpush1.msra.mxu0 %v7865
      %7867 = vmatprep.subr.mxu0 0.0
      %v7868 = vand.u32 %v7547, 4294901760
      %v7869 = vsub.f32 %v7547, %v7868
      %v7870 = vand.u32 %v7869, 4294901760
      %v7871 = vsub.f32 %v7869, %v7870
      %v7872 = vand.u32 %v7871, 4294901760
      %7873 = vmatpush1.msra.mxu0 %v7872
      %7874 = vmatprep.subr.mxu0 0.0
      %v7875 = vand.u32 %v7548, 4294901760
      %v7876 = vsub.f32 %v7548, %v7875
      %v7877 = vand.u32 %v7876, 4294901760
      %v7878 = vsub.f32 %v7876, %v7877
      %v7879 = vand.u32 %v7878, 4294901760
      %7880 = vmatpush1.msra.mxu0 %v7879
      %7881 = vmatprep.subr.mxu0 0.0
      %v7882 = vand.u32 %v7549, 4294901760
      %v7883 = vsub.f32 %v7549, %v7882
      %v7884 = vand.u32 %v7883, 4294901760
      %v7885 = vsub.f32 %v7883, %v7884
      %v7886 = vand.u32 %v7885, 4294901760
      %7887 = vmatpush1.msra.mxu0 %v7886
      %7888 = vmatprep.subr.mxu0 0.0
      %v7889 = vand.u32 %v7550, 4294901760
      %v7890 = vsub.f32 %v7550, %v7889
      %v7891 = vand.u32 %v7890, 4294901760
      %v7892 = vsub.f32 %v7890, %v7891
      %v7893 = vand.u32 %v7892, 4294901760
      %7894 = vmatpush1.msra.mxu0 %v7893
      %7895 = vmatprep.subr.mxu0 0.0
      %7896 = vmatpush1.msra.mxu0 0.0
      %7897 = vmatprep.subr.mxu0 0.0
      %7898 = vmatpush1.msra.mxu0 0.0
      %7899 = vmatprep.subr.mxu0 0.0
      %7900 = vmatpush1.msra.mxu0 0.0
      %7901 = vmatprep.subr.mxu0 0.0
      %7902 = vmatpush1.msra.mxu0 0.0
      %7903 = vmatprep.subr.mxu0 0.0
      %7904 = vmatpush1.msra.mxu0 0.0
      %7905 = vmatprep.subr.mxu0 0.0
      %7906 = vmatpush1.msra.mxu0 0.0
      %7907 = vmatprep.subr.mxu0 0.0
      %7908 = vmatpush1.msra.mxu0 0.0
      %7909 = vmatprep.subr.mxu0 0.0
      %7910 = vmatpush1.msra.mxu0 0.0
      %7911 = vmatprep.subr.mxu0 0.0
      %7912 = vmatpush1.msra.mxu0 0.0
      %7913 = vmatprep.subr.mxu0 0.0
      %7914 = vmatpush1.msra.mxu0 0.0
      %7915 = vmatprep.subr.mxu0 0.0
      %7916 = vmatpush1.msra.mxu0 0.0
      %7917 = vmatprep.subr.mxu0 0.0
      %7918 = vmatpush1.msra.mxu0 0.0
      %7919 = vmatprep.subr.mxu0 0.0
      %7920 = vmatpush1.msra.mxu0 0.0
      %7921 = vmatprep.subr.mxu0 0.0
      %7922 = vmatpush1.msra.mxu0 0.0
      %7923 = vmatprep.subr.mxu0 0.0
      %7924 = vmatpush1.msra.mxu0 0.0
      %7925 = vmatprep.subr.mxu0 0.0
      %7926 = vmatpush1.msra.mxu0 0.0
      %7927 = vmatprep.subr.mxu0 0.0
      %7928 = vmatpush1.msra.mxu0 0.0
      %7929 = vmatprep.subr.mxu0 0.0
      %7930 = vmatpush1.msra.mxu0 0.0
      %7931 = vmatprep.subr.mxu0 0.0
      %7932 = vmatpush1.msra.mxu0 0.0
      %7933 = vmatprep.subr.mxu0 0.0
      %7934 = vmatpush1.msra.mxu0 0.0
      %7935 = vmatprep.subr.mxu0 0.0
      %7936 = vmatpush1.msra.mxu0 0.0
      %7937 = vmatprep.subr.mxu0 0.0
      %7938 = vmatpush1.msra.mxu0 0.0
      %7939 = vmatprep.subr.mxu0 0.0
      %7940 = vmatpush1.msra.mxu0 0.0
      %7941 = vmatprep.subr.mxu0 0.0
      %7942 = vmatpush1.msra.mxu0 0.0
      %7943 = vmatprep.mubr.f32.mxu0 0.0
      %v7944 = vand.u32 %v7559, 4294901760
      %7945 = vmatmul.mubr.f32.gmra.mrb[0].mxu0 %v7944
      %v7946 = vpop.f32.mrb[0].mxu0
      %v7947 = vadd.f32 %v7686, %v7946
      %v7948 = vpop.f32.mrb[0].mxu0
      %7949 = vmatprep.mubr.f32.mxu0 0.0
      %v7950 = vand.u32 %v7562, 4294901760
      %7951 = vmatmul.mubr.f32.gmra.mrb[0].mxu0 %v7950
      %v7952 = vpop.f32.mrb[0].mxu0
      %v7953 = vadd.f32 %v7696, %v7952
      %v7954 = vpop.f32.mrb[0].mxu0
      %7955 = vmatprep.mubr.f32.mxu0 0.0
      %v7956 = vand.u32 %v7565, 4294901760
      %7957 = vmatmul.mubr.f32.gmra.mrb[0].mxu0 %v7956
      %v7958 = vpop.f32.mrb[0].mxu0
      %v7959 = vadd.f32 %v7706, %v7958
      %v7960 = vpop.f32.mrb[0].mxu0
      %7961 = vmatprep.mubr.f32.mxu0 0.0
      %v7962 = vand.u32 %v7568, 4294901760
      %7963 = vmatmul.mubr.f32.gmra.mrb[0].mxu0 %v7962
      %v7964 = vpop.f32.mrb[0].mxu0
      %v7965 = vadd.f32 %v7716, %v7964
      %v7966 = vpop.f32.mrb[0].mxu0
      %7967 = vmatprep.mubr.f32.mxu0 0.0
      %v7968 = vand.u32 %v7571, 4294901760
      %7969 = vmatmul.mubr.f32.gmra.mrb[0].mxu0 %v7968
      %v7970 = vpop.f32.mrb[0].mxu0
      %v7971 = vadd.f32 %v7726, %v7970
      %v7972 = vpop.f32.mrb[0].mxu0
      %7973 = vmatprep.mubr.f32.mxu0 0.0
      %v7974 = vand.u32 %v7574, 4294901760
      %7975 = vmatmul.mubr.f32.gmra.mrb[0].mxu0 %v7974
      %v7976 = vpop.f32.mrb[0].mxu0
      %v7977 = vadd.f32 %v7736, %v7976
      %v7978 = vpop.f32.mrb[0].mxu0
      %7979 = vmatprep.mubr.f32.mxu0 0.0
      %v7980 = vand.u32 %v7577, 4294901760
      %7981 = vmatmul.mubr.f32.gmra.mrb[0].mxu0 %v7980
      %v7982 = vpop.f32.mrb[0].mxu0
      %v7983 = vadd.f32 %v7746, %v7982
      %v7984 = vpop.f32.mrb[0].mxu0
      %7985 = vmatprep.mubr.f32.mxu0 0.0
      %v7986 = vand.u32 %v7580, 4294901760
      %7987 = vmatmul.mubr.f32.gmra.mrb[0].mxu0 %v7986
      %v7988 = vpop.f32.mrb[0].mxu0
      %v7989 = vadd.f32 %v7756, %v7988
      %v7990 = vpop.f32.mrb[0].mxu0
      %7991 = vmatprep.mubr.f32.mxu0 0.0
      %v7992 = vand.u32 %v7583, 4294901760
      %7993 = vmatmul.mubr.f32.gmra.mrb[0].mxu0 %v7992
      %v7994 = vpop.f32.mrb[0].mxu0
      %v7995 = vadd.f32 %v7766, %v7994
      %v7996 = vpop.f32.mrb[0].mxu0
      %7997 = vmatprep.mubr.f32.mxu0 0.0
      %v7998 = vand.u32 %v7586, 4294901760
      %7999 = vmatmul.mubr.f32.gmra.mrb[0].mxu0 %v7998
      %v8000 = vpop.f32.mrb[0].mxu0
      %v8001 = vadd.f32 %v7776, %v8000
      %v8002 = vpop.f32.mrb[0].mxu0
      %8003 = vmatprep.mubr.f32.mxu0 0.0
      %v8004 = vand.u32 %v7589, 4294901760
      %8005 = vmatmul.mubr.f32.gmra.mrb[0].mxu0 %v8004
      %v8006 = vpop.f32.mrb[0].mxu0
      %v8007 = vadd.f32 %v7786, %v8006
      %v8008 = vpop.f32.mrb[0].mxu0
      %8009 = vmatprep.mubr.f32.mxu0 0.0
      %v8010 = vand.u32 %v7592, 4294901760
      %8011 = vmatmul.mubr.f32.gmra.mrb[0].mxu0 %v8010
      %v8012 = vpop.f32.mrb[0].mxu0
      %v8013 = vadd.f32 %v7796, %v8012
      %v8014 = vpop.f32.mrb[0].mxu0
      %8015 = vmatprep.mubr.f32.mxu0 0.0
      %v8016 = vand.u32 %v7595, 4294901760
      %8017 = vmatmul.mubr.f32.gmra.mrb[0].mxu0 %v8016
      %v8018 = vpop.f32.mrb[0].mxu0
      %v8019 = vadd.f32 %v7806, %v8018
      %v8020 = vpop.f32.mrb[0].mxu0
      %8021 = vmatprep.mubr.f32.mxu0 0.0
      %v8022 = vand.u32 %v7598, 4294901760
      %8023 = vmatmul.mubr.f32.gmra.mrb[0].mxu0 %v8022
      %v8024 = vpop.f32.mrb[0].mxu0
      %v8025 = vadd.f32 %v7816, %v8024
      %v8026 = vpop.f32.mrb[0].mxu0
      %8027 = vmatprep.mubr.f32.mxu0 0.0
      %v8028 = vand.u32 %v7601, 4294901760
      %8029 = vmatmul.mubr.f32.gmra.mrb[0].mxu0 %v8028
      %v8030 = vpop.f32.mrb[0].mxu0
      %v8031 = vadd.f32 %v7826, %v8030
      %v8032 = vpop.f32.mrb[0].mxu0
      %8033 = vmatprep.mubr.f32.mxu0 0.0
      %v8034 = vand.u32 %v7604, 4294901760
      %8035 = vmatmul.mubr.f32.gmra.mrb[0].mxu0 %v8034
      %v8036 = vpop.f32.mrb[0].mxu0
      %v8037 = vadd.f32 %v7836, %v8036
      %v8038 = vpop.f32.mrb[0].mxu0
      %8039 = vdwg.mxu0
      %8040 = vmatprep.subr.mxu0 0.0
      %v8041 = vand.u32 %v7543, 4294901760
      %v8042 = vsub.f32 %v7543, %v8041
      %8043 = vmatpush1.msra.mxu0 %v8042
      %8044 = vmatprep.subr.mxu0 0.0
      %v8045 = vand.u32 %v7544, 4294901760
      %v8046 = vsub.f32 %v7544, %v8045
      %8047 = vmatpush1.msra.mxu0 %v8046
      %8048 = vmatprep.subr.mxu0 0.0
      %v8049 = vand.u32 %v7545, 4294901760
      %v8050 = vsub.f32 %v7545, %v8049
      %8051 = vmatpush1.msra.mxu0 %v8050
      %8052 = vmatprep.subr.mxu0 0.0
      %v8053 = vand.u32 %v7546, 4294901760
      %v8054 = vsub.f32 %v7546, %v8053
      %8055 = vmatpush1.msra.mxu0 %v8054
      %8056 = vmatprep.subr.mxu0 0.0
      %v8057 = vand.u32 %v7547, 4294901760
      %v8058 = vsub.f32 %v7547, %v8057
      %8059 = vmatpush1.msra.mxu0 %v8058
      %8060 = vmatprep.subr.mxu0 0.0
      %v8061 = vand.u32 %v7548, 4294901760
      %v8062 = vsub.f32 %v7548, %v8061
      %8063 = vmatpush1.msra.mxu0 %v8062
      %8064 = vmatprep.subr.mxu0 0.0
      %v8065 = vand.u32 %v7549, 4294901760
      %v8066 = vsub.f32 %v7549, %v8065
      %8067 = vmatpush1.msra.mxu0 %v8066
      %8068 = vmatprep.subr.mxu0 0.0
      %v8069 = vand.u32 %v7550, 4294901760
      %v8070 = vsub.f32 %v7550, %v8069
      %8071 = vmatpush1.msra.mxu0 %v8070
      %8072 = vmatprep.subr.mxu0 0.0
      %8073 = vmatpush1.msra.mxu0 0.0
      %8074 = vmatprep.subr.mxu0 0.0
      %8075 = vmatpush1.msra.mxu0 0.0
      %8076 = vmatprep.subr.mxu0 0.0
      %8077 = vmatpush1.msra.mxu0 0.0
      %8078 = vmatprep.subr.mxu0 0.0
      %8079 = vmatpush1.msra.mxu0 0.0
      %8080 = vmatprep.subr.mxu0 0.0
      %8081 = vmatpush1.msra.mxu0 0.0
      %8082 = vmatprep.subr.mxu0 0.0
      %8083 = vmatpush1.msra.mxu0 0.0
      %8084 = vmatprep.subr.mxu0 0.0
      %8085 = vmatpush1.msra.mxu0 0.0
      %8086 = vmatprep.subr.mxu0 0.0
      %8087 = vmatpush1.msra.mxu0 0.0
      %8088 = vmatprep.subr.mxu0 0.0
      %8089 = vmatpush1.msra.mxu0 0.0
      %8090 = vmatprep.subr.mxu0 0.0
      %8091 = vmatpush1.msra.mxu0 0.0
      %8092 = vmatprep.subr.mxu0 0.0
      %8093 = vmatpush1.msra.mxu0 0.0
      %8094 = vmatprep.subr.mxu0 0.0
      %8095 = vmatpush1.msra.mxu0 0.0
      %8096 = vmatprep.subr.mxu0 0.0
      %8097 = vmatpush1.msra.mxu0 0.0
      %8098 = vmatprep.subr.mxu0 0.0
      %8099 = vmatpush1.msra.mxu0 0.0
      %8100 = vmatprep.subr.mxu0 0.0
      %8101 = vmatpush1.msra.mxu0 0.0
      %8102 = vmatprep.subr.mxu0 0.0
      %8103 = vmatpush1.msra.mxu0 0.0
      %8104 = vmatprep.subr.mxu0 0.0
      %8105 = vmatpush1.msra.mxu0 0.0
      %8106 = vmatprep.subr.mxu0 0.0
      %8107 = vmatpush1.msra.mxu0 0.0
      %8108 = vmatprep.subr.mxu0 0.0
      %8109 = vmatpush1.msra.mxu0 0.0
      %8110 = vmatprep.subr.mxu0 0.0
      %8111 = vmatpush1.msra.mxu0 0.0
      %8112 = vmatprep.subr.mxu0 0.0
      %8113 = vmatpush1.msra.mxu0 0.0
      %8114 = vmatprep.subr.mxu0 0.0
      %8115 = vmatpush1.msra.mxu0 0.0
      %8116 = vmatprep.subr.mxu0 0.0
      %8117 = vmatpush1.msra.mxu0 0.0
      %8118 = vmatprep.subr.mxu0 0.0
      %8119 = vmatpush1.msra.mxu0 0.0
      %8120 = vmatprep.mubr.f32.mxu0 0.0
      %v8121 = vand.u32 %v7559, 4294901760
      %v8122 = vsub.f32 %v7559, %v8121
      %8123 = vmatmul.mubr.f32.gmra.mrb[0].mxu0 %v8122
      %v8124 = vpop.f32.mrb[0].mxu0
      %v8125 = vadd.f32 %v7947, %v8124
      %v8126 = vpop.f32.mrb[0].mxu0
      %8127 = vmatprep.mubr.f32.mxu0 0.0
      %v8128 = vand.u32 %v7562, 4294901760
      %v8129 = vsub.f32 %v7562, %v8128
      %8130 = vmatmul.mubr.f32.gmra.mrb[0].mxu0 %v8129
      %v8131 = vpop.f32.mrb[0].mxu0
      %v8132 = vadd.f32 %v7953, %v8131
      %v8133 = vpop.f32.mrb[0].mxu0
      %8134 = vmatprep.mubr.f32.mxu0 0.0
      %v8135 = vand.u32 %v7565, 4294901760
      %v8136 = vsub.f32 %v7565, %v8135
      %8137 = vmatmul.mubr.f32.gmra.mrb[0].mxu0 %v8136
      %v8138 = vpop.f32.mrb[0].mxu0
      %v8139 = vadd.f32 %v7959, %v8138
      %v8140 = vpop.f32.mrb[0].mxu0
      %8141 = vmatprep.mubr.f32.mxu0 0.0
      %v8142 = vand.u32 %v7568, 4294901760
      %v8143 = vsub.f32 %v7568, %v8142
      %8144 = vmatmul.mubr.f32.gmra.mrb[0].mxu0 %v8143
      %v8145 = vpop.f32.mrb[0].mxu0
      %v8146 = vadd.f32 %v7965, %v8145
      %v8147 = vpop.f32.mrb[0].mxu0
      %8148 = vmatprep.mubr.f32.mxu0 0.0
      %v8149 = vand.u32 %v7571, 4294901760
      %v8150 = vsub.f32 %v7571, %v8149
      %8151 = vmatmul.mubr.f32.gmra.mrb[0].mxu0 %v8150
      %v8152 = vpop.f32.mrb[0].mxu0
      %v8153 = vadd.f32 %v7971, %v8152
      %v8154 = vpop.f32.mrb[0].mxu0
      %8155 = vmatprep.mubr.f32.mxu0 0.0
      %v8156 = vand.u32 %v7574, 4294901760
      %v8157 = vsub.f32 %v7574, %v8156
      %8158 = vmatmul.mubr.f32.gmra.mrb[0].mxu0 %v8157
      %v8159 = vpop.f32.mrb[0].mxu0
      %v8160 = vadd.f32 %v7977, %v8159
      %v8161 = vpop.f32.mrb[0].mxu0
      %8162 = vmatprep.mubr.f32.mxu0 0.0
      %v8163 = vand.u32 %v7577, 4294901760
      %v8164 = vsub.f32 %v7577, %v8163
      %8165 = vmatmul.mubr.f32.gmra.mrb[0].mxu0 %v8164
      %v8166 = vpop.f32.mrb[0].mxu0
      %v8167 = vadd.f32 %v7983, %v8166
      %v8168 = vpop.f32.mrb[0].mxu0
      %8169 = vmatprep.mubr.f32.mxu0 0.0
      %v8170 = vand.u32 %v7580, 4294901760
      %v8171 = vsub.f32 %v7580, %v8170
      %8172 = vmatmul.mubr.f32.gmra.mrb[0].mxu0 %v8171
      %v8173 = vpop.f32.mrb[0].mxu0
      %v8174 = vadd.f32 %v7989, %v8173
      %v8175 = vpop.f32.mrb[0].mxu0
      %8176 = vmatprep.mubr.f32.mxu0 0.0
      %v8177 = vand.u32 %v7583, 4294901760
      %v8178 = vsub.f32 %v7583, %v8177
      %8179 = vmatmul.mubr.f32.gmra.mrb[0].mxu0 %v8178
      %v8180 = vpop.f32.mrb[0].mxu0
      %v8181 = vadd.f32 %v7995, %v8180
      %v8182 = vpop.f32.mrb[0].mxu0
      %8183 = vmatprep.mubr.f32.mxu0 0.0
      %v8184 = vand.u32 %v7586, 4294901760
      %v8185 = vsub.f32 %v7586, %v8184
      %8186 = vmatmul.mubr.f32.gmra.mrb[0].mxu0 %v8185
      %v8187 = vpop.f32.mrb[0].mxu0
      %v8188 = vadd.f32 %v8001, %v8187
      %v8189 = vpop.f32.mrb[0].mxu0
      %8190 = vmatprep.mubr.f32.mxu0 0.0
      %v8191 = vand.u32 %v7589, 4294901760
      %v8192 = vsub.f32 %v7589, %v8191
      %8193 = vmatmul.mubr.f32.gmra.mrb[0].mxu0 %v8192
      %v8194 = vpop.f32.mrb[0].mxu0
      %v8195 = vadd.f32 %v8007, %v8194
      %v8196 = vpop.f32.mrb[0].mxu0
      %8197 = vmatprep.mubr.f32.mxu0 0.0
      %v8198 = vand.u32 %v7592, 4294901760
      %v8199 = vsub.f32 %v7592, %v8198
      %8200 = vmatmul.mubr.f32.gmra.mrb[0].mxu0 %v8199
      %v8201 = vpop.f32.mrb[0].mxu0
      %v8202 = vadd.f32 %v8013, %v8201
      %v8203 = vpop.f32.mrb[0].mxu0
      %8204 = vmatprep.mubr.f32.mxu0 0.0
      %v8205 = vand.u32 %v7595, 4294901760
      %v8206 = vsub.f32 %v7595, %v8205
      %8207 = vmatmul.mubr.f32.gmra.mrb[0].mxu0 %v8206
      %v8208 = vpop.f32.mrb[0].mxu0
      %v8209 = vadd.f32 %v8019, %v8208
      %v8210 = vpop.f32.mrb[0].mxu0
      %8211 = vmatprep.mubr.f32.mxu0 0.0
      %v8212 = vand.u32 %v7598, 4294901760
      %v8213 = vsub.f32 %v7598, %v8212
      %8214 = vmatmul.mubr.f32.gmra.mrb[0].mxu0 %v8213
      %v8215 = vpop.f32.mrb[0].mxu0
      %v8216 = vadd.f32 %v8025, %v8215
      %v8217 = vpop.f32.mrb[0].mxu0
      %8218 = vmatprep.mubr.f32.mxu0 0.0
      %v8219 = vand.u32 %v7601, 4294901760
      %v8220 = vsub.f32 %v7601, %v8219
      %8221 = vmatmul.mubr.f32.gmra.mrb[0].mxu0 %v8220
      %v8222 = vpop.f32.mrb[0].mxu0
      %v8223 = vadd.f32 %v8031, %v8222
      %v8224 = vpop.f32.mrb[0].mxu0
      %8225 = vmatprep.mubr.f32.mxu0 0.0
      %v8226 = vand.u32 %v7604, 4294901760
      %v8227 = vsub.f32 %v7604, %v8226
      %8228 = vmatmul.mubr.f32.gmra.mrb[0].mxu0 %v8227
      %v8229 = vpop.f32.mrb[0].mxu0
      %v8230 = vadd.f32 %v8037, %v8229
      %v8231 = vpop.f32.mrb[0].mxu0
      %8232 = vdwg.mxu0
      %8233 = vmatprep.subr.mxu0 0.0
      %v8234 = vand.u32 %v7543, 4294901760
      %8235 = vmatpush1.msra.mxu0 %v8234
      %8236 = vmatprep.subr.mxu0 0.0
      %v8237 = vand.u32 %v7544, 4294901760
      %8238 = vmatpush1.msra.mxu0 %v8237
      %8239 = vmatprep.subr.mxu0 0.0
      %v8240 = vand.u32 %v7545, 4294901760
      %8241 = vmatpush1.msra.mxu0 %v8240
      %8242 = vmatprep.subr.mxu0 0.0
      %v8243 = vand.u32 %v7546, 4294901760
      %8244 = vmatpush1.msra.mxu0 %v8243
      %8245 = vmatprep.subr.mxu0 0.0
      %v8246 = vand.u32 %v7547, 4294901760
      %8247 = vmatpush1.msra.mxu0 %v8246
      %8248 = vmatprep.subr.mxu0 0.0
      %v8249 = vand.u32 %v7548, 4294901760
      %8250 = vmatpush1.msra.mxu0 %v8249
      %8251 = vmatprep.subr.mxu0 0.0
      %v8252 = vand.u32 %v7549, 4294901760
      %8253 = vmatpush1.msra.mxu0 %v8252
      %8254 = vmatprep.subr.mxu0 0.0
      %v8255 = vand.u32 %v7550, 4294901760
      %8256 = vmatpush1.msra.mxu0 %v8255
      %8257 = vmatprep.subr.mxu0 0.0
      %8258 = vmatpush1.msra.mxu0 0.0
      %8259 = vmatprep.subr.mxu0 0.0
      %8260 = vmatpush1.msra.mxu0 0.0
      %8261 = vmatprep.subr.mxu0 0.0
      %8262 = vmatpush1.msra.mxu0 0.0
      %8263 = vmatprep.subr.mxu0 0.0
      %8264 = vmatpush1.msra.mxu0 0.0
      %8265 = vmatprep.subr.mxu0 0.0
      %8266 = vmatpush1.msra.mxu0 0.0
      %8267 = vmatprep.subr.mxu0 0.0
      %8268 = vmatpush1.msra.mxu0 0.0
      %8269 = vmatprep.subr.mxu0 0.0
      %8270 = vmatpush1.msra.mxu0 0.0
      %8271 = vmatprep.subr.mxu0 0.0
      %8272 = vmatpush1.msra.mxu0 0.0
      %8273 = vmatprep.subr.mxu0 0.0
      %8274 = vmatpush1.msra.mxu0 0.0
      %8275 = vmatprep.subr.mxu0 0.0
      %8276 = vmatpush1.msra.mxu0 0.0
      %8277 = vmatprep.subr.mxu0 0.0
      %8278 = vmatpush1.msra.mxu0 0.0
      %8279 = vmatprep.subr.mxu0 0.0
      %8280 = vmatpush1.msra.mxu0 0.0
      %8281 = vmatprep.subr.mxu0 0.0
      %8282 = vmatpush1.msra.mxu0 0.0
      %8283 = vmatprep.subr.mxu0 0.0
      %8284 = vmatpush1.msra.mxu0 0.0
      %8285 = vmatprep.subr.mxu0 0.0
      %8286 = vmatpush1.msra.mxu0 0.0
      %8287 = vmatprep.subr.mxu0 0.0
      %8288 = vmatpush1.msra.mxu0 0.0
      %8289 = vmatprep.subr.mxu0 0.0
      %8290 = vmatpush1.msra.mxu0 0.0
      %8291 = vmatprep.subr.mxu0 0.0
      %8292 = vmatpush1.msra.mxu0 0.0
      %8293 = vmatprep.subr.mxu0 0.0
      %8294 = vmatpush1.msra.mxu0 0.0
      %8295 = vmatprep.subr.mxu0 0.0
      %8296 = vmatpush1.msra.mxu0 0.0
      %8297 = vmatprep.subr.mxu0 0.0
      %8298 = vmatpush1.msra.mxu0 0.0
      %8299 = vmatprep.subr.mxu0 0.0
      %8300 = vmatpush1.msra.mxu0 0.0
      %8301 = vmatprep.subr.mxu0 0.0
      %8302 = vmatpush1.msra.mxu0 0.0
      %8303 = vmatprep.subr.mxu0 0.0
      %8304 = vmatpush1.msra.mxu0 0.0
      %8305 = vmatprep.mubr.f32.mxu0 0.0
      %v8306 = vand.u32 %v7559, 4294901760
      %v8307 = vsub.f32 %v7559, %v8306
      %v8308 = vand.u32 %v8307, 4294901760
      %8309 = vmatmul.mubr.f32.gmra.mrb[0].mxu0 %v8308
      %v8310 = vpop.f32.mrb[0].mxu0
      %v8311 = vadd.f32 %v8125, %v8310
      %v8312 = vpop.f32.mrb[0].mxu0
      %8313 = vmatprep.mubr.f32.mxu0 0.0
      %v8314 = vand.u32 %v7562, 4294901760
      %v8315 = vsub.f32 %v7562, %v8314
      %v8316 = vand.u32 %v8315, 4294901760
      %8317 = vmatmul.mubr.f32.gmra.mrb[0].mxu0 %v8316
      %v8318 = vpop.f32.mrb[0].mxu0
      %v8319 = vadd.f32 %v8132, %v8318
      %v8320 = vpop.f32.mrb[0].mxu0
      %8321 = vmatprep.mubr.f32.mxu0 0.0
      %v8322 = vand.u32 %v7565, 4294901760
      %v8323 = vsub.f32 %v7565, %v8322
      %v8324 = vand.u32 %v8323, 4294901760
      %8325 = vmatmul.mubr.f32.gmra.mrb[0].mxu0 %v8324
      %v8326 = vpop.f32.mrb[0].mxu0
      %v8327 = vadd.f32 %v8139, %v8326
      %v8328 = vpop.f32.mrb[0].mxu0
      %8329 = vmatprep.mubr.f32.mxu0 0.0
      %v8330 = vand.u32 %v7568, 4294901760
      %v8331 = vsub.f32 %v7568, %v8330
      %v8332 = vand.u32 %v8331, 4294901760
      %8333 = vmatmul.mubr.f32.gmra.mrb[0].mxu0 %v8332
      %v8334 = vpop.f32.mrb[0].mxu0
      %v8335 = vadd.f32 %v8146, %v8334
      %v8336 = vpop.f32.mrb[0].mxu0
      %8337 = vmatprep.mubr.f32.mxu0 0.0
      %v8338 = vand.u32 %v7571, 4294901760
      %v8339 = vsub.f32 %v7571, %v8338
      %v8340 = vand.u32 %v8339, 4294901760
      %8341 = vmatmul.mubr.f32.gmra.mrb[0].mxu0 %v8340
      %v8342 = vpop.f32.mrb[0].mxu0
      %v8343 = vadd.f32 %v8153, %v8342
      %v8344 = vpop.f32.mrb[0].mxu0
      %8345 = vmatprep.mubr.f32.mxu0 0.0
      %v8346 = vand.u32 %v7574, 4294901760
      %v8347 = vsub.f32 %v7574, %v8346
      %v8348 = vand.u32 %v8347, 4294901760
      %8349 = vmatmul.mubr.f32.gmra.mrb[0].mxu0 %v8348
      %v8350 = vpop.f32.mrb[0].mxu0
      %v8351 = vadd.f32 %v8160, %v8350
      %v8352 = vpop.f32.mrb[0].mxu0
      %8353 = vmatprep.mubr.f32.mxu0 0.0
      %v8354 = vand.u32 %v7577, 4294901760
      %v8355 = vsub.f32 %v7577, %v8354
      %v8356 = vand.u32 %v8355, 4294901760
      %8357 = vmatmul.mubr.f32.gmra.mrb[0].mxu0 %v8356
      %v8358 = vpop.f32.mrb[0].mxu0
      %v8359 = vadd.f32 %v8167, %v8358
      %v8360 = vpop.f32.mrb[0].mxu0
      %8361 = vmatprep.mubr.f32.mxu0 0.0
      %v8362 = vand.u32 %v7580, 4294901760
      %v8363 = vsub.f32 %v7580, %v8362
      %v8364 = vand.u32 %v8363, 4294901760
      %8365 = vmatmul.mubr.f32.gmra.mrb[0].mxu0 %v8364
      %v8366 = vpop.f32.mrb[0].mxu0
      %v8367 = vadd.f32 %v8174, %v8366
      %v8368 = vpop.f32.mrb[0].mxu0
      %8369 = vmatprep.mubr.f32.mxu0 0.0
      %v8370 = vand.u32 %v7583, 4294901760
      %v8371 = vsub.f32 %v7583, %v8370
      %v8372 = vand.u32 %v8371, 4294901760
      %8373 = vmatmul.mubr.f32.gmra.mrb[0].mxu0 %v8372
      %v8374 = vpop.f32.mrb[0].mxu0
      %v8375 = vadd.f32 %v8181, %v8374
      %v8376 = vpop.f32.mrb[0].mxu0
      %8377 = vmatprep.mubr.f32.mxu0 0.0
      %v8378 = vand.u32 %v7586, 4294901760
      %v8379 = vsub.f32 %v7586, %v8378
      %v8380 = vand.u32 %v8379, 4294901760
      %8381 = vmatmul.mubr.f32.gmra.mrb[0].mxu0 %v8380
      %v8382 = vpop.f32.mrb[0].mxu0
      %v8383 = vadd.f32 %v8188, %v8382
      %v8384 = vpop.f32.mrb[0].mxu0
      %8385 = vmatprep.mubr.f32.mxu0 0.0
      %v8386 = vand.u32 %v7589, 4294901760
      %v8387 = vsub.f32 %v7589, %v8386
      %v8388 = vand.u32 %v8387, 4294901760
      %8389 = vmatmul.mubr.f32.gmra.mrb[0].mxu0 %v8388
      %v8390 = vpop.f32.mrb[0].mxu0
      %v8391 = vadd.f32 %v8195, %v8390
      %v8392 = vpop.f32.mrb[0].mxu0
      %8393 = vmatprep.mubr.f32.mxu0 0.0
      %v8394 = vand.u32 %v7592, 4294901760
      %v8395 = vsub.f32 %v7592, %v8394
      %v8396 = vand.u32 %v8395, 4294901760
      %8397 = vmatmul.mubr.f32.gmra.mrb[0].mxu0 %v8396
      %v8398 = vpop.f32.mrb[0].mxu0
      %v8399 = vadd.f32 %v8202, %v8398
      %v8400 = vpop.f32.mrb[0].mxu0
      %8401 = vmatprep.mubr.f32.mxu0 0.0
      %v8402 = vand.u32 %v7595, 4294901760
      %v8403 = vsub.f32 %v7595, %v8402
      %v8404 = vand.u32 %v8403, 4294901760
      %8405 = vmatmul.mubr.f32.gmra.mrb[0].mxu0 %v8404
      %v8406 = vpop.f32.mrb[0].mxu0
      %v8407 = vadd.f32 %v8209, %v8406
      %v8408 = vpop.f32.mrb[0].mxu0
      %8409 = vmatprep.mubr.f32.mxu0 0.0
      %v8410 = vand.u32 %v7598, 4294901760
      %v8411 = vsub.f32 %v7598, %v8410
      %v8412 = vand.u32 %v8411, 4294901760
      %8413 = vmatmul.mubr.f32.gmra.mrb[0].mxu0 %v8412
      %v8414 = vpop.f32.mrb[0].mxu0
      %v8415 = vadd.f32 %v8216, %v8414
      %v8416 = vpop.f32.mrb[0].mxu0
      %8417 = vmatprep.mubr.f32.mxu0 0.0
      %v8418 = vand.u32 %v7601, 4294901760
      %v8419 = vsub.f32 %v7601, %v8418
      %v8420 = vand.u32 %v8419, 4294901760
      %8421 = vmatmul.mubr.f32.gmra.mrb[0].mxu0 %v8420
      %v8422 = vpop.f32.mrb[0].mxu0
      %v8423 = vadd.f32 %v8223, %v8422
      %v8424 = vpop.f32.mrb[0].mxu0
      %8425 = vmatprep.mubr.f32.mxu0 0.0
      %v8426 = vand.u32 %v7604, 4294901760
      %v8427 = vsub.f32 %v7604, %v8426
      %v8428 = vand.u32 %v8427, 4294901760
      %8429 = vmatmul.mubr.f32.gmra.mrb[0].mxu0 %v8428
      %v8430 = vpop.f32.mrb[0].mxu0
      %v8431 = vadd.f32 %v8230, %v8430
      %v8432 = vpop.f32.mrb[0].mxu0
      %8433 = vdwg.mxu0
      %8434 = vmatprep.subr.mxu0 0.0
      %v8435 = vand.u32 %v7543, 4294901760
      %v8436 = vsub.f32 %v7543, %v8435
      %v8437 = vand.u32 %v8436, 4294901760
      %8438 = vmatpush1.msra.mxu0 %v8437
      %8439 = vmatprep.subr.mxu0 0.0
      %v8440 = vand.u32 %v7544, 4294901760
      %v8441 = vsub.f32 %v7544, %v8440
      %v8442 = vand.u32 %v8441, 4294901760
      %8443 = vmatpush1.msra.mxu0 %v8442
      %8444 = vmatprep.subr.mxu0 0.0
      %v8445 = vand.u32 %v7545, 4294901760
      %v8446 = vsub.f32 %v7545, %v8445
      %v8447 = vand.u32 %v8446, 4294901760
      %8448 = vmatpush1.msra.mxu0 %v8447
      %8449 = vmatprep.subr.mxu0 0.0
      %v8450 = vand.u32 %v7546, 4294901760
      %v8451 = vsub.f32 %v7546, %v8450
      %v8452 = vand.u32 %v8451, 4294901760
      %8453 = vmatpush1.msra.mxu0 %v8452
      %8454 = vmatprep.subr.mxu0 0.0
      %v8455 = vand.u32 %v7547, 4294901760
      %v8456 = vsub.f32 %v7547, %v8455
      %v8457 = vand.u32 %v8456, 4294901760
      %8458 = vmatpush1.msra.mxu0 %v8457
      %8459 = vmatprep.subr.mxu0 0.0
      %v8460 = vand.u32 %v7548, 4294901760
      %v8461 = vsub.f32 %v7548, %v8460
      %v8462 = vand.u32 %v8461, 4294901760
      %8463 = vmatpush1.msra.mxu0 %v8462
      %8464 = vmatprep.subr.mxu0 0.0
      %v8465 = vand.u32 %v7549, 4294901760
      %v8466 = vsub.f32 %v7549, %v8465
      %v8467 = vand.u32 %v8466, 4294901760
      %8468 = vmatpush1.msra.mxu0 %v8467
      %8469 = vmatprep.subr.mxu0 0.0
      %v8470 = vand.u32 %v7550, 4294901760
      %v8471 = vsub.f32 %v7550, %v8470
      %v8472 = vand.u32 %v8471, 4294901760
      %8473 = vmatpush1.msra.mxu0 %v8472
      %8474 = vmatprep.subr.mxu0 0.0
      %8475 = vmatpush1.msra.mxu0 0.0
      %8476 = vmatprep.subr.mxu0 0.0
      %8477 = vmatpush1.msra.mxu0 0.0
      %8478 = vmatprep.subr.mxu0 0.0
      %8479 = vmatpush1.msra.mxu0 0.0
      %8480 = vmatprep.subr.mxu0 0.0
      %8481 = vmatpush1.msra.mxu0 0.0
      %8482 = vmatprep.subr.mxu0 0.0
      %8483 = vmatpush1.msra.mxu0 0.0
      %8484 = vmatprep.subr.mxu0 0.0
      %8485 = vmatpush1.msra.mxu0 0.0
      %8486 = vmatprep.subr.mxu0 0.0
      %8487 = vmatpush1.msra.mxu0 0.0
      %8488 = vmatprep.subr.mxu0 0.0
      %8489 = vmatpush1.msra.mxu0 0.0
      %8490 = vmatprep.subr.mxu0 0.0
      %8491 = vmatpush1.msra.mxu0 0.0
      %8492 = vmatprep.subr.mxu0 0.0
      %8493 = vmatpush1.msra.mxu0 0.0
      %8494 = vmatprep.subr.mxu0 0.0
      %8495 = vmatpush1.msra.mxu0 0.0
      %8496 = vmatprep.subr.mxu0 0.0
      %8497 = vmatpush1.msra.mxu0 0.0
      %8498 = vmatprep.subr.mxu0 0.0
      %8499 = vmatpush1.msra.mxu0 0.0
      %8500 = vmatprep.subr.mxu0 0.0
      %8501 = vmatpush1.msra.mxu0 0.0
      %8502 = vmatprep.subr.mxu0 0.0
      %8503 = vmatpush1.msra.mxu0 0.0
      %8504 = vmatprep.subr.mxu0 0.0
      %8505 = vmatpush1.msra.mxu0 0.0
      %8506 = vmatprep.subr.mxu0 0.0
      %8507 = vmatpush1.msra.mxu0 0.0
      %8508 = vmatprep.subr.mxu0 0.0
      %8509 = vmatpush1.msra.mxu0 0.0
      %8510 = vmatprep.subr.mxu0 0.0
      %8511 = vmatpush1.msra.mxu0 0.0
      %8512 = vmatprep.subr.mxu0 0.0
      %8513 = vmatpush1.msra.mxu0 0.0
      %8514 = vmatprep.subr.mxu0 0.0
      %8515 = vmatpush1.msra.mxu0 0.0
      %8516 = vmatprep.subr.mxu0 0.0
      %8517 = vmatpush1.msra.mxu0 0.0
      %8518 = vmatprep.subr.mxu0 0.0
      %8519 = vmatpush1.msra.mxu0 0.0
      %8520 = vmatprep.subr.mxu0 0.0
      %8521 = vmatpush1.msra.mxu0 0.0
      %8522 = vmatprep.mubr.f32.mxu0 0.0
      %v8523 = vand.u32 %v7559, 4294901760
      %8524 = vmatmul.mubr.f32.gmra.mrb[0].mxu0 %v8523
      %v8525 = vpop.f32.mrb[0].mxu0
      %v8526 = vadd.f32 %v8311, %v8525
      %v8527 = vpop.f32.mrb[0].mxu0
      %8528 = vmatprep.mubr.f32.mxu0 0.0
      %v8529 = vand.u32 %v7562, 4294901760
      %8530 = vmatmul.mubr.f32.gmra.mrb[0].mxu0 %v8529
      %v8531 = vpop.f32.mrb[0].mxu0
      %v8532 = vadd.f32 %v8319, %v8531
      %v8533 = vpop.f32.mrb[0].mxu0
      %8534 = vmatprep.mubr.f32.mxu0 0.0
      %v8535 = vand.u32 %v7565, 4294901760
      %8536 = vmatmul.mubr.f32.gmra.mrb[0].mxu0 %v8535
      %v8537 = vpop.f32.mrb[0].mxu0
      %v8538 = vadd.f32 %v8327, %v8537
      %v8539 = vpop.f32.mrb[0].mxu0
      %8540 = vmatprep.mubr.f32.mxu0 0.0
      %v8541 = vand.u32 %v7568, 4294901760
      %8542 = vmatmul.mubr.f32.gmra.mrb[0].mxu0 %v8541
      %v8543 = vpop.f32.mrb[0].mxu0
      %v8544 = vadd.f32 %v8335, %v8543
      %v8545 = vpop.f32.mrb[0].mxu0
      %8546 = vmatprep.mubr.f32.mxu0 0.0
      %v8547 = vand.u32 %v7571, 4294901760
      %8548 = vmatmul.mubr.f32.gmra.mrb[0].mxu0 %v8547
      %v8549 = vpop.f32.mrb[0].mxu0
      %v8550 = vadd.f32 %v8343, %v8549
      %v8551 = vpop.f32.mrb[0].mxu0
      %8552 = vmatprep.mubr.f32.mxu0 0.0
      %v8553 = vand.u32 %v7574, 4294901760
      %8554 = vmatmul.mubr.f32.gmra.mrb[0].mxu0 %v8553
      %v8555 = vpop.f32.mrb[0].mxu0
      %v8556 = vadd.f32 %v8351, %v8555
      %v8557 = vpop.f32.mrb[0].mxu0
      %8558 = vmatprep.mubr.f32.mxu0 0.0
      %v8559 = vand.u32 %v7577, 4294901760
      %8560 = vmatmul.mubr.f32.gmra.mrb[0].mxu0 %v8559
      %v8561 = vpop.f32.mrb[0].mxu0
      %v8562 = vadd.f32 %v8359, %v8561
      %v8563 = vpop.f32.mrb[0].mxu0
      %8564 = vmatprep.mubr.f32.mxu0 0.0
      %v8565 = vand.u32 %v7580, 4294901760
      %8566 = vmatmul.mubr.f32.gmra.mrb[0].mxu0 %v8565
      %v8567 = vpop.f32.mrb[0].mxu0
      %v8568 = vadd.f32 %v8367, %v8567
      %v8569 = vpop.f32.mrb[0].mxu0
      %8570 = vmatprep.mubr.f32.mxu0 0.0
      %v8571 = vand.u32 %v7583, 4294901760
      %8572 = vmatmul.mubr.f32.gmra.mrb[0].mxu0 %v8571
      %v8573 = vpop.f32.mrb[0].mxu0
      %v8574 = vadd.f32 %v8375, %v8573
      %v8575 = vpop.f32.mrb[0].mxu0
      %8576 = vmatprep.mubr.f32.mxu0 0.0
      %v8577 = vand.u32 %v7586, 4294901760
      %8578 = vmatmul.mubr.f32.gmra.mrb[0].mxu0 %v8577
      %v8579 = vpop.f32.mrb[0].mxu0
      %v8580 = vadd.f32 %v8383, %v8579
      %v8581 = vpop.f32.mrb[0].mxu0
      %8582 = vmatprep.mubr.f32.mxu0 0.0
      %v8583 = vand.u32 %v7589, 4294901760
      %8584 = vmatmul.mubr.f32.gmra.mrb[0].mxu0 %v8583
      %v8585 = vpop.f32.mrb[0].mxu0
      %v8586 = vadd.f32 %v8391, %v8585
      %v8587 = vpop.f32.mrb[0].mxu0
      %8588 = vmatprep.mubr.f32.mxu0 0.0
      %v8589 = vand.u32 %v7592, 4294901760
      %8590 = vmatmul.mubr.f32.gmra.mrb[0].mxu0 %v8589
      %v8591 = vpop.f32.mrb[0].mxu0
      %v8592 = vadd.f32 %v8399, %v8591
      %v8593 = vpop.f32.mrb[0].mxu0
      %8594 = vmatprep.mubr.f32.mxu0 0.0
      %v8595 = vand.u32 %v7595, 4294901760
      %8596 = vmatmul.mubr.f32.gmra.mrb[0].mxu0 %v8595
      %v8597 = vpop.f32.mrb[0].mxu0
      %v8598 = vadd.f32 %v8407, %v8597
      %v8599 = vpop.f32.mrb[0].mxu0
      %8600 = vmatprep.mubr.f32.mxu0 0.0
      %v8601 = vand.u32 %v7598, 4294901760
      %8602 = vmatmul.mubr.f32.gmra.mrb[0].mxu0 %v8601
      %v8603 = vpop.f32.mrb[0].mxu0
      %v8604 = vadd.f32 %v8415, %v8603
      %v8605 = vpop.f32.mrb[0].mxu0
      %8606 = vmatprep.mubr.f32.mxu0 0.0
      %v8607 = vand.u32 %v7601, 4294901760
      %8608 = vmatmul.mubr.f32.gmra.mrb[0].mxu0 %v8607
      %v8609 = vpop.f32.mrb[0].mxu0
      %v8610 = vadd.f32 %v8423, %v8609
      %v8611 = vpop.f32.mrb[0].mxu0
      %8612 = vmatprep.mubr.f32.mxu0 0.0
      %v8613 = vand.u32 %v7604, 4294901760
      %8614 = vmatmul.mubr.f32.gmra.mrb[0].mxu0 %v8613
      %v8615 = vpop.f32.mrb[0].mxu0
      %v8616 = vadd.f32 %v8431, %v8615
      %v8617 = vpop.f32.mrb[0].mxu0
      %8618 = vdwg.mxu0
      %8619 = vmatprep.subr.mxu0 0.0
      %v8620 = vand.u32 %v7543, 4294901760
      %8621 = vmatpush1.msra.mxu0 %v8620
      %8622 = vmatprep.subr.mxu0 0.0
      %v8623 = vand.u32 %v7544, 4294901760
      %8624 = vmatpush1.msra.mxu0 %v8623
      %8625 = vmatprep.subr.mxu0 0.0
      %v8626 = vand.u32 %v7545, 4294901760
      %8627 = vmatpush1.msra.mxu0 %v8626
      %8628 = vmatprep.subr.mxu0 0.0
      %v8629 = vand.u32 %v7546, 4294901760
      %8630 = vmatpush1.msra.mxu0 %v8629
      %8631 = vmatprep.subr.mxu0 0.0
      %v8632 = vand.u32 %v7547, 4294901760
      %8633 = vmatpush1.msra.mxu0 %v8632
      %8634 = vmatprep.subr.mxu0 0.0
      %v8635 = vand.u32 %v7548, 4294901760
      %8636 = vmatpush1.msra.mxu0 %v8635
      %8637 = vmatprep.subr.mxu0 0.0
      %v8638 = vand.u32 %v7549, 4294901760
      %8639 = vmatpush1.msra.mxu0 %v8638
      %8640 = vmatprep.subr.mxu0 0.0
      %v8641 = vand.u32 %v7550, 4294901760
      %8642 = vmatpush1.msra.mxu0 %v8641
      %8643 = vmatprep.subr.mxu0 0.0
      %8644 = vmatpush1.msra.mxu0 0.0
      %8645 = vmatprep.subr.mxu0 0.0
      %8646 = vmatpush1.msra.mxu0 0.0
      %8647 = vmatprep.subr.mxu0 0.0
      %8648 = vmatpush1.msra.mxu0 0.0
      %8649 = vmatprep.subr.mxu0 0.0
      %8650 = vmatpush1.msra.mxu0 0.0
      %8651 = vmatprep.subr.mxu0 0.0
      %8652 = vmatpush1.msra.mxu0 0.0
      %8653 = vmatprep.subr.mxu0 0.0
      %8654 = vmatpush1.msra.mxu0 0.0
      %8655 = vmatprep.subr.mxu0 0.0
      %8656 = vmatpush1.msra.mxu0 0.0
      %8657 = vmatprep.subr.mxu0 0.0
      %8658 = vmatpush1.msra.mxu0 0.0
      %8659 = vmatprep.subr.mxu0 0.0
      %8660 = vmatpush1.msra.mxu0 0.0
      %8661 = vmatprep.subr.mxu0 0.0
      %8662 = vmatpush1.msra.mxu0 0.0
      %8663 = vmatprep.subr.mxu0 0.0
      %8664 = vmatpush1.msra.mxu0 0.0
      %8665 = vmatprep.subr.mxu0 0.0
      %8666 = vmatpush1.msra.mxu0 0.0
      %8667 = vmatprep.subr.mxu0 0.0
      %8668 = vmatpush1.msra.mxu0 0.0
      %8669 = vmatprep.subr.mxu0 0.0
      %8670 = vmatpush1.msra.mxu0 0.0
      %8671 = vmatprep.subr.mxu0 0.0
      %8672 = vmatpush1.msra.mxu0 0.0
      %8673 = vmatprep.subr.mxu0 0.0
      %8674 = vmatpush1.msra.mxu0 0.0
      %8675 = vmatprep.subr.mxu0 0.0
      %8676 = vmatpush1.msra.mxu0 0.0
      %8677 = vmatprep.subr.mxu0 0.0
      %8678 = vmatpush1.msra.mxu0 0.0
      %8679 = vmatprep.subr.mxu0 0.0
      %8680 = vmatpush1.msra.mxu0 0.0
      %8681 = vmatprep.subr.mxu0 0.0
      %8682 = vmatpush1.msra.mxu0 0.0
      %8683 = vmatprep.subr.mxu0 0.0
      %8684 = vmatpush1.msra.mxu0 0.0
      %8685 = vmatprep.subr.mxu0 0.0
      %8686 = vmatpush1.msra.mxu0 0.0
      %8687 = vmatprep.subr.mxu0 0.0
      %8688 = vmatpush1.msra.mxu0 0.0
      %8689 = vmatprep.subr.mxu0 0.0
      %8690 = vmatpush1.msra.mxu0 0.0
      %8691 = vmatprep.mubr.f32.mxu0 0.0
      %v8692 = vand.u32 %v7559, 4294901760
      %8693 = vmatmul.mubr.f32.gmra.mrb[0].mxu0 %v8692
      %v8694 = vpop.f32.mrb[0].mxu0
      %v8695 = vadd.f32 %v8526, %v8694
      %v8696 = vpop.f32.mrb[0].mxu0
      %8697 = vmatprep.mubr.f32.mxu0 0.0
      %v8698 = vand.u32 %v7562, 4294901760
      %8699 = vmatmul.mubr.f32.gmra.mrb[0].mxu0 %v8698
      %v8700 = vpop.f32.mrb[0].mxu0
      %v8701 = vadd.f32 %v8532, %v8700
      %v8702 = vpop.f32.mrb[0].mxu0
      %8703 = vmatprep.mubr.f32.mxu0 0.0
      %v8704 = vand.u32 %v7565, 4294901760
      %8705 = vmatmul.mubr.f32.gmra.mrb[0].mxu0 %v8704
      %v8706 = vpop.f32.mrb[0].mxu0
      %v8707 = vadd.f32 %v8538, %v8706
      %v8708 = vpop.f32.mrb[0].mxu0
      %8709 = vmatprep.mubr.f32.mxu0 0.0
      %v8710 = vand.u32 %v7568, 4294901760
      %8711 = vmatmul.mubr.f32.gmra.mrb[0].mxu0 %v8710
      %v8712 = vpop.f32.mrb[0].mxu0
      %v8713 = vadd.f32 %v8544, %v8712
      %v8714 = vpop.f32.mrb[0].mxu0
      %8715 = vmatprep.mubr.f32.mxu0 0.0
      %v8716 = vand.u32 %v7571, 4294901760
      %8717 = vmatmul.mubr.f32.gmra.mrb[0].mxu0 %v8716
      %v8718 = vpop.f32.mrb[0].mxu0
      %v8719 = vadd.f32 %v8550, %v8718
      %v8720 = vpop.f32.mrb[0].mxu0
      %8721 = vmatprep.mubr.f32.mxu0 0.0
      %v8722 = vand.u32 %v7574, 4294901760
      %8723 = vmatmul.mubr.f32.gmra.mrb[0].mxu0 %v8722
      %v8724 = vpop.f32.mrb[0].mxu0
      %v8725 = vadd.f32 %v8556, %v8724
      %v8726 = vpop.f32.mrb[0].mxu0
      %8727 = vmatprep.mubr.f32.mxu0 0.0
      %v8728 = vand.u32 %v7577, 4294901760
      %8729 = vmatmul.mubr.f32.gmra.mrb[0].mxu0 %v8728
      %v8730 = vpop.f32.mrb[0].mxu0
      %v8731 = vadd.f32 %v8562, %v8730
      %v8732 = vpop.f32.mrb[0].mxu0
      %8733 = vmatprep.mubr.f32.mxu0 0.0
      %v8734 = vand.u32 %v7580, 4294901760
      %8735 = vmatmul.mubr.f32.gmra.mrb[0].mxu0 %v8734
      %v8736 = vpop.f32.mrb[0].mxu0
      %v8737 = vadd.f32 %v8568, %v8736
      %v8738 = vpop.f32.mrb[0].mxu0
      %8739 = vmatprep.mubr.f32.mxu0 0.0
      %v8740 = vand.u32 %v7583, 4294901760
      %8741 = vmatmul.mubr.f32.gmra.mrb[0].mxu0 %v8740
      %v8742 = vpop.f32.mrb[0].mxu0
      %v8743 = vadd.f32 %v8574, %v8742
      %v8744 = vpop.f32.mrb[0].mxu0
      %8745 = vmatprep.mubr.f32.mxu0 0.0
      %v8746 = vand.u32 %v7586, 4294901760
      %8747 = vmatmul.mubr.f32.gmra.mrb[0].mxu0 %v8746
      %v8748 = vpop.f32.mrb[0].mxu0
      %v8749 = vadd.f32 %v8580, %v8748
      %v8750 = vpop.f32.mrb[0].mxu0
      %8751 = vmatprep.mubr.f32.mxu0 0.0
      %v8752 = vand.u32 %v7589, 4294901760
      %8753 = vmatmul.mubr.f32.gmra.mrb[0].mxu0 %v8752
      %v8754 = vpop.f32.mrb[0].mxu0
      %v8755 = vadd.f32 %v8586, %v8754
      %v8756 = vpop.f32.mrb[0].mxu0
      %8757 = vmatprep.mubr.f32.mxu0 0.0
      %v8758 = vand.u32 %v7592, 4294901760
      %8759 = vmatmul.mubr.f32.gmra.mrb[0].mxu0 %v8758
      %v8760 = vpop.f32.mrb[0].mxu0
      %v8761 = vadd.f32 %v8592, %v8760
      %v8762 = vpop.f32.mrb[0].mxu0
      %8763 = vmatprep.mubr.f32.mxu0 0.0
      %v8764 = vand.u32 %v7595, 4294901760
      %8765 = vmatmul.mubr.f32.gmra.mrb[0].mxu0 %v8764
      %v8766 = vpop.f32.mrb[0].mxu0
      %v8767 = vadd.f32 %v8598, %v8766
      %v8768 = vpop.f32.mrb[0].mxu0
      %8769 = vmatprep.mubr.f32.mxu0 0.0
      %v8770 = vand.u32 %v7598, 4294901760
      %8771 = vmatmul.mubr.f32.gmra.mrb[0].mxu0 %v8770
      %v8772 = vpop.f32.mrb[0].mxu0
      %v8773 = vadd.f32 %v8604, %v8772
      %v8774 = vpop.f32.mrb[0].mxu0
      %8775 = vmatprep.mubr.f32.mxu0 0.0
      %v8776 = vand.u32 %v7601, 4294901760
      %8777 = vmatmul.mubr.f32.gmra.mrb[0].mxu0 %v8776
      %v8778 = vpop.f32.mrb[0].mxu0
      %v8779 = vadd.f32 %v8610, %v8778
      %v8780 = vpop.f32.mrb[0].mxu0
      %8781 = vmatprep.mubr.f32.mxu0 0.0
      %v8782 = vand.u32 %v7604, 4294901760
      %8783 = vmatmul.mubr.f32.gmra.mrb[0].mxu0 %v8782
      %v8784 = vpop.f32.mrb[0].mxu0
      %v8785 = vadd.f32 %v8616, %v8784
      %v8786 = vpop.f32.mrb[0].mxu0
      %8787 = vdwg.mxu0
      %s8788 = smul.u32 %s28, 128
      %v8789 = vlaneseq
      %v8790 = vshrl.u32 %v8789, 7
      %v8791 = vadd.s32 %v8790, 8
      %v8792 = vadd.s32 %v8790, 16
      %v8793 = vadd.s32 %v8790, 24
      %v8794 = vadd.s32 %v8790, 32
      %v8795 = vadd.s32 %v8790, 40
      %v8796 = vadd.s32 %v8790, 48
      %v8797 = vadd.s32 %v8790, 56
      %v8798 = vadd.s32 %v8790, 64
      %v8799 = vadd.s32 %v8790, 72
      %v8800 = vadd.s32 %v8790, 80
      %v8801 = vadd.s32 %v8790, 88
      %v8802 = vadd.s32 %v8790, 96
      %v8803 = vadd.s32 %v8790, 104
      %v8804 = vadd.s32 %v8790, 112
      %v8805 = vadd.s32 %v8790, 120
      %v8806 = vstv %s8788
      %v8807 = vadd.s32 %v8806, %v8790
      %v8808 = vadd.s32 %v8806, %v8791
      %v8809 = vadd.s32 %v8806, %v8792
      %v8810 = vadd.s32 %v8806, %v8793
      %v8811 = vadd.s32 %v8806, %v8794
      %v8812 = vadd.s32 %v8806, %v8795
      %v8813 = vadd.s32 %v8806, %v8796
      %v8814 = vadd.s32 %v8806, %v8797
      %v8815 = vadd.s32 %v8806, %v8798
      %v8816 = vadd.s32 %v8806, %v8799
      %v8817 = vadd.s32 %v8806, %v8800
      %v8818 = vadd.s32 %v8806, %v8801
      %v8819 = vadd.s32 %v8806, %v8802
      %v8820 = vadd.s32 %v8806, %v8803
      %v8821 = vadd.s32 %v8806, %v8804
      %v8822 = vadd.s32 %v8806, %v8805
      %vm8823 = vcmp.lt.s32.totalorder %v8807, 200
      %vm8824 = vcmp.lt.s32.totalorder %v8808, 200
      %vm8825 = vcmp.lt.s32.totalorder %v8809, 200
      %vm8826 = vcmp.lt.s32.totalorder %v8810, 200
      %vm8827 = vcmp.lt.s32.totalorder %v8811, 200
      %vm8828 = vcmp.lt.s32.totalorder %v8812, 200
      %vm8829 = vcmp.lt.s32.totalorder %v8813, 200
      %vm8830 = vcmp.lt.s32.totalorder %v8814, 200
      %vm8831 = vcmp.lt.s32.totalorder %v8815, 200
      %vm8832 = vcmp.lt.s32.totalorder %v8816, 200
      %vm8833 = vcmp.lt.s32.totalorder %v8817, 200
      %vm8834 = vcmp.lt.s32.totalorder %v8818, 200
      %vm8835 = vcmp.lt.s32.totalorder %v8819, 200
      %vm8836 = vcmp.lt.s32.totalorder %v8820, 200
      %vm8837 = vcmp.lt.s32.totalorder %v8821, 200
      %vm8838 = vcmp.lt.s32.totalorder %v8822, 200
      %v8839 = vsel %vm8823, 1, 0
      %v8840 = vsel %vm8824, 1, 0
      %v8841 = vsel %vm8825, 1, 0
      %v8842 = vsel %vm8826, 1, 0
      %v8843 = vsel %vm8827, 1, 0
      %v8844 = vsel %vm8828, 1, 0
      %v8845 = vsel %vm8829, 1, 0
      %v8846 = vsel %vm8830, 1, 0
      %v8847 = vsel %vm8831, 1, 0
      %v8848 = vsel %vm8832, 1, 0
      %v8849 = vsel %vm8833, 1, 0
      %v8850 = vsel %vm8834, 1, 0
      %v8851 = vsel %vm8835, 1, 0
      %v8852 = vsel %vm8836, 1, 0
      %v8853 = vsel %vm8837, 1, 0
      %v8854 = vsel %vm8838, 1, 0
      %vm8855 = vcmp.eq.s32.totalorder %v8839, 1
      %vm8856 = vcmp.eq.s32.totalorder %v8840, 1
      %vm8857 = vcmp.eq.s32.totalorder %v8841, 1
      %vm8858 = vcmp.eq.s32.totalorder %v8842, 1
      %vm8859 = vcmp.eq.s32.totalorder %v8843, 1
      %vm8860 = vcmp.eq.s32.totalorder %v8844, 1
      %vm8861 = vcmp.eq.s32.totalorder %v8845, 1
      %vm8862 = vcmp.eq.s32.totalorder %v8846, 1
      %vm8863 = vcmp.eq.s32.totalorder %v8847, 1
      %vm8864 = vcmp.eq.s32.totalorder %v8848, 1
      %vm8865 = vcmp.eq.s32.totalorder %v8849, 1
      %vm8866 = vcmp.eq.s32.totalorder %v8850, 1
      %vm8867 = vcmp.eq.s32.totalorder %v8851, 1
      %vm8868 = vcmp.eq.s32.totalorder %v8852, 1
      %vm8869 = vcmp.eq.s32.totalorder %v8853, 1
      %vm8870 = vcmp.eq.s32.totalorder %v8854, 1
      %v8871 = vsel %vm8855, %v8695, 0.0
      %v8872 = vsel %vm8856, %v8701, 0.0
      %v8873 = vsel %vm8857, %v8707, 0.0
      %v8874 = vsel %vm8858, %v8713, 0.0
      %v8875 = vsel %vm8859, %v8719, 0.0
      %v8876 = vsel %vm8860, %v8725, 0.0
      %v8877 = vsel %vm8861, %v8731, 0.0
      %v8878 = vsel %vm8862, %v8737, 0.0
      %v8879 = vsel %vm8863, %v8743, 0.0
      %v8880 = vsel %vm8864, %v8749, 0.0
      %v8881 = vsel %vm8865, %v8755, 0.0
      %v8882 = vsel %vm8866, %v8761, 0.0
      %v8883 = vsel %vm8867, %v8767, 0.0
      %v8884 = vsel %vm8868, %v8773, 0.0
      %v8885 = vsel %vm8869, %v8779, 0.0
      %v8886 = vsel %vm8870, %v8785, 0.0
      %v8887 = vld [vmem:[%s639] sm:$0x1]
      %v8888 = vlaneseq
      %v8889 = vshrl.u32 %v8888, 7
      %v8890 = vsub.s32 0, %v8889
      %v8891 = vrot.slane %v8887, %v8890
      %vm8892 = vcmp.eq.s32.totalorder %v8790, %v8891
      %vm8893 = vcmp.eq.s32.totalorder %v8791, %v8891
      %vm8894 = vcmp.eq.s32.totalorder %v8792, %v8891
      %vm8895 = vcmp.eq.s32.totalorder %v8793, %v8891
      %vm8896 = vcmp.eq.s32.totalorder %v8794, %v8891
      %vm8897 = vcmp.eq.s32.totalorder %v8795, %v8891
      %vm8898 = vcmp.eq.s32.totalorder %v8796, %v8891
      %vm8899 = vcmp.eq.s32.totalorder %v8797, %v8891
      %v8900 = vsel %vm8892, 1, 0
      %v8901 = vsel %vm8893, 1, 0
      %v8902 = vsel %vm8894, 1, 0
      %v8903 = vsel %vm8895, 1, 0
      %v8904 = vsel %vm8896, 1, 0
      %v8905 = vsel %vm8897, 1, 0
      %v8906 = vsel %vm8898, 1, 0
      %v8907 = vsel %vm8899, 1, 0
      %v8908 = vcvt.s32.f32 %v8900
      %v8909 = vcvt.s32.f32 %v8901
      %v8910 = vcvt.s32.f32 %v8902
      %v8911 = vcvt.s32.f32 %v8903
      %v8912 = vcvt.s32.f32 %v8904
      %v8913 = vcvt.s32.f32 %v8905
      %v8914 = vcvt.s32.f32 %v8906
      %v8915 = vcvt.s32.f32 %v8907
      %v8916 = vld [vmem:[%s17] sm:$0xff]
      %v8917 = vld [vmem:[%s17 + $0x8] sm:$0xff]
      %v8918 = vld [vmem:[%s17 + $0x10] sm:$0xff]
      %v8919 = vld [vmem:[%s17 + $0x18] sm:$0xff]
      %v8920 = vld [vmem:[%s17 + $0x20] sm:$0xff]
      %v8921 = vld [vmem:[%s17 + $0x28] sm:$0xff]
      %v8922 = vld [vmem:[%s17 + $0x30] sm:$0xff]
      %v8923 = vld [vmem:[%s17 + $0x38] sm:$0xff]
      %8924 = vmatprep.subr.mxu0 0.0
      %v8925 = vand.u32 %v8871, 4294901760
      %8926 = vmatpush1.msra.mxu0 %v8925
      %8927 = vmatprep.subr.mxu0 0.0
      %v8928 = vand.u32 %v8872, 4294901760
      %8929 = vmatpush1.msra.mxu0 %v8928
      %8930 = vmatprep.subr.mxu0 0.0
      %v8931 = vand.u32 %v8873, 4294901760
      %8932 = vmatpush1.msra.mxu0 %v8931
      %8933 = vmatprep.subr.mxu0 0.0
      %v8934 = vand.u32 %v8874, 4294901760
      %8935 = vmatpush1.msra.mxu0 %v8934
      %8936 = vmatprep.subr.mxu0 0.0
      %v8937 = vand.u32 %v8875, 4294901760
      %8938 = vmatpush1.msra.mxu0 %v8937
      %8939 = vmatprep.subr.mxu0 0.0
      %v8940 = vand.u32 %v8876, 4294901760
      %8941 = vmatpush1.msra.mxu0 %v8940
      %8942 = vmatprep.subr.mxu0 0.0
      %v8943 = vand.u32 %v8877, 4294901760
      %8944 = vmatpush1.msra.mxu0 %v8943
      %8945 = vmatprep.subr.mxu0 0.0
      %v8946 = vand.u32 %v8878, 4294901760
      %8947 = vmatpush1.msra.mxu0 %v8946
      %8948 = vmatprep.subr.mxu0 0.0
      %v8949 = vand.u32 %v8879, 4294901760
      %8950 = vmatpush1.msra.mxu0 %v8949
      %8951 = vmatprep.subr.mxu0 0.0
      %v8952 = vand.u32 %v8880, 4294901760
      %8953 = vmatpush1.msra.mxu0 %v8952
      %8954 = vmatprep.subr.mxu0 0.0
      %v8955 = vand.u32 %v8881, 4294901760
      %8956 = vmatpush1.msra.mxu0 %v8955
      %8957 = vmatprep.subr.mxu0 0.0
      %v8958 = vand.u32 %v8882, 4294901760
      %8959 = vmatpush1.msra.mxu0 %v8958
      %8960 = vmatprep.subr.mxu0 0.0
      %v8961 = vand.u32 %v8883, 4294901760
      %8962 = vmatpush1.msra.mxu0 %v8961
      %8963 = vmatprep.subr.mxu0 0.0
      %v8964 = vand.u32 %v8884, 4294901760
      %8965 = vmatpush1.msra.mxu0 %v8964
      %8966 = vmatprep.subr.mxu0 0.0
      %v8967 = vand.u32 %v8885, 4294901760
      %8968 = vmatpush1.msra.mxu0 %v8967
      %8969 = vmatprep.subr.mxu0 0.0
      %v8970 = vand.u32 %v8886, 4294901760
      %8971 = vmatpush1.msra.mxu0 %v8970
      %8972 = vmatprep.subr.mxu0 0.0
      %8973 = vmatpush1.msra.mxu0 0.0
      %8974 = vmatprep.subr.mxu0 0.0
      %8975 = vmatpush1.msra.mxu0 0.0
      %8976 = vmatprep.subr.mxu0 0.0
      %8977 = vmatpush1.msra.mxu0 0.0
      %8978 = vmatprep.subr.mxu0 0.0
      %8979 = vmatpush1.msra.mxu0 0.0
      %8980 = vmatprep.subr.mxu0 0.0
      %8981 = vmatpush1.msra.mxu0 0.0
      %8982 = vmatprep.subr.mxu0 0.0
      %8983 = vmatpush1.msra.mxu0 0.0
      %8984 = vmatprep.subr.mxu0 0.0
      %8985 = vmatpush1.msra.mxu0 0.0
      %8986 = vmatprep.subr.mxu0 0.0
      %8987 = vmatpush1.msra.mxu0 0.0
      %8988 = vmatprep.subr.mxu0 0.0
      %8989 = vmatpush1.msra.mxu0 0.0
      %8990 = vmatprep.subr.mxu0 0.0
      %8991 = vmatpush1.msra.mxu0 0.0
      %8992 = vmatprep.subr.mxu0 0.0
      %8993 = vmatpush1.msra.mxu0 0.0
      %8994 = vmatprep.subr.mxu0 0.0
      %8995 = vmatpush1.msra.mxu0 0.0
      %8996 = vmatprep.subr.mxu0 0.0
      %8997 = vmatpush1.msra.mxu0 0.0
      %8998 = vmatprep.subr.mxu0 0.0
      %8999 = vmatpush1.msra.mxu0 0.0
      %9000 = vmatprep.subr.mxu0 0.0
      %9001 = vmatpush1.msra.mxu0 0.0
      %9002 = vmatprep.subr.mxu0 0.0
      %9003 = vmatpush1.msra.mxu0 0.0
      %9004 = vmatprep.mubr.f32.mxu0 0.0
      %v9005 = vand.u32 %v8908, 4294901760
      %v9006 = vsub.f32 %v8908, %v9005
      %v9007 = vand.u32 %v9006, 4294901760
      %v9008 = vsub.f32 %v9006, %v9007
      %v9009 = vand.u32 %v9008, 4294901760
      %9010 = vmatmul.mubr.f32.gmra.mrb[0].mxu0 %v9009
      %v9011 = vpop.f32.mrb[0].mxu0
      %v9012 = vadd.f32 0.0, %v9011
      %v9013 = vpop.f32.mrb[0].mxu0
      %9014 = vmatprep.mubr.f32.mxu0 0.0
      %v9015 = vand.u32 %v8909, 4294901760
      %v9016 = vsub.f32 %v8909, %v9015
      %v9017 = vand.u32 %v9016, 4294901760
      %v9018 = vsub.f32 %v9016, %v9017
      %v9019 = vand.u32 %v9018, 4294901760
      %9020 = vmatmul.mubr.f32.gmra.mrb[0].mxu0 %v9019
      %v9021 = vpop.f32.mrb[0].mxu0
      %v9022 = vadd.f32 0.0, %v9021
      %v9023 = vpop.f32.mrb[0].mxu0
      %9024 = vmatprep.mubr.f32.mxu0 0.0
      %v9025 = vand.u32 %v8910, 4294901760
      %v9026 = vsub.f32 %v8910, %v9025
      %v9027 = vand.u32 %v9026, 4294901760
      %v9028 = vsub.f32 %v9026, %v9027
      %v9029 = vand.u32 %v9028, 4294901760
      %9030 = vmatmul.mubr.f32.gmra.mrb[0].mxu0 %v9029
      %v9031 = vpop.f32.mrb[0].mxu0
      %v9032 = vadd.f32 0.0, %v9031
      %v9033 = vpop.f32.mrb[0].mxu0
      %9034 = vmatprep.mubr.f32.mxu0 0.0
      %v9035 = vand.u32 %v8911, 4294901760
      %v9036 = vsub.f32 %v8911, %v9035
      %v9037 = vand.u32 %v9036, 4294901760
      %v9038 = vsub.f32 %v9036, %v9037
      %v9039 = vand.u32 %v9038, 4294901760
      %9040 = vmatmul.mubr.f32.gmra.mrb[0].mxu0 %v9039
      %v9041 = vpop.f32.mrb[0].mxu0
      %v9042 = vadd.f32 0.0, %v9041
      %v9043 = vpop.f32.mrb[0].mxu0
      %9044 = vmatprep.mubr.f32.mxu0 0.0
      %v9045 = vand.u32 %v8912, 4294901760
      %v9046 = vsub.f32 %v8912, %v9045
      %v9047 = vand.u32 %v9046, 4294901760
      %v9048 = vsub.f32 %v9046, %v9047
      %v9049 = vand.u32 %v9048, 4294901760
      %9050 = vmatmul.mubr.f32.gmra.mrb[0].mxu0 %v9049
      %v9051 = vpop.f32.mrb[0].mxu0
      %v9052 = vadd.f32 0.0, %v9051
      %v9053 = vpop.f32.mrb[0].mxu0
      %9054 = vmatprep.mubr.f32.mxu0 0.0
      %v9055 = vand.u32 %v8913, 4294901760
      %v9056 = vsub.f32 %v8913, %v9055
      %v9057 = vand.u32 %v9056, 4294901760
      %v9058 = vsub.f32 %v9056, %v9057
      %v9059 = vand.u32 %v9058, 4294901760
      %9060 = vmatmul.mubr.f32.gmra.mrb[0].mxu0 %v9059
      %v9061 = vpop.f32.mrb[0].mxu0
      %v9062 = vadd.f32 0.0, %v9061
      %v9063 = vpop.f32.mrb[0].mxu0
      %9064 = vmatprep.mubr.f32.mxu0 0.0
      %v9065 = vand.u32 %v8914, 4294901760
      %v9066 = vsub.f32 %v8914, %v9065
      %v9067 = vand.u32 %v9066, 4294901760
      %v9068 = vsub.f32 %v9066, %v9067
      %v9069 = vand.u32 %v9068, 4294901760
      %9070 = vmatmul.mubr.f32.gmra.mrb[0].mxu0 %v9069
      %v9071 = vpop.f32.mrb[0].mxu0
      %v9072 = vadd.f32 0.0, %v9071
      %v9073 = vpop.f32.mrb[0].mxu0
      %9074 = vmatprep.mubr.f32.mxu0 0.0
      %v9075 = vand.u32 %v8915, 4294901760
      %v9076 = vsub.f32 %v8915, %v9075
      %v9077 = vand.u32 %v9076, 4294901760
      %v9078 = vsub.f32 %v9076, %v9077
      %v9079 = vand.u32 %v9078, 4294901760
      %9080 = vmatmul.mubr.f32.gmra.mrb[0].mxu0 %v9079
      %v9081 = vpop.f32.mrb[0].mxu0
      %v9082 = vadd.f32 0.0, %v9081
      %v9083 = vpop.f32.mrb[0].mxu0
      %9084 = vdwg.mxu0
      %9085 = vmatprep.subr.mxu0 0.0
      %v9086 = vand.u32 %v8871, 4294901760
      %v9087 = vsub.f32 %v8871, %v9086
      %v9088 = vand.u32 %v9087, 4294901760
      %v9089 = vsub.f32 %v9087, %v9088
      %v9090 = vand.u32 %v9089, 4294901760
      %9091 = vmatpush1.msra.mxu0 %v9090
      %9092 = vmatprep.subr.mxu0 0.0
      %v9093 = vand.u32 %v8872, 4294901760
      %v9094 = vsub.f32 %v8872, %v9093
      %v9095 = vand.u32 %v9094, 4294901760
      %v9096 = vsub.f32 %v9094, %v9095
      %v9097 = vand.u32 %v9096, 4294901760
      %9098 = vmatpush1.msra.mxu0 %v9097
      %9099 = vmatprep.subr.mxu0 0.0
      %v9100 = vand.u32 %v8873, 4294901760
      %v9101 = vsub.f32 %v8873, %v9100
      %v9102 = vand.u32 %v9101, 4294901760
      %v9103 = vsub.f32 %v9101, %v9102
      %v9104 = vand.u32 %v9103, 4294901760
      %9105 = vmatpush1.msra.mxu0 %v9104
      %9106 = vmatprep.subr.mxu0 0.0
      %v9107 = vand.u32 %v8874, 4294901760
      %v9108 = vsub.f32 %v8874, %v9107
      %v9109 = vand.u32 %v9108, 4294901760
      %v9110 = vsub.f32 %v9108, %v9109
      %v9111 = vand.u32 %v9110, 4294901760
      %9112 = vmatpush1.msra.mxu0 %v9111
      %9113 = vmatprep.subr.mxu0 0.0
      %v9114 = vand.u32 %v8875, 4294901760
      %v9115 = vsub.f32 %v8875, %v9114
      %v9116 = vand.u32 %v9115, 4294901760
      %v9117 = vsub.f32 %v9115, %v9116
      %v9118 = vand.u32 %v9117, 4294901760
      %9119 = vmatpush1.msra.mxu0 %v9118
      %9120 = vmatprep.subr.mxu0 0.0
      %v9121 = vand.u32 %v8876, 4294901760
      %v9122 = vsub.f32 %v8876, %v9121
      %v9123 = vand.u32 %v9122, 4294901760
      %v9124 = vsub.f32 %v9122, %v9123
      %v9125 = vand.u32 %v9124, 4294901760
      %9126 = vmatpush1.msra.mxu0 %v9125
      %9127 = vmatprep.subr.mxu0 0.0
      %v9128 = vand.u32 %v8877, 4294901760
      %v9129 = vsub.f32 %v8877, %v9128
      %v9130 = vand.u32 %v9129, 4294901760
      %v9131 = vsub.f32 %v9129, %v9130
      %v9132 = vand.u32 %v9131, 4294901760
      %9133 = vmatpush1.msra.mxu0 %v9132
      %9134 = vmatprep.subr.mxu0 0.0
      %v9135 = vand.u32 %v8878, 4294901760
      %v9136 = vsub.f32 %v8878, %v9135
      %v9137 = vand.u32 %v9136, 4294901760
      %v9138 = vsub.f32 %v9136, %v9137
      %v9139 = vand.u32 %v9138, 4294901760
      %9140 = vmatpush1.msra.mxu0 %v9139
      %9141 = vmatprep.subr.mxu0 0.0
      %v9142 = vand.u32 %v8879, 4294901760
      %v9143 = vsub.f32 %v8879, %v9142
      %v9144 = vand.u32 %v9143, 4294901760
      %v9145 = vsub.f32 %v9143, %v9144
      %v9146 = vand.u32 %v9145, 4294901760
      %9147 = vmatpush1.msra.mxu0 %v9146
      %9148 = vmatprep.subr.mxu0 0.0
      %v9149 = vand.u32 %v8880, 4294901760
      %v9150 = vsub.f32 %v8880, %v9149
      %v9151 = vand.u32 %v9150, 4294901760
      %v9152 = vsub.f32 %v9150, %v9151
      %v9153 = vand.u32 %v9152, 4294901760
      %9154 = vmatpush1.msra.mxu0 %v9153
      %9155 = vmatprep.subr.mxu0 0.0
      %v9156 = vand.u32 %v8881, 4294901760
      %v9157 = vsub.f32 %v8881, %v9156
      %v9158 = vand.u32 %v9157, 4294901760
      %v9159 = vsub.f32 %v9157, %v9158
      %v9160 = vand.u32 %v9159, 4294901760
      %9161 = vmatpush1.msra.mxu0 %v9160
      %9162 = vmatprep.subr.mxu0 0.0
      %v9163 = vand.u32 %v8882, 4294901760
      %v9164 = vsub.f32 %v8882, %v9163
      %v9165 = vand.u32 %v9164, 4294901760
      %v9166 = vsub.f32 %v9164, %v9165
      %v9167 = vand.u32 %v9166, 4294901760
      %9168 = vmatpush1.msra.mxu0 %v9167
      %9169 = vmatprep.subr.mxu0 0.0
      %v9170 = vand.u32 %v8883, 4294901760
      %v9171 = vsub.f32 %v8883, %v9170
      %v9172 = vand.u32 %v9171, 4294901760
      %v9173 = vsub.f32 %v9171, %v9172
      %v9174 = vand.u32 %v9173, 4294901760
      %9175 = vmatpush1.msra.mxu0 %v9174
      %9176 = vmatprep.subr.mxu0 0.0
      %v9177 = vand.u32 %v8884, 4294901760
      %v9178 = vsub.f32 %v8884, %v9177
      %v9179 = vand.u32 %v9178, 4294901760
      %v9180 = vsub.f32 %v9178, %v9179
      %v9181 = vand.u32 %v9180, 4294901760
      %9182 = vmatpush1.msra.mxu0 %v9181
      %9183 = vmatprep.subr.mxu0 0.0
      %v9184 = vand.u32 %v8885, 4294901760
      %v9185 = vsub.f32 %v8885, %v9184
      %v9186 = vand.u32 %v9185, 4294901760
      %v9187 = vsub.f32 %v9185, %v9186
      %v9188 = vand.u32 %v9187, 4294901760
      %9189 = vmatpush1.msra.mxu0 %v9188
      %9190 = vmatprep.subr.mxu0 0.0
      %v9191 = vand.u32 %v8886, 4294901760
      %v9192 = vsub.f32 %v8886, %v9191
      %v9193 = vand.u32 %v9192, 4294901760
      %v9194 = vsub.f32 %v9192, %v9193
      %v9195 = vand.u32 %v9194, 4294901760
      %9196 = vmatpush1.msra.mxu0 %v9195
      %9197 = vmatprep.subr.mxu0 0.0
      %9198 = vmatpush1.msra.mxu0 0.0
      %9199 = vmatprep.subr.mxu0 0.0
      %9200 = vmatpush1.msra.mxu0 0.0
      %9201 = vmatprep.subr.mxu0 0.0
      %9202 = vmatpush1.msra.mxu0 0.0
      %9203 = vmatprep.subr.mxu0 0.0
      %9204 = vmatpush1.msra.mxu0 0.0
      %9205 = vmatprep.subr.mxu0 0.0
      %9206 = vmatpush1.msra.mxu0 0.0
      %9207 = vmatprep.subr.mxu0 0.0
      %9208 = vmatpush1.msra.mxu0 0.0
      %9209 = vmatprep.subr.mxu0 0.0
      %9210 = vmatpush1.msra.mxu0 0.0
      %9211 = vmatprep.subr.mxu0 0.0
      %9212 = vmatpush1.msra.mxu0 0.0
      %9213 = vmatprep.subr.mxu0 0.0
      %9214 = vmatpush1.msra.mxu0 0.0
      %9215 = vmatprep.subr.mxu0 0.0
      %9216 = vmatpush1.msra.mxu0 0.0
      %9217 = vmatprep.subr.mxu0 0.0
      %9218 = vmatpush1.msra.mxu0 0.0
      %9219 = vmatprep.subr.mxu0 0.0
      %9220 = vmatpush1.msra.mxu0 0.0
      %9221 = vmatprep.subr.mxu0 0.0
      %9222 = vmatpush1.msra.mxu0 0.0
      %9223 = vmatprep.subr.mxu0 0.0
      %9224 = vmatpush1.msra.mxu0 0.0
      %9225 = vmatprep.subr.mxu0 0.0
      %9226 = vmatpush1.msra.mxu0 0.0
      %9227 = vmatprep.subr.mxu0 0.0
      %9228 = vmatpush1.msra.mxu0 0.0
      %9229 = vmatprep.mubr.f32.mxu0 0.0
      %v9230 = vand.u32 %v8908, 4294901760
      %9231 = vmatmul.mubr.f32.gmra.mrb[0].mxu0 %v9230
      %v9232 = vpop.f32.mrb[0].mxu0
      %v9233 = vadd.f32 %v9012, %v9232
      %v9234 = vpop.f32.mrb[0].mxu0
      %9235 = vmatprep.mubr.f32.mxu0 0.0
      %v9236 = vand.u32 %v8909, 4294901760
      %9237 = vmatmul.mubr.f32.gmra.mrb[0].mxu0 %v9236
      %v9238 = vpop.f32.mrb[0].mxu0
      %v9239 = vadd.f32 %v9022, %v9238
      %v9240 = vpop.f32.mrb[0].mxu0
      %9241 = vmatprep.mubr.f32.mxu0 0.0
      %v9242 = vand.u32 %v8910, 4294901760
      %9243 = vmatmul.mubr.f32.gmra.mrb[0].mxu0 %v9242
      %v9244 = vpop.f32.mrb[0].mxu0
      %v9245 = vadd.f32 %v9032, %v9244
      %v9246 = vpop.f32.mrb[0].mxu0
      %9247 = vmatprep.mubr.f32.mxu0 0.0
      %v9248 = vand.u32 %v8911, 4294901760
      %9249 = vmatmul.mubr.f32.gmra.mrb[0].mxu0 %v9248
      %v9250 = vpop.f32.mrb[0].mxu0
      %v9251 = vadd.f32 %v9042, %v9250
      %v9252 = vpop.f32.mrb[0].mxu0
      %9253 = vmatprep.mubr.f32.mxu0 0.0
      %v9254 = vand.u32 %v8912, 4294901760
      %9255 = vmatmul.mubr.f32.gmra.mrb[0].mxu0 %v9254
      %v9256 = vpop.f32.mrb[0].mxu0
      %v9257 = vadd.f32 %v9052, %v9256
      %v9258 = vpop.f32.mrb[0].mxu0
      %9259 = vmatprep.mubr.f32.mxu0 0.0
      %v9260 = vand.u32 %v8913, 4294901760
      %9261 = vmatmul.mubr.f32.gmra.mrb[0].mxu0 %v9260
      %v9262 = vpop.f32.mrb[0].mxu0
      %v9263 = vadd.f32 %v9062, %v9262
      %v9264 = vpop.f32.mrb[0].mxu0
      %9265 = vmatprep.mubr.f32.mxu0 0.0
      %v9266 = vand.u32 %v8914, 4294901760
      %9267 = vmatmul.mubr.f32.gmra.mrb[0].mxu0 %v9266
      %v9268 = vpop.f32.mrb[0].mxu0
      %v9269 = vadd.f32 %v9072, %v9268
      %v9270 = vpop.f32.mrb[0].mxu0
      %9271 = vmatprep.mubr.f32.mxu0 0.0
      %v9272 = vand.u32 %v8915, 4294901760
      %9273 = vmatmul.mubr.f32.gmra.mrb[0].mxu0 %v9272
      %v9274 = vpop.f32.mrb[0].mxu0
      %v9275 = vadd.f32 %v9082, %v9274
      %v9276 = vpop.f32.mrb[0].mxu0
      %9277 = vdwg.mxu0
      %9278 = vmatprep.subr.mxu0 0.0
      %v9279 = vand.u32 %v8871, 4294901760
      %v9280 = vsub.f32 %v8871, %v9279
      %9281 = vmatpush1.msra.mxu0 %v9280
      %9282 = vmatprep.subr.mxu0 0.0
      %v9283 = vand.u32 %v8872, 4294901760
      %v9284 = vsub.f32 %v8872, %v9283
      %9285 = vmatpush1.msra.mxu0 %v9284
      %9286 = vmatprep.subr.mxu0 0.0
      %v9287 = vand.u32 %v8873, 4294901760
      %v9288 = vsub.f32 %v8873, %v9287
      %9289 = vmatpush1.msra.mxu0 %v9288
      %9290 = vmatprep.subr.mxu0 0.0
      %v9291 = vand.u32 %v8874, 4294901760
      %v9292 = vsub.f32 %v8874, %v9291
      %9293 = vmatpush1.msra.mxu0 %v9292
      %9294 = vmatprep.subr.mxu0 0.0
      %v9295 = vand.u32 %v8875, 4294901760
      %v9296 = vsub.f32 %v8875, %v9295
      %9297 = vmatpush1.msra.mxu0 %v9296
      %9298 = vmatprep.subr.mxu0 0.0
      %v9299 = vand.u32 %v8876, 4294901760
      %v9300 = vsub.f32 %v8876, %v9299
      %9301 = vmatpush1.msra.mxu0 %v9300
      %9302 = vmatprep.subr.mxu0 0.0
      %v9303 = vand.u32 %v8877, 4294901760
      %v9304 = vsub.f32 %v8877, %v9303
      %9305 = vmatpush1.msra.mxu0 %v9304
      %9306 = vmatprep.subr.mxu0 0.0
      %v9307 = vand.u32 %v8878, 4294901760
      %v9308 = vsub.f32 %v8878, %v9307
      %9309 = vmatpush1.msra.mxu0 %v9308
      %9310 = vmatprep.subr.mxu0 0.0
      %v9311 = vand.u32 %v8879, 4294901760
      %v9312 = vsub.f32 %v8879, %v9311
      %9313 = vmatpush1.msra.mxu0 %v9312
      %9314 = vmatprep.subr.mxu0 0.0
      %v9315 = vand.u32 %v8880, 4294901760
      %v9316 = vsub.f32 %v8880, %v9315
      %9317 = vmatpush1.msra.mxu0 %v9316
      %9318 = vmatprep.subr.mxu0 0.0
      %v9319 = vand.u32 %v8881, 4294901760
      %v9320 = vsub.f32 %v8881, %v9319
      %9321 = vmatpush1.msra.mxu0 %v9320
      %9322 = vmatprep.subr.mxu0 0.0
      %v9323 = vand.u32 %v8882, 4294901760
      %v9324 = vsub.f32 %v8882, %v9323
      %9325 = vmatpush1.msra.mxu0 %v9324
      %9326 = vmatprep.subr.mxu0 0.0
      %v9327 = vand.u32 %v8883, 4294901760
      %v9328 = vsub.f32 %v8883, %v9327
      %9329 = vmatpush1.msra.mxu0 %v9328
      %9330 = vmatprep.subr.mxu0 0.0
      %v9331 = vand.u32 %v8884, 4294901760
      %v9332 = vsub.f32 %v8884, %v9331
      %9333 = vmatpush1.msra.mxu0 %v9332
      %9334 = vmatprep.subr.mxu0 0.0
      %v9335 = vand.u32 %v8885, 4294901760
      %v9336 = vsub.f32 %v8885, %v9335
      %9337 = vmatpush1.msra.mxu0 %v9336
      %9338 = vmatprep.subr.mxu0 0.0
      %v9339 = vand.u32 %v8886, 4294901760
      %v9340 = vsub.f32 %v8886, %v9339
      %9341 = vmatpush1.msra.mxu0 %v9340
      %9342 = vmatprep.subr.mxu0 0.0
      %9343 = vmatpush1.msra.mxu0 0.0
      %9344 = vmatprep.subr.mxu0 0.0
      %9345 = vmatpush1.msra.mxu0 0.0
      %9346 = vmatprep.subr.mxu0 0.0
      %9347 = vmatpush1.msra.mxu0 0.0
      %9348 = vmatprep.subr.mxu0 0.0
      %9349 = vmatpush1.msra.mxu0 0.0
      %9350 = vmatprep.subr.mxu0 0.0
      %9351 = vmatpush1.msra.mxu0 0.0
      %9352 = vmatprep.subr.mxu0 0.0
      %9353 = vmatpush1.msra.mxu0 0.0
      %9354 = vmatprep.subr.mxu0 0.0
      %9355 = vmatpush1.msra.mxu0 0.0
      %9356 = vmatprep.subr.mxu0 0.0
      %9357 = vmatpush1.msra.mxu0 0.0
      %9358 = vmatprep.subr.mxu0 0.0
      %9359 = vmatpush1.msra.mxu0 0.0
      %9360 = vmatprep.subr.mxu0 0.0
      %9361 = vmatpush1.msra.mxu0 0.0
      %9362 = vmatprep.subr.mxu0 0.0
      %9363 = vmatpush1.msra.mxu0 0.0
      %9364 = vmatprep.subr.mxu0 0.0
      %9365 = vmatpush1.msra.mxu0 0.0
      %9366 = vmatprep.subr.mxu0 0.0
      %9367 = vmatpush1.msra.mxu0 0.0
      %9368 = vmatprep.subr.mxu0 0.0
      %9369 = vmatpush1.msra.mxu0 0.0
      %9370 = vmatprep.subr.mxu0 0.0
      %9371 = vmatpush1.msra.mxu0 0.0
      %9372 = vmatprep.subr.mxu0 0.0
      %9373 = vmatpush1.msra.mxu0 0.0
      %9374 = vmatprep.mubr.f32.mxu0 0.0
      %v9375 = vand.u32 %v8908, 4294901760
      %v9376 = vsub.f32 %v8908, %v9375
      %9377 = vmatmul.mubr.f32.gmra.mrb[0].mxu0 %v9376
      %v9378 = vpop.f32.mrb[0].mxu0
      %v9379 = vadd.f32 %v9233, %v9378
      %v9380 = vpop.f32.mrb[0].mxu0
      %9381 = vmatprep.mubr.f32.mxu0 0.0
      %v9382 = vand.u32 %v8909, 4294901760
      %v9383 = vsub.f32 %v8909, %v9382
      %9384 = vmatmul.mubr.f32.gmra.mrb[0].mxu0 %v9383
      %v9385 = vpop.f32.mrb[0].mxu0
      %v9386 = vadd.f32 %v9239, %v9385
      %v9387 = vpop.f32.mrb[0].mxu0
      %9388 = vmatprep.mubr.f32.mxu0 0.0
      %v9389 = vand.u32 %v8910, 4294901760
      %v9390 = vsub.f32 %v8910, %v9389
      %9391 = vmatmul.mubr.f32.gmra.mrb[0].mxu0 %v9390
      %v9392 = vpop.f32.mrb[0].mxu0
      %v9393 = vadd.f32 %v9245, %v9392
      %v9394 = vpop.f32.mrb[0].mxu0
      %9395 = vmatprep.mubr.f32.mxu0 0.0
      %v9396 = vand.u32 %v8911, 4294901760
      %v9397 = vsub.f32 %v8911, %v9396
      %9398 = vmatmul.mubr.f32.gmra.mrb[0].mxu0 %v9397
      %v9399 = vpop.f32.mrb[0].mxu0
      %v9400 = vadd.f32 %v9251, %v9399
      %v9401 = vpop.f32.mrb[0].mxu0
      %9402 = vmatprep.mubr.f32.mxu0 0.0
      %v9403 = vand.u32 %v8912, 4294901760
      %v9404 = vsub.f32 %v8912, %v9403
      %9405 = vmatmul.mubr.f32.gmra.mrb[0].mxu0 %v9404
      %v9406 = vpop.f32.mrb[0].mxu0
      %v9407 = vadd.f32 %v9257, %v9406
      %v9408 = vpop.f32.mrb[0].mxu0
      %9409 = vmatprep.mubr.f32.mxu0 0.0
      %v9410 = vand.u32 %v8913, 4294901760
      %v9411 = vsub.f32 %v8913, %v9410
      %9412 = vmatmul.mubr.f32.gmra.mrb[0].mxu0 %v9411
      %v9413 = vpop.f32.mrb[0].mxu0
      %v9414 = vadd.f32 %v9263, %v9413
      %v9415 = vpop.f32.mrb[0].mxu0
      %9416 = vmatprep.mubr.f32.mxu0 0.0
      %v9417 = vand.u32 %v8914, 4294901760
      %v9418 = vsub.f32 %v8914, %v9417
      %9419 = vmatmul.mubr.f32.gmra.mrb[0].mxu0 %v9418
      %v9420 = vpop.f32.mrb[0].mxu0
      %v9421 = vadd.f32 %v9269, %v9420
      %v9422 = vpop.f32.mrb[0].mxu0
      %9423 = vmatprep.mubr.f32.mxu0 0.0
      %v9424 = vand.u32 %v8915, 4294901760
      %v9425 = vsub.f32 %v8915, %v9424
      %9426 = vmatmul.mubr.f32.gmra.mrb[0].mxu0 %v9425
      %v9427 = vpop.f32.mrb[0].mxu0
      %v9428 = vadd.f32 %v9275, %v9427
      %v9429 = vpop.f32.mrb[0].mxu0
      %9430 = vdwg.mxu0
      %9431 = vmatprep.subr.mxu0 0.0
      %v9432 = vand.u32 %v8871, 4294901760
      %9433 = vmatpush1.msra.mxu0 %v9432
      %9434 = vmatprep.subr.mxu0 0.0
      %v9435 = vand.u32 %v8872, 4294901760
      %9436 = vmatpush1.msra.mxu0 %v9435
      %9437 = vmatprep.subr.mxu0 0.0
      %v9438 = vand.u32 %v8873, 4294901760
      %9439 = vmatpush1.msra.mxu0 %v9438
      %9440 = vmatprep.subr.mxu0 0.0
      %v9441 = vand.u32 %v8874, 4294901760
      %9442 = vmatpush1.msra.mxu0 %v9441
      %9443 = vmatprep.subr.mxu0 0.0
      %v9444 = vand.u32 %v8875, 4294901760
      %9445 = vmatpush1.msra.mxu0 %v9444
      %9446 = vmatprep.subr.mxu0 0.0
      %v9447 = vand.u32 %v8876, 4294901760
      %9448 = vmatpush1.msra.mxu0 %v9447
      %9449 = vmatprep.subr.mxu0 0.0
      %v9450 = vand.u32 %v8877, 4294901760
      %9451 = vmatpush1.msra.mxu0 %v9450
      %9452 = vmatprep.subr.mxu0 0.0
      %v9453 = vand.u32 %v8878, 4294901760
      %9454 = vmatpush1.msra.mxu0 %v9453
      %9455 = vmatprep.subr.mxu0 0.0
      %v9456 = vand.u32 %v8879, 4294901760
      %9457 = vmatpush1.msra.mxu0 %v9456
      %9458 = vmatprep.subr.mxu0 0.0
      %v9459 = vand.u32 %v8880, 4294901760
      %9460 = vmatpush1.msra.mxu0 %v9459
      %9461 = vmatprep.subr.mxu0 0.0
      %v9462 = vand.u32 %v8881, 4294901760
      %9463 = vmatpush1.msra.mxu0 %v9462
      %9464 = vmatprep.subr.mxu0 0.0
      %v9465 = vand.u32 %v8882, 4294901760
      %9466 = vmatpush1.msra.mxu0 %v9465
      %9467 = vmatprep.subr.mxu0 0.0
      %v9468 = vand.u32 %v8883, 4294901760
      %9469 = vmatpush1.msra.mxu0 %v9468
      %9470 = vmatprep.subr.mxu0 0.0
      %v9471 = vand.u32 %v8884, 4294901760
      %9472 = vmatpush1.msra.mxu0 %v9471
      %9473 = vmatprep.subr.mxu0 0.0
      %v9474 = vand.u32 %v8885, 4294901760
      %9475 = vmatpush1.msra.mxu0 %v9474
      %9476 = vmatprep.subr.mxu0 0.0
      %v9477 = vand.u32 %v8886, 4294901760
      %9478 = vmatpush1.msra.mxu0 %v9477
      %9479 = vmatprep.subr.mxu0 0.0
      %9480 = vmatpush1.msra.mxu0 0.0
      %9481 = vmatprep.subr.mxu0 0.0
      %9482 = vmatpush1.msra.mxu0 0.0
      %9483 = vmatprep.subr.mxu0 0.0
      %9484 = vmatpush1.msra.mxu0 0.0
      %9485 = vmatprep.subr.mxu0 0.0
      %9486 = vmatpush1.msra.mxu0 0.0
      %9487 = vmatprep.subr.mxu0 0.0
      %9488 = vmatpush1.msra.mxu0 0.0
      %9489 = vmatprep.subr.mxu0 0.0
      %9490 = vmatpush1.msra.mxu0 0.0
      %9491 = vmatprep.subr.mxu0 0.0
      %9492 = vmatpush1.msra.mxu0 0.0
      %9493 = vmatprep.subr.mxu0 0.0
      %9494 = vmatpush1.msra.mxu0 0.0
      %9495 = vmatprep.subr.mxu0 0.0
      %9496 = vmatpush1.msra.mxu0 0.0
      %9497 = vmatprep.subr.mxu0 0.0
      %9498 = vmatpush1.msra.mxu0 0.0
      %9499 = vmatprep.subr.mxu0 0.0
      %9500 = vmatpush1.msra.mxu0 0.0
      %9501 = vmatprep.subr.mxu0 0.0
      %9502 = vmatpush1.msra.mxu0 0.0
      %9503 = vmatprep.subr.mxu0 0.0
      %9504 = vmatpush1.msra.mxu0 0.0
      %9505 = vmatprep.subr.mxu0 0.0
      %9506 = vmatpush1.msra.mxu0 0.0
      %9507 = vmatprep.subr.mxu0 0.0
      %9508 = vmatpush1.msra.mxu0 0.0
      %9509 = vmatprep.subr.mxu0 0.0
      %9510 = vmatpush1.msra.mxu0 0.0
      %9511 = vmatprep.mubr.f32.mxu0 0.0
      %v9512 = vand.u32 %v8908, 4294901760
      %v9513 = vsub.f32 %v8908, %v9512
      %v9514 = vand.u32 %v9513, 4294901760
      %9515 = vmatmul.mubr.f32.gmra.mrb[0].mxu0 %v9514
      %v9516 = vpop.f32.mrb[0].mxu0
      %v9517 = vadd.f32 %v9379, %v9516
      %v9518 = vpop.f32.mrb[0].mxu0
      %9519 = vmatprep.mubr.f32.mxu0 0.0
      %v9520 = vand.u32 %v8909, 4294901760
      %v9521 = vsub.f32 %v8909, %v9520
      %v9522 = vand.u32 %v9521, 4294901760
      %9523 = vmatmul.mubr.f32.gmra.mrb[0].mxu0 %v9522
      %v9524 = vpop.f32.mrb[0].mxu0
      %v9525 = vadd.f32 %v9386, %v9524
      %v9526 = vpop.f32.mrb[0].mxu0
      %9527 = vmatprep.mubr.f32.mxu0 0.0
      %v9528 = vand.u32 %v8910, 4294901760
      %v9529 = vsub.f32 %v8910, %v9528
      %v9530 = vand.u32 %v9529, 4294901760
      %9531 = vmatmul.mubr.f32.gmra.mrb[0].mxu0 %v9530
      %v9532 = vpop.f32.mrb[0].mxu0
      %v9533 = vadd.f32 %v9393, %v9532
      %v9534 = vpop.f32.mrb[0].mxu0
      %9535 = vmatprep.mubr.f32.mxu0 0.0
      %v9536 = vand.u32 %v8911, 4294901760
      %v9537 = vsub.f32 %v8911, %v9536
      %v9538 = vand.u32 %v9537, 4294901760
      %9539 = vmatmul.mubr.f32.gmra.mrb[0].mxu0 %v9538
      %v9540 = vpop.f32.mrb[0].mxu0
      %v9541 = vadd.f32 %v9400, %v9540
      %v9542 = vpop.f32.mrb[0].mxu0
      %9543 = vmatprep.mubr.f32.mxu0 0.0
      %v9544 = vand.u32 %v8912, 4294901760
      %v9545 = vsub.f32 %v8912, %v9544
      %v9546 = vand.u32 %v9545, 4294901760
      %9547 = vmatmul.mubr.f32.gmra.mrb[0].mxu0 %v9546
      %v9548 = vpop.f32.mrb[0].mxu0
      %v9549 = vadd.f32 %v9407, %v9548
      %v9550 = vpop.f32.mrb[0].mxu0
      %9551 = vmatprep.mubr.f32.mxu0 0.0
      %v9552 = vand.u32 %v8913, 4294901760
      %v9553 = vsub.f32 %v8913, %v9552
      %v9554 = vand.u32 %v9553, 4294901760
      %9555 = vmatmul.mubr.f32.gmra.mrb[0].mxu0 %v9554
      %v9556 = vpop.f32.mrb[0].mxu0
      %v9557 = vadd.f32 %v9414, %v9556
      %v9558 = vpop.f32.mrb[0].mxu0
      %9559 = vmatprep.mubr.f32.mxu0 0.0
      %v9560 = vand.u32 %v8914, 4294901760
      %v9561 = vsub.f32 %v8914, %v9560
      %v9562 = vand.u32 %v9561, 4294901760
      %9563 = vmatmul.mubr.f32.gmra.mrb[0].mxu0 %v9562
      %v9564 = vpop.f32.mrb[0].mxu0
      %v9565 = vadd.f32 %v9421, %v9564
      %v9566 = vpop.f32.mrb[0].mxu0
      %9567 = vmatprep.mubr.f32.mxu0 0.0
      %v9568 = vand.u32 %v8915, 4294901760
      %v9569 = vsub.f32 %v8915, %v9568
      %v9570 = vand.u32 %v9569, 4294901760
      %9571 = vmatmul.mubr.f32.gmra.mrb[0].mxu0 %v9570
      %v9572 = vpop.f32.mrb[0].mxu0
      %v9573 = vadd.f32 %v9428, %v9572
      %v9574 = vpop.f32.mrb[0].mxu0
      %9575 = vdwg.mxu0
      %9576 = vmatprep.subr.mxu0 0.0
      %v9577 = vand.u32 %v8871, 4294901760
      %v9578 = vsub.f32 %v8871, %v9577
      %v9579 = vand.u32 %v9578, 4294901760
      %9580 = vmatpush1.msra.mxu0 %v9579
      %9581 = vmatprep.subr.mxu0 0.0
      %v9582 = vand.u32 %v8872, 4294901760
      %v9583 = vsub.f32 %v8872, %v9582
      %v9584 = vand.u32 %v9583, 4294901760
      %9585 = vmatpush1.msra.mxu0 %v9584
      %9586 = vmatprep.subr.mxu0 0.0
      %v9587 = vand.u32 %v8873, 4294901760
      %v9588 = vsub.f32 %v8873, %v9587
      %v9589 = vand.u32 %v9588, 4294901760
      %9590 = vmatpush1.msra.mxu0 %v9589
      %9591 = vmatprep.subr.mxu0 0.0
      %v9592 = vand.u32 %v8874, 4294901760
      %v9593 = vsub.f32 %v8874, %v9592
      %v9594 = vand.u32 %v9593, 4294901760
      %9595 = vmatpush1.msra.mxu0 %v9594
      %9596 = vmatprep.subr.mxu0 0.0
      %v9597 = vand.u32 %v8875, 4294901760
      %v9598 = vsub.f32 %v8875, %v9597
      %v9599 = vand.u32 %v9598, 4294901760
      %9600 = vmatpush1.msra.mxu0 %v9599
      %9601 = vmatprep.subr.mxu0 0.0
      %v9602 = vand.u32 %v8876, 4294901760
      %v9603 = vsub.f32 %v8876, %v9602
      %v9604 = vand.u32 %v9603, 4294901760
      %9605 = vmatpush1.msra.mxu0 %v9604
      %9606 = vmatprep.subr.mxu0 0.0
      %v9607 = vand.u32 %v8877, 4294901760
      %v9608 = vsub.f32 %v8877, %v9607
      %v9609 = vand.u32 %v9608, 4294901760
      %9610 = vmatpush1.msra.mxu0 %v9609
      %9611 = vmatprep.subr.mxu0 0.0
      %v9612 = vand.u32 %v8878, 4294901760
      %v9613 = vsub.f32 %v8878, %v9612
      %v9614 = vand.u32 %v9613, 4294901760
      %9615 = vmatpush1.msra.mxu0 %v9614
      %9616 = vmatprep.subr.mxu0 0.0
      %v9617 = vand.u32 %v8879, 4294901760
      %v9618 = vsub.f32 %v8879, %v9617
      %v9619 = vand.u32 %v9618, 4294901760
      %9620 = vmatpush1.msra.mxu0 %v9619
      %9621 = vmatprep.subr.mxu0 0.0
      %v9622 = vand.u32 %v8880, 4294901760
      %v9623 = vsub.f32 %v8880, %v9622
      %v9624 = vand.u32 %v9623, 4294901760
      %9625 = vmatpush1.msra.mxu0 %v9624
      %9626 = vmatprep.subr.mxu0 0.0
      %v9627 = vand.u32 %v8881, 4294901760
      %v9628 = vsub.f32 %v8881, %v9627
      %v9629 = vand.u32 %v9628, 4294901760
      %9630 = vmatpush1.msra.mxu0 %v9629
      %9631 = vmatprep.subr.mxu0 0.0
      %v9632 = vand.u32 %v8882, 4294901760
      %v9633 = vsub.f32 %v8882, %v9632
      %v9634 = vand.u32 %v9633, 4294901760
      %9635 = vmatpush1.msra.mxu0 %v9634
      %9636 = vmatprep.subr.mxu0 0.0
      %v9637 = vand.u32 %v8883, 4294901760
      %v9638 = vsub.f32 %v8883, %v9637
      %v9639 = vand.u32 %v9638, 4294901760
      %9640 = vmatpush1.msra.mxu0 %v9639
      %9641 = vmatprep.subr.mxu0 0.0
      %v9642 = vand.u32 %v8884, 4294901760
      %v9643 = vsub.f32 %v8884, %v9642
      %v9644 = vand.u32 %v9643, 4294901760
      %9645 = vmatpush1.msra.mxu0 %v9644
      %9646 = vmatprep.subr.mxu0 0.0
      %v9647 = vand.u32 %v8885, 4294901760
      %v9648 = vsub.f32 %v8885, %v9647
      %v9649 = vand.u32 %v9648, 4294901760
      %9650 = vmatpush1.msra.mxu0 %v9649
      %9651 = vmatprep.subr.mxu0 0.0
      %v9652 = vand.u32 %v8886, 4294901760
      %v9653 = vsub.f32 %v8886, %v9652
      %v9654 = vand.u32 %v9653, 4294901760
      %9655 = vmatpush1.msra.mxu0 %v9654
      %9656 = vmatprep.subr.mxu0 0.0
      %9657 = vmatpush1.msra.mxu0 0.0
      %9658 = vmatprep.subr.mxu0 0.0
      %9659 = vmatpush1.msra.mxu0 0.0
      %9660 = vmatprep.subr.mxu0 0.0
      %9661 = vmatpush1.msra.mxu0 0.0
      %9662 = vmatprep.subr.mxu0 0.0
      %9663 = vmatpush1.msra.mxu0 0.0
      %9664 = vmatprep.subr.mxu0 0.0
      %9665 = vmatpush1.msra.mxu0 0.0
      %9666 = vmatprep.subr.mxu0 0.0
      %9667 = vmatpush1.msra.mxu0 0.0
      %9668 = vmatprep.subr.mxu0 0.0
      %9669 = vmatpush1.msra.mxu0 0.0
      %9670 = vmatprep.subr.mxu0 0.0
      %9671 = vmatpush1.msra.mxu0 0.0
      %9672 = vmatprep.subr.mxu0 0.0
      %9673 = vmatpush1.msra.mxu0 0.0
      %9674 = vmatprep.subr.mxu0 0.0
      %9675 = vmatpush1.msra.mxu0 0.0
      %9676 = vmatprep.subr.mxu0 0.0
      %9677 = vmatpush1.msra.mxu0 0.0
      %9678 = vmatprep.subr.mxu0 0.0
      %9679 = vmatpush1.msra.mxu0 0.0
      %9680 = vmatprep.subr.mxu0 0.0
      %9681 = vmatpush1.msra.mxu0 0.0
      %9682 = vmatprep.subr.mxu0 0.0
      %9683 = vmatpush1.msra.mxu0 0.0
      %9684 = vmatprep.subr.mxu0 0.0
      %9685 = vmatpush1.msra.mxu0 0.0
      %9686 = vmatprep.subr.mxu0 0.0
      %9687 = vmatpush1.msra.mxu0 0.0
      %9688 = vmatprep.mubr.f32.mxu0 0.0
      %v9689 = vand.u32 %v8908, 4294901760
      %9690 = vmatmul.mubr.f32.gmra.mrb[0].mxu0 %v9689
      %v9691 = vpop.f32.mrb[0].mxu0
      %v9692 = vadd.f32 %v9517, %v9691
      %v9693 = vpop.f32.mrb[0].mxu0
      %9694 = vmatprep.mubr.f32.mxu0 0.0
      %v9695 = vand.u32 %v8909, 4294901760
      %9696 = vmatmul.mubr.f32.gmra.mrb[0].mxu0 %v9695
      %v9697 = vpop.f32.mrb[0].mxu0
      %v9698 = vadd.f32 %v9525, %v9697
      %v9699 = vpop.f32.mrb[0].mxu0
      %9700 = vmatprep.mubr.f32.mxu0 0.0
      %v9701 = vand.u32 %v8910, 4294901760
      %9702 = vmatmul.mubr.f32.gmra.mrb[0].mxu0 %v9701
      %v9703 = vpop.f32.mrb[0].mxu0
      %v9704 = vadd.f32 %v9533, %v9703
      %v9705 = vpop.f32.mrb[0].mxu0
      %9706 = vmatprep.mubr.f32.mxu0 0.0
      %v9707 = vand.u32 %v8911, 4294901760
      %9708 = vmatmul.mubr.f32.gmra.mrb[0].mxu0 %v9707
      %v9709 = vpop.f32.mrb[0].mxu0
      %v9710 = vadd.f32 %v9541, %v9709
      %v9711 = vpop.f32.mrb[0].mxu0
      %9712 = vmatprep.mubr.f32.mxu0 0.0
      %v9713 = vand.u32 %v8912, 4294901760
      %9714 = vmatmul.mubr.f32.gmra.mrb[0].mxu0 %v9713
      %v9715 = vpop.f32.mrb[0].mxu0
      %v9716 = vadd.f32 %v9549, %v9715
      %v9717 = vpop.f32.mrb[0].mxu0
      %9718 = vmatprep.mubr.f32.mxu0 0.0
      %v9719 = vand.u32 %v8913, 4294901760
      %9720 = vmatmul.mubr.f32.gmra.mrb[0].mxu0 %v9719
      %v9721 = vpop.f32.mrb[0].mxu0
      %v9722 = vadd.f32 %v9557, %v9721
      %v9723 = vpop.f32.mrb[0].mxu0
      %9724 = vmatprep.mubr.f32.mxu0 0.0
      %v9725 = vand.u32 %v8914, 4294901760
      %9726 = vmatmul.mubr.f32.gmra.mrb[0].mxu0 %v9725
      %v9727 = vpop.f32.mrb[0].mxu0
      %v9728 = vadd.f32 %v9565, %v9727
      %v9729 = vpop.f32.mrb[0].mxu0
      %9730 = vmatprep.mubr.f32.mxu0 0.0
      %v9731 = vand.u32 %v8915, 4294901760
      %9732 = vmatmul.mubr.f32.gmra.mrb[0].mxu0 %v9731
      %v9733 = vpop.f32.mrb[0].mxu0
      %v9734 = vadd.f32 %v9573, %v9733
      %v9735 = vpop.f32.mrb[0].mxu0
      %9736 = vdwg.mxu0
      %9737 = vmatprep.subr.mxu0 0.0
      %v9738 = vand.u32 %v8871, 4294901760
      %9739 = vmatpush1.msra.mxu0 %v9738
      %9740 = vmatprep.subr.mxu0 0.0
      %v9741 = vand.u32 %v8872, 4294901760
      %9742 = vmatpush1.msra.mxu0 %v9741
      %9743 = vmatprep.subr.mxu0 0.0
      %v9744 = vand.u32 %v8873, 4294901760
      %9745 = vmatpush1.msra.mxu0 %v9744
      %9746 = vmatprep.subr.mxu0 0.0
      %v9747 = vand.u32 %v8874, 4294901760
      %9748 = vmatpush1.msra.mxu0 %v9747
      %9749 = vmatprep.subr.mxu0 0.0
      %v9750 = vand.u32 %v8875, 4294901760
      %9751 = vmatpush1.msra.mxu0 %v9750
      %9752 = vmatprep.subr.mxu0 0.0
      %v9753 = vand.u32 %v8876, 4294901760
      %9754 = vmatpush1.msra.mxu0 %v9753
      %9755 = vmatprep.subr.mxu0 0.0
      %v9756 = vand.u32 %v8877, 4294901760
      %9757 = vmatpush1.msra.mxu0 %v9756
      %9758 = vmatprep.subr.mxu0 0.0
      %v9759 = vand.u32 %v8878, 4294901760
      %9760 = vmatpush1.msra.mxu0 %v9759
      %9761 = vmatprep.subr.mxu0 0.0
      %v9762 = vand.u32 %v8879, 4294901760
      %9763 = vmatpush1.msra.mxu0 %v9762
      %9764 = vmatprep.subr.mxu0 0.0
      %v9765 = vand.u32 %v8880, 4294901760
      %9766 = vmatpush1.msra.mxu0 %v9765
      %9767 = vmatprep.subr.mxu0 0.0
      %v9768 = vand.u32 %v8881, 4294901760
      %9769 = vmatpush1.msra.mxu0 %v9768
      %9770 = vmatprep.subr.mxu0 0.0
      %v9771 = vand.u32 %v8882, 4294901760
      %9772 = vmatpush1.msra.mxu0 %v9771
      %9773 = vmatprep.subr.mxu0 0.0
      %v9774 = vand.u32 %v8883, 4294901760
      %9775 = vmatpush1.msra.mxu0 %v9774
      %9776 = vmatprep.subr.mxu0 0.0
      %v9777 = vand.u32 %v8884, 4294901760
      %9778 = vmatpush1.msra.mxu0 %v9777
      %9779 = vmatprep.subr.mxu0 0.0
      %v9780 = vand.u32 %v8885, 4294901760
      %9781 = vmatpush1.msra.mxu0 %v9780
      %9782 = vmatprep.subr.mxu0 0.0
      %v9783 = vand.u32 %v8886, 4294901760
      %9784 = vmatpush1.msra.mxu0 %v9783
      %9785 = vmatprep.subr.mxu0 0.0
      %9786 = vmatpush1.msra.mxu0 0.0
      %9787 = vmatprep.subr.mxu0 0.0
      %9788 = vmatpush1.msra.mxu0 0.0
      %9789 = vmatprep.subr.mxu0 0.0
      %9790 = vmatpush1.msra.mxu0 0.0
      %9791 = vmatprep.subr.mxu0 0.0
      %9792 = vmatpush1.msra.mxu0 0.0
      %9793 = vmatprep.subr.mxu0 0.0
      %9794 = vmatpush1.msra.mxu0 0.0
      %9795 = vmatprep.subr.mxu0 0.0
      %9796 = vmatpush1.msra.mxu0 0.0
      %9797 = vmatprep.subr.mxu0 0.0
      %9798 = vmatpush1.msra.mxu0 0.0
      %9799 = vmatprep.subr.mxu0 0.0
      %9800 = vmatpush1.msra.mxu0 0.0
      %9801 = vmatprep.subr.mxu0 0.0
      %9802 = vmatpush1.msra.mxu0 0.0
      %9803 = vmatprep.subr.mxu0 0.0
      %9804 = vmatpush1.msra.mxu0 0.0
      %9805 = vmatprep.subr.mxu0 0.0
      %9806 = vmatpush1.msra.mxu0 0.0
      %9807 = vmatprep.subr.mxu0 0.0
      %9808 = vmatpush1.msra.mxu0 0.0
      %9809 = vmatprep.subr.mxu0 0.0
      %9810 = vmatpush1.msra.mxu0 0.0
      %9811 = vmatprep.subr.mxu0 0.0
      %9812 = vmatpush1.msra.mxu0 0.0
      %9813 = vmatprep.subr.mxu0 0.0
      %9814 = vmatpush1.msra.mxu0 0.0
      %9815 = vmatprep.subr.mxu0 0.0
      %9816 = vmatpush1.msra.mxu0 0.0
      %9817 = vmatprep.mubr.f32.mxu0 0.0
      %v9818 = vand.u32 %v8908, 4294901760
      %9819 = vmatmul.mubr.f32.gmra.mrb[0].mxu0 %v9818
      %v9820 = vpop.f32.mrb[0].mxu0
      %v9821 = vadd.f32 %v9692, %v9820
      %v9822 = vpop.f32.mrb[0].mxu0
      %9823 = vmatprep.mubr.f32.mxu0 0.0
      %v9824 = vand.u32 %v8909, 4294901760
      %9825 = vmatmul.mubr.f32.gmra.mrb[0].mxu0 %v9824
      %v9826 = vpop.f32.mrb[0].mxu0
      %v9827 = vadd.f32 %v9698, %v9826
      %v9828 = vpop.f32.mrb[0].mxu0
      %9829 = vmatprep.mubr.f32.mxu0 0.0
      %v9830 = vand.u32 %v8910, 4294901760
      %9831 = vmatmul.mubr.f32.gmra.mrb[0].mxu0 %v9830
      %v9832 = vpop.f32.mrb[0].mxu0
      %v9833 = vadd.f32 %v9704, %v9832
      %v9834 = vpop.f32.mrb[0].mxu0
      %9835 = vmatprep.mubr.f32.mxu0 0.0
      %v9836 = vand.u32 %v8911, 4294901760
      %9837 = vmatmul.mubr.f32.gmra.mrb[0].mxu0 %v9836
      %v9838 = vpop.f32.mrb[0].mxu0
      %v9839 = vadd.f32 %v9710, %v9838
      %v9840 = vpop.f32.mrb[0].mxu0
      %9841 = vmatprep.mubr.f32.mxu0 0.0
      %v9842 = vand.u32 %v8912, 4294901760
      %9843 = vmatmul.mubr.f32.gmra.mrb[0].mxu0 %v9842
      %v9844 = vpop.f32.mrb[0].mxu0
      %v9845 = vadd.f32 %v9716, %v9844
      %v9846 = vpop.f32.mrb[0].mxu0
      %9847 = vmatprep.mubr.f32.mxu0 0.0
      %v9848 = vand.u32 %v8913, 4294901760
      %9849 = vmatmul.mubr.f32.gmra.mrb[0].mxu0 %v9848
      %v9850 = vpop.f32.mrb[0].mxu0
      %v9851 = vadd.f32 %v9722, %v9850
      %v9852 = vpop.f32.mrb[0].mxu0
      %9853 = vmatprep.mubr.f32.mxu0 0.0
      %v9854 = vand.u32 %v8914, 4294901760
      %9855 = vmatmul.mubr.f32.gmra.mrb[0].mxu0 %v9854
      %v9856 = vpop.f32.mrb[0].mxu0
      %v9857 = vadd.f32 %v9728, %v9856
      %v9858 = vpop.f32.mrb[0].mxu0
      %9859 = vmatprep.mubr.f32.mxu0 0.0
      %v9860 = vand.u32 %v8915, 4294901760
      %9861 = vmatmul.mubr.f32.gmra.mrb[0].mxu0 %v9860
      %v9862 = vpop.f32.mrb[0].mxu0
      %v9863 = vadd.f32 %v9734, %v9862
      %v9864 = vpop.f32.mrb[0].mxu0
      %9865 = vdwg.mxu0
      %v9866 = vadd.f32 %v8916, %v9821
      %v9867 = vadd.f32 %v8917, %v9827
      %v9868 = vadd.f32 %v8918, %v9833
      %v9869 = vadd.f32 %v8919, %v9839
      %v9870 = vadd.f32 %v8920, %v9845
      %v9871 = vadd.f32 %v8921, %v9851
      %v9872 = vadd.f32 %v8922, %v9857
      %v9873 = vadd.f32 %v8923, %v9863
      %9874 = vst.msk [vmem:[%s17] sm:$0xff] %vm3898, %v9866
      %9875 = vst.msk [vmem:[%s17 + $0x8] sm:$0xff] %vm3898, %v9867
      %9876 = vst.msk [vmem:[%s17 + $0x10] sm:$0xff] %vm3898, %v9868
      %9877 = vst.msk [vmem:[%s17 + $0x18] sm:$0xff] %vm3898, %v9869
      %9878 = vst.msk [vmem:[%s17 + $0x20] sm:$0xff] %vm3898, %v9870
      %9879 = vst.msk [vmem:[%s17 + $0x28] sm:$0xff] %vm3898, %v9871
      %9880 = vst.msk [vmem:[%s17 + $0x30] sm:$0xff] %vm3898, %v9872
      %9881 = vst.msk [vmem:[%s17 + $0x38] sm:$0xff] %vm3898, %v9873
      // Predicated region
      $region93: #{tpu_custom_call.1} parent=87 // pred_check
        %p9882 = pneg %p418
      $region94: #{tpu_custom_call.1} parent=87 // pred_check_branch
        %9884 = sbr.rel (%p9882) target = $region96
      $region95: #{tpu_custom_call.1} parent=87 // pred_region
        _
      $region96: #{tpu_custom_call.1} parent=87 // pred_fallthru
        _
      // Predicated region
      $region97: #{tpu_custom_call.1} parent=87 // pred_check
        %p9885 = pneg %p418
      $region98: #{tpu_custom_call.1} parent=87 // pred_check_branch
        %9887 = sbr.rel (%p9885) target = $region100
      $region99: #{tpu_custom_call.1} parent=87 // pred_region
        _
      $region100: #{tpu_custom_call.1} parent=87 // pred_fallthru
        _
    $region88: #{tpu_custom_call.1} parent=5 // pred_fallthru
      _
    %p9888 = scmp.le.s32.totalorder 2, %s23
    // Predicated region
    $region101: #{tpu_custom_call.1} parent=5 // pred_check
      %p9889 = pneg %p9888
    $region102: #{tpu_custom_call.1} parent=5 // pred_check_branch
      %9891 = sbr.rel (%p9889) target = $region104
    $region103: #{tpu_custom_call.1} parent=5 // pred_region
      %s9892 = ssub.s32 %s23, 2
    $region104: #{tpu_custom_call.1} parent=5 // pred_fallthru
      _
  $region6: #{tpu_custom_call.1} parent=0 // loop_footer
    %s27 = sadd.s32 1, %s23
  $region7: #{tpu_custom_call.1} parent=0 // loop_footer_branch
    %22 = sbr.rel target = $region3
  $region8: #{tpu_custom_call.1} parent=0 // loop_exit
    _

</llo_original>
